<compile_context>
chip_gen: v7x
topology: tpu7x:2x2x1
jax: 0.10.0
libtpu: 0.0.40
codegen_flags: <defaults>
</compile_context>

<pallas_src>
import functools

import jax
import jax.numpy as jnp
from jax.experimental import pallas as pl
from jax.experimental.pallas import tpu as pltpu

# --------------------------------------------------------------------------
# Configuration (small, CIFAR-like):
#   in_channels  (shallow -> deep) : [16, 32, 64]
#   out_channels (shallow -> deep) : [16, 32, 64]
#   shapes / out_shapes (deep -> shallow spatial sizes): [4, 8, 16]
#   model_name = 'wrn40_1_cifar'  -> fc1: BN1d(64) + Dropout + Linear(64,128)
# --------------------------------------------------------------------------
IN_CHANNELS = [16, 32, 64]
OUT_CHANNELS = [16, 32, 64]
SHAPES = [4, 8, 16]           # deepest feature first (matches ReviewKD usage)
OUT_SHAPES = SHAPES           # out_shapes=None -> out_shapes = shapes
MID_CHANNEL = min(512, IN_CHANNELS[-1])   # 64
S_EMB, T_EMB, N_CLASSES = 64, 128, 10
BN_EPS = 1e-5


# ==========================================================================
# Fused 3-stage ABF kernel (one grid step = one image, all stages in VMEM)
# ==========================================================================
def _make_fused_kernel(stages, mid):
    """stages: deep->shallow list of dicts(h, w, cin, cout, fuse)."""
    n_stage = len(stages)

    def kernel(*refs):
        x_refs = refs[:n_stage]
        idx = n_stage
        per_stage = []
        for st in stages:
            cnt = 7 if st["fuse"] else 4
            per_stage.append(refs[idx:idx + cnt])
            idx += cnt
        out_refs = refs[idx:idx + n_stage]

        res = None
        for si, st in enumerate(stages):
            h, w = st["h"], st["w"]
            P = h * w
            if st["fuse"]:
                w1, sb1, aw, ab, w2, sb2, up = per_stage[si]
            else:
                w1, sb1, w2, sb2 = per_stage[si]

            # ---- 1x1 conv: bf16 MXU, BN scale/shift applied in f32 ----
            sb1v = sb1[...]                                       # (2, mid)
            xc = jnp.dot(x_refs[si][0], w1[...],
                         preferred_element_type=jnp.float32)      # (P, mid)
            xc = xc * sb1v[0:1, :] + sb1v[1:2, :]

            # ---- attention fuse: lane-packed (P, 2*mid) VPU/XLU ----
            if st["fuse"]:
                # in-kernel nearest 2x upsample of previous residual
                # (exact 0/1 f32 matmul on the otherwise-idle MXU)
                yv = jnp.dot(up[...], res, preferred_element_type=jnp.float32)
                xy = jnp.concatenate([xc, yv], axis=-1)           # (P, 2*mid)
                awv, abv = aw[...], ab[...]
                l0 = (jnp.sum(xy * awv[0:1, :], axis=1, keepdims=True)
                      + abv[:, 0:1])
                l1 = (jnp.sum(xy * awv[1:2, :], axis=1, keepdims=True)
                      + abv[:, 1:2])
                xc = xc * jax.nn.sigmoid(l0) + yv * jax.nn.sigmoid(l1)
            res = xc                                              # stays on-chip

            # ---- 3x3 conv (pad=1): value halo + 9 masked shifted taps,
            #      lane-concat -> single K=9*mid bf16 MXU dot ----
            pad = ((w + 1 + 7) // 8) * 8          # sublane-aligned halo rows
            zeros = jnp.zeros((pad, mid), jnp.float32)
            xp = jnp.concatenate([zeros, xc, zeros], axis=0)      # (P+2*pad, mid)
            col = jax.lax.broadcasted_iota(jnp.int32, (P, 1), 0) % w
            mask_l = col >= 1              # neighbour column c-1 in range
            mask_r = col <= w - 2          # neighbour column c+1 in range
            taps = []
            for dh in (-1, 0, 1):
                for dw in (-1, 0, 1):
                    off = pad + dh * w + dw
                    nb = xp[off:off + P, :]                       # (P, mid)
                    if dw == -1:
                        nb = jnp.where(mask_l, nb, 0.0)
                    elif dw == 1:
                        nb = jnp.where(mask_r, nb, 0.0)
                    taps.append(nb)
            kmat = jnp.concatenate(taps, axis=-1).astype(jnp.bfloat16)  # (P, 9*mid)
            sb2v = sb2[...]                                       # (2, cout)
            o = jnp.dot(kmat, w2[...], preferred_element_type=jnp.float32)
            out_refs[si][0] = o * sb2v[0:1, :] + sb2v[1:2, :]

    return kernel


def _const2d_spec(a):
    return pl.BlockSpec(a.shape, lambda b: (0, 0))


def run_fused_abfs(preps, ups, x_flats, n):
    """Single pallas_call for all ABF stages.

    preps   : deep->shallow list of prepared ABF params.
    ups     : nearest-upsample matrices for the fuse stages (deep->shallow).
    x_flats : deep->shallow list of (N, H*W, Cin) bf16 flat-NHWC features.
    returns : deep->shallow list of (N, H*W, Cout) f32 conv2 outputs.
    """
    mid = MID_CHANNEL
    stages = []
    for i, s in enumerate(SHAPES):
        stages.append(dict(h=s, w=s,
                           cin=x_flats[i].shape[-1],
                           cout=preps[i]["sb2"].shape[-1],
                           fuse=preps[i]["attw"] is not None))

    kernel = _make_fused_kernel(stages, mid)

    args, in_specs = [], []
    for i, st in enumerate(stages):
        P = st["h"] * st["w"]
        args.append(x_flats[i])
        in_specs.append(pl.BlockSpec((1, P, st["cin"]), lambda b: (b, 0, 0)))

    ui = 0
    for i, st in enumerate(stages):
        p = preps[i]
        if st["fuse"]:
            stage_args = [p["w1"], p["sb1"], p["attw"], p["attb"],
                          p["w2"], p["sb2"], ups[ui]]
            ui += 1
        else:
            stage_args = [p["w1"], p["sb1"], p["w2"], p["sb2"]]
        for a in stage_args:
            args.append(a)
            in_specs.append(_const2d_spec(a))

    out_specs, out_shape = [], []
    for st in stages:
        P = st["h"] * st["w"]
        out_specs.append(pl.BlockSpec((1, P, st["cout"]), lambda b: (b, 0, 0)))
        out_shape.append(jax.ShapeDtypeStruct((n, P, st["cout"]), jnp.float32))

    return pl.pallas_call(
        kernel,
        grid=(n,),   # one image per step; "parallel" -> both v7x TensorCores
        in_specs=in_specs,
        out_specs=out_specs,
        out_shape=out_shape,
        compiler_params=pltpu.CompilerParams(
            dimension_semantics=("parallel",)),
    )(*args)


# ==========================================================================
# Parameter preparation (done once, outside the forward pass)
# ==========================================================================
def fold_bn(bn):
    """Eval-mode BN -> per-channel (scale, bias), kept in f32."""
    scale = bn["gamma"] / jnp.sqrt(bn["var"] + BN_EPS)
    bias = bn["beta"] - bn["mean"] * scale
    return scale, bias


def prepare_abf(p):
    """Pre-layout conv weights for the kernel; BN stays a f32 post-dot affine."""
    mid = p["conv1_w"].shape[0]
    cout = p["conv2_w"].shape[0]

    s1, b1 = fold_bn(p["bn1"])
    w1 = jnp.transpose(p["conv1_w"][:, :, 0, 0])                  # (cin, mid)

    s2, b2 = fold_bn(p["bn2"])
    w2 = jnp.transpose(p["conv2_w"], (2, 3, 1, 0)).reshape(9 * mid, cout)

    prep = dict(
        w1=w1.astype(jnp.bfloat16),
        sb1=jnp.stack([s1, b1]).astype(jnp.float32),              # (2, mid)
        w2=w2.astype(jnp.bfloat16),
        sb2=jnp.stack([s2, b2]).astype(jnp.float32),              # (2, cout)
        attw=None, attb=None)
    if p["att_w"] is not None:
        prep["attw"] = p["att_w"][:, :, 0, 0].astype(jnp.float32)  # (2, 2*mid)
        prep["attb"] = p["att_b"].reshape(1, 2).astype(jnp.float32)
    return prep


def nearest_upsample_matrix(s_in, s_out):
    """(s_out^2, s_in^2) 0/1 matrix implementing F.interpolate(mode='nearest')."""
    r = (jnp.arange(s_out) * s_in) // s_out
    src = (r[:, None] * s_in + r[None, :]).reshape(-1)            # (s_out^2,)
    return (src[:, None] == jnp.arange(s_in * s_in)[None, :]).astype(jnp.float32)


def prepare_params(params):
    ups = [nearest_upsample_matrix(SHAPES[i - 1], SHAPES[i])
           for i in range(1, len(SHAPES))]
    return dict(abfs=[prepare_abf(p) for p in params["abfs"]],
                ups=ups, fc1=params["fc1"], student=params["student"])


# ==========================================================================
# Plain-JAX glue (tiny ops, not worth a kernel launch)
# ==========================================================================
def nearest_resize_nchw(x, out_h, out_w):
    n, c, h, w = x.shape
    ih = (jnp.arange(out_h) * h // out_h).astype(jnp.int32)
    iw = (jnp.arange(out_w) * w // out_w).astype(jnp.int32)
    return x[:, :, ih[:, None], iw[None, :]]


def fc1_forward(p, emb):
    """BatchNorm1d (eval) + Dropout (eval=identity) + Linear, plain jnp."""
    s = p["bn_gamma"] * jax.lax.rsqrt(p["bn_var"] + BN_EPS)
    sh = p["bn_beta"] - p["bn_mean"] * s
    return (emb * s + sh) @ jnp.transpose(p["lin_w"]) + p["lin_b"]


def student_forward(sp, x):
    """Deterministic stand-in for the (external) student network.
    Emits flat-NHWC features directly (no per-stage transposes later)."""
    n = x.shape[0]
    feats = []
    for w1x1, s in zip(sp["proj_ws"], [16, 8, 4]):          # shallow -> deep
        xd = nearest_resize_nchw(x, s, s)                   # (N, 3, s, s)
        f = jnp.tanh(jnp.einsum("nchw,kc->nhwk", xd, w1x1)) # (N, s, s, C)
        feats.append(f.reshape(n, s * s, -1))               # flat NHWC
    emb = jnp.mean(feats[-1], axis=1)                       # (N, 64)
    logit = emb @ sp["cls_w"]                               # (N, 10)
    feats_bf16 = [f.astype(jnp.bfloat16) for f in feats]
    return feats_bf16, emb, logit


# ==========================================================================
# ReviewKD forward
# ==========================================================================
def reviewkd_forward(pp, x):
    feats_flat, emb, logit = student_forward(pp["student"], x)   # shallow -> deep
    emb = fc1_forward(pp["fc1"], emb)

    n = x.shape[0]
    xr = feats_flat[::-1]                                        # deepest first
    # TODO(synk): mid-stage nearest resize (shape != out_shape) is not fused;
    # never triggered for out_shapes=None (out_shapes == shapes).
    outs = run_fused_abfs(pp["abfs"], pp["ups"], xr, n)          # deep -> shallow

    results = []
    for i, o in enumerate(outs):
        h = w = SHAPES[i]
        c = o.shape[-1]
        out_nchw = jnp.transpose(o.reshape(n, h, w, c), (0, 3, 1, 2))
        results.insert(0, out_nchw)
    return results, emb, logit


# ==========================================================================
# Deterministic parameter construction
# ==========================================================================
def kaiming_uniform(key, shape, fan_in, a=1.0):
    gain = (2.0 / (1.0 + a * a)) ** 0.5
    bound = gain * (3.0 / fan_in) ** 0.5
    return jax.random.uniform(key, shape, jnp.float32, -bound, bound)


def make_bn(c):
    return dict(gamma=jnp.ones((c,), jnp.float32),
                beta=jnp.zeros((c,), jnp.float32),
                mean=jnp.zeros((c,), jnp.float32),
                var=jnp.ones((c,), jnp.float32))


def init_params(key):
    keys = jax.random.split(key, 32)
    ki = iter(keys)
    mid = MID_CHANNEL

    # ABFs, constructed in original index order then reversed (as in __init__).
    abfs = []
    n_stage = len(IN_CHANNELS)
    for idx, in_c in enumerate(IN_CHANNELS):
        out_c = OUT_CHANNELS[idx]
        fuse = idx < n_stage - 1
        p = dict(
            conv1_w=kaiming_uniform(next(ki), (mid, in_c, 1, 1), in_c, a=1.0),
            bn1=make_bn(mid),
            conv2_w=kaiming_uniform(next(ki), (out_c, mid, 3, 3), mid * 9, a=1.0),
            bn2=make_bn(out_c),
            att_w=None,
            att_b=None,
        )
        if fuse:
            fan_in = 2 * mid
            bound = 1.0 / (fan_in ** 0.5)
            p["att_w"] = jax.random.uniform(next(ki), (2, 2 * mid, 1, 1),
                                            jnp.float32, -bound, bound)
            p["att_b"] = jax.random.uniform(next(ki), (2,),
                                            jnp.float32, -bound, bound)
        abfs.append(p)
    abfs = abfs[::-1]

    # fc1 : BatchNorm1d(64) (weight=1, bias=0) + Dropout + Linear(64,128) (bias=0)
    lb = 1.0 / (S_EMB ** 0.5)
    fc1 = dict(
        bn_gamma=jnp.ones((S_EMB,), jnp.float32),
        bn_beta=jnp.zeros((S_EMB,), jnp.float32),
        bn_mean=jnp.zeros((S_EMB,), jnp.float32),
        bn_var=jnp.ones((S_EMB,), jnp.float32),
        lin_w=jax.random.uniform(next(ki), (T_EMB, S_EMB), jnp.float32, -lb, lb),
        lin_b=jnp.zeros((T_EMB,), jnp.float32),
    )

    # toy student projections (3 -> in_channels[i]) and classifier head
    student = dict(
        proj_ws=[jax.random.normal(next(ki), (c, 3), jnp.float32) * 0.1
                 for c in IN_CHANNELS],
        cls_w=jax.random.normal(next(ki), (S_EMB, N_CLASSES), jnp.float32) * 0.1,
    )
    return dict(abfs=abfs, fc1=fc1, student=student)


# ==========================================================================
if __name__ == "__main__":
    key = jax.random.PRNGKey(0)
    pkey, xkey = jax.random.split(key)
    params = init_params(pkey)
    prep = prepare_params(params)          # pre-layout weights once

    x = jax.random.normal(xkey, (2, 3, 16, 16), jnp.float32)   # NCHW input

    fwd = jax.jit(functools.partial(reviewkd_forward, prep))
    results, emb_fea, logit = fwd(x)
    jax.block_until_ready((results, emb_fea, logit))

    expected = [(2, 16, 16, 16), (2, 32, 8, 8), (2, 64, 4, 4)]
    assert [tuple(r.shape) for r in results] == expected, results
    assert emb_fea.shape == (2, T_EMB)
    assert logit.shape == (2, N_CLASSES)
    assert all(bool(jnp.all(jnp.isfinite(r))) for r in results)

    print("KERNEL_OK")
</pallas_src>

<mosaic_0001>
module attributes {stable_mosaic.version = 11 : i64} {
  func.func @kernel(%arg0: i32, %arg1: memref<1x16x64xbf16, #tpu.memory_space<vmem>>, %arg2: memref<1x64x32xbf16, #tpu.memory_space<vmem>>, %arg3: memref<1x256x16xbf16, #tpu.memory_space<vmem>>, %arg4: memref<64x64xbf16, #tpu.memory_space<vmem>>, %arg5: memref<2x64xf32, #tpu.memory_space<vmem>>, %arg6: memref<576x64xbf16, #tpu.memory_space<vmem>>, %arg7: memref<2x64xf32, #tpu.memory_space<vmem>>, %arg8: memref<32x64xbf16, #tpu.memory_space<vmem>>, %arg9: memref<2x64xf32, #tpu.memory_space<vmem>>, %arg10: memref<2x128xf32, #tpu.memory_space<vmem>>, %arg11: memref<1x2xf32, #tpu.memory_space<vmem>>, %arg12: memref<576x32xbf16, #tpu.memory_space<vmem>>, %arg13: memref<2x32xf32, #tpu.memory_space<vmem>>, %arg14: memref<64x16xf32, #tpu.memory_space<vmem>>, %arg15: memref<16x64xbf16, #tpu.memory_space<vmem>>, %arg16: memref<2x64xf32, #tpu.memory_space<vmem>>, %arg17: memref<2x128xf32, #tpu.memory_space<vmem>>, %arg18: memref<1x2xf32, #tpu.memory_space<vmem>>, %arg19: memref<576x16xbf16, #tpu.memory_space<vmem>>, %arg20: memref<2x16xf32, #tpu.memory_space<vmem>>, %arg21: memref<256x64xf32, #tpu.memory_space<vmem>>, %arg22: memref<1x16x64xf32, #tpu.memory_space<vmem>>, %arg23: memref<1x64x32xf32, #tpu.memory_space<vmem>>, %arg24: memref<1x256x16xf32, #tpu.memory_space<vmem>>) attributes {dimension_semantics = [#tpu.dimension_semantics<parallel>], iteration_bounds = array<i64: 2>, scalar_prefetch = 0 : i64, scratch_operands = 0 : i64, tpu.core_type = #tpu.core_type<tc>, window_params = [{transform_indices = @transform_0, window_bounds = array<i64: 1, 16, 64>}, {transform_indices = @transform_1, window_bounds = array<i64: 1, 64, 32>}, {transform_indices = @transform_2, window_bounds = array<i64: 1, 256, 16>}, {pipeline_mode = #tpu.pipeline_mode<synchronous>, transform_indices = @transform_3, window_bounds = array<i64: 64, 64>}, {pipeline_mode = #tpu.pipeline_mode<synchronous>, transform_indices = @transform_4, window_bounds = array<i64: 2, 64>}, {pipeline_mode = #tpu.pipeline_mode<synchronous>, transform_indices = @transform_5, window_bounds = array<i64: 576, 64>}, {pipeline_mode = #tpu.pipeline_mode<synchronous>, transform_indices = @transform_6, window_bounds = array<i64: 2, 64>}, {pipeline_mode = #tpu.pipeline_mode<synchronous>, transform_indices = @transform_7, window_bounds = array<i64: 32, 64>}, {pipeline_mode = #tpu.pipeline_mode<synchronous>, transform_indices = @transform_8, window_bounds = array<i64: 2, 64>}, {pipeline_mode = #tpu.pipeline_mode<synchronous>, transform_indices = @transform_9, window_bounds = array<i64: 2, 128>}, {pipeline_mode = #tpu.pipeline_mode<synchronous>, transform_indices = @transform_10, window_bounds = array<i64: 1, 2>}, {pipeline_mode = #tpu.pipeline_mode<synchronous>, transform_indices = @transform_11, window_bounds = array<i64: 576, 32>}, {pipeline_mode = #tpu.pipeline_mode<synchronous>, transform_indices = @transform_12, window_bounds = array<i64: 2, 32>}, {pipeline_mode = #tpu.pipeline_mode<synchronous>, transform_indices = @transform_13, window_bounds = array<i64: 64, 16>}, {pipeline_mode = #tpu.pipeline_mode<synchronous>, transform_indices = @transform_14, window_bounds = array<i64: 16, 64>}, {pipeline_mode = #tpu.pipeline_mode<synchronous>, transform_indices = @transform_15, window_bounds = array<i64: 2, 64>}, {pipeline_mode = #tpu.pipeline_mode<synchronous>, transform_indices = @transform_16, window_bounds = array<i64: 2, 128>}, {pipeline_mode = #tpu.pipeline_mode<synchronous>, transform_indices = @transform_17, window_bounds = array<i64: 1, 2>}, {pipeline_mode = #tpu.pipeline_mode<synchronous>, transform_indices = @transform_18, window_bounds = array<i64: 576, 16>}, {pipeline_mode = #tpu.pipeline_mode<synchronous>, transform_indices = @transform_19, window_bounds = array<i64: 2, 16>}, {pipeline_mode = #tpu.pipeline_mode<synchronous>, transform_indices = @transform_20, window_bounds = array<i64: 256, 64>}, {transform_indices = @transform_21, window_bounds = array<i64: 1, 16, 64>}, {transform_indices = @transform_22, window_bounds = array<i64: 1, 64, 32>}, {transform_indices = @transform_23, window_bounds = array<i64: 1, 256, 16>}]} {
    %c0 = arith.constant 0 : index
    %c0_0 = arith.constant 0 : index
    %0 = vector.load %arg5[%c0, %c0_0] : memref<2x64xf32, #tpu.memory_space<vmem>>, vector<2x64xf32>
    %c0_1 = arith.constant 0 : index
    %c0_2 = arith.constant 0 : index
    %c0_3 = arith.constant 0 : index
    %1 = vector.load %arg1[%c0_1, %c0_2, %c0_3] : memref<1x16x64xbf16, #tpu.memory_space<vmem>>, vector<1x16x64xbf16>
    %2 = vector.shape_cast %1 : vector<1x16x64xbf16> to vector<16x64xbf16>
    %c0_4 = arith.constant 0 : index
    %c0_5 = arith.constant 0 : index
    %3 = vector.load %arg4[%c0_4, %c0_5] : memref<64x64xbf16, #tpu.memory_space<vmem>>, vector<64x64xbf16>
    %cst = arith.constant dense<0.000000e+00> : vector<16x64xf32>
    %4 = tpu.matmul %2, %3, %cst {dimension_numbers = #tpu.dot_dimension_numbers<[1], [0], [0], [1], [0, 0, 1, 1], [], []>} : vector<16x64xbf16>, vector<64x64xbf16>, vector<16x64xf32> -> vector<16x64xf32>
    %5 = vector.extract_strided_slice %0 {offsets = [0, 0], sizes = [1, 64], strides = [1, 1]} : vector<2x64xf32> to vector<1x64xf32>
    %6 = vector.broadcast %5 : vector<1x64xf32> to vector<16x64xf32>
    %7 = arith.mulf %4, %6 : vector<16x64xf32>
    %8 = vector.extract_strided_slice %0 {offsets = [1, 0], sizes = [1, 64], strides = [1, 1]} : vector<2x64xf32> to vector<1x64xf32>
    %9 = vector.broadcast %8 : vector<1x64xf32> to vector<16x64xf32>
    %10 = arith.addf %7, %9 : vector<16x64xf32>
    %cst_6 = arith.constant 0.000000e+00 : f32
    %11 = vector.broadcast %cst_6 : f32 to vector<8x64xf32>
    %12 = tpu.concatenate %11, %10, %11 in 0 : vector<8x64xf32>, vector<16x64xf32>, vector<8x64xf32> -> vector<32x64xf32>
    %13 = tpu.iota {dimensions = array<i32: 0>} : vector<16x1xi32>
    %c4_i32 = arith.constant 4 : i32
    %c0_i32 = arith.constant 0 : i32
    %14 = arith.cmpi eq, %c4_i32, %c0_i32 : i32
    %c1_i32 = arith.constant 1 : i32
    %15 = arith.select %14, %c1_i32, %c4_i32 : i32
    %16 = vector.broadcast %15 : i32 to vector<16x1xi32>
    %17 = arith.remsi %13, %16 : vector<16x1xi32>
    %c0_i32_7 = arith.constant 0 : i32
    %18 = vector.broadcast %c0_i32_7 : i32 to vector<16x1xi32>
    %19 = arith.cmpi ne, %17, %18 : vector<16x1xi32>
    %c0_i32_8 = arith.constant 0 : i32
    %20 = vector.broadcast %c0_i32_8 : i32 to vector<16x1xi32>
    %21 = arith.cmpi slt, %17, %20 : vector<16x1xi32>
    %c0_i32_9 = arith.constant 0 : i32
    %22 = arith.cmpi slt, %15, %c0_i32_9 : i32
    %23 = vector.broadcast %22 : i1 to vector<16x1xi1>
    %24 = vector.broadcast %23 : vector<16x1xi1> to vector<16x1xi1>
    %25 = arith.xori %21, %24 : vector<16x1xi1>
    %26 = arith.andi %25, %19 : vector<16x1xi1>
    %27 = vector.broadcast %15 : i32 to vector<16x1xi32>
    %28 = arith.addi %17, %27 : vector<16x1xi32>
    %29 = arith.select %26, %28, %17 : vector<16x1xi1>, vector<16x1xi32>
    %c1_i32_10 = arith.constant 1 : i32
    %30 = vector.broadcast %c1_i32_10 : i32 to vector<16x1xi32>
    %31 = arith.cmpi sge, %29, %30 : vector<16x1xi32>
    %c2_i32 = arith.constant 2 : i32
    %32 = vector.broadcast %c2_i32 : i32 to vector<16x1xi32>
    %33 = arith.cmpi sle, %29, %32 : vector<16x1xi32>
    %34 = vector.extract_strided_slice %12 {offsets = [3, 0], sizes = [16, 64], strides = [1, 1]} : vector<32x64xf32> to vector<16x64xf32>
    %cst_11 = arith.constant 0.000000e+00 : f32
    %35 = vector.shape_cast %31 : vector<16x1xi1> to vector<16x1xi1>
    %36 = vector.broadcast %35 : vector<16x1xi1> to vector<16x64xi1>
    %37 = vector.broadcast %cst_11 : f32 to vector<16x64xf32>
    %38 = arith.select %36, %34, %37 : vector<16x64xi1>, vector<16x64xf32>
    %39 = vector.extract_strided_slice %12 {offsets = [4, 0], sizes = [16, 64], strides = [1, 1]} : vector<32x64xf32> to vector<16x64xf32>
    %40 = vector.extract_strided_slice %12 {offsets = [5, 0], sizes = [16, 64], strides = [1, 1]} : vector<32x64xf32> to vector<16x64xf32>
    %cst_12 = arith.constant 0.000000e+00 : f32
    %41 = vector.shape_cast %33 : vector<16x1xi1> to vector<16x1xi1>
    %42 = vector.broadcast %41 : vector<16x1xi1> to vector<16x64xi1>
    %43 = vector.broadcast %cst_12 : f32 to vector<16x64xf32>
    %44 = arith.select %42, %40, %43 : vector<16x64xi1>, vector<16x64xf32>
    %45 = vector.extract_strided_slice %12 {offsets = [7, 0], sizes = [16, 64], strides = [1, 1]} : vector<32x64xf32> to vector<16x64xf32>
    %cst_13 = arith.constant 0.000000e+00 : f32
    %46 = vector.shape_cast %31 : vector<16x1xi1> to vector<16x1xi1>
    %47 = vector.broadcast %46 : vector<16x1xi1> to vector<16x64xi1>
    %48 = vector.broadcast %cst_13 : f32 to vector<16x64xf32>
    %49 = arith.select %47, %45, %48 : vector<16x64xi1>, vector<16x64xf32>
    %50 = vector.extract_strided_slice %12 {offsets = [8, 0], sizes = [16, 64], strides = [1, 1]} : vector<32x64xf32> to vector<16x64xf32>
    %51 = vector.extract_strided_slice %12 {offsets = [9, 0], sizes = [16, 64], strides = [1, 1]} : vector<32x64xf32> to vector<16x64xf32>
    %cst_14 = arith.constant 0.000000e+00 : f32
    %52 = vector.shape_cast %33 : vector<16x1xi1> to vector<16x1xi1>
    %53 = vector.broadcast %52 : vector<16x1xi1> to vector<16x64xi1>
    %54 = vector.broadcast %cst_14 : f32 to vector<16x64xf32>
    %55 = arith.select %53, %51, %54 : vector<16x64xi1>, vector<16x64xf32>
    %56 = vector.extract_strided_slice %12 {offsets = [11, 0], sizes = [16, 64], strides = [1, 1]} : vector<32x64xf32> to vector<16x64xf32>
    %cst_15 = arith.constant 0.000000e+00 : f32
    %57 = vector.shape_cast %31 : vector<16x1xi1> to vector<16x1xi1>
    %58 = vector.broadcast %57 : vector<16x1xi1> to vector<16x64xi1>
    %59 = vector.broadcast %cst_15 : f32 to vector<16x64xf32>
    %60 = arith.select %58, %56, %59 : vector<16x64xi1>, vector<16x64xf32>
    %61 = vector.extract_strided_slice %12 {offsets = [12, 0], sizes = [16, 64], strides = [1, 1]} : vector<32x64xf32> to vector<16x64xf32>
    %62 = vector.extract_strided_slice %12 {offsets = [13, 0], sizes = [16, 64], strides = [1, 1]} : vector<32x64xf32> to vector<16x64xf32>
    %cst_16 = arith.constant 0.000000e+00 : f32
    %63 = vector.shape_cast %33 : vector<16x1xi1> to vector<16x1xi1>
    %64 = vector.broadcast %63 : vector<16x1xi1> to vector<16x64xi1>
    %65 = vector.broadcast %cst_16 : f32 to vector<16x64xf32>
    %66 = arith.select %64, %62, %65 : vector<16x64xi1>, vector<16x64xf32>
    %67 = tpu.concatenate %38, %39, %44, %49, %50, %55, %60, %61, %66 in 1 : vector<16x64xf32>, vector<16x64xf32>, vector<16x64xf32>, vector<16x64xf32>, vector<16x64xf32>, vector<16x64xf32>, vector<16x64xf32>, vector<16x64xf32>, vector<16x64xf32> -> vector<16x576xf32>
    %68 = arith.truncf %67 : vector<16x576xf32> to vector<16x576xbf16>
    %c0_17 = arith.constant 0 : index
    %c0_18 = arith.constant 0 : index
    %69 = vector.load %arg7[%c0_17, %c0_18] : memref<2x64xf32, #tpu.memory_space<vmem>>, vector<2x64xf32>
    %c0_19 = arith.constant 0 : index
    %c0_20 = arith.constant 0 : index
    %70 = vector.load %arg6[%c0_19, %c0_20] : memref<576x64xbf16, #tpu.memory_space<vmem>>, vector<576x64xbf16>
    %cst_21 = arith.constant dense<0.000000e+00> : vector<16x64xf32>
    %71 = tpu.matmul %68, %70, %cst_21 {dimension_numbers = #tpu.dot_dimension_numbers<[1], [0], [0], [1], [0, 0, 1, 1], [], []>} : vector<16x576xbf16>, vector<576x64xbf16>, vector<16x64xf32> -> vector<16x64xf32>
    %72 = vector.extract_strided_slice %69 {offsets = [0, 0], sizes = [1, 64], strides = [1, 1]} : vector<2x64xf32> to vector<1x64xf32>
    %73 = vector.broadcast %72 : vector<1x64xf32> to vector<16x64xf32>
    %74 = arith.mulf %71, %73 : vector<16x64xf32>
    %75 = vector.extract_strided_slice %69 {offsets = [1, 0], sizes = [1, 64], strides = [1, 1]} : vector<2x64xf32> to vector<1x64xf32>
    %76 = vector.broadcast %75 : vector<1x64xf32> to vector<16x64xf32>
    %77 = arith.addf %74, %76 : vector<16x64xf32>
    %c0_22 = arith.constant 0 : index
    %c0_23 = arith.constant 0 : index
    %c0_24 = arith.constant 0 : index
    %78 = vector.load %arg22[%c0_22, %c0_23, %c0_24] : memref<1x16x64xf32, #tpu.memory_space<vmem>>, vector<1x16x64xf32>
    %79 = vector.shape_cast %78 : vector<1x16x64xf32> to vector<16x64xf32>
    %80 = vector.shape_cast %77 : vector<16x64xf32> to vector<1x16x64xf32>
    tpu.vector_store %arg22[%c0_22, %c0_23, %c0_24], %80 {strides = array<i32>} : memref<1x16x64xf32, #tpu.memory_space<vmem>>, vector<1x16x64xf32>,
    %c0_25 = arith.constant 0 : index
    %c0_26 = arith.constant 0 : index
    %81 = vector.load %arg9[%c0_25, %c0_26] : memref<2x64xf32, #tpu.memory_space<vmem>>, vector<2x64xf32>
    %c0_27 = arith.constant 0 : index
    %c0_28 = arith.constant 0 : index
    %c0_29 = arith.constant 0 : index
    %82 = vector.load %arg2[%c0_27, %c0_28, %c0_29] : memref<1x64x32xbf16, #tpu.memory_space<vmem>>, vector<1x64x32xbf16>
    %83 = vector.shape_cast %82 : vector<1x64x32xbf16> to vector<64x32xbf16>
    %c0_30 = arith.constant 0 : index
    %c0_31 = arith.constant 0 : index
    %84 = vector.load %arg8[%c0_30, %c0_31] : memref<32x64xbf16, #tpu.memory_space<vmem>>, vector<32x64xbf16>
    %cst_32 = arith.constant dense<0.000000e+00> : vector<64x64xf32>
    %85 = tpu.matmul %83, %84, %cst_32 {dimension_numbers = #tpu.dot_dimension_numbers<[1], [0], [0], [1], [0, 0, 1, 1], [], []>} : vector<64x32xbf16>, vector<32x64xbf16>, vector<64x64xf32> -> vector<64x64xf32>
    %86 = vector.extract_strided_slice %81 {offsets = [0, 0], sizes = [1, 64], strides = [1, 1]} : vector<2x64xf32> to vector<1x64xf32>
    %87 = vector.broadcast %86 : vector<1x64xf32> to vector<64x64xf32>
    %88 = arith.mulf %85, %87 : vector<64x64xf32>
    %89 = vector.extract_strided_slice %81 {offsets = [1, 0], sizes = [1, 64], strides = [1, 1]} : vector<2x64xf32> to vector<1x64xf32>
    %90 = vector.broadcast %89 : vector<1x64xf32> to vector<64x64xf32>
    %91 = arith.addf %88, %90 : vector<64x64xf32>
    %c0_33 = arith.constant 0 : index
    %c0_34 = arith.constant 0 : index
    %92 = vector.load %arg14[%c0_33, %c0_34] : memref<64x16xf32, #tpu.memory_space<vmem>>, vector<64x16xf32>
    %cst_35 = arith.constant dense<0.000000e+00> : vector<64x64xf32>
    %93 = tpu.matmul %92, %10, %cst_35 {dimension_numbers = #tpu.dot_dimension_numbers<[1], [0], [0], [1], [0, 0, 1, 1], [], []>} : vector<64x16xf32>, vector<16x64xf32>, vector<64x64xf32> -> vector<64x64xf32>
    %94 = tpu.concatenate %91, %93 in 1 : vector<64x64xf32>, vector<64x64xf32> -> vector<64x128xf32>
    %c0_36 = arith.constant 0 : index
    %c0_37 = arith.constant 0 : index
    %95 = vector.load %arg10[%c0_36, %c0_37] : memref<2x128xf32, #tpu.memory_space<vmem>>, vector<2x128xf32>
    %c0_38 = arith.constant 0 : index
    %c0_39 = arith.constant 0 : index
    %96 = vector.load %arg11[%c0_38, %c0_39] : memref<1x2xf32, #tpu.memory_space<vmem>>, vector<1x2xf32>
    %97 = vector.extract_strided_slice %95 {offsets = [0, 0], sizes = [1, 128], strides = [1, 1]} : vector<2x128xf32> to vector<1x128xf32>
    %98 = vector.broadcast %97 : vector<1x128xf32> to vector<64x128xf32>
    %99 = arith.mulf %94, %98 : vector<64x128xf32>
    %cst_40 = arith.constant dense<0.000000e+00> : vector<64xf32>
    %100 = vector.multi_reduction <add>, %99, %cst_40 [1] : vector<64x128xf32> to vector<64xf32>
    %101 = vector.shape_cast %100 : vector<64xf32> to vector<64x1xf32>
    %102 = vector.extract_strided_slice %96 {offsets = [0, 0], sizes = [1, 1], strides = [1, 1]} : vector<1x2xf32> to vector<1x1xf32>
    %103 = vector.broadcast %102 : vector<1x1xf32> to vector<64x1xf32>
    %104 = arith.addf %101, %103 : vector<64x1xf32>
    %105 = vector.extract_strided_slice %95 {offsets = [1, 0], sizes = [1, 128], strides = [1, 1]} : vector<2x128xf32> to vector<1x128xf32>
    %106 = vector.broadcast %105 : vector<1x128xf32> to vector<64x128xf32>
    %107 = arith.mulf %94, %106 : vector<64x128xf32>
    %cst_41 = arith.constant dense<0.000000e+00> : vector<64xf32>
    %108 = vector.multi_reduction <add>, %107, %cst_41 [1] : vector<64x128xf32> to vector<64xf32>
    %109 = vector.shape_cast %108 : vector<64xf32> to vector<64x1xf32>
    %110 = vector.extract_strided_slice %96 {offsets = [0, 1], sizes = [1, 1], strides = [1, 1]} : vector<1x2xf32> to vector<1x1xf32>
    %111 = vector.broadcast %110 : vector<1x1xf32> to vector<64x1xf32>
    %112 = arith.addf %109, %111 : vector<64x1xf32>
    %113 = arith.negf %104 : vector<64x1xf32>
    %114 = math.exp %113 : vector<64x1xf32>
    %cst_42 = arith.constant 1.000000e+00 : f32
    %115 = vector.broadcast %cst_42 : f32 to vector<64x1xf32>
    %116 = arith.addf %115, %114 : vector<64x1xf32>
    %117 = arith.divf %115, %116 : vector<64x1xf32>
    %118 = vector.broadcast %117 : vector<64x1xf32> to vector<64x64xf32>
    %119 = arith.mulf %91, %118 : vector<64x64xf32>
    %120 = arith.negf %112 : vector<64x1xf32>
    %121 = math.exp %120 : vector<64x1xf32>
    %cst_43 = arith.constant 1.000000e+00 : f32
    %122 = vector.broadcast %cst_43 : f32 to vector<64x1xf32>
    %123 = arith.addf %122, %121 : vector<64x1xf32>
    %124 = arith.divf %122, %123 : vector<64x1xf32>
    %125 = vector.broadcast %124 : vector<64x1xf32> to vector<64x64xf32>
    %126 = arith.mulf %93, %125 : vector<64x64xf32>
    %127 = arith.addf %119, %126 : vector<64x64xf32>
    %cst_44 = arith.constant 0.000000e+00 : f32
    %128 = vector.broadcast %cst_44 : f32 to vector<16x64xf32>
    %129 = tpu.concatenate %128, %127, %128 in 0 : vector<16x64xf32>, vector<64x64xf32>, vector<16x64xf32> -> vector<96x64xf32>
    %130 = tpu.iota {dimensions = array<i32: 0>} : vector<64x1xi32>
    %c8_i32 = arith.constant 8 : i32
    %c0_i32_45 = arith.constant 0 : i32
    %131 = arith.cmpi eq, %c8_i32, %c0_i32_45 : i32
    %c1_i32_46 = arith.constant 1 : i32
    %132 = arith.select %131, %c1_i32_46, %c8_i32 : i32
    %133 = vector.broadcast %132 : i32 to vector<64x1xi32>
    %134 = arith.remsi %130, %133 : vector<64x1xi32>
    %c0_i32_47 = arith.constant 0 : i32
    %135 = vector.broadcast %c0_i32_47 : i32 to vector<64x1xi32>
    %136 = arith.cmpi ne, %134, %135 : vector<64x1xi32>
    %c0_i32_48 = arith.constant 0 : i32
    %137 = vector.broadcast %c0_i32_48 : i32 to vector<64x1xi32>
    %138 = arith.cmpi slt, %134, %137 : vector<64x1xi32>
    %c0_i32_49 = arith.constant 0 : i32
    %139 = arith.cmpi slt, %132, %c0_i32_49 : i32
    %140 = vector.broadcast %139 : i1 to vector<64x1xi1>
    %141 = vector.broadcast %140 : vector<64x1xi1> to vector<64x1xi1>
    %142 = arith.xori %138, %141 : vector<64x1xi1>
    %143 = arith.andi %142, %136 : vector<64x1xi1>
    %144 = vector.broadcast %132 : i32 to vector<64x1xi32>
    %145 = arith.addi %134, %144 : vector<64x1xi32>
    %146 = arith.select %143, %145, %134 : vector<64x1xi1>, vector<64x1xi32>
    %c1_i32_50 = arith.constant 1 : i32
    %147 = vector.broadcast %c1_i32_50 : i32 to vector<64x1xi32>
    %148 = arith.cmpi sge, %146, %147 : vector<64x1xi32>
    %c6_i32 = arith.constant 6 : i32
    %149 = vector.broadcast %c6_i32 : i32 to vector<64x1xi32>
    %150 = arith.cmpi sle, %146, %149 : vector<64x1xi32>
    %151 = vector.extract_strided_slice %129 {offsets = [7, 0], sizes = [64, 64], strides = [1, 1]} : vector<96x64xf32> to vector<64x64xf32>
    %cst_51 = arith.constant 0.000000e+00 : f32
    %152 = vector.shape_cast %148 : vector<64x1xi1> to vector<64x1xi1>
    %153 = vector.broadcast %152 : vector<64x1xi1> to vector<64x64xi1>
    %154 = vector.broadcast %cst_51 : f32 to vector<64x64xf32>
    %155 = arith.select %153, %151, %154 : vector<64x64xi1>, vector<64x64xf32>
    %156 = vector.extract_strided_slice %129 {offsets = [8, 0], sizes = [64, 64], strides = [1, 1]} : vector<96x64xf32> to vector<64x64xf32>
    %157 = vector.extract_strided_slice %129 {offsets = [9, 0], sizes = [64, 64], strides = [1, 1]} : vector<96x64xf32> to vector<64x64xf32>
    %cst_52 = arith.constant 0.000000e+00 : f32
    %158 = vector.shape_cast %150 : vector<64x1xi1> to vector<64x1xi1>
    %159 = vector.broadcast %158 : vector<64x1xi1> to vector<64x64xi1>
    %160 = vector.broadcast %cst_52 : f32 to vector<64x64xf32>
    %161 = arith.select %159, %157, %160 : vector<64x64xi1>, vector<64x64xf32>
    %162 = vector.extract_strided_slice %129 {offsets = [15, 0], sizes = [64, 64], strides = [1, 1]} : vector<96x64xf32> to vector<64x64xf32>
    %cst_53 = arith.constant 0.000000e+00 : f32
    %163 = vector.shape_cast %148 : vector<64x1xi1> to vector<64x1xi1>
    %164 = vector.broadcast %163 : vector<64x1xi1> to vector<64x64xi1>
    %165 = vector.broadcast %cst_53 : f32 to vector<64x64xf32>
    %166 = arith.select %164, %162, %165 : vector<64x64xi1>, vector<64x64xf32>
    %167 = vector.extract_strided_slice %129 {offsets = [16, 0], sizes = [64, 64], strides = [1, 1]} : vector<96x64xf32> to vector<64x64xf32>
    %168 = vector.extract_strided_slice %129 {offsets = [17, 0], sizes = [64, 64], strides = [1, 1]} : vector<96x64xf32> to vector<64x64xf32>
    %cst_54 = arith.constant 0.000000e+00 : f32
    %169 = vector.shape_cast %150 : vector<64x1xi1> to vector<64x1xi1>
    %170 = vector.broadcast %169 : vector<64x1xi1> to vector<64x64xi1>
    %171 = vector.broadcast %cst_54 : f32 to vector<64x64xf32>
    %172 = arith.select %170, %168, %171 : vector<64x64xi1>, vector<64x64xf32>
    %173 = vector.extract_strided_slice %129 {offsets = [23, 0], sizes = [64, 64], strides = [1, 1]} : vector<96x64xf32> to vector<64x64xf32>
    %cst_55 = arith.constant 0.000000e+00 : f32
    %174 = vector.shape_cast %148 : vector<64x1xi1> to vector<64x1xi1>
    %175 = vector.broadcast %174 : vector<64x1xi1> to vector<64x64xi1>
    %176 = vector.broadcast %cst_55 : f32 to vector<64x64xf32>
    %177 = arith.select %175, %173, %176 : vector<64x64xi1>, vector<64x64xf32>
    %178 = vector.extract_strided_slice %129 {offsets = [24, 0], sizes = [64, 64], strides = [1, 1]} : vector<96x64xf32> to vector<64x64xf32>
    %179 = vector.extract_strided_slice %129 {offsets = [25, 0], sizes = [64, 64], strides = [1, 1]} : vector<96x64xf32> to vector<64x64xf32>
    %cst_56 = arith.constant 0.000000e+00 : f32
    %180 = vector.shape_cast %150 : vector<64x1xi1> to vector<64x1xi1>
    %181 = vector.broadcast %180 : vector<64x1xi1> to vector<64x64xi1>
    %182 = vector.broadcast %cst_56 : f32 to vector<64x64xf32>
    %183 = arith.select %181, %179, %182 : vector<64x64xi1>, vector<64x64xf32>
    %184 = tpu.concatenate %155, %156, %161, %166, %167, %172, %177, %178, %183 in 1 : vector<64x64xf32>, vector<64x64xf32>, vector<64x64xf32>, vector<64x64xf32>, vector<64x64xf32>, vector<64x64xf32>, vector<64x64xf32>, vector<64x64xf32>, vector<64x64xf32> -> vector<64x576xf32>
    %185 = arith.truncf %184 : vector<64x576xf32> to vector<64x576xbf16>
    %c0_57 = arith.constant 0 : index
    %c0_58 = arith.constant 0 : index
    %186 = vector.load %arg13[%c0_57, %c0_58] : memref<2x32xf32, #tpu.memory_space<vmem>>, vector<2x32xf32>
    %c0_59 = arith.constant 0 : index
    %c0_60 = arith.constant 0 : index
    %187 = vector.load %arg12[%c0_59, %c0_60] : memref<576x32xbf16, #tpu.memory_space<vmem>>, vector<576x32xbf16>
    %cst_61 = arith.constant dense<0.000000e+00> : vector<64x32xf32>
    %188 = tpu.matmul %185, %187, %cst_61 {dimension_numbers = #tpu.dot_dimension_numbers<[1], [0], [0], [1], [0, 0, 1, 1], [], []>} : vector<64x576xbf16>, vector<576x32xbf16>, vector<64x32xf32> -> vector<64x32xf32>
    %189 = vector.extract_strided_slice %186 {offsets = [0, 0], sizes = [1, 32], strides = [1, 1]} : vector<2x32xf32> to vector<1x32xf32>
    %190 = vector.broadcast %189 : vector<1x32xf32> to vector<64x32xf32>
    %191 = arith.mulf %188, %190 : vector<64x32xf32>
    %192 = vector.extract_strided_slice %186 {offsets = [1, 0], sizes = [1, 32], strides = [1, 1]} : vector<2x32xf32> to vector<1x32xf32>
    %193 = vector.broadcast %192 : vector<1x32xf32> to vector<64x32xf32>
    %194 = arith.addf %191, %193 : vector<64x32xf32>
    %c0_62 = arith.constant 0 : index
    %c0_63 = arith.constant 0 : index
    %c0_64 = arith.constant 0 : index
    %195 = vector.load %arg23[%c0_62, %c0_63, %c0_64] : memref<1x64x32xf32, #tpu.memory_space<vmem>>, vector<1x64x32xf32>
    %196 = vector.shape_cast %195 : vector<1x64x32xf32> to vector<64x32xf32>
    %197 = vector.shape_cast %194 : vector<64x32xf32> to vector<1x64x32xf32>
    tpu.vector_store %arg23[%c0_62, %c0_63, %c0_64], %197 {strides = array<i32>} : memref<1x64x32xf32, #tpu.memory_space<vmem>>, vector<1x64x32xf32>,
    %c0_65 = arith.constant 0 : index
    %c0_66 = arith.constant 0 : index
    %198 = vector.load %arg16[%c0_65, %c0_66] : memref<2x64xf32, #tpu.memory_space<vmem>>, vector<2x64xf32>
    %c0_67 = arith.constant 0 : index
    %c0_68 = arith.constant 0 : index
    %c0_69 = arith.constant 0 : index
    %199 = vector.load %arg3[%c0_67, %c0_68, %c0_69] : memref<1x256x16xbf16, #tpu.memory_space<vmem>>, vector<1x256x16xbf16>
    %200 = vector.shape_cast %199 : vector<1x256x16xbf16> to vector<256x16xbf16>
    %c0_70 = arith.constant 0 : index
    %c0_71 = arith.constant 0 : index
    %201 = vector.load %arg15[%c0_70, %c0_71] : memref<16x64xbf16, #tpu.memory_space<vmem>>, vector<16x64xbf16>
    %cst_72 = arith.constant dense<0.000000e+00> : vector<256x64xf32>
    %202 = tpu.matmul %200, %201, %cst_72 {dimension_numbers = #tpu.dot_dimension_numbers<[1], [0], [0], [1], [0, 0, 1, 1], [], []>} : vector<256x16xbf16>, vector<16x64xbf16>, vector<256x64xf32> -> vector<256x64xf32>
    %203 = vector.extract_strided_slice %198 {offsets = [0, 0], sizes = [1, 64], strides = [1, 1]} : vector<2x64xf32> to vector<1x64xf32>
    %204 = vector.broadcast %203 : vector<1x64xf32> to vector<256x64xf32>
    %205 = arith.mulf %202, %204 : vector<256x64xf32>
    %206 = vector.extract_strided_slice %198 {offsets = [1, 0], sizes = [1, 64], strides = [1, 1]} : vector<2x64xf32> to vector<1x64xf32>
    %207 = vector.broadcast %206 : vector<1x64xf32> to vector<256x64xf32>
    %208 = arith.addf %205, %207 : vector<256x64xf32>
    %c0_73 = arith.constant 0 : index
    %c0_74 = arith.constant 0 : index
    %209 = vector.load %arg21[%c0_73, %c0_74] : memref<256x64xf32, #tpu.memory_space<vmem>>, vector<256x64xf32>
    %cst_75 = arith.constant dense<0.000000e+00> : vector<256x64xf32>
    %210 = tpu.matmul %209, %127, %cst_75 {dimension_numbers = #tpu.dot_dimension_numbers<[1], [0], [0], [1], [0, 0, 1, 1], [], []>} : vector<256x64xf32>, vector<64x64xf32>, vector<256x64xf32> -> vector<256x64xf32>
    %211 = tpu.concatenate %208, %210 in 1 : vector<256x64xf32>, vector<256x64xf32> -> vector<256x128xf32>
    %c0_76 = arith.constant 0 : index
    %c0_77 = arith.constant 0 : index
    %212 = vector.load %arg17[%c0_76, %c0_77] : memref<2x128xf32, #tpu.memory_space<vmem>>, vector<2x128xf32>
    %c0_78 = arith.constant 0 : index
    %c0_79 = arith.constant 0 : index
    %213 = vector.load %arg18[%c0_78, %c0_79] : memref<1x2xf32, #tpu.memory_space<vmem>>, vector<1x2xf32>
    %214 = vector.extract_strided_slice %212 {offsets = [0, 0], sizes = [1, 128], strides = [1, 1]} : vector<2x128xf32> to vector<1x128xf32>
    %215 = vector.broadcast %214 : vector<1x128xf32> to vector<256x128xf32>
    %216 = arith.mulf %211, %215 : vector<256x128xf32>
    %cst_80 = arith.constant dense<0.000000e+00> : vector<256xf32>
    %217 = vector.multi_reduction <add>, %216, %cst_80 [1] : vector<256x128xf32> to vector<256xf32>
    %218 = vector.shape_cast %217 : vector<256xf32> to vector<256x1xf32>
    %219 = vector.extract_strided_slice %213 {offsets = [0, 0], sizes = [1, 1], strides = [1, 1]} : vector<1x2xf32> to vector<1x1xf32>
    %220 = vector.broadcast %219 : vector<1x1xf32> to vector<256x1xf32>
    %221 = arith.addf %218, %220 : vector<256x1xf32>
    %222 = vector.extract_strided_slice %212 {offsets = [1, 0], sizes = [1, 128], strides = [1, 1]} : vector<2x128xf32> to vector<1x128xf32>
    %223 = vector.broadcast %222 : vector<1x128xf32> to vector<256x128xf32>
    %224 = arith.mulf %211, %223 : vector<256x128xf32>
    %cst_81 = arith.constant dense<0.000000e+00> : vector<256xf32>
    %225 = vector.multi_reduction <add>, %224, %cst_81 [1] : vector<256x128xf32> to vector<256xf32>
    %226 = vector.shape_cast %225 : vector<256xf32> to vector<256x1xf32>
    %227 = vector.extract_strided_slice %213 {offsets = [0, 1], sizes = [1, 1], strides = [1, 1]} : vector<1x2xf32> to vector<1x1xf32>
    %228 = vector.broadcast %227 : vector<1x1xf32> to vector<256x1xf32>
    %229 = arith.addf %226, %228 : vector<256x1xf32>
    %230 = arith.negf %221 : vector<256x1xf32>
    %231 = math.exp %230 : vector<256x1xf32>
    %cst_82 = arith.constant 1.000000e+00 : f32
    %232 = vector.broadcast %cst_82 : f32 to vector<256x1xf32>
    %233 = arith.addf %232, %231 : vector<256x1xf32>
    %234 = arith.divf %232, %233 : vector<256x1xf32>
    %235 = vector.broadcast %234 : vector<256x1xf32> to vector<256x64xf32>
    %236 = arith.mulf %208, %235 : vector<256x64xf32>
    %237 = arith.negf %229 : vector<256x1xf32>
    %238 = math.exp %237 : vector<256x1xf32>
    %cst_83 = arith.constant 1.000000e+00 : f32
    %239 = vector.broadcast %cst_83 : f32 to vector<256x1xf32>
    %240 = arith.addf %239, %238 : vector<256x1xf32>
    %241 = arith.divf %239, %240 : vector<256x1xf32>
    %242 = vector.broadcast %241 : vector<256x1xf32> to vector<256x64xf32>
    %243 = arith.mulf %210, %242 : vector<256x64xf32>
    %244 = arith.addf %236, %243 : vector<256x64xf32>
    %cst_84 = arith.constant 0.000000e+00 : f32
    %245 = vector.broadcast %cst_84 : f32 to vector<24x64xf32>
    %246 = tpu.concatenate %245, %244, %245 in 0 : vector<24x64xf32>, vector<256x64xf32>, vector<24x64xf32> -> vector<304x64xf32>
    %247 = tpu.iota {dimensions = array<i32: 0>} : vector<256x1xi32>
    %c16_i32 = arith.constant 16 : i32
    %c0_i32_85 = arith.constant 0 : i32
    %248 = arith.cmpi eq, %c16_i32, %c0_i32_85 : i32
    %c1_i32_86 = arith.constant 1 : i32
    %249 = arith.select %248, %c1_i32_86, %c16_i32 : i32
    %250 = vector.broadcast %249 : i32 to vector<256x1xi32>
    %251 = arith.remsi %247, %250 : vector<256x1xi32>
    %c0_i32_87 = arith.constant 0 : i32
    %252 = vector.broadcast %c0_i32_87 : i32 to vector<256x1xi32>
    %253 = arith.cmpi ne, %251, %252 : vector<256x1xi32>
    %c0_i32_88 = arith.constant 0 : i32
    %254 = vector.broadcast %c0_i32_88 : i32 to vector<256x1xi32>
    %255 = arith.cmpi slt, %251, %254 : vector<256x1xi32>
    %c0_i32_89 = arith.constant 0 : i32
    %256 = arith.cmpi slt, %249, %c0_i32_89 : i32
    %257 = vector.broadcast %256 : i1 to vector<256x1xi1>
    %258 = vector.broadcast %257 : vector<256x1xi1> to vector<256x1xi1>
    %259 = arith.xori %255, %258 : vector<256x1xi1>
    %260 = arith.andi %259, %253 : vector<256x1xi1>
    %261 = vector.broadcast %249 : i32 to vector<256x1xi32>
    %262 = arith.addi %251, %261 : vector<256x1xi32>
    %263 = arith.select %260, %262, %251 : vector<256x1xi1>, vector<256x1xi32>
    %c1_i32_90 = arith.constant 1 : i32
    %264 = vector.broadcast %c1_i32_90 : i32 to vector<256x1xi32>
    %265 = arith.cmpi sge, %263, %264 : vector<256x1xi32>
    %c14_i32 = arith.constant 14 : i32
    %266 = vector.broadcast %c14_i32 : i32 to vector<256x1xi32>
    %267 = arith.cmpi sle, %263, %266 : vector<256x1xi32>
    %268 = vector.extract_strided_slice %246 {offsets = [7, 0], sizes = [256, 64], strides = [1, 1]} : vector<304x64xf32> to vector<256x64xf32>
    %cst_91 = arith.constant 0.000000e+00 : f32
    %269 = vector.shape_cast %265 : vector<256x1xi1> to vector<256x1xi1>
    %270 = vector.broadcast %269 : vector<256x1xi1> to vector<256x64xi1>
    %271 = vector.broadcast %cst_91 : f32 to vector<256x64xf32>
    %272 = arith.select %270, %268, %271 : vector<256x64xi1>, vector<256x64xf32>
    %273 = vector.extract_strided_slice %246 {offsets = [8, 0], sizes = [256, 64], strides = [1, 1]} : vector<304x64xf32> to vector<256x64xf32>
    %274 = vector.extract_strided_slice %246 {offsets = [9, 0], sizes = [256, 64], strides = [1, 1]} : vector<304x64xf32> to vector<256x64xf32>
    %cst_92 = arith.constant 0.000000e+00 : f32
    %275 = vector.shape_cast %267 : vector<256x1xi1> to vector<256x1xi1>
    %276 = vector.broadcast %275 : vector<256x1xi1> to vector<256x64xi1>
    %277 = vector.broadcast %cst_92 : f32 to vector<256x64xf32>
    %278 = arith.select %276, %274, %277 : vector<256x64xi1>, vector<256x64xf32>
    %279 = vector.extract_strided_slice %246 {offsets = [23, 0], sizes = [256, 64], strides = [1, 1]} : vector<304x64xf32> to vector<256x64xf32>
    %cst_93 = arith.constant 0.000000e+00 : f32
    %280 = vector.shape_cast %265 : vector<256x1xi1> to vector<256x1xi1>
    %281 = vector.broadcast %280 : vector<256x1xi1> to vector<256x64xi1>
    %282 = vector.broadcast %cst_93 : f32 to vector<256x64xf32>
    %283 = arith.select %281, %279, %282 : vector<256x64xi1>, vector<256x64xf32>
    %284 = vector.extract_strided_slice %246 {offsets = [24, 0], sizes = [256, 64], strides = [1, 1]} : vector<304x64xf32> to vector<256x64xf32>
    %285 = vector.extract_strided_slice %246 {offsets = [25, 0], sizes = [256, 64], strides = [1, 1]} : vector<304x64xf32> to vector<256x64xf32>
    %cst_94 = arith.constant 0.000000e+00 : f32
    %286 = vector.shape_cast %267 : vector<256x1xi1> to vector<256x1xi1>
    %287 = vector.broadcast %286 : vector<256x1xi1> to vector<256x64xi1>
    %288 = vector.broadcast %cst_94 : f32 to vector<256x64xf32>
    %289 = arith.select %287, %285, %288 : vector<256x64xi1>, vector<256x64xf32>
    %290 = vector.extract_strided_slice %246 {offsets = [39, 0], sizes = [256, 64], strides = [1, 1]} : vector<304x64xf32> to vector<256x64xf32>
    %cst_95 = arith.constant 0.000000e+00 : f32
    %291 = vector.shape_cast %265 : vector<256x1xi1> to vector<256x1xi1>
    %292 = vector.broadcast %291 : vector<256x1xi1> to vector<256x64xi1>
    %293 = vector.broadcast %cst_95 : f32 to vector<256x64xf32>
    %294 = arith.select %292, %290, %293 : vector<256x64xi1>, vector<256x64xf32>
    %295 = vector.extract_strided_slice %246 {offsets = [40, 0], sizes = [256, 64], strides = [1, 1]} : vector<304x64xf32> to vector<256x64xf32>
    %296 = vector.extract_strided_slice %246 {offsets = [41, 0], sizes = [256, 64], strides = [1, 1]} : vector<304x64xf32> to vector<256x64xf32>
    %cst_96 = arith.constant 0.000000e+00 : f32
    %297 = vector.shape_cast %267 : vector<256x1xi1> to vector<256x1xi1>
    %298 = vector.broadcast %297 : vector<256x1xi1> to vector<256x64xi1>
    %299 = vector.broadcast %cst_96 : f32 to vector<256x64xf32>
    %300 = arith.select %298, %296, %299 : vector<256x64xi1>, vector<256x64xf32>
    %301 = tpu.concatenate %272, %273, %278, %283, %284, %289, %294, %295, %300 in 1 : vector<256x64xf32>, vector<256x64xf32>, vector<256x64xf32>, vector<256x64xf32>, vector<256x64xf32>, vector<256x64xf32>, vector<256x64xf32>, vector<256x64xf32>, vector<256x64xf32> -> vector<256x576xf32>
    %302 = arith.truncf %301 : vector<256x576xf32> to vector<256x576xbf16>
    %c0_97 = arith.constant 0 : index
    %c0_98 = arith.constant 0 : index
    %303 = vector.load %arg20[%c0_97, %c0_98] : memref<2x16xf32, #tpu.memory_space<vmem>>, vector<2x16xf32>
    %c0_99 = arith.constant 0 : index
    %c0_100 = arith.constant 0 : index
    %304 = vector.load %arg19[%c0_99, %c0_100] : memref<576x16xbf16, #tpu.memory_space<vmem>>, vector<576x16xbf16>
    %cst_101 = arith.constant dense<0.000000e+00> : vector<256x16xf32>
    %305 = tpu.matmul %302, %304, %cst_101 {dimension_numbers = #tpu.dot_dimension_numbers<[1], [0], [0], [1], [0, 0, 1, 1], [], []>} : vector<256x576xbf16>, vector<576x16xbf16>, vector<256x16xf32> -> vector<256x16xf32>
    %306 = vector.extract_strided_slice %303 {offsets = [0, 0], sizes = [1, 16], strides = [1, 1]} : vector<2x16xf32> to vector<1x16xf32>
    %307 = vector.broadcast %306 : vector<1x16xf32> to vector<256x16xf32>
    %308 = arith.mulf %305, %307 : vector<256x16xf32>
    %309 = vector.extract_strided_slice %303 {offsets = [1, 0], sizes = [1, 16], strides = [1, 1]} : vector<2x16xf32> to vector<1x16xf32>
    %310 = vector.broadcast %309 : vector<1x16xf32> to vector<256x16xf32>
    %311 = arith.addf %308, %310 : vector<256x16xf32>
    %c0_102 = arith.constant 0 : index
    %c0_103 = arith.constant 0 : index
    %c0_104 = arith.constant 0 : index
    %312 = vector.load %arg24[%c0_102, %c0_103, %c0_104] : memref<1x256x16xf32, #tpu.memory_space<vmem>>, vector<1x256x16xf32>
    %313 = vector.shape_cast %312 : vector<1x256x16xf32> to vector<256x16xf32>
    %314 = vector.shape_cast %311 : vector<256x16xf32> to vector<1x256x16xf32>
    tpu.vector_store %arg24[%c0_102, %c0_103, %c0_104], %314 {strides = array<i32>} : memref<1x256x16xf32, #tpu.memory_space<vmem>>, vector<1x256x16xf32>,
    return
  }
  func.func @transform_0(%arg0: i32) -> (i32, i32, i32) {
    %c0_i32 = arith.constant 0 : i32
    %c0_i32_0 = arith.constant 0 : i32
    %c0_i32_1 = arith.constant 0 : i32
    return %arg0, %c0_i32, %c0_i32_0 : i32, i32, i32
  }
  func.func @transform_1(%arg0: i32) -> (i32, i32, i32) {
    %c0_i32 = arith.constant 0 : i32
    %c0_i32_0 = arith.constant 0 : i32
    %c0_i32_1 = arith.constant 0 : i32
    return %arg0, %c0_i32, %c0_i32_0 : i32, i32, i32
  }
  func.func @transform_2(%arg0: i32) -> (i32, i32, i32) {
    %c0_i32 = arith.constant 0 : i32
    %c0_i32_0 = arith.constant 0 : i32
    %c0_i32_1 = arith.constant 0 : i32
    return %arg0, %c0_i32, %c0_i32_0 : i32, i32, i32
  }
  func.func @transform_3(%arg0: i32) -> (i32, i32) {
    %c0_i32 = arith.constant 0 : i32
    %c0_i32_0 = arith.constant 0 : i32
    %c0_i32_1 = arith.constant 0 : i32
    return %c0_i32, %c0_i32_0 : i32, i32
  }
  func.func @transform_4(%arg0: i32) -> (i32, i32) {
    %c0_i32 = arith.constant 0 : i32
    %c0_i32_0 = arith.constant 0 : i32
    %c0_i32_1 = arith.constant 0 : i32
    return %c0_i32, %c0_i32_0 : i32, i32
  }
  func.func @transform_5(%arg0: i32) -> (i32, i32) {
    %c0_i32 = arith.constant 0 : i32
    %c0_i32_0 = arith.constant 0 : i32
    %c0_i32_1 = arith.constant 0 : i32
    return %c0_i32, %c0_i32_0 : i32, i32
  }
  func.func @transform_6(%arg0: i32) -> (i32, i32) {
    %c0_i32 = arith.constant 0 : i32
    %c0_i32_0 = arith.constant 0 : i32
    %c0_i32_1 = arith.constant 0 : i32
    return %c0_i32, %c0_i32_0 : i32, i32
  }
  func.func @transform_7(%arg0: i32) -> (i32, i32) {
    %c0_i32 = arith.constant 0 : i32
    %c0_i32_0 = arith.constant 0 : i32
    %c0_i32_1 = arith.constant 0 : i32
    return %c0_i32, %c0_i32_0 : i32, i32
  }
  func.func @transform_8(%arg0: i32) -> (i32, i32) {
    %c0_i32 = arith.constant 0 : i32
    %c0_i32_0 = arith.constant 0 : i32
    %c0_i32_1 = arith.constant 0 : i32
    return %c0_i32, %c0_i32_0 : i32, i32
  }
  func.func @transform_9(%arg0: i32) -> (i32, i32) {
    %c0_i32 = arith.constant 0 : i32
    %c0_i32_0 = arith.constant 0 : i32
    %c0_i32_1 = arith.constant 0 : i32
    return %c0_i32, %c0_i32_0 : i32, i32
  }
  func.func @transform_10(%arg0: i32) -> (i32, i32) {
    %c0_i32 = arith.constant 0 : i32
    %c0_i32_0 = arith.constant 0 : i32
    %c0_i32_1 = arith.constant 0 : i32
    return %c0_i32, %c0_i32_0 : i32, i32
  }
  func.func @transform_11(%arg0: i32) -> (i32, i32) {
    %c0_i32 = arith.constant 0 : i32
    %c0_i32_0 = arith.constant 0 : i32
    %c0_i32_1 = arith.constant 0 : i32
    return %c0_i32, %c0_i32_0 : i32, i32
  }
  func.func @transform_12(%arg0: i32) -> (i32, i32) {
    %c0_i32 = arith.constant 0 : i32
    %c0_i32_0 = arith.constant 0 : i32
    %c0_i32_1 = arith.constant 0 : i32
    return %c0_i32, %c0_i32_0 : i32, i32
  }
  func.func @transform_13(%arg0: i32) -> (i32, i32) {
    %c0_i32 = arith.constant 0 : i32
    %c0_i32_0 = arith.constant 0 : i32
    %c0_i32_1 = arith.constant 0 : i32
    return %c0_i32, %c0_i32_0 : i32, i32
  }
  func.func @transform_14(%arg0: i32) -> (i32, i32) {
    %c0_i32 = arith.constant 0 : i32
    %c0_i32_0 = arith.constant 0 : i32
    %c0_i32_1 = arith.constant 0 : i32
    return %c0_i32, %c0_i32_0 : i32, i32
  }
  func.func @transform_15(%arg0: i32) -> (i32, i32) {
    %c0_i32 = arith.constant 0 : i32
    %c0_i32_0 = arith.constant 0 : i32
    %c0_i32_1 = arith.constant 0 : i32
    return %c0_i32, %c0_i32_0 : i32, i32
  }
  func.func @transform_16(%arg0: i32) -> (i32, i32) {
    %c0_i32 = arith.constant 0 : i32
    %c0_i32_0 = arith.constant 0 : i32
    %c0_i32_1 = arith.constant 0 : i32
    return %c0_i32, %c0_i32_0 : i32, i32
  }
  func.func @transform_17(%arg0: i32) -> (i32, i32) {
    %c0_i32 = arith.constant 0 : i32
    %c0_i32_0 = arith.constant 0 : i32
    %c0_i32_1 = arith.constant 0 : i32
    return %c0_i32, %c0_i32_0 : i32, i32
  }
  func.func @transform_18(%arg0: i32) -> (i32, i32) {
    %c0_i32 = arith.constant 0 : i32
    %c0_i32_0 = arith.constant 0 : i32
    %c0_i32_1 = arith.constant 0 : i32
    return %c0_i32, %c0_i32_0 : i32, i32
  }
  func.func @transform_19(%arg0: i32) -> (i32, i32) {
    %c0_i32 = arith.constant 0 : i32
    %c0_i32_0 = arith.constant 0 : i32
    %c0_i32_1 = arith.constant 0 : i32
    return %c0_i32, %c0_i32_0 : i32, i32
  }
  func.func @transform_20(%arg0: i32) -> (i32, i32) {
    %c0_i32 = arith.constant 0 : i32
    %c0_i32_0 = arith.constant 0 : i32
    %c0_i32_1 = arith.constant 0 : i32
    return %c0_i32, %c0_i32_0 : i32, i32
  }
  func.func @transform_21(%arg0: i32) -> (i32, i32, i32) {
    %c0_i32 = arith.constant 0 : i32
    %c0_i32_0 = arith.constant 0 : i32
    %c0_i32_1 = arith.constant 0 : i32
    return %arg0, %c0_i32, %c0_i32_0 : i32, i32, i32
  }
  func.func @transform_22(%arg0: i32) -> (i32, i32, i32) {
    %c0_i32 = arith.constant 0 : i32
    %c0_i32_0 = arith.constant 0 : i32
    %c0_i32_1 = arith.constant 0 : i32
    return %arg0, %c0_i32, %c0_i32_0 : i32, i32, i32
  }
  func.func @transform_23(%arg0: i32) -> (i32, i32, i32) {
    %c0_i32 = arith.constant 0 : i32
    %c0_i32_0 = arith.constant 0 : i32
    %c0_i32_1 = arith.constant 0 : i32
    return %arg0, %c0_i32, %c0_i32_0 : i32, i32, i32
  }
}

</mosaic_0001>

<llo_original>
// kernel: reviewkd_forward.1
$region0: #{reviewkd_forward.1}
  #allocation0 [shape = 'u32[]', space=smem, size = 0x4, offset = 0x4, fixed_abs, tag = 'smem constant byte address 0x4 - core index']
  #allocation1 [shape = 'u32[144,128]{1,0:T(1,128)}', space=vmem, size = 0x12000, scoped, tag = 'internal scratch']
  %s0 = inlined_call_operand.vmem [shape: bf16[2,16,64], index: 0, kind: input, shape index: {}]
  %s1 = inlined_call_operand.vmem [shape: bf16[2,64,32], index: 1, kind: input, shape index: {}]
  %s2 = inlined_call_operand.vmem [shape: bf16[2,256,16], index: 2, kind: input, shape index: {}]
  %s3 = inlined_call_operand.vmem [shape: bf16[64,64], index: 3, kind: input, shape index: {}]
  %s4 = inlined_call_operand.vmem [shape: f32[2,64], index: 4, kind: input, shape index: {}, may-alias: {4,6,8,15}]
  %s5 = inlined_call_operand.vmem [shape: bf16[576,64], index: 5, kind: input, shape index: {}]
  %s6 = inlined_call_operand.vmem [shape: f32[2,64], index: 6, kind: input, shape index: {}, may-alias: {4,6,8,15}]
  %s7 = inlined_call_operand.vmem [shape: bf16[32,64], index: 7, kind: input, shape index: {}]
  %s8 = inlined_call_operand.vmem [shape: f32[2,64], index: 8, kind: input, shape index: {}, may-alias: {4,6,8,15}]
  %s9 = inlined_call_operand.vmem [shape: f32[2,128], index: 9, kind: input, shape index: {}]
  %s10 = inlined_call_operand.vmem [shape: f32[1,2], index: 10, kind: input, shape index: {}]
  %s11 = inlined_call_operand.vmem [shape: bf16[576,32], index: 11, kind: input, shape index: {}]
  %s12 = inlined_call_operand.vmem [shape: f32[2,32], index: 12, kind: input, shape index: {}]
  %s13 = inlined_call_operand.vmem [shape: f32[64,16], index: 13, kind: input, shape index: {}]
  %s14 = inlined_call_operand.vmem [shape: bf16[16,64], index: 14, kind: input, shape index: {}]
  %s15 = inlined_call_operand.vmem [shape: f32[2,64], index: 15, kind: input, shape index: {}, may-alias: {4,6,8,15}]
  %s16 = inlined_call_operand.vmem [shape: f32[2,128], index: 16, kind: input, shape index: {}]
  %s17 = inlined_call_operand.vmem [shape: f32[1,2], index: 17, kind: input, shape index: {}]
  %s18 = inlined_call_operand.vmem [shape: bf16[576,16], index: 18, kind: input, shape index: {}]
  %s19 = inlined_call_operand.vmem [shape: f32[2,16], index: 19, kind: input, shape index: {}]
  %s20 = inlined_call_operand.vmem [shape: f32[256,64], index: 20, kind: input, shape index: {}]
  %s21 = inlined_call_operand.hbm [shape: f32[2,16,64], index: 21, kind: output, shape index: {0}]
  %s22 = inlined_call_operand.hbm [shape: f32[2,64,32], index: 22, kind: output, shape index: {1}]
  %s23 = inlined_call_operand.vmem [shape: f32[2,256,16], index: 23, kind: output, shape index: {2}]
  %24 = xla_tuple %s21, %s22, %s23
  %s25 = sld [smem:[#allocation0]]
  $region133: #{reviewkd_forward.1} parent=0
    _
  %s27 = ssub.s32 1, %s25
  %s28 = scalar_select 0, %s27, %s25
  $region1: #{reviewkd_forward.1} parent=0
    #allocation2 [shape = 'u8[16384]{0}', space=vmem, size = 0x4000, scoped, tag = 'output window, operand 0']
    #allocation3 [shape = 's32[2]{0}', space=sflag, size = 0x8, scoped, tag = 'scoped memory for reviewkd_forward.1']
    #allocation4 [shape = 'u8[65536]{0}', space=vmem, size = 0x10000, scoped, tag = 'output window, operand 1']
    #allocation5 [shape = 's32[2]{0}', space=sflag, size = 0x8, scoped, tag = 'scoped memory for reviewkd_forward.1']
    %29 = vsyncpa [#allocation3], 0
    %s30 = scalar_lea.sflag [#allocation3], 1
    %31 = vsyncpa %s30, 0
    %32 = vsyncpa [#allocation5], 0
    %s33 = scalar_lea.sflag [#allocation5], 1
    %34 = vsyncpa %s33, 0
    loop: start=0, step=1, limit=4
    $region2: #{reviewkd_forward.1} parent=1 // loop_pre_header
      _
    $region3: #{reviewkd_forward.1} parent=1 // loop_header
      %s36 = sphi 0, %s40
      %p37 = scmp.ge.s32.totalorder %s36, 4
      %s46 = sphi 0, %s48
      %s49 = sphi 0, %s46
      %s50 = sphi 0, %s49
      %s66 = sphi 0, %s50
      %s72 = sphi 0, %s74
      %s75 = sphi 0, %s72
      %s76 = sphi 0, %s75
      %s92 = sphi 0, %s76
      %s98 = sphi 0, %s100
      %s101 = sphi 0, %s98
      %s102 = sphi 0, %s101
      %s118 = sphi 0, %s102
      %s122 = sphi 0, %s122
      %s124 = sphi 0, %s122
      %s125 = sphi 0, %s124
      %s139 = sphi 0, %s125
      %s143 = sphi 0, %s143
      %s145 = sphi 0, %s143
      %s146 = sphi 0, %s145
      %s160 = sphi 0, %s146
      %s164 = sphi 0, %s164
      %s166 = sphi 0, %s164
      %s167 = sphi 0, %s166
      %s181 = sphi 0, %s167
      %s185 = sphi 0, %s185
      %s187 = sphi 0, %s185
      %s188 = sphi 0, %s187
      %s202 = sphi 0, %s188
      %s206 = sphi 0, %s206
      %s208 = sphi 0, %s206
      %s209 = sphi 0, %s208
      %s223 = sphi 0, %s209
      %s227 = sphi 0, %s227
      %s229 = sphi 0, %s227
      %s230 = sphi 0, %s229
      %s244 = sphi 0, %s230
      %s248 = sphi 0, %s248
      %s250 = sphi 0, %s248
      %s251 = sphi 0, %s250
      %s265 = sphi 0, %s251
      %s269 = sphi 0, %s269
      %s271 = sphi 0, %s269
      %s272 = sphi 0, %s271
      %s286 = sphi 0, %s272
      %s290 = sphi 0, %s290
      %s292 = sphi 0, %s290
      %s293 = sphi 0, %s292
      %s307 = sphi 0, %s293
      %s311 = sphi 0, %s311
      %s313 = sphi 0, %s311
      %s314 = sphi 0, %s313
      %s328 = sphi 0, %s314
      %s332 = sphi 0, %s332
      %s334 = sphi 0, %s332
      %s335 = sphi 0, %s334
      %s349 = sphi 0, %s335
      %s353 = sphi 0, %s353
      %s355 = sphi 0, %s353
      %s356 = sphi 0, %s355
      %s370 = sphi 0, %s356
      %s374 = sphi 0, %s374
      %s376 = sphi 0, %s374
      %s377 = sphi 0, %s376
      %s391 = sphi 0, %s377
      %s395 = sphi 0, %s395
      %s397 = sphi 0, %s395
      %s398 = sphi 0, %s397
      %s412 = sphi 0, %s398
      %s416 = sphi 0, %s416
      %s418 = sphi 0, %s416
      %s419 = sphi 0, %s418
      %s433 = sphi 0, %s419
      %s437 = sphi 0, %s437
      %s439 = sphi 0, %s437
      %s440 = sphi 0, %s439
      %s454 = sphi 0, %s440
      %s458 = sphi 0, %s458
      %s460 = sphi 0, %s458
      %s461 = sphi 0, %s460
      %s475 = sphi 0, %s461
      %s479 = sphi 0, %s479
      %s481 = sphi 0, %s479
      %s482 = sphi 0, %s481
      %s496 = sphi 0, %s482
      %s502 = sphi 0, %s504
      %s505 = sphi 0, %s502
      %s506 = sphi 0, %s505
      %s522 = sphi 0, %s506
      %s528 = sphi 0, %s530
      %s531 = sphi 0, %s528
      %s532 = sphi 0, %s531
      %s548 = sphi 0, %s532
      %s554 = sphi 0, %s556
      %s557 = sphi 0, %s554
      %s558 = sphi 0, %s557
      %s574 = sphi 0, %s558
    $region4: #{reviewkd_forward.1} parent=1 // loop_header_branch
      %39 = sbr.rel (%p37) target = $region8
    $region5: #{reviewkd_forward.1} parent=1 // loop_body
      %s41 = ssub.s32 %s36, 1
      %s42 = ssub.s32 %s36, 2
      %s43 = sadd.s32 %s36, 1
      %s44 = ssub.s32 %s36, %s43
      %p45 = scmp.eq.s32.totalorder %s44, 0
      %s47 = sadd.s32 %s46, 1
      %s48 = scalar_select %p45, %s46, %s47
      %p51 = pneg %p45
      %p52 = scmp.eq.s32.totalorder %s36, 1
      %p53 = por %p51, %p52
      %p54 = scmp.ne.s32.totalorder %s46, %s49
      %p55 = scmp.eq.s32.totalorder %s36, 0
      %p56 = por %p54, %p55
      %p57 = scmp.ne.s32.totalorder %s46, %s49
      %p58 = scmp.eq.s32.totalorder %s41, 1
      %p59 = por %p57, %p58
      %p60 = scmp.ne.s32.totalorder %s49, %s50
      %p61 = scmp.eq.s32.totalorder %s41, 0
      %p62 = por %p60, %p61
      %p63 = scmp.ne.s32.totalorder %s49, %s50
      %p64 = scmp.eq.s32.totalorder %s42, 1
      %p65 = por %p63, %p64
      %p67 = scmp.ne.s32.totalorder %s50, %s66
      %p68 = scmp.eq.s32.totalorder %s42, 0
      %p69 = por %p67, %p68
      %s70 = ssub.s32 %s36, %s43
      %p71 = scmp.eq.s32.totalorder %s70, 0
      %s73 = sadd.s32 %s72, 1
      %s74 = scalar_select %p71, %s72, %s73
      %p77 = pneg %p71
      %p78 = scmp.eq.s32.totalorder %s36, 1
      %p79 = por %p77, %p78
      %p80 = scmp.ne.s32.totalorder %s72, %s75
      %p81 = scmp.eq.s32.totalorder %s36, 0
      %p82 = por %p80, %p81
      %p83 = scmp.ne.s32.totalorder %s72, %s75
      %p84 = scmp.eq.s32.totalorder %s41, 1
      %p85 = por %p83, %p84
      %p86 = scmp.ne.s32.totalorder %s75, %s76
      %p87 = scmp.eq.s32.totalorder %s41, 0
      %p88 = por %p86, %p87
      %p89 = scmp.ne.s32.totalorder %s75, %s76
      %p90 = scmp.eq.s32.totalorder %s42, 1
      %p91 = por %p89, %p90
      %p93 = scmp.ne.s32.totalorder %s76, %s92
      %p94 = scmp.eq.s32.totalorder %s42, 0
      %p95 = por %p93, %p94
      %s96 = ssub.s32 %s36, %s43
      %p97 = scmp.eq.s32.totalorder %s96, 0
      %s99 = sadd.s32 %s98, 1
      %s100 = scalar_select %p97, %s98, %s99
      %p103 = pneg %p97
      %p104 = scmp.eq.s32.totalorder %s36, 1
      %p105 = por %p103, %p104
      %p106 = scmp.ne.s32.totalorder %s98, %s101
      %p107 = scmp.eq.s32.totalorder %s36, 0
      %p108 = por %p106, %p107
      %p109 = scmp.ne.s32.totalorder %s98, %s101
      %p110 = scmp.eq.s32.totalorder %s41, 1
      %p111 = por %p109, %p110
      %p112 = scmp.ne.s32.totalorder %s101, %s102
      %p113 = scmp.eq.s32.totalorder %s41, 0
      %p114 = por %p112, %p113
      %p115 = scmp.ne.s32.totalorder %s101, %s102
      %p116 = scmp.eq.s32.totalorder %s42, 1
      %p117 = por %p115, %p116
      %p119 = scmp.ne.s32.totalorder %s102, %s118
      %p120 = scmp.eq.s32.totalorder %s42, 0
      %p121 = por %p119, %p120
      %s123 = sadd.s32 %s122, 1
      %p126 = scmp.eq.s32.totalorder %s36, 1
      %p127 = scmp.ne.s32.totalorder %s122, %s124
      %p128 = scmp.eq.s32.totalorder %s36, 0
      %p129 = por %p127, %p128
      %p130 = scmp.ne.s32.totalorder %s122, %s124
      %p131 = scmp.eq.s32.totalorder %s41, 1
      %p132 = por %p130, %p131
      %p133 = scmp.ne.s32.totalorder %s124, %s125
      %p134 = scmp.eq.s32.totalorder %s41, 0
      %p135 = por %p133, %p134
      %p136 = scmp.ne.s32.totalorder %s124, %s125
      %p137 = scmp.eq.s32.totalorder %s42, 1
      %p138 = por %p136, %p137
      %p140 = scmp.ne.s32.totalorder %s125, %s139
      %p141 = scmp.eq.s32.totalorder %s42, 0
      %p142 = por %p140, %p141
      %s144 = sadd.s32 %s143, 1
      %p147 = scmp.eq.s32.totalorder %s36, 1
      %p148 = scmp.ne.s32.totalorder %s143, %s145
      %p149 = scmp.eq.s32.totalorder %s36, 0
      %p150 = por %p148, %p149
      %p151 = scmp.ne.s32.totalorder %s143, %s145
      %p152 = scmp.eq.s32.totalorder %s41, 1
      %p153 = por %p151, %p152
      %p154 = scmp.ne.s32.totalorder %s145, %s146
      %p155 = scmp.eq.s32.totalorder %s41, 0
      %p156 = por %p154, %p155
      %p157 = scmp.ne.s32.totalorder %s145, %s146
      %p158 = scmp.eq.s32.totalorder %s42, 1
      %p159 = por %p157, %p158
      %p161 = scmp.ne.s32.totalorder %s146, %s160
      %p162 = scmp.eq.s32.totalorder %s42, 0
      %p163 = por %p161, %p162
      %s165 = sadd.s32 %s164, 1
      %p168 = scmp.eq.s32.totalorder %s36, 1
      %p169 = scmp.ne.s32.totalorder %s164, %s166
      %p170 = scmp.eq.s32.totalorder %s36, 0
      %p171 = por %p169, %p170
      %p172 = scmp.ne.s32.totalorder %s164, %s166
      %p173 = scmp.eq.s32.totalorder %s41, 1
      %p174 = por %p172, %p173
      %p175 = scmp.ne.s32.totalorder %s166, %s167
      %p176 = scmp.eq.s32.totalorder %s41, 0
      %p177 = por %p175, %p176
      %p178 = scmp.ne.s32.totalorder %s166, %s167
      %p179 = scmp.eq.s32.totalorder %s42, 1
      %p180 = por %p178, %p179
      %p182 = scmp.ne.s32.totalorder %s167, %s181
      %p183 = scmp.eq.s32.totalorder %s42, 0
      %p184 = por %p182, %p183
      %s186 = sadd.s32 %s185, 1
      %p189 = scmp.eq.s32.totalorder %s36, 1
      %p190 = scmp.ne.s32.totalorder %s185, %s187
      %p191 = scmp.eq.s32.totalorder %s36, 0
      %p192 = por %p190, %p191
      %p193 = scmp.ne.s32.totalorder %s185, %s187
      %p194 = scmp.eq.s32.totalorder %s41, 1
      %p195 = por %p193, %p194
      %p196 = scmp.ne.s32.totalorder %s187, %s188
      %p197 = scmp.eq.s32.totalorder %s41, 0
      %p198 = por %p196, %p197
      %p199 = scmp.ne.s32.totalorder %s187, %s188
      %p200 = scmp.eq.s32.totalorder %s42, 1
      %p201 = por %p199, %p200
      %p203 = scmp.ne.s32.totalorder %s188, %s202
      %p204 = scmp.eq.s32.totalorder %s42, 0
      %p205 = por %p203, %p204
      %s207 = sadd.s32 %s206, 1
      %p210 = scmp.eq.s32.totalorder %s36, 1
      %p211 = scmp.ne.s32.totalorder %s206, %s208
      %p212 = scmp.eq.s32.totalorder %s36, 0
      %p213 = por %p211, %p212
      %p214 = scmp.ne.s32.totalorder %s206, %s208
      %p215 = scmp.eq.s32.totalorder %s41, 1
      %p216 = por %p214, %p215
      %p217 = scmp.ne.s32.totalorder %s208, %s209
      %p218 = scmp.eq.s32.totalorder %s41, 0
      %p219 = por %p217, %p218
      %p220 = scmp.ne.s32.totalorder %s208, %s209
      %p221 = scmp.eq.s32.totalorder %s42, 1
      %p222 = por %p220, %p221
      %p224 = scmp.ne.s32.totalorder %s209, %s223
      %p225 = scmp.eq.s32.totalorder %s42, 0
      %p226 = por %p224, %p225
      %s228 = sadd.s32 %s227, 1
      %p231 = scmp.eq.s32.totalorder %s36, 1
      %p232 = scmp.ne.s32.totalorder %s227, %s229
      %p233 = scmp.eq.s32.totalorder %s36, 0
      %p234 = por %p232, %p233
      %p235 = scmp.ne.s32.totalorder %s227, %s229
      %p236 = scmp.eq.s32.totalorder %s41, 1
      %p237 = por %p235, %p236
      %p238 = scmp.ne.s32.totalorder %s229, %s230
      %p239 = scmp.eq.s32.totalorder %s41, 0
      %p240 = por %p238, %p239
      %p241 = scmp.ne.s32.totalorder %s229, %s230
      %p242 = scmp.eq.s32.totalorder %s42, 1
      %p243 = por %p241, %p242
      %p245 = scmp.ne.s32.totalorder %s230, %s244
      %p246 = scmp.eq.s32.totalorder %s42, 0
      %p247 = por %p245, %p246
      %s249 = sadd.s32 %s248, 1
      %p252 = scmp.eq.s32.totalorder %s36, 1
      %p253 = scmp.ne.s32.totalorder %s248, %s250
      %p254 = scmp.eq.s32.totalorder %s36, 0
      %p255 = por %p253, %p254
      %p256 = scmp.ne.s32.totalorder %s248, %s250
      %p257 = scmp.eq.s32.totalorder %s41, 1
      %p258 = por %p256, %p257
      %p259 = scmp.ne.s32.totalorder %s250, %s251
      %p260 = scmp.eq.s32.totalorder %s41, 0
      %p261 = por %p259, %p260
      %p262 = scmp.ne.s32.totalorder %s250, %s251
      %p263 = scmp.eq.s32.totalorder %s42, 1
      %p264 = por %p262, %p263
      %p266 = scmp.ne.s32.totalorder %s251, %s265
      %p267 = scmp.eq.s32.totalorder %s42, 0
      %p268 = por %p266, %p267
      %s270 = sadd.s32 %s269, 1
      %p273 = scmp.eq.s32.totalorder %s36, 1
      %p274 = scmp.ne.s32.totalorder %s269, %s271
      %p275 = scmp.eq.s32.totalorder %s36, 0
      %p276 = por %p274, %p275
      %p277 = scmp.ne.s32.totalorder %s269, %s271
      %p278 = scmp.eq.s32.totalorder %s41, 1
      %p279 = por %p277, %p278
      %p280 = scmp.ne.s32.totalorder %s271, %s272
      %p281 = scmp.eq.s32.totalorder %s41, 0
      %p282 = por %p280, %p281
      %p283 = scmp.ne.s32.totalorder %s271, %s272
      %p284 = scmp.eq.s32.totalorder %s42, 1
      %p285 = por %p283, %p284
      %p287 = scmp.ne.s32.totalorder %s272, %s286
      %p288 = scmp.eq.s32.totalorder %s42, 0
      %p289 = por %p287, %p288
      %s291 = sadd.s32 %s290, 1
      %p294 = scmp.eq.s32.totalorder %s36, 1
      %p295 = scmp.ne.s32.totalorder %s290, %s292
      %p296 = scmp.eq.s32.totalorder %s36, 0
      %p297 = por %p295, %p296
      %p298 = scmp.ne.s32.totalorder %s290, %s292
      %p299 = scmp.eq.s32.totalorder %s41, 1
      %p300 = por %p298, %p299
      %p301 = scmp.ne.s32.totalorder %s292, %s293
      %p302 = scmp.eq.s32.totalorder %s41, 0
      %p303 = por %p301, %p302
      %p304 = scmp.ne.s32.totalorder %s292, %s293
      %p305 = scmp.eq.s32.totalorder %s42, 1
      %p306 = por %p304, %p305
      %p308 = scmp.ne.s32.totalorder %s293, %s307
      %p309 = scmp.eq.s32.totalorder %s42, 0
      %p310 = por %p308, %p309
      %s312 = sadd.s32 %s311, 1
      %p315 = scmp.eq.s32.totalorder %s36, 1
      %p316 = scmp.ne.s32.totalorder %s311, %s313
      %p317 = scmp.eq.s32.totalorder %s36, 0
      %p318 = por %p316, %p317
      %p319 = scmp.ne.s32.totalorder %s311, %s313
      %p320 = scmp.eq.s32.totalorder %s41, 1
      %p321 = por %p319, %p320
      %p322 = scmp.ne.s32.totalorder %s313, %s314
      %p323 = scmp.eq.s32.totalorder %s41, 0
      %p324 = por %p322, %p323
      %p325 = scmp.ne.s32.totalorder %s313, %s314
      %p326 = scmp.eq.s32.totalorder %s42, 1
      %p327 = por %p325, %p326
      %p329 = scmp.ne.s32.totalorder %s314, %s328
      %p330 = scmp.eq.s32.totalorder %s42, 0
      %p331 = por %p329, %p330
      %s333 = sadd.s32 %s332, 1
      %p336 = scmp.eq.s32.totalorder %s36, 1
      %p337 = scmp.ne.s32.totalorder %s332, %s334
      %p338 = scmp.eq.s32.totalorder %s36, 0
      %p339 = por %p337, %p338
      %p340 = scmp.ne.s32.totalorder %s332, %s334
      %p341 = scmp.eq.s32.totalorder %s41, 1
      %p342 = por %p340, %p341
      %p343 = scmp.ne.s32.totalorder %s334, %s335
      %p344 = scmp.eq.s32.totalorder %s41, 0
      %p345 = por %p343, %p344
      %p346 = scmp.ne.s32.totalorder %s334, %s335
      %p347 = scmp.eq.s32.totalorder %s42, 1
      %p348 = por %p346, %p347
      %p350 = scmp.ne.s32.totalorder %s335, %s349
      %p351 = scmp.eq.s32.totalorder %s42, 0
      %p352 = por %p350, %p351
      %s354 = sadd.s32 %s353, 1
      %p357 = scmp.eq.s32.totalorder %s36, 1
      %p358 = scmp.ne.s32.totalorder %s353, %s355
      %p359 = scmp.eq.s32.totalorder %s36, 0
      %p360 = por %p358, %p359
      %p361 = scmp.ne.s32.totalorder %s353, %s355
      %p362 = scmp.eq.s32.totalorder %s41, 1
      %p363 = por %p361, %p362
      %p364 = scmp.ne.s32.totalorder %s355, %s356
      %p365 = scmp.eq.s32.totalorder %s41, 0
      %p366 = por %p364, %p365
      %p367 = scmp.ne.s32.totalorder %s355, %s356
      %p368 = scmp.eq.s32.totalorder %s42, 1
      %p369 = por %p367, %p368
      %p371 = scmp.ne.s32.totalorder %s356, %s370
      %p372 = scmp.eq.s32.totalorder %s42, 0
      %p373 = por %p371, %p372
      %s375 = sadd.s32 %s374, 1
      %p378 = scmp.eq.s32.totalorder %s36, 1
      %p379 = scmp.ne.s32.totalorder %s374, %s376
      %p380 = scmp.eq.s32.totalorder %s36, 0
      %p381 = por %p379, %p380
      %p382 = scmp.ne.s32.totalorder %s374, %s376
      %p383 = scmp.eq.s32.totalorder %s41, 1
      %p384 = por %p382, %p383
      %p385 = scmp.ne.s32.totalorder %s376, %s377
      %p386 = scmp.eq.s32.totalorder %s41, 0
      %p387 = por %p385, %p386
      %p388 = scmp.ne.s32.totalorder %s376, %s377
      %p389 = scmp.eq.s32.totalorder %s42, 1
      %p390 = por %p388, %p389
      %p392 = scmp.ne.s32.totalorder %s377, %s391
      %p393 = scmp.eq.s32.totalorder %s42, 0
      %p394 = por %p392, %p393
      %s396 = sadd.s32 %s395, 1
      %p399 = scmp.eq.s32.totalorder %s36, 1
      %p400 = scmp.ne.s32.totalorder %s395, %s397
      %p401 = scmp.eq.s32.totalorder %s36, 0
      %p402 = por %p400, %p401
      %p403 = scmp.ne.s32.totalorder %s395, %s397
      %p404 = scmp.eq.s32.totalorder %s41, 1
      %p405 = por %p403, %p404
      %p406 = scmp.ne.s32.totalorder %s397, %s398
      %p407 = scmp.eq.s32.totalorder %s41, 0
      %p408 = por %p406, %p407
      %p409 = scmp.ne.s32.totalorder %s397, %s398
      %p410 = scmp.eq.s32.totalorder %s42, 1
      %p411 = por %p409, %p410
      %p413 = scmp.ne.s32.totalorder %s398, %s412
      %p414 = scmp.eq.s32.totalorder %s42, 0
      %p415 = por %p413, %p414
      %s417 = sadd.s32 %s416, 1
      %p420 = scmp.eq.s32.totalorder %s36, 1
      %p421 = scmp.ne.s32.totalorder %s416, %s418
      %p422 = scmp.eq.s32.totalorder %s36, 0
      %p423 = por %p421, %p422
      %p424 = scmp.ne.s32.totalorder %s416, %s418
      %p425 = scmp.eq.s32.totalorder %s41, 1
      %p426 = por %p424, %p425
      %p427 = scmp.ne.s32.totalorder %s418, %s419
      %p428 = scmp.eq.s32.totalorder %s41, 0
      %p429 = por %p427, %p428
      %p430 = scmp.ne.s32.totalorder %s418, %s419
      %p431 = scmp.eq.s32.totalorder %s42, 1
      %p432 = por %p430, %p431
      %p434 = scmp.ne.s32.totalorder %s419, %s433
      %p435 = scmp.eq.s32.totalorder %s42, 0
      %p436 = por %p434, %p435
      %s438 = sadd.s32 %s437, 1
      %p441 = scmp.eq.s32.totalorder %s36, 1
      %p442 = scmp.ne.s32.totalorder %s437, %s439
      %p443 = scmp.eq.s32.totalorder %s36, 0
      %p444 = por %p442, %p443
      %p445 = scmp.ne.s32.totalorder %s437, %s439
      %p446 = scmp.eq.s32.totalorder %s41, 1
      %p447 = por %p445, %p446
      %p448 = scmp.ne.s32.totalorder %s439, %s440
      %p449 = scmp.eq.s32.totalorder %s41, 0
      %p450 = por %p448, %p449
      %p451 = scmp.ne.s32.totalorder %s439, %s440
      %p452 = scmp.eq.s32.totalorder %s42, 1
      %p453 = por %p451, %p452
      %p455 = scmp.ne.s32.totalorder %s440, %s454
      %p456 = scmp.eq.s32.totalorder %s42, 0
      %p457 = por %p455, %p456
      %s459 = sadd.s32 %s458, 1
      %p462 = scmp.eq.s32.totalorder %s36, 1
      %p463 = scmp.ne.s32.totalorder %s458, %s460
      %p464 = scmp.eq.s32.totalorder %s36, 0
      %p465 = por %p463, %p464
      %p466 = scmp.ne.s32.totalorder %s458, %s460
      %p467 = scmp.eq.s32.totalorder %s41, 1
      %p468 = por %p466, %p467
      %p469 = scmp.ne.s32.totalorder %s460, %s461
      %p470 = scmp.eq.s32.totalorder %s41, 0
      %p471 = por %p469, %p470
      %p472 = scmp.ne.s32.totalorder %s460, %s461
      %p473 = scmp.eq.s32.totalorder %s42, 1
      %p474 = por %p472, %p473
      %p476 = scmp.ne.s32.totalorder %s461, %s475
      %p477 = scmp.eq.s32.totalorder %s42, 0
      %p478 = por %p476, %p477
      %s480 = sadd.s32 %s479, 1
      %p483 = scmp.eq.s32.totalorder %s36, 1
      %p484 = scmp.ne.s32.totalorder %s479, %s481
      %p485 = scmp.eq.s32.totalorder %s36, 0
      %p486 = por %p484, %p485
      %p487 = scmp.ne.s32.totalorder %s479, %s481
      %p488 = scmp.eq.s32.totalorder %s41, 1
      %p489 = por %p487, %p488
      %p490 = scmp.ne.s32.totalorder %s481, %s482
      %p491 = scmp.eq.s32.totalorder %s41, 0
      %p492 = por %p490, %p491
      %p493 = scmp.ne.s32.totalorder %s481, %s482
      %p494 = scmp.eq.s32.totalorder %s42, 1
      %p495 = por %p493, %p494
      %p497 = scmp.ne.s32.totalorder %s482, %s496
      %p498 = scmp.eq.s32.totalorder %s42, 0
      %p499 = por %p497, %p498
      %s500 = ssub.s32 %s36, %s43
      %p501 = scmp.eq.s32.totalorder %s500, 0
      %s503 = sadd.s32 %s502, 1
      %s504 = scalar_select %p501, %s502, %s503
      %p507 = pneg %p501
      %p508 = scmp.eq.s32.totalorder %s36, 1
      %p509 = por %p507, %p508
      %p510 = scmp.ne.s32.totalorder %s502, %s505
      %p511 = scmp.eq.s32.totalorder %s36, 0
      %p512 = por %p510, %p511
      %p513 = scmp.ne.s32.totalorder %s502, %s505
      %p514 = scmp.eq.s32.totalorder %s41, 1
      %p515 = por %p513, %p514
      %p516 = scmp.ne.s32.totalorder %s505, %s506
      %p517 = scmp.eq.s32.totalorder %s41, 0
      %p518 = por %p516, %p517
      %p519 = scmp.ne.s32.totalorder %s505, %s506
      %p520 = scmp.eq.s32.totalorder %s42, 1
      %p521 = por %p519, %p520
      %p523 = scmp.ne.s32.totalorder %s506, %s522
      %p524 = scmp.eq.s32.totalorder %s42, 0
      %p525 = por %p523, %p524
      %s526 = ssub.s32 %s36, %s43
      %p527 = scmp.eq.s32.totalorder %s526, 0
      %s529 = sadd.s32 %s528, 1
      %s530 = scalar_select %p527, %s528, %s529
      %p533 = pneg %p527
      %p534 = scmp.eq.s32.totalorder %s36, 1
      %p535 = por %p533, %p534
      %p536 = scmp.ne.s32.totalorder %s528, %s531
      %p537 = scmp.eq.s32.totalorder %s36, 0
      %p538 = por %p536, %p537
      %p539 = scmp.ne.s32.totalorder %s528, %s531
      %p540 = scmp.eq.s32.totalorder %s41, 1
      %p541 = por %p539, %p540
      %p542 = scmp.ne.s32.totalorder %s531, %s532
      %p543 = scmp.eq.s32.totalorder %s41, 0
      %p544 = por %p542, %p543
      %p545 = scmp.ne.s32.totalorder %s531, %s532
      %p546 = scmp.eq.s32.totalorder %s42, 1
      %p547 = por %p545, %p546
      %p549 = scmp.ne.s32.totalorder %s532, %s548
      %p550 = scmp.eq.s32.totalorder %s42, 0
      %p551 = por %p549, %p550
      %s552 = ssub.s32 %s36, %s43
      %p553 = scmp.eq.s32.totalorder %s552, 0
      %s555 = sadd.s32 %s554, 1
      %s556 = scalar_select %p553, %s554, %s555
      %p559 = pneg %p553
      %p560 = scmp.eq.s32.totalorder %s36, 1
      %p561 = por %p559, %p560
      %p562 = scmp.ne.s32.totalorder %s554, %s557
      %p563 = scmp.eq.s32.totalorder %s36, 0
      %p564 = por %p562, %p563
      %p565 = scmp.ne.s32.totalorder %s554, %s557
      %p566 = scmp.eq.s32.totalorder %s41, 1
      %p567 = por %p565, %p566
      %p568 = scmp.ne.s32.totalorder %s557, %s558
      %p569 = scmp.eq.s32.totalorder %s41, 0
      %p570 = por %p568, %p569
      %p571 = scmp.ne.s32.totalorder %s557, %s558
      %p572 = scmp.eq.s32.totalorder %s42, 1
      %p573 = por %p571, %p572
      %p575 = scmp.ne.s32.totalorder %s558, %s574
      %p576 = scmp.eq.s32.totalorder %s42, 0
      %p577 = por %p575, %p576
      %p578 = scmp.le.s32.totalorder 1, %s36
      %p579 = scmp.lt.s32.totalorder %s36, 3
      %p580 = pnand %p578, %p579
      %p581 = pneg %p580
      // Predicated region
      $region9: #{reviewkd_forward.1} parent=5 // pred_check
        _
      $region10: #{reviewkd_forward.1} parent=5 // pred_check_branch
        %583 = sbr.rel (%p580) target = $region12
      $region11: #{reviewkd_forward.1} parent=5 // pred_region
        %s584 = ssub.s32 %s36, 1
        // Predicated region
        $region13: #{reviewkd_forward.1} parent=11 // pred_check
          %p585 = pneg %p135
        $region14: #{reviewkd_forward.1} parent=11 // pred_check_branch
          %587 = sbr.rel (%p585) target = $region16
        $region15: #{reviewkd_forward.1} parent=11 // pred_region
          _
        $region16: #{reviewkd_forward.1} parent=11 // pred_fallthru
          _
        // Predicated region
        $region17: #{reviewkd_forward.1} parent=11 // pred_check
          %p588 = pneg %p156
        $region18: #{reviewkd_forward.1} parent=11 // pred_check_branch
          %590 = sbr.rel (%p588) target = $region20
        $region19: #{reviewkd_forward.1} parent=11 // pred_region
          _
        $region20: #{reviewkd_forward.1} parent=11 // pred_fallthru
          _
        // Predicated region
        $region21: #{reviewkd_forward.1} parent=11 // pred_check
          %p591 = pneg %p177
        $region22: #{reviewkd_forward.1} parent=11 // pred_check_branch
          %593 = sbr.rel (%p591) target = $region24
        $region23: #{reviewkd_forward.1} parent=11 // pred_region
          _
        $region24: #{reviewkd_forward.1} parent=11 // pred_fallthru
          _
        // Predicated region
        $region25: #{reviewkd_forward.1} parent=11 // pred_check
          %p594 = pneg %p198
        $region26: #{reviewkd_forward.1} parent=11 // pred_check_branch
          %596 = sbr.rel (%p594) target = $region28
        $region27: #{reviewkd_forward.1} parent=11 // pred_region
          _
        $region28: #{reviewkd_forward.1} parent=11 // pred_fallthru
          _
        // Predicated region
        $region29: #{reviewkd_forward.1} parent=11 // pred_check
          %p597 = pneg %p219
        $region30: #{reviewkd_forward.1} parent=11 // pred_check_branch
          %599 = sbr.rel (%p597) target = $region32
        $region31: #{reviewkd_forward.1} parent=11 // pred_region
          _
        $region32: #{reviewkd_forward.1} parent=11 // pred_fallthru
          _
        // Predicated region
        $region33: #{reviewkd_forward.1} parent=11 // pred_check
          %p600 = pneg %p240
        $region34: #{reviewkd_forward.1} parent=11 // pred_check_branch
          %602 = sbr.rel (%p600) target = $region36
        $region35: #{reviewkd_forward.1} parent=11 // pred_region
          _
        $region36: #{reviewkd_forward.1} parent=11 // pred_fallthru
          _
        // Predicated region
        $region37: #{reviewkd_forward.1} parent=11 // pred_check
          %p603 = pneg %p261
        $region38: #{reviewkd_forward.1} parent=11 // pred_check_branch
          %605 = sbr.rel (%p603) target = $region40
        $region39: #{reviewkd_forward.1} parent=11 // pred_region
          _
        $region40: #{reviewkd_forward.1} parent=11 // pred_fallthru
          _
        // Predicated region
        $region41: #{reviewkd_forward.1} parent=11 // pred_check
          %p606 = pneg %p282
        $region42: #{reviewkd_forward.1} parent=11 // pred_check_branch
          %608 = sbr.rel (%p606) target = $region44
        $region43: #{reviewkd_forward.1} parent=11 // pred_region
          _
        $region44: #{reviewkd_forward.1} parent=11 // pred_fallthru
          _
        // Predicated region
        $region45: #{reviewkd_forward.1} parent=11 // pred_check
          %p609 = pneg %p303
        $region46: #{reviewkd_forward.1} parent=11 // pred_check_branch
          %611 = sbr.rel (%p609) target = $region48
        $region47: #{reviewkd_forward.1} parent=11 // pred_region
          _
        $region48: #{reviewkd_forward.1} parent=11 // pred_fallthru
          _
        // Predicated region
        $region49: #{reviewkd_forward.1} parent=11 // pred_check
          %p612 = pneg %p324
        $region50: #{reviewkd_forward.1} parent=11 // pred_check_branch
          %614 = sbr.rel (%p612) target = $region52
        $region51: #{reviewkd_forward.1} parent=11 // pred_region
          _
        $region52: #{reviewkd_forward.1} parent=11 // pred_fallthru
          _
        // Predicated region
        $region53: #{reviewkd_forward.1} parent=11 // pred_check
          %p615 = pneg %p345
        $region54: #{reviewkd_forward.1} parent=11 // pred_check_branch
          %617 = sbr.rel (%p615) target = $region56
        $region55: #{reviewkd_forward.1} parent=11 // pred_region
          _
        $region56: #{reviewkd_forward.1} parent=11 // pred_fallthru
          _
        // Predicated region
        $region57: #{reviewkd_forward.1} parent=11 // pred_check
          %p618 = pneg %p366
        $region58: #{reviewkd_forward.1} parent=11 // pred_check_branch
          %620 = sbr.rel (%p618) target = $region60
        $region59: #{reviewkd_forward.1} parent=11 // pred_region
          _
        $region60: #{reviewkd_forward.1} parent=11 // pred_fallthru
          _
        // Predicated region
        $region61: #{reviewkd_forward.1} parent=11 // pred_check
          %p621 = pneg %p387
        $region62: #{reviewkd_forward.1} parent=11 // pred_check_branch
          %623 = sbr.rel (%p621) target = $region64
        $region63: #{reviewkd_forward.1} parent=11 // pred_region
          _
        $region64: #{reviewkd_forward.1} parent=11 // pred_fallthru
          _
        // Predicated region
        $region65: #{reviewkd_forward.1} parent=11 // pred_check
          %p624 = pneg %p408
        $region66: #{reviewkd_forward.1} parent=11 // pred_check_branch
          %626 = sbr.rel (%p624) target = $region68
        $region67: #{reviewkd_forward.1} parent=11 // pred_region
          _
        $region68: #{reviewkd_forward.1} parent=11 // pred_fallthru
          _
        // Predicated region
        $region69: #{reviewkd_forward.1} parent=11 // pred_check
          %p627 = pneg %p429
        $region70: #{reviewkd_forward.1} parent=11 // pred_check_branch
          %629 = sbr.rel (%p627) target = $region72
        $region71: #{reviewkd_forward.1} parent=11 // pred_region
          _
        $region72: #{reviewkd_forward.1} parent=11 // pred_fallthru
          _
        // Predicated region
        $region73: #{reviewkd_forward.1} parent=11 // pred_check
          %p630 = pneg %p450
        $region74: #{reviewkd_forward.1} parent=11 // pred_check_branch
          %632 = sbr.rel (%p630) target = $region76
        $region75: #{reviewkd_forward.1} parent=11 // pred_region
          _
        $region76: #{reviewkd_forward.1} parent=11 // pred_fallthru
          _
        // Predicated region
        $region77: #{reviewkd_forward.1} parent=11 // pred_check
          %p633 = pneg %p471
        $region78: #{reviewkd_forward.1} parent=11 // pred_check_branch
          %635 = sbr.rel (%p633) target = $region80
        $region79: #{reviewkd_forward.1} parent=11 // pred_region
          _
        $region80: #{reviewkd_forward.1} parent=11 // pred_fallthru
          _
        // Predicated region
        $region81: #{reviewkd_forward.1} parent=11 // pred_check
          %p636 = pneg %p492
        $region82: #{reviewkd_forward.1} parent=11 // pred_check_branch
          %638 = sbr.rel (%p636) target = $region84
        $region83: #{reviewkd_forward.1} parent=11 // pred_region
          _
        $region84: #{reviewkd_forward.1} parent=11 // pred_fallthru
          _
      $region12: #{reviewkd_forward.1} parent=5 // pred_fallthru
        _
      %p639 = scmp.lt.s32.totalorder %s36, 2
      // Predicated region
      $region85: #{reviewkd_forward.1} parent=5 // pred_check
        %p640 = pneg %p639
      $region86: #{reviewkd_forward.1} parent=5 // pred_check_branch
        %642 = sbr.rel (%p640) target = $region88
      $region87: #{reviewkd_forward.1} parent=5 // pred_region
        // Predicated region
        $region89: #{reviewkd_forward.1} parent=87 // pred_check
          %p643 = pneg %p56
        $region90: #{reviewkd_forward.1} parent=87 // pred_check_branch
          %645 = sbr.rel (%p643) target = $region92
        $region91: #{reviewkd_forward.1} parent=87 // pred_region
          %p646 = scmp.lt.s32.totalorder %s36, 1
          %s647 = scalar_select %p646, %s36, 1
          %s648 = smul.addr %s647, 2
          %s649 = smul.addr %s648, 4
          %s650 = scalar_lea.vmem %s0, %s649
        $region92: #{reviewkd_forward.1} parent=87 // pred_fallthru
          _
        // Predicated region
        $region93: #{reviewkd_forward.1} parent=87 // pred_check
          %p651 = pneg %p82
        $region94: #{reviewkd_forward.1} parent=87 // pred_check_branch
          %653 = sbr.rel (%p651) target = $region96
        $region95: #{reviewkd_forward.1} parent=87 // pred_region
          %p654 = scmp.lt.s32.totalorder %s36, 1
          %s655 = scalar_select %p654, %s36, 1
          %s656 = smul.addr %s655, 8
          %s657 = smul.addr %s656, 4
          %s658 = scalar_lea.vmem %s1, %s657
        $region96: #{reviewkd_forward.1} parent=87 // pred_fallthru
          _
        // Predicated region
        $region97: #{reviewkd_forward.1} parent=87 // pred_check
          %p659 = pneg %p108
        $region98: #{reviewkd_forward.1} parent=87 // pred_check_branch
          %661 = sbr.rel (%p659) target = $region100
        $region99: #{reviewkd_forward.1} parent=87 // pred_region
          %p662 = scmp.lt.s32.totalorder %s36, 1
          %s663 = scalar_select %p662, %s36, 1
          %s664 = smul.addr %s663, 32
          %s665 = smul.addr %s664, 4
          %s666 = scalar_lea.vmem %s2, %s665
        $region100: #{reviewkd_forward.1} parent=87 // pred_fallthru
          _
      $region88: #{reviewkd_forward.1} parent=5 // pred_fallthru
        _
      %p667 = scmp.le.s32.totalorder 1, %s36
      %p668 = scmp.lt.s32.totalorder %s36, 3
      %p669 = pnand %p667, %p668
      %p670 = pneg %p669
      // Predicated region
      $region101: #{reviewkd_forward.1} parent=5 // pred_check
        _
      $region102: #{reviewkd_forward.1} parent=5 // pred_check_branch
        %672 = sbr.rel (%p669) target = $region104
      $region103: #{reviewkd_forward.1} parent=5 // pred_region
        %s673 = ssub.s32 %s36, 1
        %p674 = scmp.lt.s32.totalorder %s41, 1
        %s675 = scalar_select %p674, %s41, 1
        %s676 = smul.addr %s675, 2
        %s677 = smul.addr %s676, 4
        %s678 = scalar_lea.vmem %s0, %s677
        %p679 = pneg %p62
        %p680 = pneg %p59
        %p681 = scmp.lt.s32.totalorder %s41, 1
        %s682 = scalar_select %p681, %s41, 1
        %s683 = smul.addr %s682, 8
        %s684 = smul.addr %s683, 4
        %s685 = scalar_lea.vmem %s1, %s684
        %p686 = pneg %p88
        %p687 = pneg %p85
        %p688 = scmp.lt.s32.totalorder %s41, 1
        %s689 = scalar_select %p688, %s41, 1
        %s690 = smul.addr %s689, 32
        %s691 = smul.addr %s690, 4
        %s692 = scalar_lea.vmem %s2, %s691
        %p693 = pneg %p114
        %p694 = pneg %p111
        %p695 = pneg %p135
        %p696 = pneg %p132
        %p697 = pneg %p156
        %p698 = pneg %p153
        %p699 = pneg %p177
        %p700 = pneg %p174
        %p701 = pneg %p198
        %p702 = pneg %p195
        %p703 = pneg %p219
        %p704 = pneg %p216
        %p705 = pneg %p240
        %p706 = pneg %p237
        %p707 = pneg %p261
        %p708 = pneg %p258
        %p709 = pneg %p282
        %p710 = pneg %p279
        %p711 = pneg %p303
        %p712 = pneg %p300
        %p713 = pneg %p324
        %p714 = pneg %p321
        %p715 = pneg %p345
        %p716 = pneg %p342
        %p717 = pneg %p366
        %p718 = pneg %p363
        %p719 = pneg %p387
        %p720 = pneg %p384
        %p721 = pneg %p408
        %p722 = pneg %p405
        %p723 = pneg %p429
        %p724 = pneg %p426
        %p725 = pneg %p450
        %p726 = pneg %p447
        %p727 = pneg %p471
        %p728 = pneg %p468
        %p729 = pneg %p492
        %p730 = pneg %p489
        %p731 = pneg %p518
        %p732 = pneg %p515
        %s733 = sand.u32 %s505, 1
        %s734 = scalar_lea.sflag [#allocation3], %s733
        %s735 = sand.u32 %s505, 1
        %s736 = smul.addr %s735, 16
        %s737 = scalar_lea.vmem [#allocation2], %s736
        %p738 = pneg %p544
        %p739 = pneg %p541
        %s740 = sand.u32 %s531, 1
        %s741 = scalar_lea.sflag [#allocation5], %s740
        %s742 = sand.u32 %s531, 1
        %s743 = smul.addr %s742, 64
        %s744 = scalar_lea.vmem [#allocation4], %s743
        %p745 = pneg %p570
        %p746 = pneg %p567
        %p747 = scmp.lt.s32.totalorder %s41, 1
        %s748 = scalar_select %p747, %s41, 1
        %s749 = smul.addr %s748, 32
        %s750 = smul.addr %s749, 8
        %s751 = scalar_lea.vmem %s23, %s750
        %p752 = scmp.lt.s32.totalorder %s41, 1
        %s753 = scalar_select %p752, %s41, 1
        %s754 = smul.addr %s753, 2
        %s755 = smul.addr %s754, 4
        %s756 = scalar_lea.vmem %s0, %s755
        %p757 = scmp.lt.s32.totalorder %s41, 1
        %s758 = scalar_select %p757, %s41, 1
        %s759 = smul.addr %s758, 8
        %s760 = smul.addr %s759, 4
        %s761 = scalar_lea.vmem %s1, %s760
        %p762 = scmp.lt.s32.totalorder %s41, 1
        %s763 = scalar_select %p762, %s41, 1
        %s764 = smul.addr %s763, 32
        %s765 = smul.addr %s764, 4
        %s766 = scalar_lea.vmem %s2, %s765
        %p767 = scmp.lt.s32.totalorder %s41, 1
        %s768 = scalar_select %p767, %s41, 1
        %s769 = smul.addr %s768, 32
        %s770 = smul.addr %s769, 8
        %s771 = scalar_lea.vmem %s23, %s770
        %v773 = vld [vmem:[%s4] sm:$0x3]
        %v774 = vld [vmem:[%s756] sm:$0xf]
        %v775 = vld [vmem:[%s756 + $0x4] sm:$0xf]
        %v776 = vld [vmem:[%s3] sm:$0xf]
        %v777 = vld [vmem:[%s3 + $0x4] sm:$0xf]
        %v778 = vld [vmem:[%s3 + $0x8] sm:$0xf]
        %v779 = vld [vmem:[%s3 + $0xc] sm:$0xf]
        %v780 = vld [vmem:[%s3 + $0x10] sm:$0xf]
        %v781 = vld [vmem:[%s3 + $0x14] sm:$0xf]
        %v782 = vld [vmem:[%s3 + $0x18] sm:$0xf]
        %v783 = vld [vmem:[%s3 + $0x1c] sm:$0xf]
        %v786 = vunpack.c.l.b16 %v774
        %v787 = vunpack.c.l.b16 %v775
        %v788 = vpack.c.b16 %v787, %v786
        %v797 = vunpack.c.l.b16 %v776
        %v798 = vunpack.c.l.b16 %v777
        %v799 = vunpack.c.l.b16 %v778
        %v800 = vunpack.c.l.b16 %v779
        %v801 = vunpack.c.l.b16 %v780
        %v802 = vunpack.c.l.b16 %v781
        %v803 = vunpack.c.l.b16 %v782
        %v804 = vunpack.c.l.b16 %v783
        %v805 = vpack.c.b16 %v798, %v797
        %v806 = vpack.c.b16 %v800, %v799
        %v807 = vpack.c.b16 %v802, %v801
        %v808 = vpack.c.b16 %v804, %v803
        %vm813 = vcmask 523264
        %v815 = vsel %vm813, %v788, 0
        %817 = vmatprep.subr.bf16.mxu0 0
        %818 = vmatpush1.bf16.msra.mxu0 %v805
        %819 = vmatprep.subr.bf16.mxu0 0
        %820 = vmatpush1.bf16.msra.mxu0 %v806
        %821 = vmatprep.subr.bf16.mxu0 0
        %822 = vmatpush1.bf16.msra.mxu0 %v807
        %823 = vmatprep.subr.bf16.mxu0 0
        %824 = vmatpush1.bf16.msra.mxu0 %v808
        %825 = vmatprep.subr.bf16.mxu0 0
        %826 = vmatpush1.bf16.msra.mxu0 0
        %827 = vmatprep.subr.bf16.mxu0 0
        %828 = vmatpush1.bf16.msra.mxu0 0
        %829 = vmatprep.subr.bf16.mxu0 0
        %830 = vmatpush1.bf16.msra.mxu0 0
        %831 = vmatprep.subr.bf16.mxu0 0
        %832 = vmatpush1.bf16.msra.mxu0 0
        %833 = vmatprep.subr.bf16.mxu0 0
        %834 = vmatpush1.bf16.msra.mxu0 0
        %835 = vmatprep.subr.bf16.mxu0 0
        %836 = vmatpush1.bf16.msra.mxu0 0
        %837 = vmatprep.subr.bf16.mxu0 0
        %838 = vmatpush1.bf16.msra.mxu0 0
        %839 = vmatprep.subr.bf16.mxu0 0
        %840 = vmatpush1.bf16.msra.mxu0 0
        %841 = vmatprep.subr.bf16.mxu0 0
        %842 = vmatpush1.bf16.msra.mxu0 0
        %843 = vmatprep.subr.bf16.mxu0 0
        %844 = vmatpush1.bf16.msra.mxu0 0
        %845 = vmatprep.subr.bf16.mxu0 0
        %846 = vmatpush1.bf16.msra.mxu0 0
        %847 = vmatprep.subr.bf16.mxu0 0
        %848 = vmatpush1.bf16.msra.mxu0 0
        %849 = vmatprep.mubr.bf16.mxu0 0
        %850 = vmatmul.mubr.bf16.gmra.mrb[0].mxu0 %v815
        %v851 = vpop.f32.mrb[0].mxu0
        %v852 = vadd.f32 0.0, %v851
        %v853 = vpop.f32.mrb[0].mxu0
        %v854 = vpop.f32.mrb[0].mxu0
        %v855 = vadd.f32 0.0, %v854
        %v856 = vpop.f32.mrb[0].mxu0
        %857 = vdwg.mxu0
        %v858 = vlaneseq
        %v859 = vshrl.u32 %v858, 7
        %v860 = vsub.s32 0, %v859
        %v861 = vrot.slane %v773, %v860
        %v862 = vmul.f32 %v852, %v861
        %v863 = vmul.f32 %v855, %v861
        %v864 = vlaneseq
        %v865 = vshrl.u32 %v864, 7
        %v866 = vsub.s32 1, %v865
        %v867 = vrot.slane %v773, %v866
        %v868 = vadd.f32 %v862, %v867
        %v869 = vadd.f32 %v863, %v867
        %v870 = vlaneseq
        %v871 = vshrl.u32 %v870, 7
        %v872 = vadd.s32 %v871, 8
        %vm873 = vcmp.lt.s32.totalorder %v871, 0
        %v874 = vsub.s32 0, %v871
        %v875 = vsel %vm873, %v874, %v871
        %v876 = vshrl.u32 %v875, 2
        %v877 = vand.u32 %v875, 3
        %v878 = vsub.s32 0, %v877
        %v879 = vsel %vm873, %v878, %v877
        %vm880 = vcmp.lt.s32.totalorder %v872, 0
        %v881 = vsub.s32 0, %v872
        %v882 = vsel %vm880, %v881, %v872
        %v883 = vshrl.u32 %v882, 2
        %v884 = vand.u32 %v882, 3
        %v885 = vsub.s32 0, %v884
        %v886 = vsel %vm880, %v885, %v884
        %vm887 = vcmp.ne.s32.totalorder %v879, 0
        %vm888 = vcmp.ne.s32.totalorder %v886, 0
        %vm889 = vcmp.lt.s32.totalorder %v879, 0
        %vm890 = vcmp.lt.s32.totalorder %v886, 0
        %vm891 = vmand %vm889, %vm887
        %vm892 = vmand %vm890, %vm888
        %v893 = vadd.s32 %v879, 4
        %v894 = vadd.s32 %v886, 4
        %v895 = vsel %vm891, %v893, %v879
        %v896 = vsel %vm892, %v894, %v886
        %vm897 = vcmp.ge.s32.totalorder %v895, 1
        %vm898 = vcmp.ge.s32.totalorder %v896, 1
        %vm899 = vcmp.le.s32.totalorder %v895, 2
        %vm900 = vcmp.le.s32.totalorder %v896, 2
        %v901 = vsel %vm897, 1, 0
        %v902 = vsel %vm898, 1, 0
        %vm903 = vcmp.eq.s32.totalorder %v901, 1
        %vm904 = vcmp.eq.s32.totalorder %v902, 1
        %vm908 = vcmask 1044480
        %v909 = vrot.slane 0.0, 3
        %v910 = vrot.slane %v868, 3
        %v911 = vsel %vm908, %v909, %v910
        %v912 = vrot.slane %v869, 3
        %v913 = vsel %vm908, %v910, %v912
        %v916 = vsel %vm903, %v911, 0.0
        %v917 = vsel %vm904, %v913, 0.0
        %v918 = vsel %vm899, 1, 0
        %v919 = vsel %vm900, 1, 0
        %vm920 = vcmp.eq.s32.totalorder %v918, 1
        %vm921 = vcmp.eq.s32.totalorder %v919, 1
        %vm922 = vcmask 1042432
        %v923 = vrot.slane 0.0, 5
        %v924 = vrot.slane %v868, 5
        %v925 = vsel %vm922, %v923, %v924
        %v926 = vrot.slane %v869, 5
        %v927 = vsel %vm922, %v924, %v926
        %v930 = vsel %vm920, %v925, 0.0
        %v931 = vsel %vm921, %v927, 0.0
        %vm932 = vcmask 1040384
        %v933 = vrot.slane 0.0, 7
        %v934 = vrot.slane %v868, 7
        %v935 = vsel %vm932, %v933, %v934
        %v936 = vrot.slane %v869, 7
        %v937 = vsel %vm932, %v934, %v936
        %v940 = vsel %vm903, %v935, 0.0
        %v941 = vsel %vm904, %v937, 0.0
        %vm942 = vcmask 1046528
        %v943 = vrot.slane %v868, 1
        %v944 = vrot.slane %v869, 1
        %v945 = vsel %vm942, %v943, %v944
        %v946 = vrot.slane 0.0, 1
        %v947 = vsel %vm942, %v944, %v946
        %v950 = vsel %vm920, %v945, 0.0
        %v951 = vsel %vm921, %v947, 0.0
        %v952 = vsel %vm908, %v912, %v909
        %v954 = vsel %vm903, %v913, 0.0
        %v955 = vsel %vm904, %v952, 0.0
        %v956 = vsel %vm922, %v926, %v923
        %v958 = vsel %vm920, %v927, 0.0
        %v959 = vsel %vm921, %v956, 0.0
        %vm960 = vcmask 1043456
        %v961 = vrot.slane 0.0, 4
        %v962 = vrot.slane %v868, 4
        %v963 = vsel %vm960, %v961, %v962
        %v964 = vrot.slane %v869, 4
        %v965 = vsel %vm960, %v962, %v964
        %966 = vrot.lane.b32.xlu0 %v963, 64
        %v967 = vpop.permute.xlu0 %966
        %968 = vrot.lane.b32.xlu0 %v965, 64
        %v969 = vpop.permute.xlu0 %968
        %974 = vrot.lane.b32.xlu0 %v940, 64
        %v975 = vpop.permute.xlu0 %974
        %976 = vrot.lane.b32.xlu0 %v941, 64
        %v977 = vpop.permute.xlu0 %976
        %982 = vrot.lane.b32.xlu0 %v950, 64
        %v983 = vpop.permute.xlu0 %982
        %984 = vrot.lane.b32.xlu0 %v951, 64
        %v985 = vpop.permute.xlu0 %984
        %v988 = vsel %vm960, %v964, %v961
        %989 = vrot.lane.b32.xlu0 %v988, 64
        %v990 = vpop.permute.xlu0 %989
        %v992 = vsel %vm813, %v916, %v967
        %v993 = vsel %vm813, %v917, %v969
        %v994 = vsel %vm813, %v930, %v975
        %v995 = vsel %vm813, %v931, %v977
        %v996 = vsel %vm813, %v868, %v983
        %v997 = vsel %vm813, %v869, %v985
        %v998 = vsel %vm813, %v954, %v969
        %v999 = vsel %vm813, %v955, %v990
        %v1000 = vpack.c.bf16 %v993, %v992
        %v1001 = vpack.c.bf16 %v995, %v994
        %v1002 = vpack.c.bf16 %v997, %v996
        %v1003 = vpack.c.bf16 %v999, %v998
        %v1004 = vpack.c.bf16 %v959, %v958
        %v1005 = vld [vmem:[%s6] sm:$0x3]
        %v1006 = vld [vmem:[%s5] sm:$0xf]
        %v1007 = vld [vmem:[%s5 + $0x4] sm:$0xf]
        %v1008 = vld [vmem:[%s5 + $0x8] sm:$0xf]
        %v1009 = vld [vmem:[%s5 + $0xc] sm:$0xf]
        %v1010 = vld [vmem:[%s5 + $0x10] sm:$0xf]
        %v1011 = vld [vmem:[%s5 + $0x14] sm:$0xf]
        %v1012 = vld [vmem:[%s5 + $0x18] sm:$0xf]
        %v1013 = vld [vmem:[%s5 + $0x1c] sm:$0xf]
        %v1014 = vld [vmem:[%s5 + $0x20] sm:$0xf]
        %v1015 = vld [vmem:[%s5 + $0x24] sm:$0xf]
        %v1016 = vld [vmem:[%s5 + $0x28] sm:$0xf]
        %v1017 = vld [vmem:[%s5 + $0x2c] sm:$0xf]
        %v1018 = vld [vmem:[%s5 + $0x30] sm:$0xf]
        %v1019 = vld [vmem:[%s5 + $0x34] sm:$0xf]
        %v1020 = vld [vmem:[%s5 + $0x38] sm:$0xf]
        %v1021 = vld [vmem:[%s5 + $0x3c] sm:$0xf]
        %v1022 = vld [vmem:[%s5 + $0x40] sm:$0xf]
        %v1023 = vld [vmem:[%s5 + $0x44] sm:$0xf]
        %v1024 = vld [vmem:[%s5 + $0x48] sm:$0xf]
        %v1025 = vld [vmem:[%s5 + $0x4c] sm:$0xf]
        %v1026 = vld [vmem:[%s5 + $0x50] sm:$0xf]
        %v1027 = vld [vmem:[%s5 + $0x54] sm:$0xf]
        %v1028 = vld [vmem:[%s5 + $0x58] sm:$0xf]
        %v1029 = vld [vmem:[%s5 + $0x5c] sm:$0xf]
        %v1030 = vld [vmem:[%s5 + $0x60] sm:$0xf]
        %v1031 = vld [vmem:[%s5 + $0x64] sm:$0xf]
        %v1032 = vld [vmem:[%s5 + $0x68] sm:$0xf]
        %v1033 = vld [vmem:[%s5 + $0x6c] sm:$0xf]
        %v1034 = vld [vmem:[%s5 + $0x70] sm:$0xf]
        %v1035 = vld [vmem:[%s5 + $0x74] sm:$0xf]
        %v1036 = vld [vmem:[%s5 + $0x78] sm:$0xf]
        %v1037 = vld [vmem:[%s5 + $0x7c] sm:$0xf]
        %v1038 = vld [vmem:[%s5 + $0x80] sm:$0xf]
        %v1039 = vld [vmem:[%s5 + $0x84] sm:$0xf]
        %v1040 = vld [vmem:[%s5 + $0x88] sm:$0xf]
        %v1041 = vld [vmem:[%s5 + $0x8c] sm:$0xf]
        %v1042 = vld [vmem:[%s5 + $0x90] sm:$0xf]
        %v1043 = vld [vmem:[%s5 + $0x94] sm:$0xf]
        %v1044 = vld [vmem:[%s5 + $0x98] sm:$0xf]
        %v1045 = vld [vmem:[%s5 + $0x9c] sm:$0xf]
        %v1046 = vld [vmem:[%s5 + $0xa0] sm:$0xf]
        %v1047 = vld [vmem:[%s5 + $0xa4] sm:$0xf]
        %v1048 = vld [vmem:[%s5 + $0xa8] sm:$0xf]
        %v1049 = vld [vmem:[%s5 + $0xac] sm:$0xf]
        %v1050 = vld [vmem:[%s5 + $0xb0] sm:$0xf]
        %v1051 = vld [vmem:[%s5 + $0xb4] sm:$0xf]
        %v1052 = vld [vmem:[%s5 + $0xb8] sm:$0xf]
        %v1053 = vld [vmem:[%s5 + $0xbc] sm:$0xf]
        %v1054 = vld [vmem:[%s5 + $0xc0] sm:$0xf]
        %v1055 = vld [vmem:[%s5 + $0xc4] sm:$0xf]
        %v1056 = vld [vmem:[%s5 + $0xc8] sm:$0xf]
        %v1057 = vld [vmem:[%s5 + $0xcc] sm:$0xf]
        %v1058 = vld [vmem:[%s5 + $0xd0] sm:$0xf]
        %v1059 = vld [vmem:[%s5 + $0xd4] sm:$0xf]
        %v1060 = vld [vmem:[%s5 + $0xd8] sm:$0xf]
        %v1061 = vld [vmem:[%s5 + $0xdc] sm:$0xf]
        %v1062 = vld [vmem:[%s5 + $0xe0] sm:$0xf]
        %v1063 = vld [vmem:[%s5 + $0xe4] sm:$0xf]
        %v1064 = vld [vmem:[%s5 + $0xe8] sm:$0xf]
        %v1065 = vld [vmem:[%s5 + $0xec] sm:$0xf]
        %v1066 = vld [vmem:[%s5 + $0xf0] sm:$0xf]
        %v1067 = vld [vmem:[%s5 + $0xf4] sm:$0xf]
        %v1068 = vld [vmem:[%s5 + $0xf8] sm:$0xf]
        %v1069 = vld [vmem:[%s5 + $0xfc] sm:$0xf]
        %v1070 = vld [vmem:[%s5 + $0x100] sm:$0xf]
        %v1071 = vld [vmem:[%s5 + $0x104] sm:$0xf]
        %v1072 = vld [vmem:[%s5 + $0x108] sm:$0xf]
        %v1073 = vld [vmem:[%s5 + $0x10c] sm:$0xf]
        %v1074 = vld [vmem:[%s5 + $0x110] sm:$0xf]
        %v1075 = vld [vmem:[%s5 + $0x114] sm:$0xf]
        %v1076 = vld [vmem:[%s5 + $0x118] sm:$0xf]
        %v1077 = vld [vmem:[%s5 + $0x11c] sm:$0xf]
        %v1150 = vunpack.c.l.b16 %v1006
        %v1151 = vunpack.c.l.b16 %v1007
        %v1152 = vunpack.c.l.b16 %v1008
        %v1153 = vunpack.c.l.b16 %v1009
        %v1154 = vunpack.c.l.b16 %v1010
        %v1155 = vunpack.c.l.b16 %v1011
        %v1156 = vunpack.c.l.b16 %v1012
        %v1157 = vunpack.c.l.b16 %v1013
        %v1158 = vunpack.c.l.b16 %v1014
        %v1159 = vunpack.c.l.b16 %v1015
        %v1160 = vunpack.c.l.b16 %v1016
        %v1161 = vunpack.c.l.b16 %v1017
        %v1162 = vunpack.c.l.b16 %v1018
        %v1163 = vunpack.c.l.b16 %v1019
        %v1164 = vunpack.c.l.b16 %v1020
        %v1165 = vunpack.c.l.b16 %v1021
        %v1166 = vunpack.c.l.b16 %v1022
        %v1167 = vunpack.c.l.b16 %v1023
        %v1168 = vunpack.c.l.b16 %v1024
        %v1169 = vunpack.c.l.b16 %v1025
        %v1170 = vunpack.c.l.b16 %v1026
        %v1171 = vunpack.c.l.b16 %v1027
        %v1172 = vunpack.c.l.b16 %v1028
        %v1173 = vunpack.c.l.b16 %v1029
        %v1174 = vunpack.c.l.b16 %v1030
        %v1175 = vunpack.c.l.b16 %v1031
        %v1176 = vunpack.c.l.b16 %v1032
        %v1177 = vunpack.c.l.b16 %v1033
        %v1178 = vunpack.c.l.b16 %v1034
        %v1179 = vunpack.c.l.b16 %v1035
        %v1180 = vunpack.c.l.b16 %v1036
        %v1181 = vunpack.c.l.b16 %v1037
        %v1182 = vunpack.c.l.b16 %v1038
        %v1183 = vunpack.c.l.b16 %v1039
        %v1184 = vunpack.c.l.b16 %v1040
        %v1185 = vunpack.c.l.b16 %v1041
        %v1186 = vunpack.c.l.b16 %v1042
        %v1187 = vunpack.c.l.b16 %v1043
        %v1188 = vunpack.c.l.b16 %v1044
        %v1189 = vunpack.c.l.b16 %v1045
        %v1190 = vunpack.c.l.b16 %v1046
        %v1191 = vunpack.c.l.b16 %v1047
        %v1192 = vunpack.c.l.b16 %v1048
        %v1193 = vunpack.c.l.b16 %v1049
        %v1194 = vunpack.c.l.b16 %v1050
        %v1195 = vunpack.c.l.b16 %v1051
        %v1196 = vunpack.c.l.b16 %v1052
        %v1197 = vunpack.c.l.b16 %v1053
        %v1198 = vunpack.c.l.b16 %v1054
        %v1199 = vunpack.c.l.b16 %v1055
        %v1200 = vunpack.c.l.b16 %v1056
        %v1201 = vunpack.c.l.b16 %v1057
        %v1202 = vunpack.c.l.b16 %v1058
        %v1203 = vunpack.c.l.b16 %v1059
        %v1204 = vunpack.c.l.b16 %v1060
        %v1205 = vunpack.c.l.b16 %v1061
        %v1206 = vunpack.c.l.b16 %v1062
        %v1207 = vunpack.c.l.b16 %v1063
        %v1208 = vunpack.c.l.b16 %v1064
        %v1209 = vunpack.c.l.b16 %v1065
        %v1210 = vunpack.c.l.b16 %v1066
        %v1211 = vunpack.c.l.b16 %v1067
        %v1212 = vunpack.c.l.b16 %v1068
        %v1213 = vunpack.c.l.b16 %v1069
        %v1214 = vunpack.c.l.b16 %v1070
        %v1215 = vunpack.c.l.b16 %v1071
        %v1216 = vunpack.c.l.b16 %v1072
        %v1217 = vunpack.c.l.b16 %v1073
        %v1218 = vunpack.c.l.b16 %v1074
        %v1219 = vunpack.c.l.b16 %v1075
        %v1220 = vunpack.c.l.b16 %v1076
        %v1221 = vunpack.c.l.b16 %v1077
        %v1222 = vpack.c.b16 %v1151, %v1150
        %v1223 = vpack.c.b16 %v1153, %v1152
        %v1224 = vpack.c.b16 %v1155, %v1154
        %v1225 = vpack.c.b16 %v1157, %v1156
        %v1226 = vpack.c.b16 %v1159, %v1158
        %v1227 = vpack.c.b16 %v1161, %v1160
        %v1228 = vpack.c.b16 %v1163, %v1162
        %v1229 = vpack.c.b16 %v1165, %v1164
        %v1230 = vpack.c.b16 %v1167, %v1166
        %v1231 = vpack.c.b16 %v1169, %v1168
        %v1232 = vpack.c.b16 %v1171, %v1170
        %v1233 = vpack.c.b16 %v1173, %v1172
        %v1234 = vpack.c.b16 %v1175, %v1174
        %v1235 = vpack.c.b16 %v1177, %v1176
        %v1236 = vpack.c.b16 %v1179, %v1178
        %v1237 = vpack.c.b16 %v1181, %v1180
        %v1238 = vpack.c.b16 %v1183, %v1182
        %v1239 = vpack.c.b16 %v1185, %v1184
        %v1240 = vpack.c.b16 %v1187, %v1186
        %v1241 = vpack.c.b16 %v1189, %v1188
        %v1242 = vpack.c.b16 %v1191, %v1190
        %v1243 = vpack.c.b16 %v1193, %v1192
        %v1244 = vpack.c.b16 %v1195, %v1194
        %v1245 = vpack.c.b16 %v1197, %v1196
        %v1246 = vpack.c.b16 %v1199, %v1198
        %v1247 = vpack.c.b16 %v1201, %v1200
        %v1248 = vpack.c.b16 %v1203, %v1202
        %v1249 = vpack.c.b16 %v1205, %v1204
        %v1250 = vpack.c.b16 %v1207, %v1206
        %v1251 = vpack.c.b16 %v1209, %v1208
        %v1252 = vpack.c.b16 %v1211, %v1210
        %v1253 = vpack.c.b16 %v1213, %v1212
        %v1254 = vpack.c.b16 %v1215, %v1214
        %v1255 = vpack.c.b16 %v1217, %v1216
        %v1256 = vpack.c.b16 %v1219, %v1218
        %v1257 = vpack.c.b16 %v1221, %v1220
        %v1295 = vsel %vm813, %v1004, 0
        %1297 = vmatprep.subr.bf16.mxu0 0
        %1298 = vmatpush1.bf16.msra.mxu0 %v1222
        %1299 = vmatprep.subr.bf16.mxu0 0
        %1300 = vmatpush1.bf16.msra.mxu0 %v1223
        %1301 = vmatprep.subr.bf16.mxu0 0
        %1302 = vmatpush1.bf16.msra.mxu0 %v1224
        %1303 = vmatprep.subr.bf16.mxu0 0
        %1304 = vmatpush1.bf16.msra.mxu0 %v1225
        %1305 = vmatprep.subr.bf16.mxu0 0
        %1306 = vmatpush1.bf16.msra.mxu0 %v1226
        %1307 = vmatprep.subr.bf16.mxu0 0
        %1308 = vmatpush1.bf16.msra.mxu0 %v1227
        %1309 = vmatprep.subr.bf16.mxu0 0
        %1310 = vmatpush1.bf16.msra.mxu0 %v1228
        %1311 = vmatprep.subr.bf16.mxu0 0
        %1312 = vmatpush1.bf16.msra.mxu0 %v1229
        %1313 = vmatprep.subr.bf16.mxu0 0
        %1314 = vmatpush1.bf16.msra.mxu0 %v1230
        %1315 = vmatprep.subr.bf16.mxu0 0
        %1316 = vmatpush1.bf16.msra.mxu0 %v1231
        %1317 = vmatprep.subr.bf16.mxu0 0
        %1318 = vmatpush1.bf16.msra.mxu0 %v1232
        %1319 = vmatprep.subr.bf16.mxu0 0
        %1320 = vmatpush1.bf16.msra.mxu0 %v1233
        %1321 = vmatprep.subr.bf16.mxu0 0
        %1322 = vmatpush1.bf16.msra.mxu0 %v1234
        %1323 = vmatprep.subr.bf16.mxu0 0
        %1324 = vmatpush1.bf16.msra.mxu0 %v1235
        %1325 = vmatprep.subr.bf16.mxu0 0
        %1326 = vmatpush1.bf16.msra.mxu0 %v1236
        %1327 = vmatprep.subr.bf16.mxu0 0
        %1328 = vmatpush1.bf16.msra.mxu0 %v1237
        %1329 = vmatprep.mubr.bf16.mxu0 %v1001
        %1330 = vmatmul.mubr.bf16.gmra.mrb[0].mxu0 %v1000
        %v1331 = vpop.f32.mrb[0].mxu0
        %v1332 = vadd.f32 0.0, %v1331
        %v1333 = vpop.f32.mrb[0].mxu0
        %v1334 = vpop.f32.mrb[0].mxu0
        %v1335 = vadd.f32 0.0, %v1334
        %v1336 = vpop.f32.mrb[0].mxu0
        %1337 = vdwg.mxu0
        %1338 = vmatprep.subr.bf16.mxu0 0
        %1339 = vmatpush1.bf16.msra.mxu0 %v1238
        %1340 = vmatprep.subr.bf16.mxu0 0
        %1341 = vmatpush1.bf16.msra.mxu0 %v1239
        %1342 = vmatprep.subr.bf16.mxu0 0
        %1343 = vmatpush1.bf16.msra.mxu0 %v1240
        %1344 = vmatprep.subr.bf16.mxu0 0
        %1345 = vmatpush1.bf16.msra.mxu0 %v1241
        %1346 = vmatprep.subr.bf16.mxu0 0
        %1347 = vmatpush1.bf16.msra.mxu0 %v1242
        %1348 = vmatprep.subr.bf16.mxu0 0
        %1349 = vmatpush1.bf16.msra.mxu0 %v1243
        %1350 = vmatprep.subr.bf16.mxu0 0
        %1351 = vmatpush1.bf16.msra.mxu0 %v1244
        %1352 = vmatprep.subr.bf16.mxu0 0
        %1353 = vmatpush1.bf16.msra.mxu0 %v1245
        %1354 = vmatprep.subr.bf16.mxu0 0
        %1355 = vmatpush1.bf16.msra.mxu0 %v1246
        %1356 = vmatprep.subr.bf16.mxu0 0
        %1357 = vmatpush1.bf16.msra.mxu0 %v1247
        %1358 = vmatprep.subr.bf16.mxu0 0
        %1359 = vmatpush1.bf16.msra.mxu0 %v1248
        %1360 = vmatprep.subr.bf16.mxu0 0
        %1361 = vmatpush1.bf16.msra.mxu0 %v1249
        %1362 = vmatprep.subr.bf16.mxu0 0
        %1363 = vmatpush1.bf16.msra.mxu0 %v1250
        %1364 = vmatprep.subr.bf16.mxu0 0
        %1365 = vmatpush1.bf16.msra.mxu0 %v1251
        %1366 = vmatprep.subr.bf16.mxu0 0
        %1367 = vmatpush1.bf16.msra.mxu0 %v1252
        %1368 = vmatprep.subr.bf16.mxu0 0
        %1369 = vmatpush1.bf16.msra.mxu0 %v1253
        %1370 = vmatprep.mubr.bf16.mxu0 %v1003
        %1371 = vmatmul.mubr.bf16.gmra.mrb[0].mxu0 %v1002
        %v1372 = vpop.f32.mrb[0].mxu0
        %v1373 = vadd.f32 %v1332, %v1372
        %v1374 = vpop.f32.mrb[0].mxu0
        %v1375 = vpop.f32.mrb[0].mxu0
        %v1376 = vadd.f32 %v1335, %v1375
        %v1377 = vpop.f32.mrb[0].mxu0
        %1378 = vdwg.mxu0
        %1379 = vmatprep.subr.bf16.mxu0 0
        %1380 = vmatpush1.bf16.msra.mxu0 %v1254
        %1381 = vmatprep.subr.bf16.mxu0 0
        %1382 = vmatpush1.bf16.msra.mxu0 %v1255
        %1383 = vmatprep.subr.bf16.mxu0 0
        %1384 = vmatpush1.bf16.msra.mxu0 %v1256
        %1385 = vmatprep.subr.bf16.mxu0 0
        %1386 = vmatpush1.bf16.msra.mxu0 %v1257
        %1387 = vmatprep.subr.bf16.mxu0 0
        %1388 = vmatpush1.bf16.msra.mxu0 0
        %1389 = vmatprep.subr.bf16.mxu0 0
        %1390 = vmatpush1.bf16.msra.mxu0 0
        %1391 = vmatprep.subr.bf16.mxu0 0
        %1392 = vmatpush1.bf16.msra.mxu0 0
        %1393 = vmatprep.subr.bf16.mxu0 0
        %1394 = vmatpush1.bf16.msra.mxu0 0
        %1395 = vmatprep.subr.bf16.mxu0 0
        %1396 = vmatpush1.bf16.msra.mxu0 0
        %1397 = vmatprep.subr.bf16.mxu0 0
        %1398 = vmatpush1.bf16.msra.mxu0 0
        %1399 = vmatprep.subr.bf16.mxu0 0
        %1400 = vmatpush1.bf16.msra.mxu0 0
        %1401 = vmatprep.subr.bf16.mxu0 0
        %1402 = vmatpush1.bf16.msra.mxu0 0
        %1403 = vmatprep.subr.bf16.mxu0 0
        %1404 = vmatpush1.bf16.msra.mxu0 0
        %1405 = vmatprep.subr.bf16.mxu0 0
        %1406 = vmatpush1.bf16.msra.mxu0 0
        %1407 = vmatprep.subr.bf16.mxu0 0
        %1408 = vmatpush1.bf16.msra.mxu0 0
        %1409 = vmatprep.subr.bf16.mxu0 0
        %1410 = vmatpush1.bf16.msra.mxu0 0
        %1411 = vmatprep.mubr.bf16.mxu0 0
        %1412 = vmatmul.mubr.bf16.gmra.mrb[0].mxu0 %v1295
        %v1413 = vpop.f32.mrb[0].mxu0
        %v1414 = vadd.f32 %v1373, %v1413
        %v1415 = vpop.f32.mrb[0].mxu0
        %v1416 = vpop.f32.mrb[0].mxu0
        %v1417 = vadd.f32 %v1376, %v1416
        %v1418 = vpop.f32.mrb[0].mxu0
        %1419 = vdwg.mxu0
        %v1420 = vlaneseq
        %v1421 = vshrl.u32 %v1420, 7
        %v1422 = vsub.s32 0, %v1421
        %v1423 = vrot.slane %v1005, %v1422
        %v1424 = vmul.f32 %v1414, %v1423
        %v1425 = vmul.f32 %v1417, %v1423
        %v1426 = vlaneseq
        %v1427 = vshrl.u32 %v1426, 7
        %v1428 = vsub.s32 1, %v1427
        %v1429 = vrot.slane %v1005, %v1428
        %v1430 = vadd.f32 %v1424, %v1429
        %v1431 = vadd.f32 %v1425, %v1429
        %1432 = vst.msk [vmem:[%s737] sm:$0xff] %vm813, %v1430
        %1433 = vst.msk [vmem:[%s737 + $0x8] sm:$0xff] %vm813, %v1431
        %v1434 = vld [vmem:[%s8] sm:$0x3]
        %v1435 = vld [vmem:[%s761] sm:$0xf]
        %v1436 = vld [vmem:[%s761 + $0x4] sm:$0xf]
        %v1437 = vld [vmem:[%s761 + $0x8] sm:$0xf]
        %v1438 = vld [vmem:[%s761 + $0xc] sm:$0xf]
        %v1439 = vld [vmem:[%s761 + $0x10] sm:$0xf]
        %v1440 = vld [vmem:[%s761 + $0x14] sm:$0xf]
        %v1441 = vld [vmem:[%s761 + $0x18] sm:$0xf]
        %v1442 = vld [vmem:[%s761 + $0x1c] sm:$0xf]
        %v1443 = vld [vmem:[%s7] sm:$0xf]
        %v1444 = vld [vmem:[%s7 + $0x4] sm:$0xf]
        %v1445 = vld [vmem:[%s7 + $0x8] sm:$0xf]
        %v1446 = vld [vmem:[%s7 + $0xc] sm:$0xf]
        %v1455 = vunpack.c.l.b16 %v1435
        %v1456 = vunpack.c.l.b16 %v1436
        %v1457 = vunpack.c.l.b16 %v1437
        %v1458 = vunpack.c.l.b16 %v1438
        %v1459 = vunpack.c.l.b16 %v1439
        %v1460 = vunpack.c.l.b16 %v1440
        %v1461 = vunpack.c.l.b16 %v1441
        %v1462 = vunpack.c.l.b16 %v1442
        %v1463 = vpack.c.b16 %v1456, %v1455
        %v1464 = vpack.c.b16 %v1458, %v1457
        %v1465 = vpack.c.b16 %v1460, %v1459
        %v1466 = vpack.c.b16 %v1462, %v1461
        %v1471 = vunpack.c.l.b16 %v1443
        %v1472 = vunpack.c.l.b16 %v1444
        %v1473 = vunpack.c.l.b16 %v1445
        %v1474 = vunpack.c.l.b16 %v1446
        %v1475 = vpack.c.b16 %v1472, %v1471
        %v1476 = vpack.c.b16 %v1474, %v1473
        %vm1479 = vcmask 261120
        %v1481 = vsel %vm1479, %v1463, 0
        %v1484 = vsel %vm1479, %v1464, 0
        %v1487 = vsel %vm1479, %v1465, 0
        %v1490 = vsel %vm1479, %v1466, 0
        %1492 = vmatprep.subr.bf16.mxu0 0
        %1493 = vmatpush1.bf16.msra.mxu0 %v1475
        %1494 = vmatprep.subr.bf16.mxu0 0
        %1495 = vmatpush1.bf16.msra.mxu0 %v1476
        %1496 = vmatprep.subr.bf16.mxu0 0
        %1497 = vmatpush1.bf16.msra.mxu0 0
        %1498 = vmatprep.subr.bf16.mxu0 0
        %1499 = vmatpush1.bf16.msra.mxu0 0
        %1500 = vmatprep.subr.bf16.mxu0 0
        %1501 = vmatpush1.bf16.msra.mxu0 0
        %1502 = vmatprep.subr.bf16.mxu0 0
        %1503 = vmatpush1.bf16.msra.mxu0 0
        %1504 = vmatprep.subr.bf16.mxu0 0
        %1505 = vmatpush1.bf16.msra.mxu0 0
        %1506 = vmatprep.subr.bf16.mxu0 0
        %1507 = vmatpush1.bf16.msra.mxu0 0
        %1508 = vmatprep.subr.bf16.mxu0 0
        %1509 = vmatpush1.bf16.msra.mxu0 0
        %1510 = vmatprep.subr.bf16.mxu0 0
        %1511 = vmatpush1.bf16.msra.mxu0 0
        %1512 = vmatprep.subr.bf16.mxu0 0
        %1513 = vmatpush1.bf16.msra.mxu0 0
        %1514 = vmatprep.subr.bf16.mxu0 0
        %1515 = vmatpush1.bf16.msra.mxu0 0
        %1516 = vmatprep.subr.bf16.mxu0 0
        %1517 = vmatpush1.bf16.msra.mxu0 0
        %1518 = vmatprep.subr.bf16.mxu0 0
        %1519 = vmatpush1.bf16.msra.mxu0 0
        %1520 = vmatprep.subr.bf16.mxu0 0
        %1521 = vmatpush1.bf16.msra.mxu0 0
        %1522 = vmatprep.subr.bf16.mxu0 0
        %1523 = vmatpush1.bf16.msra.mxu0 0
        %1524 = vmatprep.mubr.bf16.mxu0 0
        %1525 = vmatmul.mubr.bf16.gmra.mrb[0].mxu0 %v1481
        %v1526 = vpop.f32.mrb[0].mxu0
        %v1527 = vadd.f32 0.0, %v1526
        %v1528 = vpop.f32.mrb[0].mxu0
        %v1529 = vpop.f32.mrb[0].mxu0
        %v1530 = vadd.f32 0.0, %v1529
        %v1531 = vpop.f32.mrb[0].mxu0
        %1532 = vmatprep.mubr.bf16.mxu0 0
        %1533 = vmatmul.mubr.bf16.gmra.mrb[0].mxu0 %v1484
        %v1534 = vpop.f32.mrb[0].mxu0
        %v1535 = vadd.f32 0.0, %v1534
        %v1536 = vpop.f32.mrb[0].mxu0
        %v1537 = vpop.f32.mrb[0].mxu0
        %v1538 = vadd.f32 0.0, %v1537
        %v1539 = vpop.f32.mrb[0].mxu0
        %1540 = vmatprep.mubr.bf16.mxu0 0
        %1541 = vmatmul.mubr.bf16.gmra.mrb[0].mxu0 %v1487
        %v1542 = vpop.f32.mrb[0].mxu0
        %v1543 = vadd.f32 0.0, %v1542
        %v1544 = vpop.f32.mrb[0].mxu0
        %v1545 = vpop.f32.mrb[0].mxu0
        %v1546 = vadd.f32 0.0, %v1545
        %v1547 = vpop.f32.mrb[0].mxu0
        %1548 = vmatprep.mubr.bf16.mxu0 0
        %1549 = vmatmul.mubr.bf16.gmra.mrb[0].mxu0 %v1490
        %v1550 = vpop.f32.mrb[0].mxu0
        %v1551 = vadd.f32 0.0, %v1550
        %v1552 = vpop.f32.mrb[0].mxu0
        %v1553 = vpop.f32.mrb[0].mxu0
        %v1554 = vadd.f32 0.0, %v1553
        %v1555 = vpop.f32.mrb[0].mxu0
        %1556 = vdwg.mxu0
        %v1557 = vlaneseq
        %v1558 = vshrl.u32 %v1557, 7
        %v1559 = vsub.s32 0, %v1558
        %v1560 = vrot.slane %v1434, %v1559
        %v1561 = vmul.f32 %v1527, %v1560
        %v1562 = vmul.f32 %v1530, %v1560
        %v1563 = vmul.f32 %v1535, %v1560
        %v1564 = vmul.f32 %v1538, %v1560
        %v1565 = vmul.f32 %v1543, %v1560
        %v1566 = vmul.f32 %v1546, %v1560
        %v1567 = vmul.f32 %v1551, %v1560
        %v1568 = vmul.f32 %v1554, %v1560
        %v1569 = vlaneseq
        %v1570 = vshrl.u32 %v1569, 7
        %v1571 = vsub.s32 1, %v1570
        %v1572 = vrot.slane %v1434, %v1571
        %v1573 = vadd.f32 %v1561, %v1572
        %v1574 = vadd.f32 %v1562, %v1572
        %v1575 = vadd.f32 %v1563, %v1572
        %v1576 = vadd.f32 %v1564, %v1572
        %v1577 = vadd.f32 %v1565, %v1572
        %v1578 = vadd.f32 %v1566, %v1572
        %v1579 = vadd.f32 %v1567, %v1572
        %v1580 = vadd.f32 %v1568, %v1572
        %v1581 = vld [vmem:[%s13] sm:$0xff]
        %v1582 = vld [vmem:[%s13 + $0x8] sm:$0xff]
        %v1583 = vld [vmem:[%s13 + $0x10] sm:$0xff]
        %v1584 = vld [vmem:[%s13 + $0x18] sm:$0xff]
        %v1585 = vld [vmem:[%s13 + $0x20] sm:$0xff]
        %v1586 = vld [vmem:[%s13 + $0x28] sm:$0xff]
        %v1587 = vld [vmem:[%s13 + $0x30] sm:$0xff]
        %v1588 = vld [vmem:[%s13 + $0x38] sm:$0xff]
        %vm1589 = vcmask 130048
        %v1591 = vsel %vm1589, %v1581, 0
        %v1594 = vsel %vm1589, %v1582, 0
        %v1597 = vsel %vm1589, %v1583, 0
        %v1600 = vsel %vm1589, %v1584, 0
        %v1603 = vsel %vm1589, %v1585, 0
        %v1606 = vsel %vm1589, %v1586, 0
        %v1609 = vsel %vm1589, %v1587, 0
        %v1612 = vsel %vm1589, %v1588, 0
        %1614 = vmatprep.subr.mxu0 0.0
        %1615 = vmatpush1.msra.mxu0 %v868
        %1616 = vmatprep.subr.mxu0 0.0
        %1617 = vmatpush1.msra.mxu0 %v869
        %1618 = vmatprep.subr.mxu0 0.0
        %1619 = vmatpush1.msra.mxu0 0.0
        %1620 = vmatprep.subr.mxu0 0.0
        %1621 = vmatpush1.msra.mxu0 0.0
        %1622 = vmatprep.subr.mxu0 0.0
        %1623 = vmatpush1.msra.mxu0 0.0
        %1624 = vmatprep.subr.mxu0 0.0
        %1625 = vmatpush1.msra.mxu0 0.0
        %1626 = vmatprep.subr.mxu0 0.0
        %1627 = vmatpush1.msra.mxu0 0.0
        %1628 = vmatprep.subr.mxu0 0.0
        %1629 = vmatpush1.msra.mxu0 0.0
        %1630 = vmatprep.subr.mxu0 0.0
        %1631 = vmatpush1.msra.mxu0 0.0
        %1632 = vmatprep.subr.mxu0 0.0
        %1633 = vmatpush1.msra.mxu0 0.0
        %1634 = vmatprep.subr.mxu0 0.0
        %1635 = vmatpush1.msra.mxu0 0.0
        %1636 = vmatprep.subr.mxu0 0.0
        %1637 = vmatpush1.msra.mxu0 0.0
        %1638 = vmatprep.subr.mxu0 0.0
        %1639 = vmatpush1.msra.mxu0 0.0
        %1640 = vmatprep.subr.mxu0 0.0
        %1641 = vmatpush1.msra.mxu0 0.0
        %1642 = vmatprep.subr.mxu0 0.0
        %1643 = vmatpush1.msra.mxu0 0.0
        %1644 = vmatprep.subr.mxu0 0.0
        %1645 = vmatpush1.msra.mxu0 0.0
        %1646 = vmatprep.subr.mxu0 0.0
        %1647 = vmatpush1.msra.mxu0 0.0
        %1648 = vmatprep.subr.mxu0 0.0
        %1649 = vmatpush1.msra.mxu0 0.0
        %1650 = vmatprep.subr.mxu0 0.0
        %1651 = vmatpush1.msra.mxu0 0.0
        %1652 = vmatprep.subr.mxu0 0.0
        %1653 = vmatpush1.msra.mxu0 0.0
        %1654 = vmatprep.subr.mxu0 0.0
        %1655 = vmatpush1.msra.mxu0 0.0
        %1656 = vmatprep.subr.mxu0 0.0
        %1657 = vmatpush1.msra.mxu0 0.0
        %1658 = vmatprep.subr.mxu0 0.0
        %1659 = vmatpush1.msra.mxu0 0.0
        %1660 = vmatprep.subr.mxu0 0.0
        %1661 = vmatpush1.msra.mxu0 0.0
        %1662 = vmatprep.subr.mxu0 0.0
        %1663 = vmatpush1.msra.mxu0 0.0
        %1664 = vmatprep.subr.mxu0 0.0
        %1665 = vmatpush1.msra.mxu0 0.0
        %1666 = vmatprep.subr.mxu0 0.0
        %1667 = vmatpush1.msra.mxu0 0.0
        %1668 = vmatprep.subr.mxu0 0.0
        %1669 = vmatpush1.msra.mxu0 0.0
        %1670 = vmatprep.subr.mxu0 0.0
        %1671 = vmatpush1.msra.mxu0 0.0
        %1672 = vmatprep.subr.mxu0 0.0
        %1673 = vmatpush1.msra.mxu0 0.0
        %1674 = vmatprep.subr.mxu0 0.0
        %1675 = vmatpush1.msra.mxu0 0.0
        %1676 = vmatprep.subr.mxu0 0.0
        %1677 = vmatpush1.msra.mxu0 0.0
        %1678 = vmatprep.mubr.f32.mxu0 0.0
        %1679 = vmatmul.mubr.f32.gmra.mrb[0].mxu0 %v1591
        %v1680 = vpop.f32.mrb[0].mxu0
        %v1681 = vadd.f32 0.0, %v1680
        %v1682 = vpop.f32.mrb[0].mxu0
        %1683 = vmatprep.mubr.f32.mxu0 0.0
        %1684 = vmatmul.mubr.f32.gmra.mrb[0].mxu0 %v1594
        %v1685 = vpop.f32.mrb[0].mxu0
        %v1686 = vadd.f32 0.0, %v1685
        %v1687 = vpop.f32.mrb[0].mxu0
        %1688 = vmatprep.mubr.f32.mxu0 0.0
        %1689 = vmatmul.mubr.f32.gmra.mrb[0].mxu0 %v1597
        %v1690 = vpop.f32.mrb[0].mxu0
        %v1691 = vadd.f32 0.0, %v1690
        %v1692 = vpop.f32.mrb[0].mxu0
        %1693 = vmatprep.mubr.f32.mxu0 0.0
        %1694 = vmatmul.mubr.f32.gmra.mrb[0].mxu0 %v1600
        %v1695 = vpop.f32.mrb[0].mxu0
        %v1696 = vadd.f32 0.0, %v1695
        %v1697 = vpop.f32.mrb[0].mxu0
        %1698 = vmatprep.mubr.f32.mxu0 0.0
        %1699 = vmatmul.mubr.f32.gmra.mrb[0].mxu0 %v1603
        %v1700 = vpop.f32.mrb[0].mxu0
        %v1701 = vadd.f32 0.0, %v1700
        %v1702 = vpop.f32.mrb[0].mxu0
        %1703 = vmatprep.mubr.f32.mxu0 0.0
        %1704 = vmatmul.mubr.f32.gmra.mrb[0].mxu0 %v1606
        %v1705 = vpop.f32.mrb[0].mxu0
        %v1706 = vadd.f32 0.0, %v1705
        %v1707 = vpop.f32.mrb[0].mxu0
        %1708 = vmatprep.mubr.f32.mxu0 0.0
        %1709 = vmatmul.mubr.f32.gmra.mrb[0].mxu0 %v1609
        %v1710 = vpop.f32.mrb[0].mxu0
        %v1711 = vadd.f32 0.0, %v1710
        %v1712 = vpop.f32.mrb[0].mxu0
        %1713 = vmatprep.mubr.f32.mxu0 0.0
        %1714 = vmatmul.mubr.f32.gmra.mrb[0].mxu0 %v1612
        %v1715 = vpop.f32.mrb[0].mxu0
        %v1716 = vadd.f32 0.0, %v1715
        %v1717 = vpop.f32.mrb[0].mxu0
        %1718 = vdwg.mxu0
        %1727 = vrot.lane.b32.xlu0 %v1681, 64
        %v1728 = vpop.permute.xlu0 %1727
        %1729 = vrot.lane.b32.xlu0 %v1686, 64
        %v1730 = vpop.permute.xlu0 %1729
        %1731 = vrot.lane.b32.xlu0 %v1691, 64
        %v1732 = vpop.permute.xlu0 %1731
        %1733 = vrot.lane.b32.xlu0 %v1696, 64
        %v1734 = vpop.permute.xlu0 %1733
        %1735 = vrot.lane.b32.xlu0 %v1701, 64
        %v1736 = vpop.permute.xlu0 %1735
        %1737 = vrot.lane.b32.xlu0 %v1706, 64
        %v1738 = vpop.permute.xlu0 %1737
        %1739 = vrot.lane.b32.xlu0 %v1711, 64
        %v1740 = vpop.permute.xlu0 %1739
        %1741 = vrot.lane.b32.xlu0 %v1716, 64
        %v1742 = vpop.permute.xlu0 %1741
        %v1751 = vsel %vm813, %v1573, %v1728
        %v1752 = vsel %vm813, %v1574, %v1730
        %v1753 = vsel %vm813, %v1575, %v1732
        %v1754 = vsel %vm813, %v1576, %v1734
        %v1755 = vsel %vm813, %v1577, %v1736
        %v1756 = vsel %vm813, %v1578, %v1738
        %v1757 = vsel %vm813, %v1579, %v1740
        %v1758 = vsel %vm813, %v1580, %v1742
        %v1759 = vld [vmem:[%s9] sm:$0x3]
        %v1760 = vld [vmem:[%s10] sm:$0x1]
        %v1761 = vlaneseq
        %v1762 = vshrl.u32 %v1761, 7
        %v1763 = vsub.s32 0, %v1762
        %v1764 = vrot.slane %v1759, %v1763
        %v1765 = vmul.f32 %v1751, %v1764
        %v1766 = vmul.f32 %v1752, %v1764
        %v1767 = vmul.f32 %v1753, %v1764
        %v1768 = vmul.f32 %v1754, %v1764
        %v1769 = vmul.f32 %v1755, %v1764
        %v1770 = vmul.f32 %v1756, %v1764
        %v1771 = vmul.f32 %v1757, %v1764
        %v1772 = vmul.f32 %v1758, %v1764
        %1773 = vadd.xlane.f32.xlu0 %v1765
        %v1774 = vpop.xlane.xlu0 %1773
        %1775 = vadd.xlane.f32.xlu0 %v1766
        %v1776 = vpop.xlane.xlu0 %1775
        %1777 = vadd.xlane.f32.xlu0 %v1767
        %v1778 = vpop.xlane.xlu0 %1777
        %1779 = vadd.xlane.f32.xlu0 %v1768
        %v1780 = vpop.xlane.xlu0 %1779
        %1781 = vadd.xlane.f32.xlu0 %v1769
        %v1782 = vpop.xlane.xlu0 %1781
        %1783 = vadd.xlane.f32.xlu0 %v1770
        %v1784 = vpop.xlane.xlu0 %1783
        %1785 = vadd.xlane.f32.xlu0 %v1771
        %v1786 = vpop.xlane.xlu0 %1785
        %1787 = vadd.xlane.f32.xlu0 %v1772
        %v1788 = vpop.xlane.xlu0 %1787
        %v1790 = vlaneseq
        %v1791 = vshrl.u32 %v1790, 7
        %v1792 = vsub.s32 0, %v1791
        %v1793 = vrot.slane %v1760, %v1792
        %v1795 = vadd.f32 %v1774, %v1793
        %v1796 = vadd.f32 %v1776, %v1793
        %v1797 = vadd.f32 %v1778, %v1793
        %v1798 = vadd.f32 %v1780, %v1793
        %v1799 = vadd.f32 %v1782, %v1793
        %v1800 = vadd.f32 %v1784, %v1793
        %v1801 = vadd.f32 %v1786, %v1793
        %v1802 = vadd.f32 %v1788, %v1793
        %v1803 = vlaneseq
        %v1804 = vshrl.u32 %v1803, 7
        %v1805 = vsub.s32 1, %v1804
        %v1806 = vrot.slane %v1759, %v1805
        %v1807 = vmul.f32 %v1751, %v1806
        %v1808 = vmul.f32 %v1752, %v1806
        %v1809 = vmul.f32 %v1753, %v1806
        %v1810 = vmul.f32 %v1754, %v1806
        %v1811 = vmul.f32 %v1755, %v1806
        %v1812 = vmul.f32 %v1756, %v1806
        %v1813 = vmul.f32 %v1757, %v1806
        %v1814 = vmul.f32 %v1758, %v1806
        %1815 = vadd.xlane.f32.xlu0 %v1807
        %v1816 = vpop.xlane.xlu0 %1815
        %1817 = vadd.xlane.f32.xlu0 %v1808
        %v1818 = vpop.xlane.xlu0 %1817
        %1819 = vadd.xlane.f32.xlu0 %v1809
        %v1820 = vpop.xlane.xlu0 %1819
        %1821 = vadd.xlane.f32.xlu0 %v1810
        %v1822 = vpop.xlane.xlu0 %1821
        %1823 = vadd.xlane.f32.xlu0 %v1811
        %v1824 = vpop.xlane.xlu0 %1823
        %1825 = vadd.xlane.f32.xlu0 %v1812
        %v1826 = vpop.xlane.xlu0 %1825
        %1827 = vadd.xlane.f32.xlu0 %v1813
        %v1828 = vpop.xlane.xlu0 %1827
        %1829 = vadd.xlane.f32.xlu0 %v1814
        %v1830 = vpop.xlane.xlu0 %1829
        %v1831 = vadd.f32 %v1816, %v1793
        %v1832 = vadd.f32 %v1818, %v1793
        %v1833 = vadd.f32 %v1820, %v1793
        %v1834 = vadd.f32 %v1822, %v1793
        %v1835 = vadd.f32 %v1824, %v1793
        %v1836 = vadd.f32 %v1826, %v1793
        %v1837 = vadd.f32 %v1828, %v1793
        %v1838 = vadd.f32 %v1830, %v1793
        %v1839 = vxor.u32 %v1795, 2147483648
        %v1840 = vxor.u32 %v1796, 2147483648
        %v1841 = vxor.u32 %v1797, 2147483648
        %v1842 = vxor.u32 %v1798, 2147483648
        %v1843 = vxor.u32 %v1799, 2147483648
        %v1844 = vxor.u32 %v1800, 2147483648
        %v1845 = vxor.u32 %v1801, 2147483648
        %v1846 = vxor.u32 %v1802, 2147483648
        %v1847 = vmul.f32 %v1839, 1.442695
        %v1848 = vpow.pop %v1847
        %v1849 = vmul.f32 %v1840, 1.442695
        %v1850 = vpow.pop %v1849
        %v1851 = vmul.f32 %v1841, 1.442695
        %v1852 = vpow.pop %v1851
        %v1853 = vmul.f32 %v1842, 1.442695
        %v1854 = vpow.pop %v1853
        %v1855 = vmul.f32 %v1843, 1.442695
        %v1856 = vpow.pop %v1855
        %v1857 = vmul.f32 %v1844, 1.442695
        %v1858 = vpow.pop %v1857
        %v1859 = vmul.f32 %v1845, 1.442695
        %v1860 = vpow.pop %v1859
        %v1861 = vmul.f32 %v1846, 1.442695
        %v1862 = vpow.pop %v1861
        %v1863 = vadd.f32 %v1848, 1.0
        %v1864 = vadd.f32 %v1850, 1.0
        %v1865 = vadd.f32 %v1852, 1.0
        %v1866 = vadd.f32 %v1854, 1.0
        %v1867 = vadd.f32 %v1856, 1.0
        %v1868 = vadd.f32 %v1858, 1.0
        %v1869 = vadd.f32 %v1860, 1.0
        %v1870 = vadd.f32 %v1862, 1.0
        %v1871 = vrcp.pop %v1863
        %v1872 = vmul.f32 1.0, %v1871
        %v1873 = vrcp.pop %v1864
        %v1874 = vmul.f32 1.0, %v1873
        %v1875 = vrcp.pop %v1865
        %v1876 = vmul.f32 1.0, %v1875
        %v1877 = vrcp.pop %v1866
        %v1878 = vmul.f32 1.0, %v1877
        %v1879 = vrcp.pop %v1867
        %v1880 = vmul.f32 1.0, %v1879
        %v1881 = vrcp.pop %v1868
        %v1882 = vmul.f32 1.0, %v1881
        %v1883 = vrcp.pop %v1869
        %v1884 = vmul.f32 1.0, %v1883
        %v1885 = vrcp.pop %v1870
        %v1886 = vmul.f32 1.0, %v1885
        %1888 = vset.pattern.permute.xlu0 0
        %1889 = vperm.xlu0 %1888, %v1872
        %v1890 = vpop.permute.xlu0 %1889
        %1893 = vset.pattern.permute.xlu0 0
        %1894 = vperm.xlu0 %1893, %v1874
        %v1895 = vpop.permute.xlu0 %1894
        %1898 = vset.pattern.permute.xlu0 0
        %1899 = vperm.xlu0 %1898, %v1876
        %v1900 = vpop.permute.xlu0 %1899
        %1903 = vset.pattern.permute.xlu0 0
        %1904 = vperm.xlu0 %1903, %v1878
        %v1905 = vpop.permute.xlu0 %1904
        %1908 = vset.pattern.permute.xlu0 0
        %1909 = vperm.xlu0 %1908, %v1880
        %v1910 = vpop.permute.xlu0 %1909
        %1913 = vset.pattern.permute.xlu0 0
        %1914 = vperm.xlu0 %1913, %v1882
        %v1915 = vpop.permute.xlu0 %1914
        %1918 = vset.pattern.permute.xlu0 0
        %1919 = vperm.xlu0 %1918, %v1884
        %v1920 = vpop.permute.xlu0 %1919
        %1923 = vset.pattern.permute.xlu0 0
        %1924 = vperm.xlu0 %1923, %v1886
        %v1925 = vpop.permute.xlu0 %1924
        %v1927 = vmul.f32 %v1573, %v1890
        %v1928 = vmul.f32 %v1574, %v1895
        %v1929 = vmul.f32 %v1575, %v1900
        %v1930 = vmul.f32 %v1576, %v1905
        %v1931 = vmul.f32 %v1577, %v1910
        %v1932 = vmul.f32 %v1578, %v1915
        %v1933 = vmul.f32 %v1579, %v1920
        %v1934 = vmul.f32 %v1580, %v1925
        %v1935 = vxor.u32 %v1831, 2147483648
        %v1936 = vxor.u32 %v1832, 2147483648
        %v1937 = vxor.u32 %v1833, 2147483648
        %v1938 = vxor.u32 %v1834, 2147483648
        %v1939 = vxor.u32 %v1835, 2147483648
        %v1940 = vxor.u32 %v1836, 2147483648
        %v1941 = vxor.u32 %v1837, 2147483648
        %v1942 = vxor.u32 %v1838, 2147483648
        %v1943 = vmul.f32 %v1935, 1.442695
        %v1944 = vpow.pop %v1943
        %v1945 = vmul.f32 %v1936, 1.442695
        %v1946 = vpow.pop %v1945
        %v1947 = vmul.f32 %v1937, 1.442695
        %v1948 = vpow.pop %v1947
        %v1949 = vmul.f32 %v1938, 1.442695
        %v1950 = vpow.pop %v1949
        %v1951 = vmul.f32 %v1939, 1.442695
        %v1952 = vpow.pop %v1951
        %v1953 = vmul.f32 %v1940, 1.442695
        %v1954 = vpow.pop %v1953
        %v1955 = vmul.f32 %v1941, 1.442695
        %v1956 = vpow.pop %v1955
        %v1957 = vmul.f32 %v1942, 1.442695
        %v1958 = vpow.pop %v1957
        %v1959 = vadd.f32 %v1944, 1.0
        %v1960 = vadd.f32 %v1946, 1.0
        %v1961 = vadd.f32 %v1948, 1.0
        %v1962 = vadd.f32 %v1950, 1.0
        %v1963 = vadd.f32 %v1952, 1.0
        %v1964 = vadd.f32 %v1954, 1.0
        %v1965 = vadd.f32 %v1956, 1.0
        %v1966 = vadd.f32 %v1958, 1.0
        %v1967 = vrcp.pop %v1959
        %v1968 = vmul.f32 1.0, %v1967
        %v1969 = vrcp.pop %v1960
        %v1970 = vmul.f32 1.0, %v1969
        %v1971 = vrcp.pop %v1961
        %v1972 = vmul.f32 1.0, %v1971
        %v1973 = vrcp.pop %v1962
        %v1974 = vmul.f32 1.0, %v1973
        %v1975 = vrcp.pop %v1963
        %v1976 = vmul.f32 1.0, %v1975
        %v1977 = vrcp.pop %v1964
        %v1978 = vmul.f32 1.0, %v1977
        %v1979 = vrcp.pop %v1965
        %v1980 = vmul.f32 1.0, %v1979
        %v1981 = vrcp.pop %v1966
        %v1982 = vmul.f32 1.0, %v1981
        %1984 = vset.pattern.permute.xlu0 1
        %1985 = vperm.xlu0 %1984, %v1968
        %v1986 = vpop.permute.xlu0 %1985
        %1989 = vset.pattern.permute.xlu0 1
        %1990 = vperm.xlu0 %1989, %v1970
        %v1991 = vpop.permute.xlu0 %1990
        %1994 = vset.pattern.permute.xlu0 1
        %1995 = vperm.xlu0 %1994, %v1972
        %v1996 = vpop.permute.xlu0 %1995
        %1999 = vset.pattern.permute.xlu0 1
        %2000 = vperm.xlu0 %1999, %v1974
        %v2001 = vpop.permute.xlu0 %2000
        %2004 = vset.pattern.permute.xlu0 1
        %2005 = vperm.xlu0 %2004, %v1976
        %v2006 = vpop.permute.xlu0 %2005
        %2009 = vset.pattern.permute.xlu0 1
        %2010 = vperm.xlu0 %2009, %v1978
        %v2011 = vpop.permute.xlu0 %2010
        %2014 = vset.pattern.permute.xlu0 1
        %2015 = vperm.xlu0 %2014, %v1980
        %v2016 = vpop.permute.xlu0 %2015
        %2019 = vset.pattern.permute.xlu0 1
        %2020 = vperm.xlu0 %2019, %v1982
        %v2021 = vpop.permute.xlu0 %2020
        %v2023 = vmul.f32 %v1681, %v1986
        %v2024 = vmul.f32 %v1686, %v1991
        %v2025 = vmul.f32 %v1691, %v1996
        %v2026 = vmul.f32 %v1696, %v2001
        %v2027 = vmul.f32 %v1701, %v2006
        %v2028 = vmul.f32 %v1706, %v2011
        %v2029 = vmul.f32 %v1711, %v2016
        %v2030 = vmul.f32 %v1716, %v2021
        %v2031 = vadd.f32 %v1927, %v2023
        %v2032 = vadd.f32 %v1928, %v2024
        %v2033 = vadd.f32 %v1929, %v2025
        %v2034 = vadd.f32 %v1930, %v2026
        %v2035 = vadd.f32 %v1931, %v2027
        %v2036 = vadd.f32 %v1932, %v2028
        %v2037 = vadd.f32 %v1933, %v2029
        %v2038 = vadd.f32 %v1934, %v2030
        %v2039 = vadd.s32 %v871, 16
        %v2040 = vadd.s32 %v871, 24
        %v2041 = vadd.s32 %v871, 32
        %v2042 = vadd.s32 %v871, 40
        %v2043 = vadd.s32 %v871, 48
        %v2044 = vadd.s32 %v871, 56
        %vm2045 = vcmp.lt.s32.totalorder %v871, 0
        %v2046 = vsub.s32 0, %v871
        %v2047 = vsel %vm2045, %v2046, %v871
        %v2048 = vshrl.u32 %v2047, 3
        %v2049 = vand.u32 %v2047, 7
        %v2050 = vsub.s32 0, %v2049
        %v2051 = vsel %vm2045, %v2050, %v2049
        %vm2052 = vcmp.lt.s32.totalorder %v872, 0
        %v2053 = vsub.s32 0, %v872
        %v2054 = vsel %vm2052, %v2053, %v872
        %v2055 = vshrl.u32 %v2054, 3
        %v2056 = vand.u32 %v2054, 7
        %v2057 = vsub.s32 0, %v2056
        %v2058 = vsel %vm2052, %v2057, %v2056
        %vm2059 = vcmp.lt.s32.totalorder %v2039, 0
        %v2060 = vsub.s32 0, %v2039
        %v2061 = vsel %vm2059, %v2060, %v2039
        %v2062 = vshrl.u32 %v2061, 3
        %v2063 = vand.u32 %v2061, 7
        %v2064 = vsub.s32 0, %v2063
        %v2065 = vsel %vm2059, %v2064, %v2063
        %vm2066 = vcmp.lt.s32.totalorder %v2040, 0
        %v2067 = vsub.s32 0, %v2040
        %v2068 = vsel %vm2066, %v2067, %v2040
        %v2069 = vshrl.u32 %v2068, 3
        %v2070 = vand.u32 %v2068, 7
        %v2071 = vsub.s32 0, %v2070
        %v2072 = vsel %vm2066, %v2071, %v2070
        %vm2073 = vcmp.lt.s32.totalorder %v2041, 0
        %v2074 = vsub.s32 0, %v2041
        %v2075 = vsel %vm2073, %v2074, %v2041
        %v2076 = vshrl.u32 %v2075, 3
        %v2077 = vand.u32 %v2075, 7
        %v2078 = vsub.s32 0, %v2077
        %v2079 = vsel %vm2073, %v2078, %v2077
        %vm2080 = vcmp.lt.s32.totalorder %v2042, 0
        %v2081 = vsub.s32 0, %v2042
        %v2082 = vsel %vm2080, %v2081, %v2042
        %v2083 = vshrl.u32 %v2082, 3
        %v2084 = vand.u32 %v2082, 7
        %v2085 = vsub.s32 0, %v2084
        %v2086 = vsel %vm2080, %v2085, %v2084
        %vm2087 = vcmp.lt.s32.totalorder %v2043, 0
        %v2088 = vsub.s32 0, %v2043
        %v2089 = vsel %vm2087, %v2088, %v2043
        %v2090 = vshrl.u32 %v2089, 3
        %v2091 = vand.u32 %v2089, 7
        %v2092 = vsub.s32 0, %v2091
        %v2093 = vsel %vm2087, %v2092, %v2091
        %vm2094 = vcmp.lt.s32.totalorder %v2044, 0
        %v2095 = vsub.s32 0, %v2044
        %v2096 = vsel %vm2094, %v2095, %v2044
        %v2097 = vshrl.u32 %v2096, 3
        %v2098 = vand.u32 %v2096, 7
        %v2099 = vsub.s32 0, %v2098
        %v2100 = vsel %vm2094, %v2099, %v2098
        %vm2101 = vcmp.ne.s32.totalorder %v2051, 0
        %vm2102 = vcmp.ne.s32.totalorder %v2058, 0
        %vm2103 = vcmp.ne.s32.totalorder %v2065, 0
        %vm2104 = vcmp.ne.s32.totalorder %v2072, 0
        %vm2105 = vcmp.ne.s32.totalorder %v2079, 0
        %vm2106 = vcmp.ne.s32.totalorder %v2086, 0
        %vm2107 = vcmp.ne.s32.totalorder %v2093, 0
        %vm2108 = vcmp.ne.s32.totalorder %v2100, 0
        %vm2109 = vcmp.lt.s32.totalorder %v2051, 0
        %vm2110 = vcmp.lt.s32.totalorder %v2058, 0
        %vm2111 = vcmp.lt.s32.totalorder %v2065, 0
        %vm2112 = vcmp.lt.s32.totalorder %v2072, 0
        %vm2113 = vcmp.lt.s32.totalorder %v2079, 0
        %vm2114 = vcmp.lt.s32.totalorder %v2086, 0
        %vm2115 = vcmp.lt.s32.totalorder %v2093, 0
        %vm2116 = vcmp.lt.s32.totalorder %v2100, 0
        %vm2117 = vmand %vm2109, %vm2101
        %vm2118 = vmand %vm2110, %vm2102
        %vm2119 = vmand %vm2111, %vm2103
        %vm2120 = vmand %vm2112, %vm2104
        %vm2121 = vmand %vm2113, %vm2105
        %vm2122 = vmand %vm2114, %vm2106
        %vm2123 = vmand %vm2115, %vm2107
        %vm2124 = vmand %vm2116, %vm2108
        %v2125 = vadd.s32 %v2051, 8
        %v2126 = vadd.s32 %v2058, 8
        %v2127 = vadd.s32 %v2065, 8
        %v2128 = vadd.s32 %v2072, 8
        %v2129 = vadd.s32 %v2079, 8
        %v2130 = vadd.s32 %v2086, 8
        %v2131 = vadd.s32 %v2093, 8
        %v2132 = vadd.s32 %v2100, 8
        %v2133 = vsel %vm2117, %v2125, %v2051
        %v2134 = vsel %vm2118, %v2126, %v2058
        %v2135 = vsel %vm2119, %v2127, %v2065
        %v2136 = vsel %vm2120, %v2128, %v2072
        %v2137 = vsel %vm2121, %v2129, %v2079
        %v2138 = vsel %vm2122, %v2130, %v2086
        %v2139 = vsel %vm2123, %v2131, %v2093
        %v2140 = vsel %vm2124, %v2132, %v2100
        %vm2141 = vcmp.ge.s32.totalorder %v2133, 1
        %vm2142 = vcmp.ge.s32.totalorder %v2134, 1
        %vm2143 = vcmp.ge.s32.totalorder %v2135, 1
        %vm2144 = vcmp.ge.s32.totalorder %v2136, 1
        %vm2145 = vcmp.ge.s32.totalorder %v2137, 1
        %vm2146 = vcmp.ge.s32.totalorder %v2138, 1
        %vm2147 = vcmp.ge.s32.totalorder %v2139, 1
        %vm2148 = vcmp.ge.s32.totalorder %v2140, 1
        %vm2149 = vcmp.le.s32.totalorder %v2133, 6
        %vm2150 = vcmp.le.s32.totalorder %v2134, 6
        %vm2151 = vcmp.le.s32.totalorder %v2135, 6
        %vm2152 = vcmp.le.s32.totalorder %v2136, 6
        %vm2153 = vcmp.le.s32.totalorder %v2137, 6
        %vm2154 = vcmp.le.s32.totalorder %v2138, 6
        %vm2155 = vcmp.le.s32.totalorder %v2139, 6
        %vm2156 = vcmp.le.s32.totalorder %v2140, 6
        %v2157 = vsel %vm2141, 1, 0
        %v2158 = vsel %vm2142, 1, 0
        %v2159 = vsel %vm2143, 1, 0
        %v2160 = vsel %vm2144, 1, 0
        %v2161 = vsel %vm2145, 1, 0
        %v2162 = vsel %vm2146, 1, 0
        %v2163 = vsel %vm2147, 1, 0
        %v2164 = vsel %vm2148, 1, 0
        %vm2165 = vcmp.eq.s32.totalorder %v2157, 1
        %vm2166 = vcmp.eq.s32.totalorder %v2158, 1
        %vm2167 = vcmp.eq.s32.totalorder %v2159, 1
        %vm2168 = vcmp.eq.s32.totalorder %v2160, 1
        %vm2169 = vcmp.eq.s32.totalorder %v2161, 1
        %vm2170 = vcmp.eq.s32.totalorder %v2162, 1
        %vm2171 = vcmp.eq.s32.totalorder %v2163, 1
        %vm2172 = vcmp.eq.s32.totalorder %v2164, 1
        %v2180 = vsel %vm932, %v933, %v933
        %v2181 = vrot.slane %v2031, 7
        %v2182 = vsel %vm932, %v933, %v2181
        %v2183 = vrot.slane %v2032, 7
        %v2184 = vsel %vm932, %v2181, %v2183
        %v2185 = vrot.slane %v2033, 7
        %v2186 = vsel %vm932, %v2183, %v2185
        %v2187 = vrot.slane %v2034, 7
        %v2188 = vsel %vm932, %v2185, %v2187
        %v2189 = vrot.slane %v2035, 7
        %v2190 = vsel %vm932, %v2187, %v2189
        %v2191 = vrot.slane %v2036, 7
        %v2192 = vsel %vm932, %v2189, %v2191
        %v2193 = vrot.slane %v2037, 7
        %v2194 = vsel %vm932, %v2191, %v2193
        %v2203 = vsel %vm2165, %v2180, 0.0
        %v2204 = vsel %vm2166, %v2182, 0.0
        %v2205 = vsel %vm2167, %v2184, 0.0
        %v2206 = vsel %vm2168, %v2186, 0.0
        %v2207 = vsel %vm2169, %v2188, 0.0
        %v2208 = vsel %vm2170, %v2190, 0.0
        %v2209 = vsel %vm2171, %v2192, 0.0
        %v2210 = vsel %vm2172, %v2194, 0.0
        %v2211 = vsel %vm2149, 1, 0
        %v2212 = vsel %vm2150, 1, 0
        %v2213 = vsel %vm2151, 1, 0
        %v2214 = vsel %vm2152, 1, 0
        %v2215 = vsel %vm2153, 1, 0
        %v2216 = vsel %vm2154, 1, 0
        %v2217 = vsel %vm2155, 1, 0
        %v2218 = vsel %vm2156, 1, 0
        %vm2219 = vcmp.eq.s32.totalorder %v2211, 1
        %vm2220 = vcmp.eq.s32.totalorder %v2212, 1
        %vm2221 = vcmp.eq.s32.totalorder %v2213, 1
        %vm2222 = vcmp.eq.s32.totalorder %v2214, 1
        %vm2223 = vcmp.eq.s32.totalorder %v2215, 1
        %vm2224 = vcmp.eq.s32.totalorder %v2216, 1
        %vm2225 = vcmp.eq.s32.totalorder %v2217, 1
        %vm2226 = vcmp.eq.s32.totalorder %v2218, 1
        %v2228 = vrot.slane %v2031, 1
        %v2229 = vsel %vm942, %v946, %v2228
        %v2230 = vrot.slane %v2032, 1
        %v2231 = vsel %vm942, %v2228, %v2230
        %v2232 = vrot.slane %v2033, 1
        %v2233 = vsel %vm942, %v2230, %v2232
        %v2234 = vrot.slane %v2034, 1
        %v2235 = vsel %vm942, %v2232, %v2234
        %v2236 = vrot.slane %v2035, 1
        %v2237 = vsel %vm942, %v2234, %v2236
        %v2238 = vrot.slane %v2036, 1
        %v2239 = vsel %vm942, %v2236, %v2238
        %v2240 = vrot.slane %v2037, 1
        %v2241 = vsel %vm942, %v2238, %v2240
        %v2242 = vrot.slane %v2038, 1
        %v2243 = vsel %vm942, %v2240, %v2242
        %v2252 = vsel %vm2219, %v2229, 0.0
        %v2253 = vsel %vm2220, %v2231, 0.0
        %v2254 = vsel %vm2221, %v2233, 0.0
        %v2255 = vsel %vm2222, %v2235, 0.0
        %v2256 = vsel %vm2223, %v2237, 0.0
        %v2257 = vsel %vm2224, %v2239, 0.0
        %v2258 = vsel %vm2225, %v2241, 0.0
        %v2259 = vsel %vm2226, %v2243, 0.0
        %v2260 = vrot.slane %v2038, 7
        %v2261 = vsel %vm932, %v2193, %v2260
        %v2263 = vsel %vm2165, %v2182, 0.0
        %v2264 = vsel %vm2166, %v2184, 0.0
        %v2265 = vsel %vm2167, %v2186, 0.0
        %v2266 = vsel %vm2168, %v2188, 0.0
        %v2267 = vsel %vm2169, %v2190, 0.0
        %v2268 = vsel %vm2170, %v2192, 0.0
        %v2269 = vsel %vm2171, %v2194, 0.0
        %v2270 = vsel %vm2172, %v2261, 0.0
        %v2271 = vsel %vm942, %v2242, %v946
        %v2273 = vsel %vm2219, %v2231, 0.0
        %v2274 = vsel %vm2220, %v2233, 0.0
        %v2275 = vsel %vm2221, %v2235, 0.0
        %v2276 = vsel %vm2222, %v2237, 0.0
        %v2277 = vsel %vm2223, %v2239, 0.0
        %v2278 = vsel %vm2224, %v2241, 0.0
        %v2279 = vsel %vm2225, %v2243, 0.0
        %v2280 = vsel %vm2226, %v2271, 0.0
        %v2281 = vsel %vm932, %v2260, %v933
        %v2283 = vsel %vm2165, %v2184, 0.0
        %v2284 = vsel %vm2166, %v2186, 0.0
        %v2285 = vsel %vm2167, %v2188, 0.0
        %v2286 = vsel %vm2168, %v2190, 0.0
        %v2287 = vsel %vm2169, %v2192, 0.0
        %v2288 = vsel %vm2170, %v2194, 0.0
        %v2289 = vsel %vm2171, %v2261, 0.0
        %v2290 = vsel %vm2172, %v2281, 0.0
        %v2291 = vsel %vm942, %v946, %v946
        %v2293 = vsel %vm2219, %v2233, 0.0
        %v2294 = vsel %vm2220, %v2235, 0.0
        %v2295 = vsel %vm2221, %v2237, 0.0
        %v2296 = vsel %vm2222, %v2239, 0.0
        %v2297 = vsel %vm2223, %v2241, 0.0
        %v2298 = vsel %vm2224, %v2243, 0.0
        %v2299 = vsel %vm2225, %v2271, 0.0
        %v2300 = vsel %vm2226, %v2291, 0.0
        %2301 = vrot.lane.b32.xlu0 0.0, 64
        %v2302 = vpop.permute.xlu0 %2301
        %2303 = vrot.lane.b32.xlu0 %v2031, 64
        %v2304 = vpop.permute.xlu0 %2303
        %2305 = vrot.lane.b32.xlu0 %v2032, 64
        %v2306 = vpop.permute.xlu0 %2305
        %2307 = vrot.lane.b32.xlu0 %v2033, 64
        %v2308 = vpop.permute.xlu0 %2307
        %2309 = vrot.lane.b32.xlu0 %v2034, 64
        %v2310 = vpop.permute.xlu0 %2309
        %2311 = vrot.lane.b32.xlu0 %v2035, 64
        %v2312 = vpop.permute.xlu0 %2311
        %2313 = vrot.lane.b32.xlu0 %v2036, 64
        %v2314 = vpop.permute.xlu0 %2313
        %2315 = vrot.lane.b32.xlu0 %v2037, 64
        %v2316 = vpop.permute.xlu0 %2315
        %2333 = vrot.lane.b32.xlu0 %v2263, 64
        %v2334 = vpop.permute.xlu0 %2333
        %2335 = vrot.lane.b32.xlu0 %v2264, 64
        %v2336 = vpop.permute.xlu0 %2335
        %2337 = vrot.lane.b32.xlu0 %v2265, 64
        %v2338 = vpop.permute.xlu0 %2337
        %2339 = vrot.lane.b32.xlu0 %v2266, 64
        %v2340 = vpop.permute.xlu0 %2339
        %2341 = vrot.lane.b32.xlu0 %v2267, 64
        %v2342 = vpop.permute.xlu0 %2341
        %2343 = vrot.lane.b32.xlu0 %v2268, 64
        %v2344 = vpop.permute.xlu0 %2343
        %2345 = vrot.lane.b32.xlu0 %v2269, 64
        %v2346 = vpop.permute.xlu0 %2345
        %2347 = vrot.lane.b32.xlu0 %v2270, 64
        %v2348 = vpop.permute.xlu0 %2347
        %2365 = vrot.lane.b32.xlu0 %v2273, 64
        %v2366 = vpop.permute.xlu0 %2365
        %2367 = vrot.lane.b32.xlu0 %v2274, 64
        %v2368 = vpop.permute.xlu0 %2367
        %2369 = vrot.lane.b32.xlu0 %v2275, 64
        %v2370 = vpop.permute.xlu0 %2369
        %2371 = vrot.lane.b32.xlu0 %v2276, 64
        %v2372 = vpop.permute.xlu0 %2371
        %2373 = vrot.lane.b32.xlu0 %v2277, 64
        %v2374 = vpop.permute.xlu0 %2373
        %2375 = vrot.lane.b32.xlu0 %v2278, 64
        %v2376 = vpop.permute.xlu0 %2375
        %2377 = vrot.lane.b32.xlu0 %v2279, 64
        %v2378 = vpop.permute.xlu0 %2377
        %2379 = vrot.lane.b32.xlu0 %v2280, 64
        %v2380 = vpop.permute.xlu0 %2379
        %2389 = vrot.lane.b32.xlu0 %v2038, 64
        %v2390 = vpop.permute.xlu0 %2389
        %v2392 = vsel %vm813, %v2203, %v2302
        %v2393 = vsel %vm813, %v2204, %v2304
        %v2394 = vsel %vm813, %v2205, %v2306
        %v2395 = vsel %vm813, %v2206, %v2308
        %v2396 = vsel %vm813, %v2207, %v2310
        %v2397 = vsel %vm813, %v2208, %v2312
        %v2398 = vsel %vm813, %v2209, %v2314
        %v2399 = vsel %vm813, %v2210, %v2316
        %v2400 = vsel %vm813, %v2252, %v2334
        %v2401 = vsel %vm813, %v2253, %v2336
        %v2402 = vsel %vm813, %v2254, %v2338
        %v2403 = vsel %vm813, %v2255, %v2340
        %v2404 = vsel %vm813, %v2256, %v2342
        %v2405 = vsel %vm813, %v2257, %v2344
        %v2406 = vsel %vm813, %v2258, %v2346
        %v2407 = vsel %vm813, %v2259, %v2348
        %v2408 = vsel %vm813, %v2031, %v2366
        %v2409 = vsel %vm813, %v2032, %v2368
        %v2410 = vsel %vm813, %v2033, %v2370
        %v2411 = vsel %vm813, %v2034, %v2372
        %v2412 = vsel %vm813, %v2035, %v2374
        %v2413 = vsel %vm813, %v2036, %v2376
        %v2414 = vsel %vm813, %v2037, %v2378
        %v2415 = vsel %vm813, %v2038, %v2380
        %v2416 = vsel %vm813, %v2283, %v2306
        %v2417 = vsel %vm813, %v2284, %v2308
        %v2418 = vsel %vm813, %v2285, %v2310
        %v2419 = vsel %vm813, %v2286, %v2312
        %v2420 = vsel %vm813, %v2287, %v2314
        %v2421 = vsel %vm813, %v2288, %v2316
        %v2422 = vsel %vm813, %v2289, %v2390
        %v2423 = vsel %vm813, %v2290, %v2302
        %v2424 = vpack.c.bf16 %v2393, %v2392
        %v2425 = vpack.c.bf16 %v2401, %v2400
        %v2426 = vpack.c.bf16 %v2409, %v2408
        %v2427 = vpack.c.bf16 %v2417, %v2416
        %v2428 = vpack.c.bf16 %v2294, %v2293
        %v2429 = vpack.c.bf16 %v2395, %v2394
        %v2430 = vpack.c.bf16 %v2403, %v2402
        %v2431 = vpack.c.bf16 %v2411, %v2410
        %v2432 = vpack.c.bf16 %v2419, %v2418
        %v2433 = vpack.c.bf16 %v2296, %v2295
        %v2434 = vpack.c.bf16 %v2397, %v2396
        %v2435 = vpack.c.bf16 %v2405, %v2404
        %v2436 = vpack.c.bf16 %v2413, %v2412
        %v2437 = vpack.c.bf16 %v2421, %v2420
        %v2438 = vpack.c.bf16 %v2298, %v2297
        %v2439 = vpack.c.bf16 %v2399, %v2398
        %v2440 = vpack.c.bf16 %v2407, %v2406
        %v2441 = vpack.c.bf16 %v2415, %v2414
        %v2442 = vpack.c.bf16 %v2423, %v2422
        %v2443 = vpack.c.bf16 %v2300, %v2299
        %v2444 = vld [vmem:[%s12] sm:$0x3]
        %v2445 = vld [vmem:[%s11] sm:$0xf]
        %v2446 = vld [vmem:[%s11 + $0x4] sm:$0xf]
        %v2447 = vld [vmem:[%s11 + $0x8] sm:$0xf]
        %v2448 = vld [vmem:[%s11 + $0xc] sm:$0xf]
        %v2449 = vld [vmem:[%s11 + $0x10] sm:$0xf]
        %v2450 = vld [vmem:[%s11 + $0x14] sm:$0xf]
        %v2451 = vld [vmem:[%s11 + $0x18] sm:$0xf]
        %v2452 = vld [vmem:[%s11 + $0x1c] sm:$0xf]
        %v2453 = vld [vmem:[%s11 + $0x20] sm:$0xf]
        %v2454 = vld [vmem:[%s11 + $0x24] sm:$0xf]
        %v2455 = vld [vmem:[%s11 + $0x28] sm:$0xf]
        %v2456 = vld [vmem:[%s11 + $0x2c] sm:$0xf]
        %v2457 = vld [vmem:[%s11 + $0x30] sm:$0xf]
        %v2458 = vld [vmem:[%s11 + $0x34] sm:$0xf]
        %v2459 = vld [vmem:[%s11 + $0x38] sm:$0xf]
        %v2460 = vld [vmem:[%s11 + $0x3c] sm:$0xf]
        %v2461 = vld [vmem:[%s11 + $0x40] sm:$0xf]
        %v2462 = vld [vmem:[%s11 + $0x44] sm:$0xf]
        %v2463 = vld [vmem:[%s11 + $0x48] sm:$0xf]
        %v2464 = vld [vmem:[%s11 + $0x4c] sm:$0xf]
        %v2465 = vld [vmem:[%s11 + $0x50] sm:$0xf]
        %v2466 = vld [vmem:[%s11 + $0x54] sm:$0xf]
        %v2467 = vld [vmem:[%s11 + $0x58] sm:$0xf]
        %v2468 = vld [vmem:[%s11 + $0x5c] sm:$0xf]
        %v2469 = vld [vmem:[%s11 + $0x60] sm:$0xf]
        %v2470 = vld [vmem:[%s11 + $0x64] sm:$0xf]
        %v2471 = vld [vmem:[%s11 + $0x68] sm:$0xf]
        %v2472 = vld [vmem:[%s11 + $0x6c] sm:$0xf]
        %v2473 = vld [vmem:[%s11 + $0x70] sm:$0xf]
        %v2474 = vld [vmem:[%s11 + $0x74] sm:$0xf]
        %v2475 = vld [vmem:[%s11 + $0x78] sm:$0xf]
        %v2476 = vld [vmem:[%s11 + $0x7c] sm:$0xf]
        %v2477 = vld [vmem:[%s11 + $0x80] sm:$0xf]
        %v2478 = vld [vmem:[%s11 + $0x84] sm:$0xf]
        %v2479 = vld [vmem:[%s11 + $0x88] sm:$0xf]
        %v2480 = vld [vmem:[%s11 + $0x8c] sm:$0xf]
        %v2481 = vld [vmem:[%s11 + $0x90] sm:$0xf]
        %v2482 = vld [vmem:[%s11 + $0x94] sm:$0xf]
        %v2483 = vld [vmem:[%s11 + $0x98] sm:$0xf]
        %v2484 = vld [vmem:[%s11 + $0x9c] sm:$0xf]
        %v2485 = vld [vmem:[%s11 + $0xa0] sm:$0xf]
        %v2486 = vld [vmem:[%s11 + $0xa4] sm:$0xf]
        %v2487 = vld [vmem:[%s11 + $0xa8] sm:$0xf]
        %v2488 = vld [vmem:[%s11 + $0xac] sm:$0xf]
        %v2489 = vld [vmem:[%s11 + $0xb0] sm:$0xf]
        %v2490 = vld [vmem:[%s11 + $0xb4] sm:$0xf]
        %v2491 = vld [vmem:[%s11 + $0xb8] sm:$0xf]
        %v2492 = vld [vmem:[%s11 + $0xbc] sm:$0xf]
        %v2493 = vld [vmem:[%s11 + $0xc0] sm:$0xf]
        %v2494 = vld [vmem:[%s11 + $0xc4] sm:$0xf]
        %v2495 = vld [vmem:[%s11 + $0xc8] sm:$0xf]
        %v2496 = vld [vmem:[%s11 + $0xcc] sm:$0xf]
        %v2497 = vld [vmem:[%s11 + $0xd0] sm:$0xf]
        %v2498 = vld [vmem:[%s11 + $0xd4] sm:$0xf]
        %v2499 = vld [vmem:[%s11 + $0xd8] sm:$0xf]
        %v2500 = vld [vmem:[%s11 + $0xdc] sm:$0xf]
        %v2501 = vld [vmem:[%s11 + $0xe0] sm:$0xf]
        %v2502 = vld [vmem:[%s11 + $0xe4] sm:$0xf]
        %v2503 = vld [vmem:[%s11 + $0xe8] sm:$0xf]
        %v2504 = vld [vmem:[%s11 + $0xec] sm:$0xf]
        %v2505 = vld [vmem:[%s11 + $0xf0] sm:$0xf]
        %v2506 = vld [vmem:[%s11 + $0xf4] sm:$0xf]
        %v2507 = vld [vmem:[%s11 + $0xf8] sm:$0xf]
        %v2508 = vld [vmem:[%s11 + $0xfc] sm:$0xf]
        %v2509 = vld [vmem:[%s11 + $0x100] sm:$0xf]
        %v2510 = vld [vmem:[%s11 + $0x104] sm:$0xf]
        %v2511 = vld [vmem:[%s11 + $0x108] sm:$0xf]
        %v2512 = vld [vmem:[%s11 + $0x10c] sm:$0xf]
        %v2513 = vld [vmem:[%s11 + $0x110] sm:$0xf]
        %v2514 = vld [vmem:[%s11 + $0x114] sm:$0xf]
        %v2515 = vld [vmem:[%s11 + $0x118] sm:$0xf]
        %v2516 = vld [vmem:[%s11 + $0x11c] sm:$0xf]
        %v2589 = vunpack.c.l.b16 %v2445
        %v2590 = vunpack.c.l.b16 %v2446
        %v2591 = vunpack.c.l.b16 %v2447
        %v2592 = vunpack.c.l.b16 %v2448
        %v2593 = vunpack.c.l.b16 %v2449
        %v2594 = vunpack.c.l.b16 %v2450
        %v2595 = vunpack.c.l.b16 %v2451
        %v2596 = vunpack.c.l.b16 %v2452
        %v2597 = vunpack.c.l.b16 %v2453
        %v2598 = vunpack.c.l.b16 %v2454
        %v2599 = vunpack.c.l.b16 %v2455
        %v2600 = vunpack.c.l.b16 %v2456
        %v2601 = vunpack.c.l.b16 %v2457
        %v2602 = vunpack.c.l.b16 %v2458
        %v2603 = vunpack.c.l.b16 %v2459
        %v2604 = vunpack.c.l.b16 %v2460
        %v2605 = vunpack.c.l.b16 %v2461
        %v2606 = vunpack.c.l.b16 %v2462
        %v2607 = vunpack.c.l.b16 %v2463
        %v2608 = vunpack.c.l.b16 %v2464
        %v2609 = vunpack.c.l.b16 %v2465
        %v2610 = vunpack.c.l.b16 %v2466
        %v2611 = vunpack.c.l.b16 %v2467
        %v2612 = vunpack.c.l.b16 %v2468
        %v2613 = vunpack.c.l.b16 %v2469
        %v2614 = vunpack.c.l.b16 %v2470
        %v2615 = vunpack.c.l.b16 %v2471
        %v2616 = vunpack.c.l.b16 %v2472
        %v2617 = vunpack.c.l.b16 %v2473
        %v2618 = vunpack.c.l.b16 %v2474
        %v2619 = vunpack.c.l.b16 %v2475
        %v2620 = vunpack.c.l.b16 %v2476
        %v2621 = vunpack.c.l.b16 %v2477
        %v2622 = vunpack.c.l.b16 %v2478
        %v2623 = vunpack.c.l.b16 %v2479
        %v2624 = vunpack.c.l.b16 %v2480
        %v2625 = vunpack.c.l.b16 %v2481
        %v2626 = vunpack.c.l.b16 %v2482
        %v2627 = vunpack.c.l.b16 %v2483
        %v2628 = vunpack.c.l.b16 %v2484
        %v2629 = vunpack.c.l.b16 %v2485
        %v2630 = vunpack.c.l.b16 %v2486
        %v2631 = vunpack.c.l.b16 %v2487
        %v2632 = vunpack.c.l.b16 %v2488
        %v2633 = vunpack.c.l.b16 %v2489
        %v2634 = vunpack.c.l.b16 %v2490
        %v2635 = vunpack.c.l.b16 %v2491
        %v2636 = vunpack.c.l.b16 %v2492
        %v2637 = vunpack.c.l.b16 %v2493
        %v2638 = vunpack.c.l.b16 %v2494
        %v2639 = vunpack.c.l.b16 %v2495
        %v2640 = vunpack.c.l.b16 %v2496
        %v2641 = vunpack.c.l.b16 %v2497
        %v2642 = vunpack.c.l.b16 %v2498
        %v2643 = vunpack.c.l.b16 %v2499
        %v2644 = vunpack.c.l.b16 %v2500
        %v2645 = vunpack.c.l.b16 %v2501
        %v2646 = vunpack.c.l.b16 %v2502
        %v2647 = vunpack.c.l.b16 %v2503
        %v2648 = vunpack.c.l.b16 %v2504
        %v2649 = vunpack.c.l.b16 %v2505
        %v2650 = vunpack.c.l.b16 %v2506
        %v2651 = vunpack.c.l.b16 %v2507
        %v2652 = vunpack.c.l.b16 %v2508
        %v2653 = vunpack.c.l.b16 %v2509
        %v2654 = vunpack.c.l.b16 %v2510
        %v2655 = vunpack.c.l.b16 %v2511
        %v2656 = vunpack.c.l.b16 %v2512
        %v2657 = vunpack.c.l.b16 %v2513
        %v2658 = vunpack.c.l.b16 %v2514
        %v2659 = vunpack.c.l.b16 %v2515
        %v2660 = vunpack.c.l.b16 %v2516
        %v2661 = vpack.c.b16 %v2590, %v2589
        %v2662 = vpack.c.b16 %v2592, %v2591
        %v2663 = vpack.c.b16 %v2594, %v2593
        %v2664 = vpack.c.b16 %v2596, %v2595
        %v2665 = vpack.c.b16 %v2598, %v2597
        %v2666 = vpack.c.b16 %v2600, %v2599
        %v2667 = vpack.c.b16 %v2602, %v2601
        %v2668 = vpack.c.b16 %v2604, %v2603
        %v2669 = vpack.c.b16 %v2606, %v2605
        %v2670 = vpack.c.b16 %v2608, %v2607
        %v2671 = vpack.c.b16 %v2610, %v2609
        %v2672 = vpack.c.b16 %v2612, %v2611
        %v2673 = vpack.c.b16 %v2614, %v2613
        %v2674 = vpack.c.b16 %v2616, %v2615
        %v2675 = vpack.c.b16 %v2618, %v2617
        %v2676 = vpack.c.b16 %v2620, %v2619
        %v2677 = vpack.c.b16 %v2622, %v2621
        %v2678 = vpack.c.b16 %v2624, %v2623
        %v2679 = vpack.c.b16 %v2626, %v2625
        %v2680 = vpack.c.b16 %v2628, %v2627
        %v2681 = vpack.c.b16 %v2630, %v2629
        %v2682 = vpack.c.b16 %v2632, %v2631
        %v2683 = vpack.c.b16 %v2634, %v2633
        %v2684 = vpack.c.b16 %v2636, %v2635
        %v2685 = vpack.c.b16 %v2638, %v2637
        %v2686 = vpack.c.b16 %v2640, %v2639
        %v2687 = vpack.c.b16 %v2642, %v2641
        %v2688 = vpack.c.b16 %v2644, %v2643
        %v2689 = vpack.c.b16 %v2646, %v2645
        %v2690 = vpack.c.b16 %v2648, %v2647
        %v2691 = vpack.c.b16 %v2650, %v2649
        %v2692 = vpack.c.b16 %v2652, %v2651
        %v2693 = vpack.c.b16 %v2654, %v2653
        %v2694 = vpack.c.b16 %v2656, %v2655
        %v2695 = vpack.c.b16 %v2658, %v2657
        %v2696 = vpack.c.b16 %v2660, %v2659
        %v2734 = vsel %vm813, %v2428, 0
        %v2737 = vsel %vm813, %v2433, 0
        %v2740 = vsel %vm813, %v2438, 0
        %v2743 = vsel %vm813, %v2443, 0
        %2745 = vmatprep.subr.bf16.mxu0 0
        %2746 = vmatpush1.bf16.msra.mxu0 %v2661
        %2747 = vmatprep.subr.bf16.mxu0 0
        %2748 = vmatpush1.bf16.msra.mxu0 %v2662
        %2749 = vmatprep.subr.bf16.mxu0 0
        %2750 = vmatpush1.bf16.msra.mxu0 %v2663
        %2751 = vmatprep.subr.bf16.mxu0 0
        %2752 = vmatpush1.bf16.msra.mxu0 %v2664
        %2753 = vmatprep.subr.bf16.mxu0 0
        %2754 = vmatpush1.bf16.msra.mxu0 %v2665
        %2755 = vmatprep.subr.bf16.mxu0 0
        %2756 = vmatpush1.bf16.msra.mxu0 %v2666
        %2757 = vmatprep.subr.bf16.mxu0 0
        %2758 = vmatpush1.bf16.msra.mxu0 %v2667
        %2759 = vmatprep.subr.bf16.mxu0 0
        %2760 = vmatpush1.bf16.msra.mxu0 %v2668
        %2761 = vmatprep.subr.bf16.mxu0 0
        %2762 = vmatpush1.bf16.msra.mxu0 %v2669
        %2763 = vmatprep.subr.bf16.mxu0 0
        %2764 = vmatpush1.bf16.msra.mxu0 %v2670
        %2765 = vmatprep.subr.bf16.mxu0 0
        %2766 = vmatpush1.bf16.msra.mxu0 %v2671
        %2767 = vmatprep.subr.bf16.mxu0 0
        %2768 = vmatpush1.bf16.msra.mxu0 %v2672
        %2769 = vmatprep.subr.bf16.mxu0 0
        %2770 = vmatpush1.bf16.msra.mxu0 %v2673
        %2771 = vmatprep.subr.bf16.mxu0 0
        %2772 = vmatpush1.bf16.msra.mxu0 %v2674
        %2773 = vmatprep.subr.bf16.mxu0 0
        %2774 = vmatpush1.bf16.msra.mxu0 %v2675
        %2775 = vmatprep.subr.bf16.mxu0 0
        %2776 = vmatpush1.bf16.msra.mxu0 %v2676
        %2777 = vmatprep.mubr.bf16.mxu0 %v2425
        %2778 = vmatmul.mubr.bf16.gmra.mrb[0].mxu0 %v2424
        %v2779 = vpop.f32.mrb[0].mxu0
        %v2780 = vadd.f32 0.0, %v2779
        %v2781 = vpop.f32.mrb[0].mxu0
        %v2782 = vpop.f32.mrb[0].mxu0
        %v2783 = vadd.f32 0.0, %v2782
        %v2784 = vpop.f32.mrb[0].mxu0
        %2785 = vmatprep.mubr.bf16.mxu0 %v2430
        %2786 = vmatmul.mubr.bf16.gmra.mrb[0].mxu0 %v2429
        %v2787 = vpop.f32.mrb[0].mxu0
        %v2788 = vadd.f32 0.0, %v2787
        %v2789 = vpop.f32.mrb[0].mxu0
        %v2790 = vpop.f32.mrb[0].mxu0
        %v2791 = vadd.f32 0.0, %v2790
        %v2792 = vpop.f32.mrb[0].mxu0
        %2793 = vmatprep.mubr.bf16.mxu0 %v2435
        %2794 = vmatmul.mubr.bf16.gmra.mrb[0].mxu0 %v2434
        %v2795 = vpop.f32.mrb[0].mxu0
        %v2796 = vadd.f32 0.0, %v2795
        %v2797 = vpop.f32.mrb[0].mxu0
        %v2798 = vpop.f32.mrb[0].mxu0
        %v2799 = vadd.f32 0.0, %v2798
        %v2800 = vpop.f32.mrb[0].mxu0
        %2801 = vmatprep.mubr.bf16.mxu0 %v2440
        %2802 = vmatmul.mubr.bf16.gmra.mrb[0].mxu0 %v2439
        %v2803 = vpop.f32.mrb[0].mxu0
        %v2804 = vadd.f32 0.0, %v2803
        %v2805 = vpop.f32.mrb[0].mxu0
        %v2806 = vpop.f32.mrb[0].mxu0
        %v2807 = vadd.f32 0.0, %v2806
        %v2808 = vpop.f32.mrb[0].mxu0
        %2809 = vdwg.mxu0
        %2810 = vmatprep.subr.bf16.mxu0 0
        %2811 = vmatpush1.bf16.msra.mxu0 %v2677
        %2812 = vmatprep.subr.bf16.mxu0 0
        %2813 = vmatpush1.bf16.msra.mxu0 %v2678
        %2814 = vmatprep.subr.bf16.mxu0 0
        %2815 = vmatpush1.bf16.msra.mxu0 %v2679
        %2816 = vmatprep.subr.bf16.mxu0 0
        %2817 = vmatpush1.bf16.msra.mxu0 %v2680
        %2818 = vmatprep.subr.bf16.mxu0 0
        %2819 = vmatpush1.bf16.msra.mxu0 %v2681
        %2820 = vmatprep.subr.bf16.mxu0 0
        %2821 = vmatpush1.bf16.msra.mxu0 %v2682
        %2822 = vmatprep.subr.bf16.mxu0 0
        %2823 = vmatpush1.bf16.msra.mxu0 %v2683
        %2824 = vmatprep.subr.bf16.mxu0 0
        %2825 = vmatpush1.bf16.msra.mxu0 %v2684
        %2826 = vmatprep.subr.bf16.mxu0 0
        %2827 = vmatpush1.bf16.msra.mxu0 %v2685
        %2828 = vmatprep.subr.bf16.mxu0 0
        %2829 = vmatpush1.bf16.msra.mxu0 %v2686
        %2830 = vmatprep.subr.bf16.mxu0 0
        %2831 = vmatpush1.bf16.msra.mxu0 %v2687
        %2832 = vmatprep.subr.bf16.mxu0 0
        %2833 = vmatpush1.bf16.msra.mxu0 %v2688
        %2834 = vmatprep.subr.bf16.mxu0 0
        %2835 = vmatpush1.bf16.msra.mxu0 %v2689
        %2836 = vmatprep.subr.bf16.mxu0 0
        %2837 = vmatpush1.bf16.msra.mxu0 %v2690
        %2838 = vmatprep.subr.bf16.mxu0 0
        %2839 = vmatpush1.bf16.msra.mxu0 %v2691
        %2840 = vmatprep.subr.bf16.mxu0 0
        %2841 = vmatpush1.bf16.msra.mxu0 %v2692
        %2842 = vmatprep.mubr.bf16.mxu0 %v2427
        %2843 = vmatmul.mubr.bf16.gmra.mrb[0].mxu0 %v2426
        %v2844 = vpop.f32.mrb[0].mxu0
        %v2845 = vadd.f32 %v2780, %v2844
        %v2846 = vpop.f32.mrb[0].mxu0
        %v2847 = vpop.f32.mrb[0].mxu0
        %v2848 = vadd.f32 %v2783, %v2847
        %v2849 = vpop.f32.mrb[0].mxu0
        %2850 = vmatprep.mubr.bf16.mxu0 %v2432
        %2851 = vmatmul.mubr.bf16.gmra.mrb[0].mxu0 %v2431
        %v2852 = vpop.f32.mrb[0].mxu0
        %v2853 = vadd.f32 %v2788, %v2852
        %v2854 = vpop.f32.mrb[0].mxu0
        %v2855 = vpop.f32.mrb[0].mxu0
        %v2856 = vadd.f32 %v2791, %v2855
        %v2857 = vpop.f32.mrb[0].mxu0
        %2858 = vmatprep.mubr.bf16.mxu0 %v2437
        %2859 = vmatmul.mubr.bf16.gmra.mrb[0].mxu0 %v2436
        %v2860 = vpop.f32.mrb[0].mxu0
        %v2861 = vadd.f32 %v2796, %v2860
        %v2862 = vpop.f32.mrb[0].mxu0
        %v2863 = vpop.f32.mrb[0].mxu0
        %v2864 = vadd.f32 %v2799, %v2863
        %v2865 = vpop.f32.mrb[0].mxu0
        %2866 = vmatprep.mubr.bf16.mxu0 %v2442
        %2867 = vmatmul.mubr.bf16.gmra.mrb[0].mxu0 %v2441
        %v2868 = vpop.f32.mrb[0].mxu0
        %v2869 = vadd.f32 %v2804, %v2868
        %v2870 = vpop.f32.mrb[0].mxu0
        %v2871 = vpop.f32.mrb[0].mxu0
        %v2872 = vadd.f32 %v2807, %v2871
        %v2873 = vpop.f32.mrb[0].mxu0
        %2874 = vdwg.mxu0
        %2875 = vmatprep.subr.bf16.mxu0 0
        %2876 = vmatpush1.bf16.msra.mxu0 %v2693
        %2877 = vmatprep.subr.bf16.mxu0 0
        %2878 = vmatpush1.bf16.msra.mxu0 %v2694
        %2879 = vmatprep.subr.bf16.mxu0 0
        %2880 = vmatpush1.bf16.msra.mxu0 %v2695
        %2881 = vmatprep.subr.bf16.mxu0 0
        %2882 = vmatpush1.bf16.msra.mxu0 %v2696
        %2883 = vmatprep.subr.bf16.mxu0 0
        %2884 = vmatpush1.bf16.msra.mxu0 0
        %2885 = vmatprep.subr.bf16.mxu0 0
        %2886 = vmatpush1.bf16.msra.mxu0 0
        %2887 = vmatprep.subr.bf16.mxu0 0
        %2888 = vmatpush1.bf16.msra.mxu0 0
        %2889 = vmatprep.subr.bf16.mxu0 0
        %2890 = vmatpush1.bf16.msra.mxu0 0
        %2891 = vmatprep.subr.bf16.mxu0 0
        %2892 = vmatpush1.bf16.msra.mxu0 0
        %2893 = vmatprep.subr.bf16.mxu0 0
        %2894 = vmatpush1.bf16.msra.mxu0 0
        %2895 = vmatprep.subr.bf16.mxu0 0
        %2896 = vmatpush1.bf16.msra.mxu0 0
        %2897 = vmatprep.subr.bf16.mxu0 0
        %2898 = vmatpush1.bf16.msra.mxu0 0
        %2899 = vmatprep.subr.bf16.mxu0 0
        %2900 = vmatpush1.bf16.msra.mxu0 0
        %2901 = vmatprep.subr.bf16.mxu0 0
        %2902 = vmatpush1.bf16.msra.mxu0 0
        %2903 = vmatprep.subr.bf16.mxu0 0
        %2904 = vmatpush1.bf16.msra.mxu0 0
        %2905 = vmatprep.subr.bf16.mxu0 0
        %2906 = vmatpush1.bf16.msra.mxu0 0
        %2907 = vmatprep.mubr.bf16.mxu0 0
        %2908 = vmatmul.mubr.bf16.gmra.mrb[0].mxu0 %v2734
        %v2909 = vpop.f32.mrb[0].mxu0
        %v2910 = vadd.f32 %v2845, %v2909
        %v2911 = vpop.f32.mrb[0].mxu0
        %v2912 = vpop.f32.mrb[0].mxu0
        %v2913 = vadd.f32 %v2848, %v2912
        %v2914 = vpop.f32.mrb[0].mxu0
        %2915 = vmatprep.mubr.bf16.mxu0 0
        %2916 = vmatmul.mubr.bf16.gmra.mrb[0].mxu0 %v2737
        %v2917 = vpop.f32.mrb[0].mxu0
        %v2918 = vadd.f32 %v2853, %v2917
        %v2919 = vpop.f32.mrb[0].mxu0
        %v2920 = vpop.f32.mrb[0].mxu0
        %v2921 = vadd.f32 %v2856, %v2920
        %v2922 = vpop.f32.mrb[0].mxu0
        %2923 = vmatprep.mubr.bf16.mxu0 0
        %2924 = vmatmul.mubr.bf16.gmra.mrb[0].mxu0 %v2740
        %v2925 = vpop.f32.mrb[0].mxu0
        %v2926 = vadd.f32 %v2861, %v2925
        %v2927 = vpop.f32.mrb[0].mxu0
        %v2928 = vpop.f32.mrb[0].mxu0
        %v2929 = vadd.f32 %v2864, %v2928
        %v2930 = vpop.f32.mrb[0].mxu0
        %2931 = vmatprep.mubr.bf16.mxu0 0
        %2932 = vmatmul.mubr.bf16.gmra.mrb[0].mxu0 %v2743
        %v2933 = vpop.f32.mrb[0].mxu0
        %v2934 = vadd.f32 %v2869, %v2933
        %v2935 = vpop.f32.mrb[0].mxu0
        %v2936 = vpop.f32.mrb[0].mxu0
        %v2937 = vadd.f32 %v2872, %v2936
        %v2938 = vpop.f32.mrb[0].mxu0
        %2939 = vdwg.mxu0
        %v2940 = vlaneseq
        %v2941 = vshrl.u32 %v2940, 7
        %v2942 = vsub.s32 0, %v2941
        %v2943 = vrot.slane %v2444, %v2942
        %v2944 = vmul.f32 %v2910, %v2943
        %v2945 = vmul.f32 %v2913, %v2943
        %v2946 = vmul.f32 %v2918, %v2943
        %v2947 = vmul.f32 %v2921, %v2943
        %v2948 = vmul.f32 %v2926, %v2943
        %v2949 = vmul.f32 %v2929, %v2943
        %v2950 = vmul.f32 %v2934, %v2943
        %v2951 = vmul.f32 %v2937, %v2943
        %v2952 = vlaneseq
        %v2953 = vshrl.u32 %v2952, 7
        %v2954 = vsub.s32 1, %v2953
        %v2955 = vrot.slane %v2444, %v2954
        %v2956 = vadd.f32 %v2944, %v2955
        %v2957 = vadd.f32 %v2945, %v2955
        %v2958 = vadd.f32 %v2946, %v2955
        %v2959 = vadd.f32 %v2947, %v2955
        %v2960 = vadd.f32 %v2948, %v2955
        %v2961 = vadd.f32 %v2949, %v2955
        %v2962 = vadd.f32 %v2950, %v2955
        %v2963 = vadd.f32 %v2951, %v2955
        %2964 = vst.msk [vmem:[%s744] sm:$0xff] %vm1479, %v2956
        %2965 = vst.msk [vmem:[%s744 + $0x8] sm:$0xff] %vm1479, %v2957
        %2966 = vst.msk [vmem:[%s744 + $0x10] sm:$0xff] %vm1479, %v2958
        %2967 = vst.msk [vmem:[%s744 + $0x18] sm:$0xff] %vm1479, %v2959
        %2968 = vst.msk [vmem:[%s744 + $0x20] sm:$0xff] %vm1479, %v2960
        %2969 = vst.msk [vmem:[%s744 + $0x28] sm:$0xff] %vm1479, %v2961
        %2970 = vst.msk [vmem:[%s744 + $0x30] sm:$0xff] %vm1479, %v2962
        %2971 = vst.msk [vmem:[%s744 + $0x38] sm:$0xff] %vm1479, %v2963
        %v2972 = vld [vmem:[%s15] sm:$0x3]
        %v2973 = vld [vmem:[%s766] sm:$0xf]
        %v2974 = vld [vmem:[%s766 + $0x4] sm:$0xf]
        %v2975 = vld [vmem:[%s766 + $0x8] sm:$0xf]
        %v2976 = vld [vmem:[%s766 + $0xc] sm:$0xf]
        %v2977 = vld [vmem:[%s766 + $0x10] sm:$0xf]
        %v2978 = vld [vmem:[%s766 + $0x14] sm:$0xf]
        %v2979 = vld [vmem:[%s766 + $0x18] sm:$0xf]
        %v2980 = vld [vmem:[%s766 + $0x1c] sm:$0xf]
        %v2981 = vld [vmem:[%s766 + $0x20] sm:$0xf]
        %v2982 = vld [vmem:[%s766 + $0x24] sm:$0xf]
        %v2983 = vld [vmem:[%s766 + $0x28] sm:$0xf]
        %v2984 = vld [vmem:[%s766 + $0x2c] sm:$0xf]
        %v2985 = vld [vmem:[%s766 + $0x30] sm:$0xf]
        %v2986 = vld [vmem:[%s766 + $0x34] sm:$0xf]
        %v2987 = vld [vmem:[%s766 + $0x38] sm:$0xf]
        %v2988 = vld [vmem:[%s766 + $0x3c] sm:$0xf]
        %v2989 = vld [vmem:[%s766 + $0x40] sm:$0xf]
        %v2990 = vld [vmem:[%s766 + $0x44] sm:$0xf]
        %v2991 = vld [vmem:[%s766 + $0x48] sm:$0xf]
        %v2992 = vld [vmem:[%s766 + $0x4c] sm:$0xf]
        %v2993 = vld [vmem:[%s766 + $0x50] sm:$0xf]
        %v2994 = vld [vmem:[%s766 + $0x54] sm:$0xf]
        %v2995 = vld [vmem:[%s766 + $0x58] sm:$0xf]
        %v2996 = vld [vmem:[%s766 + $0x5c] sm:$0xf]
        %v2997 = vld [vmem:[%s766 + $0x60] sm:$0xf]
        %v2998 = vld [vmem:[%s766 + $0x64] sm:$0xf]
        %v2999 = vld [vmem:[%s766 + $0x68] sm:$0xf]
        %v3000 = vld [vmem:[%s766 + $0x6c] sm:$0xf]
        %v3001 = vld [vmem:[%s766 + $0x70] sm:$0xf]
        %v3002 = vld [vmem:[%s766 + $0x74] sm:$0xf]
        %v3003 = vld [vmem:[%s766 + $0x78] sm:$0xf]
        %v3004 = vld [vmem:[%s766 + $0x7c] sm:$0xf]
        %v3005 = vld [vmem:[%s14] sm:$0xf]
        %v3006 = vld [vmem:[%s14 + $0x4] sm:$0xf]
        %v3039 = vunpack.c.l.b16 %v2973
        %v3040 = vunpack.c.l.b16 %v2974
        %v3041 = vunpack.c.l.b16 %v2975
        %v3042 = vunpack.c.l.b16 %v2976
        %v3043 = vunpack.c.l.b16 %v2977
        %v3044 = vunpack.c.l.b16 %v2978
        %v3045 = vunpack.c.l.b16 %v2979
        %v3046 = vunpack.c.l.b16 %v2980
        %v3047 = vunpack.c.l.b16 %v2981
        %v3048 = vunpack.c.l.b16 %v2982
        %v3049 = vunpack.c.l.b16 %v2983
        %v3050 = vunpack.c.l.b16 %v2984
        %v3051 = vunpack.c.l.b16 %v2985
        %v3052 = vunpack.c.l.b16 %v2986
        %v3053 = vunpack.c.l.b16 %v2987
        %v3054 = vunpack.c.l.b16 %v2988
        %v3055 = vunpack.c.l.b16 %v2989
        %v3056 = vunpack.c.l.b16 %v2990
        %v3057 = vunpack.c.l.b16 %v2991
        %v3058 = vunpack.c.l.b16 %v2992
        %v3059 = vunpack.c.l.b16 %v2993
        %v3060 = vunpack.c.l.b16 %v2994
        %v3061 = vunpack.c.l.b16 %v2995
        %v3062 = vunpack.c.l.b16 %v2996
        %v3063 = vunpack.c.l.b16 %v2997
        %v3064 = vunpack.c.l.b16 %v2998
        %v3065 = vunpack.c.l.b16 %v2999
        %v3066 = vunpack.c.l.b16 %v3000
        %v3067 = vunpack.c.l.b16 %v3001
        %v3068 = vunpack.c.l.b16 %v3002
        %v3069 = vunpack.c.l.b16 %v3003
        %v3070 = vunpack.c.l.b16 %v3004
        %v3071 = vpack.c.b16 %v3040, %v3039
        %v3072 = vpack.c.b16 %v3042, %v3041
        %v3073 = vpack.c.b16 %v3044, %v3043
        %v3074 = vpack.c.b16 %v3046, %v3045
        %v3075 = vpack.c.b16 %v3048, %v3047
        %v3076 = vpack.c.b16 %v3050, %v3049
        %v3077 = vpack.c.b16 %v3052, %v3051
        %v3078 = vpack.c.b16 %v3054, %v3053
        %v3079 = vpack.c.b16 %v3056, %v3055
        %v3080 = vpack.c.b16 %v3058, %v3057
        %v3081 = vpack.c.b16 %v3060, %v3059
        %v3082 = vpack.c.b16 %v3062, %v3061
        %v3083 = vpack.c.b16 %v3064, %v3063
        %v3084 = vpack.c.b16 %v3066, %v3065
        %v3085 = vpack.c.b16 %v3068, %v3067
        %v3086 = vpack.c.b16 %v3070, %v3069
        %v3089 = vunpack.c.l.b16 %v3005
        %v3090 = vunpack.c.l.b16 %v3006
        %v3091 = vpack.c.b16 %v3090, %v3089
        %v3094 = vsel %vm1589, %v3071, 0
        %v3097 = vsel %vm1589, %v3072, 0
        %v3100 = vsel %vm1589, %v3073, 0
        %v3103 = vsel %vm1589, %v3074, 0
        %v3106 = vsel %vm1589, %v3075, 0
        %v3109 = vsel %vm1589, %v3076, 0
        %v3112 = vsel %vm1589, %v3077, 0
        %v3115 = vsel %vm1589, %v3078, 0
        %v3118 = vsel %vm1589, %v3079, 0
        %v3121 = vsel %vm1589, %v3080, 0
        %v3124 = vsel %vm1589, %v3081, 0
        %v3127 = vsel %vm1589, %v3082, 0
        %v3130 = vsel %vm1589, %v3083, 0
        %v3133 = vsel %vm1589, %v3084, 0
        %v3136 = vsel %vm1589, %v3085, 0
        %v3139 = vsel %vm1589, %v3086, 0
        %3141 = vmatprep.subr.bf16.mxu0 0
        %3142 = vmatpush1.bf16.msra.mxu0 %v3091
        %3143 = vmatprep.subr.bf16.mxu0 0
        %3144 = vmatpush1.bf16.msra.mxu0 0
        %3145 = vmatprep.subr.bf16.mxu0 0
        %3146 = vmatpush1.bf16.msra.mxu0 0
        %3147 = vmatprep.subr.bf16.mxu0 0
        %3148 = vmatpush1.bf16.msra.mxu0 0
        %3149 = vmatprep.subr.bf16.mxu0 0
        %3150 = vmatpush1.bf16.msra.mxu0 0
        %3151 = vmatprep.subr.bf16.mxu0 0
        %3152 = vmatpush1.bf16.msra.mxu0 0
        %3153 = vmatprep.subr.bf16.mxu0 0
        %3154 = vmatpush1.bf16.msra.mxu0 0
        %3155 = vmatprep.subr.bf16.mxu0 0
        %3156 = vmatpush1.bf16.msra.mxu0 0
        %3157 = vmatprep.subr.bf16.mxu0 0
        %3158 = vmatpush1.bf16.msra.mxu0 0
        %3159 = vmatprep.subr.bf16.mxu0 0
        %3160 = vmatpush1.bf16.msra.mxu0 0
        %3161 = vmatprep.subr.bf16.mxu0 0
        %3162 = vmatpush1.bf16.msra.mxu0 0
        %3163 = vmatprep.subr.bf16.mxu0 0
        %3164 = vmatpush1.bf16.msra.mxu0 0
        %3165 = vmatprep.subr.bf16.mxu0 0
        %3166 = vmatpush1.bf16.msra.mxu0 0
        %3167 = vmatprep.subr.bf16.mxu0 0
        %3168 = vmatpush1.bf16.msra.mxu0 0
        %3169 = vmatprep.subr.bf16.mxu0 0
        %3170 = vmatpush1.bf16.msra.mxu0 0
        %3171 = vmatprep.subr.bf16.mxu0 0
        %3172 = vmatpush1.bf16.msra.mxu0 0
        %3173 = vmatprep.mubr.bf16.mxu0 0
        %3174 = vmatmul.mubr.bf16.gmra.mrb[0].mxu0 %v3094
        %v3175 = vpop.f32.mrb[0].mxu0
        %v3176 = vadd.f32 0.0, %v3175
        %v3177 = vpop.f32.mrb[0].mxu0
        %v3178 = vpop.f32.mrb[0].mxu0
        %v3179 = vadd.f32 0.0, %v3178
        %v3180 = vpop.f32.mrb[0].mxu0
        %3181 = vmatprep.mubr.bf16.mxu0 0
        %3182 = vmatmul.mubr.bf16.gmra.mrb[0].mxu0 %v3097
        %v3183 = vpop.f32.mrb[0].mxu0
        %v3184 = vadd.f32 0.0, %v3183
        %v3185 = vpop.f32.mrb[0].mxu0
        %v3186 = vpop.f32.mrb[0].mxu0
        %v3187 = vadd.f32 0.0, %v3186
        %v3188 = vpop.f32.mrb[0].mxu0
        %3189 = vmatprep.mubr.bf16.mxu0 0
        %3190 = vmatmul.mubr.bf16.gmra.mrb[0].mxu0 %v3100
        %v3191 = vpop.f32.mrb[0].mxu0
        %v3192 = vadd.f32 0.0, %v3191
        %v3193 = vpop.f32.mrb[0].mxu0
        %v3194 = vpop.f32.mrb[0].mxu0
        %v3195 = vadd.f32 0.0, %v3194
        %v3196 = vpop.f32.mrb[0].mxu0
        %3197 = vmatprep.mubr.bf16.mxu0 0
        %3198 = vmatmul.mubr.bf16.gmra.mrb[0].mxu0 %v3103
        %v3199 = vpop.f32.mrb[0].mxu0
        %v3200 = vadd.f32 0.0, %v3199
        %v3201 = vpop.f32.mrb[0].mxu0
        %v3202 = vpop.f32.mrb[0].mxu0
        %v3203 = vadd.f32 0.0, %v3202
        %v3204 = vpop.f32.mrb[0].mxu0
        %3205 = vmatprep.mubr.bf16.mxu0 0
        %3206 = vmatmul.mubr.bf16.gmra.mrb[0].mxu0 %v3106
        %v3207 = vpop.f32.mrb[0].mxu0
        %v3208 = vadd.f32 0.0, %v3207
        %v3209 = vpop.f32.mrb[0].mxu0
        %v3210 = vpop.f32.mrb[0].mxu0
        %v3211 = vadd.f32 0.0, %v3210
        %v3212 = vpop.f32.mrb[0].mxu0
        %3213 = vmatprep.mubr.bf16.mxu0 0
        %3214 = vmatmul.mubr.bf16.gmra.mrb[0].mxu0 %v3109
        %v3215 = vpop.f32.mrb[0].mxu0
        %v3216 = vadd.f32 0.0, %v3215
        %v3217 = vpop.f32.mrb[0].mxu0
        %v3218 = vpop.f32.mrb[0].mxu0
        %v3219 = vadd.f32 0.0, %v3218
        %v3220 = vpop.f32.mrb[0].mxu0
        %3221 = vmatprep.mubr.bf16.mxu0 0
        %3222 = vmatmul.mubr.bf16.gmra.mrb[0].mxu0 %v3112
        %v3223 = vpop.f32.mrb[0].mxu0
        %v3224 = vadd.f32 0.0, %v3223
        %v3225 = vpop.f32.mrb[0].mxu0
        %v3226 = vpop.f32.mrb[0].mxu0
        %v3227 = vadd.f32 0.0, %v3226
        %v3228 = vpop.f32.mrb[0].mxu0
        %3229 = vmatprep.mubr.bf16.mxu0 0
        %3230 = vmatmul.mubr.bf16.gmra.mrb[0].mxu0 %v3115
        %v3231 = vpop.f32.mrb[0].mxu0
        %v3232 = vadd.f32 0.0, %v3231
        %v3233 = vpop.f32.mrb[0].mxu0
        %v3234 = vpop.f32.mrb[0].mxu0
        %v3235 = vadd.f32 0.0, %v3234
        %v3236 = vpop.f32.mrb[0].mxu0
        %3237 = vmatprep.mubr.bf16.mxu0 0
        %3238 = vmatmul.mubr.bf16.gmra.mrb[0].mxu0 %v3118
        %v3239 = vpop.f32.mrb[0].mxu0
        %v3240 = vadd.f32 0.0, %v3239
        %v3241 = vpop.f32.mrb[0].mxu0
        %v3242 = vpop.f32.mrb[0].mxu0
        %v3243 = vadd.f32 0.0, %v3242
        %v3244 = vpop.f32.mrb[0].mxu0
        %3245 = vmatprep.mubr.bf16.mxu0 0
        %3246 = vmatmul.mubr.bf16.gmra.mrb[0].mxu0 %v3121
        %v3247 = vpop.f32.mrb[0].mxu0
        %v3248 = vadd.f32 0.0, %v3247
        %v3249 = vpop.f32.mrb[0].mxu0
        %v3250 = vpop.f32.mrb[0].mxu0
        %v3251 = vadd.f32 0.0, %v3250
        %v3252 = vpop.f32.mrb[0].mxu0
        %3253 = vmatprep.mubr.bf16.mxu0 0
        %3254 = vmatmul.mubr.bf16.gmra.mrb[0].mxu0 %v3124
        %v3255 = vpop.f32.mrb[0].mxu0
        %v3256 = vadd.f32 0.0, %v3255
        %v3257 = vpop.f32.mrb[0].mxu0
        %v3258 = vpop.f32.mrb[0].mxu0
        %v3259 = vadd.f32 0.0, %v3258
        %v3260 = vpop.f32.mrb[0].mxu0
        %3261 = vmatprep.mubr.bf16.mxu0 0
        %3262 = vmatmul.mubr.bf16.gmra.mrb[0].mxu0 %v3127
        %v3263 = vpop.f32.mrb[0].mxu0
        %v3264 = vadd.f32 0.0, %v3263
        %v3265 = vpop.f32.mrb[0].mxu0
        %v3266 = vpop.f32.mrb[0].mxu0
        %v3267 = vadd.f32 0.0, %v3266
        %v3268 = vpop.f32.mrb[0].mxu0
        %3269 = vmatprep.mubr.bf16.mxu0 0
        %3270 = vmatmul.mubr.bf16.gmra.mrb[0].mxu0 %v3130
        %v3271 = vpop.f32.mrb[0].mxu0
        %v3272 = vadd.f32 0.0, %v3271
        %v3273 = vpop.f32.mrb[0].mxu0
        %v3274 = vpop.f32.mrb[0].mxu0
        %v3275 = vadd.f32 0.0, %v3274
        %v3276 = vpop.f32.mrb[0].mxu0
        %3277 = vmatprep.mubr.bf16.mxu0 0
        %3278 = vmatmul.mubr.bf16.gmra.mrb[0].mxu0 %v3133
        %v3279 = vpop.f32.mrb[0].mxu0
        %v3280 = vadd.f32 0.0, %v3279
        %v3281 = vpop.f32.mrb[0].mxu0
        %v3282 = vpop.f32.mrb[0].mxu0
        %v3283 = vadd.f32 0.0, %v3282
        %v3284 = vpop.f32.mrb[0].mxu0
        %3285 = vmatprep.mubr.bf16.mxu0 0
        %3286 = vmatmul.mubr.bf16.gmra.mrb[0].mxu0 %v3136
        %v3287 = vpop.f32.mrb[0].mxu0
        %v3288 = vadd.f32 0.0, %v3287
        %v3289 = vpop.f32.mrb[0].mxu0
        %v3290 = vpop.f32.mrb[0].mxu0
        %v3291 = vadd.f32 0.0, %v3290
        %v3292 = vpop.f32.mrb[0].mxu0
        %3293 = vmatprep.mubr.bf16.mxu0 0
        %3294 = vmatmul.mubr.bf16.gmra.mrb[0].mxu0 %v3139
        %v3295 = vpop.f32.mrb[0].mxu0
        %v3296 = vadd.f32 0.0, %v3295
        %v3297 = vpop.f32.mrb[0].mxu0
        %v3298 = vpop.f32.mrb[0].mxu0
        %v3299 = vadd.f32 0.0, %v3298
        %v3300 = vpop.f32.mrb[0].mxu0
        %3301 = vdwg.mxu0
        %v3302 = vlaneseq
        %v3303 = vshrl.u32 %v3302, 7
        %v3304 = vsub.s32 0, %v3303
        %v3305 = vrot.slane %v2972, %v3304
        %v3306 = vmul.f32 %v3176, %v3305
        %v3307 = vmul.f32 %v3179, %v3305
        %v3308 = vmul.f32 %v3184, %v3305
        %v3309 = vmul.f32 %v3187, %v3305
        %v3310 = vmul.f32 %v3192, %v3305
        %v3311 = vmul.f32 %v3195, %v3305
        %v3312 = vmul.f32 %v3200, %v3305
        %v3313 = vmul.f32 %v3203, %v3305
        %v3314 = vmul.f32 %v3208, %v3305
        %v3315 = vmul.f32 %v3211, %v3305
        %v3316 = vmul.f32 %v3216, %v3305
        %v3317 = vmul.f32 %v3219, %v3305
        %v3318 = vmul.f32 %v3224, %v3305
        %v3319 = vmul.f32 %v3227, %v3305
        %v3320 = vmul.f32 %v3232, %v3305
        %v3321 = vmul.f32 %v3235, %v3305
        %v3322 = vmul.f32 %v3240, %v3305
        %v3323 = vmul.f32 %v3243, %v3305
        %v3324 = vmul.f32 %v3248, %v3305
        %v3325 = vmul.f32 %v3251, %v3305
        %v3326 = vmul.f32 %v3256, %v3305
        %v3327 = vmul.f32 %v3259, %v3305
        %v3328 = vmul.f32 %v3264, %v3305
        %v3329 = vmul.f32 %v3267, %v3305
        %v3330 = vmul.f32 %v3272, %v3305
        %v3331 = vmul.f32 %v3275, %v3305
        %v3332 = vmul.f32 %v3280, %v3305
        %v3333 = vmul.f32 %v3283, %v3305
        %v3334 = vmul.f32 %v3288, %v3305
        %v3335 = vmul.f32 %v3291, %v3305
        %v3336 = vmul.f32 %v3296, %v3305
        %v3337 = vmul.f32 %v3299, %v3305
        %v3338 = vlaneseq
        %v3339 = vshrl.u32 %v3338, 7
        %v3340 = vsub.s32 1, %v3339
        %v3341 = vrot.slane %v2972, %v3340
        %v3342 = vadd.f32 %v3306, %v3341
        %v3343 = vadd.f32 %v3307, %v3341
        %v3344 = vadd.f32 %v3308, %v3341
        %v3345 = vadd.f32 %v3309, %v3341
        %v3346 = vadd.f32 %v3310, %v3341
        %v3347 = vadd.f32 %v3311, %v3341
        %v3348 = vadd.f32 %v3312, %v3341
        %v3349 = vadd.f32 %v3313, %v3341
        %v3350 = vadd.f32 %v3314, %v3341
        %v3351 = vadd.f32 %v3315, %v3341
        %v3352 = vadd.f32 %v3316, %v3341
        %v3353 = vadd.f32 %v3317, %v3341
        %v3354 = vadd.f32 %v3318, %v3341
        %v3355 = vadd.f32 %v3319, %v3341
        %v3356 = vadd.f32 %v3320, %v3341
        %v3357 = vadd.f32 %v3321, %v3341
        %v3358 = vadd.f32 %v3322, %v3341
        %v3359 = vadd.f32 %v3323, %v3341
        %v3360 = vadd.f32 %v3324, %v3341
        %v3361 = vadd.f32 %v3325, %v3341
        %v3362 = vadd.f32 %v3326, %v3341
        %v3363 = vadd.f32 %v3327, %v3341
        %v3364 = vadd.f32 %v3328, %v3341
        %v3365 = vadd.f32 %v3329, %v3341
        %v3366 = vadd.f32 %v3330, %v3341
        %v3367 = vadd.f32 %v3331, %v3341
        %v3368 = vadd.f32 %v3332, %v3341
        %v3369 = vadd.f32 %v3333, %v3341
        %v3370 = vadd.f32 %v3334, %v3341
        %v3371 = vadd.f32 %v3335, %v3341
        %v3372 = vadd.f32 %v3336, %v3341
        %v3373 = vadd.f32 %v3337, %v3341
        %v3374 = vld [vmem:[%s20] sm:$0xff]
        %v3375 = vld [vmem:[%s20 + $0x8] sm:$0xff]
        %v3376 = vld [vmem:[%s20 + $0x10] sm:$0xff]
        %v3377 = vld [vmem:[%s20 + $0x18] sm:$0xff]
        %v3378 = vld [vmem:[%s20 + $0x20] sm:$0xff]
        %v3379 = vld [vmem:[%s20 + $0x28] sm:$0xff]
        %v3380 = vld [vmem:[%s20 + $0x30] sm:$0xff]
        %v3381 = vld [vmem:[%s20 + $0x38] sm:$0xff]
        %v3382 = vld [vmem:[%s20 + $0x40] sm:$0xff]
        %v3383 = vld [vmem:[%s20 + $0x48] sm:$0xff]
        %v3384 = vld [vmem:[%s20 + $0x50] sm:$0xff]
        %v3385 = vld [vmem:[%s20 + $0x58] sm:$0xff]
        %v3386 = vld [vmem:[%s20 + $0x60] sm:$0xff]
        %v3387 = vld [vmem:[%s20 + $0x68] sm:$0xff]
        %v3388 = vld [vmem:[%s20 + $0x70] sm:$0xff]
        %v3389 = vld [vmem:[%s20 + $0x78] sm:$0xff]
        %v3390 = vld [vmem:[%s20 + $0x80] sm:$0xff]
        %v3391 = vld [vmem:[%s20 + $0x88] sm:$0xff]
        %v3392 = vld [vmem:[%s20 + $0x90] sm:$0xff]
        %v3393 = vld [vmem:[%s20 + $0x98] sm:$0xff]
        %v3394 = vld [vmem:[%s20 + $0xa0] sm:$0xff]
        %v3395 = vld [vmem:[%s20 + $0xa8] sm:$0xff]
        %v3396 = vld [vmem:[%s20 + $0xb0] sm:$0xff]
        %v3397 = vld [vmem:[%s20 + $0xb8] sm:$0xff]
        %v3398 = vld [vmem:[%s20 + $0xc0] sm:$0xff]
        %v3399 = vld [vmem:[%s20 + $0xc8] sm:$0xff]
        %v3400 = vld [vmem:[%s20 + $0xd0] sm:$0xff]
        %v3401 = vld [vmem:[%s20 + $0xd8] sm:$0xff]
        %v3402 = vld [vmem:[%s20 + $0xe0] sm:$0xff]
        %v3403 = vld [vmem:[%s20 + $0xe8] sm:$0xff]
        %v3404 = vld [vmem:[%s20 + $0xf0] sm:$0xff]
        %v3405 = vld [vmem:[%s20 + $0xf8] sm:$0xff]
        %v3407 = vsel %vm813, %v3374, 0
        %v3410 = vsel %vm813, %v3375, 0
        %v3413 = vsel %vm813, %v3376, 0
        %v3416 = vsel %vm813, %v3377, 0
        %v3419 = vsel %vm813, %v3378, 0
        %v3422 = vsel %vm813, %v3379, 0
        %v3425 = vsel %vm813, %v3380, 0
        %v3428 = vsel %vm813, %v3381, 0
        %v3431 = vsel %vm813, %v3382, 0
        %v3434 = vsel %vm813, %v3383, 0
        %v3437 = vsel %vm813, %v3384, 0
        %v3440 = vsel %vm813, %v3385, 0
        %v3443 = vsel %vm813, %v3386, 0
        %v3446 = vsel %vm813, %v3387, 0
        %v3449 = vsel %vm813, %v3388, 0
        %v3452 = vsel %vm813, %v3389, 0
        %v3455 = vsel %vm813, %v3390, 0
        %v3458 = vsel %vm813, %v3391, 0
        %v3461 = vsel %vm813, %v3392, 0
        %v3464 = vsel %vm813, %v3393, 0
        %v3467 = vsel %vm813, %v3394, 0
        %v3470 = vsel %vm813, %v3395, 0
        %v3473 = vsel %vm813, %v3396, 0
        %v3476 = vsel %vm813, %v3397, 0
        %v3479 = vsel %vm813, %v3398, 0
        %v3482 = vsel %vm813, %v3399, 0
        %v3485 = vsel %vm813, %v3400, 0
        %v3488 = vsel %vm813, %v3401, 0
        %v3491 = vsel %vm813, %v3402, 0
        %v3494 = vsel %vm813, %v3403, 0
        %v3497 = vsel %vm813, %v3404, 0
        %v3500 = vsel %vm813, %v3405, 0
        %3502 = vmatprep.subr.mxu0 0.0
        %3503 = vmatpush1.msra.mxu0 %v2031
        %3504 = vmatprep.subr.mxu0 0.0
        %3505 = vmatpush1.msra.mxu0 %v2032
        %3506 = vmatprep.subr.mxu0 0.0
        %3507 = vmatpush1.msra.mxu0 %v2033
        %3508 = vmatprep.subr.mxu0 0.0
        %3509 = vmatpush1.msra.mxu0 %v2034
        %3510 = vmatprep.subr.mxu0 0.0
        %3511 = vmatpush1.msra.mxu0 %v2035
        %3512 = vmatprep.subr.mxu0 0.0
        %3513 = vmatpush1.msra.mxu0 %v2036
        %3514 = vmatprep.subr.mxu0 0.0
        %3515 = vmatpush1.msra.mxu0 %v2037
        %3516 = vmatprep.subr.mxu0 0.0
        %3517 = vmatpush1.msra.mxu0 %v2038
        %3518 = vmatprep.subr.mxu0 0.0
        %3519 = vmatpush1.msra.mxu0 0.0
        %3520 = vmatprep.subr.mxu0 0.0
        %3521 = vmatpush1.msra.mxu0 0.0
        %3522 = vmatprep.subr.mxu0 0.0
        %3523 = vmatpush1.msra.mxu0 0.0
        %3524 = vmatprep.subr.mxu0 0.0
        %3525 = vmatpush1.msra.mxu0 0.0
        %3526 = vmatprep.subr.mxu0 0.0
        %3527 = vmatpush1.msra.mxu0 0.0
        %3528 = vmatprep.subr.mxu0 0.0
        %3529 = vmatpush1.msra.mxu0 0.0
        %3530 = vmatprep.subr.mxu0 0.0
        %3531 = vmatpush1.msra.mxu0 0.0
        %3532 = vmatprep.subr.mxu0 0.0
        %3533 = vmatpush1.msra.mxu0 0.0
        %3534 = vmatprep.subr.mxu0 0.0
        %3535 = vmatpush1.msra.mxu0 0.0
        %3536 = vmatprep.subr.mxu0 0.0
        %3537 = vmatpush1.msra.mxu0 0.0
        %3538 = vmatprep.subr.mxu0 0.0
        %3539 = vmatpush1.msra.mxu0 0.0
        %3540 = vmatprep.subr.mxu0 0.0
        %3541 = vmatpush1.msra.mxu0 0.0
        %3542 = vmatprep.subr.mxu0 0.0
        %3543 = vmatpush1.msra.mxu0 0.0
        %3544 = vmatprep.subr.mxu0 0.0
        %3545 = vmatpush1.msra.mxu0 0.0
        %3546 = vmatprep.subr.mxu0 0.0
        %3547 = vmatpush1.msra.mxu0 0.0
        %3548 = vmatprep.subr.mxu0 0.0
        %3549 = vmatpush1.msra.mxu0 0.0
        %3550 = vmatprep.subr.mxu0 0.0
        %3551 = vmatpush1.msra.mxu0 0.0
        %3552 = vmatprep.subr.mxu0 0.0
        %3553 = vmatpush1.msra.mxu0 0.0
        %3554 = vmatprep.subr.mxu0 0.0
        %3555 = vmatpush1.msra.mxu0 0.0
        %3556 = vmatprep.subr.mxu0 0.0
        %3557 = vmatpush1.msra.mxu0 0.0
        %3558 = vmatprep.subr.mxu0 0.0
        %3559 = vmatpush1.msra.mxu0 0.0
        %3560 = vmatprep.subr.mxu0 0.0
        %3561 = vmatpush1.msra.mxu0 0.0
        %3562 = vmatprep.subr.mxu0 0.0
        %3563 = vmatpush1.msra.mxu0 0.0
        %3564 = vmatprep.subr.mxu0 0.0
        %3565 = vmatpush1.msra.mxu0 0.0
        %3566 = vmatprep.mubr.f32.mxu0 0.0
        %3567 = vmatmul.mubr.f32.gmra.mrb[0].mxu0 %v3407
        %v3568 = vpop.f32.mrb[0].mxu0
        %v3569 = vadd.f32 0.0, %v3568
        %v3570 = vpop.f32.mrb[0].mxu0
        %3571 = vmatprep.mubr.f32.mxu0 0.0
        %3572 = vmatmul.mubr.f32.gmra.mrb[0].mxu0 %v3410
        %v3573 = vpop.f32.mrb[0].mxu0
        %v3574 = vadd.f32 0.0, %v3573
        %v3575 = vpop.f32.mrb[0].mxu0
        %3576 = vmatprep.mubr.f32.mxu0 0.0
        %3577 = vmatmul.mubr.f32.gmra.mrb[0].mxu0 %v3413
        %v3578 = vpop.f32.mrb[0].mxu0
        %v3579 = vadd.f32 0.0, %v3578
        %v3580 = vpop.f32.mrb[0].mxu0
        %3581 = vmatprep.mubr.f32.mxu0 0.0
        %3582 = vmatmul.mubr.f32.gmra.mrb[0].mxu0 %v3416
        %v3583 = vpop.f32.mrb[0].mxu0
        %v3584 = vadd.f32 0.0, %v3583
        %v3585 = vpop.f32.mrb[0].mxu0
        %3586 = vmatprep.mubr.f32.mxu0 0.0
        %3587 = vmatmul.mubr.f32.gmra.mrb[0].mxu0 %v3419
        %v3588 = vpop.f32.mrb[0].mxu0
        %v3589 = vadd.f32 0.0, %v3588
        %v3590 = vpop.f32.mrb[0].mxu0
        %3591 = vmatprep.mubr.f32.mxu0 0.0
        %3592 = vmatmul.mubr.f32.gmra.mrb[0].mxu0 %v3422
        %v3593 = vpop.f32.mrb[0].mxu0
        %v3594 = vadd.f32 0.0, %v3593
        %v3595 = vpop.f32.mrb[0].mxu0
        %3596 = vmatprep.mubr.f32.mxu0 0.0
        %3597 = vmatmul.mubr.f32.gmra.mrb[0].mxu0 %v3425
        %v3598 = vpop.f32.mrb[0].mxu0
        %v3599 = vadd.f32 0.0, %v3598
        %v3600 = vpop.f32.mrb[0].mxu0
        %3601 = vmatprep.mubr.f32.mxu0 0.0
        %3602 = vmatmul.mubr.f32.gmra.mrb[0].mxu0 %v3428
        %v3603 = vpop.f32.mrb[0].mxu0
        %v3604 = vadd.f32 0.0, %v3603
        %v3605 = vpop.f32.mrb[0].mxu0
        %3606 = vmatprep.mubr.f32.mxu0 0.0
        %3607 = vmatmul.mubr.f32.gmra.mrb[0].mxu0 %v3431
        %v3608 = vpop.f32.mrb[0].mxu0
        %v3609 = vadd.f32 0.0, %v3608
        %v3610 = vpop.f32.mrb[0].mxu0
        %3611 = vmatprep.mubr.f32.mxu0 0.0
        %3612 = vmatmul.mubr.f32.gmra.mrb[0].mxu0 %v3434
        %v3613 = vpop.f32.mrb[0].mxu0
        %v3614 = vadd.f32 0.0, %v3613
        %v3615 = vpop.f32.mrb[0].mxu0
        %3616 = vmatprep.mubr.f32.mxu0 0.0
        %3617 = vmatmul.mubr.f32.gmra.mrb[0].mxu0 %v3437
        %v3618 = vpop.f32.mrb[0].mxu0
        %v3619 = vadd.f32 0.0, %v3618
        %v3620 = vpop.f32.mrb[0].mxu0
        %3621 = vmatprep.mubr.f32.mxu0 0.0
        %3622 = vmatmul.mubr.f32.gmra.mrb[0].mxu0 %v3440
        %v3623 = vpop.f32.mrb[0].mxu0
        %v3624 = vadd.f32 0.0, %v3623
        %v3625 = vpop.f32.mrb[0].mxu0
        %3626 = vmatprep.mubr.f32.mxu0 0.0
        %3627 = vmatmul.mubr.f32.gmra.mrb[0].mxu0 %v3443
        %v3628 = vpop.f32.mrb[0].mxu0
        %v3629 = vadd.f32 0.0, %v3628
        %v3630 = vpop.f32.mrb[0].mxu0
        %3631 = vmatprep.mubr.f32.mxu0 0.0
        %3632 = vmatmul.mubr.f32.gmra.mrb[0].mxu0 %v3446
        %v3633 = vpop.f32.mrb[0].mxu0
        %v3634 = vadd.f32 0.0, %v3633
        %v3635 = vpop.f32.mrb[0].mxu0
        %3636 = vmatprep.mubr.f32.mxu0 0.0
        %3637 = vmatmul.mubr.f32.gmra.mrb[0].mxu0 %v3449
        %v3638 = vpop.f32.mrb[0].mxu0
        %v3639 = vadd.f32 0.0, %v3638
        %v3640 = vpop.f32.mrb[0].mxu0
        %3641 = vmatprep.mubr.f32.mxu0 0.0
        %3642 = vmatmul.mubr.f32.gmra.mrb[0].mxu0 %v3452
        %v3643 = vpop.f32.mrb[0].mxu0
        %v3644 = vadd.f32 0.0, %v3643
        %v3645 = vpop.f32.mrb[0].mxu0
        %3646 = vmatprep.mubr.f32.mxu0 0.0
        %3647 = vmatmul.mubr.f32.gmra.mrb[0].mxu0 %v3455
        %v3648 = vpop.f32.mrb[0].mxu0
        %v3649 = vadd.f32 0.0, %v3648
        %v3650 = vpop.f32.mrb[0].mxu0
        %3651 = vmatprep.mubr.f32.mxu0 0.0
        %3652 = vmatmul.mubr.f32.gmra.mrb[0].mxu0 %v3458
        %v3653 = vpop.f32.mrb[0].mxu0
        %v3654 = vadd.f32 0.0, %v3653
        %v3655 = vpop.f32.mrb[0].mxu0
        %3656 = vmatprep.mubr.f32.mxu0 0.0
        %3657 = vmatmul.mubr.f32.gmra.mrb[0].mxu0 %v3461
        %v3658 = vpop.f32.mrb[0].mxu0
        %v3659 = vadd.f32 0.0, %v3658
        %v3660 = vpop.f32.mrb[0].mxu0
        %3661 = vmatprep.mubr.f32.mxu0 0.0
        %3662 = vmatmul.mubr.f32.gmra.mrb[0].mxu0 %v3464
        %v3663 = vpop.f32.mrb[0].mxu0
        %v3664 = vadd.f32 0.0, %v3663
        %v3665 = vpop.f32.mrb[0].mxu0
        %3666 = vmatprep.mubr.f32.mxu0 0.0
        %3667 = vmatmul.mubr.f32.gmra.mrb[0].mxu0 %v3467
        %v3668 = vpop.f32.mrb[0].mxu0
        %v3669 = vadd.f32 0.0, %v3668
        %v3670 = vpop.f32.mrb[0].mxu0
        %3671 = vmatprep.mubr.f32.mxu0 0.0
        %3672 = vmatmul.mubr.f32.gmra.mrb[0].mxu0 %v3470
        %v3673 = vpop.f32.mrb[0].mxu0
        %v3674 = vadd.f32 0.0, %v3673
        %v3675 = vpop.f32.mrb[0].mxu0
        %3676 = vmatprep.mubr.f32.mxu0 0.0
        %3677 = vmatmul.mubr.f32.gmra.mrb[0].mxu0 %v3473
        %v3678 = vpop.f32.mrb[0].mxu0
        %v3679 = vadd.f32 0.0, %v3678
        %v3680 = vpop.f32.mrb[0].mxu0
        %3681 = vmatprep.mubr.f32.mxu0 0.0
        %3682 = vmatmul.mubr.f32.gmra.mrb[0].mxu0 %v3476
        %v3683 = vpop.f32.mrb[0].mxu0
        %v3684 = vadd.f32 0.0, %v3683
        %v3685 = vpop.f32.mrb[0].mxu0
        %3686 = vmatprep.mubr.f32.mxu0 0.0
        %3687 = vmatmul.mubr.f32.gmra.mrb[0].mxu0 %v3479
        %v3688 = vpop.f32.mrb[0].mxu0
        %v3689 = vadd.f32 0.0, %v3688
        %v3690 = vpop.f32.mrb[0].mxu0
        %3691 = vmatprep.mubr.f32.mxu0 0.0
        %3692 = vmatmul.mubr.f32.gmra.mrb[0].mxu0 %v3482
        %v3693 = vpop.f32.mrb[0].mxu0
        %v3694 = vadd.f32 0.0, %v3693
        %v3695 = vpop.f32.mrb[0].mxu0
        %3696 = vmatprep.mubr.f32.mxu0 0.0
        %3697 = vmatmul.mubr.f32.gmra.mrb[0].mxu0 %v3485
        %v3698 = vpop.f32.mrb[0].mxu0
        %v3699 = vadd.f32 0.0, %v3698
        %v3700 = vpop.f32.mrb[0].mxu0
        %3701 = vmatprep.mubr.f32.mxu0 0.0
        %3702 = vmatmul.mubr.f32.gmra.mrb[0].mxu0 %v3488
        %v3703 = vpop.f32.mrb[0].mxu0
        %v3704 = vadd.f32 0.0, %v3703
        %v3705 = vpop.f32.mrb[0].mxu0
        %3706 = vmatprep.mubr.f32.mxu0 0.0
        %3707 = vmatmul.mubr.f32.gmra.mrb[0].mxu0 %v3491
        %v3708 = vpop.f32.mrb[0].mxu0
        %v3709 = vadd.f32 0.0, %v3708
        %v3710 = vpop.f32.mrb[0].mxu0
        %3711 = vmatprep.mubr.f32.mxu0 0.0
        %3712 = vmatmul.mubr.f32.gmra.mrb[0].mxu0 %v3494
        %v3713 = vpop.f32.mrb[0].mxu0
        %v3714 = vadd.f32 0.0, %v3713
        %v3715 = vpop.f32.mrb[0].mxu0
        %3716 = vmatprep.mubr.f32.mxu0 0.0
        %3717 = vmatmul.mubr.f32.gmra.mrb[0].mxu0 %v3497
        %v3718 = vpop.f32.mrb[0].mxu0
        %v3719 = vadd.f32 0.0, %v3718
        %v3720 = vpop.f32.mrb[0].mxu0
        %3721 = vmatprep.mubr.f32.mxu0 0.0
        %3722 = vmatmul.mubr.f32.gmra.mrb[0].mxu0 %v3500
        %v3723 = vpop.f32.mrb[0].mxu0
        %v3724 = vadd.f32 0.0, %v3723
        %v3725 = vpop.f32.mrb[0].mxu0
        %3726 = vdwg.mxu0
        %3759 = vrot.lane.b32.xlu0 %v3569, 64
        %v3760 = vpop.permute.xlu0 %3759
        %3761 = vrot.lane.b32.xlu0 %v3574, 64
        %v3762 = vpop.permute.xlu0 %3761
        %3763 = vrot.lane.b32.xlu0 %v3579, 64
        %v3764 = vpop.permute.xlu0 %3763
        %3765 = vrot.lane.b32.xlu0 %v3584, 64
        %v3766 = vpop.permute.xlu0 %3765
        %3767 = vrot.lane.b32.xlu0 %v3589, 64
        %v3768 = vpop.permute.xlu0 %3767
        %3769 = vrot.lane.b32.xlu0 %v3594, 64
        %v3770 = vpop.permute.xlu0 %3769
        %3771 = vrot.lane.b32.xlu0 %v3599, 64
        %v3772 = vpop.permute.xlu0 %3771
        %3773 = vrot.lane.b32.xlu0 %v3604, 64
        %v3774 = vpop.permute.xlu0 %3773
        %3775 = vrot.lane.b32.xlu0 %v3609, 64
        %v3776 = vpop.permute.xlu0 %3775
        %3777 = vrot.lane.b32.xlu0 %v3614, 64
        %v3778 = vpop.permute.xlu0 %3777
        %3779 = vrot.lane.b32.xlu0 %v3619, 64
        %v3780 = vpop.permute.xlu0 %3779
        %3781 = vrot.lane.b32.xlu0 %v3624, 64
        %v3782 = vpop.permute.xlu0 %3781
        %3783 = vrot.lane.b32.xlu0 %v3629, 64
        %v3784 = vpop.permute.xlu0 %3783
        %3785 = vrot.lane.b32.xlu0 %v3634, 64
        %v3786 = vpop.permute.xlu0 %3785
        %3787 = vrot.lane.b32.xlu0 %v3639, 64
        %v3788 = vpop.permute.xlu0 %3787
        %3789 = vrot.lane.b32.xlu0 %v3644, 64
        %v3790 = vpop.permute.xlu0 %3789
        %3791 = vrot.lane.b32.xlu0 %v3649, 64
        %v3792 = vpop.permute.xlu0 %3791
        %3793 = vrot.lane.b32.xlu0 %v3654, 64
        %v3794 = vpop.permute.xlu0 %3793
        %3795 = vrot.lane.b32.xlu0 %v3659, 64
        %v3796 = vpop.permute.xlu0 %3795
        %3797 = vrot.lane.b32.xlu0 %v3664, 64
        %v3798 = vpop.permute.xlu0 %3797
        %3799 = vrot.lane.b32.xlu0 %v3669, 64
        %v3800 = vpop.permute.xlu0 %3799
        %3801 = vrot.lane.b32.xlu0 %v3674, 64
        %v3802 = vpop.permute.xlu0 %3801
        %3803 = vrot.lane.b32.xlu0 %v3679, 64
        %v3804 = vpop.permute.xlu0 %3803
        %3805 = vrot.lane.b32.xlu0 %v3684, 64
        %v3806 = vpop.permute.xlu0 %3805
        %3807 = vrot.lane.b32.xlu0 %v3689, 64
        %v3808 = vpop.permute.xlu0 %3807
        %3809 = vrot.lane.b32.xlu0 %v3694, 64
        %v3810 = vpop.permute.xlu0 %3809
        %3811 = vrot.lane.b32.xlu0 %v3699, 64
        %v3812 = vpop.permute.xlu0 %3811
        %3813 = vrot.lane.b32.xlu0 %v3704, 64
        %v3814 = vpop.permute.xlu0 %3813
        %3815 = vrot.lane.b32.xlu0 %v3709, 64
        %v3816 = vpop.permute.xlu0 %3815
        %3817 = vrot.lane.b32.xlu0 %v3714, 64
        %v3818 = vpop.permute.xlu0 %3817
        %3819 = vrot.lane.b32.xlu0 %v3719, 64
        %v3820 = vpop.permute.xlu0 %3819
        %3821 = vrot.lane.b32.xlu0 %v3724, 64
        %v3822 = vpop.permute.xlu0 %3821
        %v3855 = vsel %vm813, %v3342, %v3760
        %v3856 = vsel %vm813, %v3343, %v3762
        %v3857 = vsel %vm813, %v3344, %v3764
        %v3858 = vsel %vm813, %v3345, %v3766
        %v3859 = vsel %vm813, %v3346, %v3768
        %v3860 = vsel %vm813, %v3347, %v3770
        %v3861 = vsel %vm813, %v3348, %v3772
        %v3862 = vsel %vm813, %v3349, %v3774
        %v3863 = vsel %vm813, %v3350, %v3776
        %v3864 = vsel %vm813, %v3351, %v3778
        %v3865 = vsel %vm813, %v3352, %v3780
        %v3866 = vsel %vm813, %v3353, %v3782
        %v3867 = vsel %vm813, %v3354, %v3784
        %v3868 = vsel %vm813, %v3355, %v3786
        %v3869 = vsel %vm813, %v3356, %v3788
        %v3870 = vsel %vm813, %v3357, %v3790
        %v3871 = vsel %vm813, %v3358, %v3792
        %v3872 = vsel %vm813, %v3359, %v3794
        %v3873 = vsel %vm813, %v3360, %v3796
        %v3874 = vsel %vm813, %v3361, %v3798
        %v3875 = vsel %vm813, %v3362, %v3800
        %v3876 = vsel %vm813, %v3363, %v3802
        %v3877 = vsel %vm813, %v3364, %v3804
        %v3878 = vsel %vm813, %v3365, %v3806
        %v3879 = vsel %vm813, %v3366, %v3808
        %v3880 = vsel %vm813, %v3367, %v3810
        %v3881 = vsel %vm813, %v3368, %v3812
        %v3882 = vsel %vm813, %v3369, %v3814
        %v3883 = vsel %vm813, %v3370, %v3816
        %v3884 = vsel %vm813, %v3371, %v3818
        %v3885 = vsel %vm813, %v3372, %v3820
        %v3886 = vsel %vm813, %v3373, %v3822
        %v3887 = vld [vmem:[%s16] sm:$0x3]
        %v3888 = vld [vmem:[%s17] sm:$0x1]
        %v3889 = vlaneseq
        %v3890 = vshrl.u32 %v3889, 7
        %v3891 = vsub.s32 0, %v3890
        %v3892 = vrot.slane %v3887, %v3891
        %v3893 = vmul.f32 %v3855, %v3892
        %v3894 = vmul.f32 %v3856, %v3892
        %v3895 = vmul.f32 %v3857, %v3892
        %v3896 = vmul.f32 %v3858, %v3892
        %v3897 = vmul.f32 %v3859, %v3892
        %v3898 = vmul.f32 %v3860, %v3892
        %v3899 = vmul.f32 %v3861, %v3892
        %v3900 = vmul.f32 %v3862, %v3892
        %v3901 = vmul.f32 %v3863, %v3892
        %v3902 = vmul.f32 %v3864, %v3892
        %v3903 = vmul.f32 %v3865, %v3892
        %v3904 = vmul.f32 %v3866, %v3892
        %v3905 = vmul.f32 %v3867, %v3892
        %v3906 = vmul.f32 %v3868, %v3892
        %v3907 = vmul.f32 %v3869, %v3892
        %v3908 = vmul.f32 %v3870, %v3892
        %v3909 = vmul.f32 %v3871, %v3892
        %v3910 = vmul.f32 %v3872, %v3892
        %v3911 = vmul.f32 %v3873, %v3892
        %v3912 = vmul.f32 %v3874, %v3892
        %v3913 = vmul.f32 %v3875, %v3892
        %v3914 = vmul.f32 %v3876, %v3892
        %v3915 = vmul.f32 %v3877, %v3892
        %v3916 = vmul.f32 %v3878, %v3892
        %v3917 = vmul.f32 %v3879, %v3892
        %v3918 = vmul.f32 %v3880, %v3892
        %v3919 = vmul.f32 %v3881, %v3892
        %v3920 = vmul.f32 %v3882, %v3892
        %v3921 = vmul.f32 %v3883, %v3892
        %v3922 = vmul.f32 %v3884, %v3892
        %v3923 = vmul.f32 %v3885, %v3892
        %v3924 = vmul.f32 %v3886, %v3892
        %3925 = vadd.xlane.f32.xlu0 %v3893
        %v3926 = vpop.xlane.xlu0 %3925
        %3927 = vadd.xlane.f32.xlu0 %v3894
        %v3928 = vpop.xlane.xlu0 %3927
        %3929 = vadd.xlane.f32.xlu0 %v3895
        %v3930 = vpop.xlane.xlu0 %3929
        %3931 = vadd.xlane.f32.xlu0 %v3896
        %v3932 = vpop.xlane.xlu0 %3931
        %3933 = vadd.xlane.f32.xlu0 %v3897
        %v3934 = vpop.xlane.xlu0 %3933
        %3935 = vadd.xlane.f32.xlu0 %v3898
        %v3936 = vpop.xlane.xlu0 %3935
        %3937 = vadd.xlane.f32.xlu0 %v3899
        %v3938 = vpop.xlane.xlu0 %3937
        %3939 = vadd.xlane.f32.xlu0 %v3900
        %v3940 = vpop.xlane.xlu0 %3939
        %3941 = vadd.xlane.f32.xlu0 %v3901
        %v3942 = vpop.xlane.xlu0 %3941
        %3943 = vadd.xlane.f32.xlu0 %v3902
        %v3944 = vpop.xlane.xlu0 %3943
        %3945 = vadd.xlane.f32.xlu0 %v3903
        %v3946 = vpop.xlane.xlu0 %3945
        %3947 = vadd.xlane.f32.xlu0 %v3904
        %v3948 = vpop.xlane.xlu0 %3947
        %3949 = vadd.xlane.f32.xlu0 %v3905
        %v3950 = vpop.xlane.xlu0 %3949
        %3951 = vadd.xlane.f32.xlu0 %v3906
        %v3952 = vpop.xlane.xlu0 %3951
        %3953 = vadd.xlane.f32.xlu0 %v3907
        %v3954 = vpop.xlane.xlu0 %3953
        %3955 = vadd.xlane.f32.xlu0 %v3908
        %v3956 = vpop.xlane.xlu0 %3955
        %3957 = vadd.xlane.f32.xlu0 %v3909
        %v3958 = vpop.xlane.xlu0 %3957
        %3959 = vadd.xlane.f32.xlu0 %v3910
        %v3960 = vpop.xlane.xlu0 %3959
        %3961 = vadd.xlane.f32.xlu0 %v3911
        %v3962 = vpop.xlane.xlu0 %3961
        %3963 = vadd.xlane.f32.xlu0 %v3912
        %v3964 = vpop.xlane.xlu0 %3963
        %3965 = vadd.xlane.f32.xlu0 %v3913
        %v3966 = vpop.xlane.xlu0 %3965
        %3967 = vadd.xlane.f32.xlu0 %v3914
        %v3968 = vpop.xlane.xlu0 %3967
        %3969 = vadd.xlane.f32.xlu0 %v3915
        %v3970 = vpop.xlane.xlu0 %3969
        %3971 = vadd.xlane.f32.xlu0 %v3916
        %v3972 = vpop.xlane.xlu0 %3971
        %3973 = vadd.xlane.f32.xlu0 %v3917
        %v3974 = vpop.xlane.xlu0 %3973
        %3975 = vadd.xlane.f32.xlu0 %v3918
        %v3976 = vpop.xlane.xlu0 %3975
        %3977 = vadd.xlane.f32.xlu0 %v3919
        %v3978 = vpop.xlane.xlu0 %3977
        %3979 = vadd.xlane.f32.xlu0 %v3920
        %v3980 = vpop.xlane.xlu0 %3979
        %3981 = vadd.xlane.f32.xlu0 %v3921
        %v3982 = vpop.xlane.xlu0 %3981
        %3983 = vadd.xlane.f32.xlu0 %v3922
        %v3984 = vpop.xlane.xlu0 %3983
        %3985 = vadd.xlane.f32.xlu0 %v3923
        %v3986 = vpop.xlane.xlu0 %3985
        %3987 = vadd.xlane.f32.xlu0 %v3924
        %v3988 = vpop.xlane.xlu0 %3987
        %v3990 = vlaneseq
        %v3991 = vshrl.u32 %v3990, 7
        %v3992 = vsub.s32 0, %v3991
        %v3993 = vrot.slane %v3888, %v3992
        %v3995 = vadd.f32 %v3926, %v3993
        %v3996 = vadd.f32 %v3928, %v3993
        %v3997 = vadd.f32 %v3930, %v3993
        %v3998 = vadd.f32 %v3932, %v3993
        %v3999 = vadd.f32 %v3934, %v3993
        %v4000 = vadd.f32 %v3936, %v3993
        %v4001 = vadd.f32 %v3938, %v3993
        %v4002 = vadd.f32 %v3940, %v3993
        %v4003 = vadd.f32 %v3942, %v3993
        %v4004 = vadd.f32 %v3944, %v3993
        %v4005 = vadd.f32 %v3946, %v3993
        %v4006 = vadd.f32 %v3948, %v3993
        %v4007 = vadd.f32 %v3950, %v3993
        %v4008 = vadd.f32 %v3952, %v3993
        %v4009 = vadd.f32 %v3954, %v3993
        %v4010 = vadd.f32 %v3956, %v3993
        %v4011 = vadd.f32 %v3958, %v3993
        %v4012 = vadd.f32 %v3960, %v3993
        %v4013 = vadd.f32 %v3962, %v3993
        %v4014 = vadd.f32 %v3964, %v3993
        %v4015 = vadd.f32 %v3966, %v3993
        %v4016 = vadd.f32 %v3968, %v3993
        %v4017 = vadd.f32 %v3970, %v3993
        %v4018 = vadd.f32 %v3972, %v3993
        %v4019 = vadd.f32 %v3974, %v3993
        %v4020 = vadd.f32 %v3976, %v3993
        %v4021 = vadd.f32 %v3978, %v3993
        %v4022 = vadd.f32 %v3980, %v3993
        %v4023 = vadd.f32 %v3982, %v3993
        %v4024 = vadd.f32 %v3984, %v3993
        %v4025 = vadd.f32 %v3986, %v3993
        %v4026 = vadd.f32 %v3988, %v3993
        %v4027 = vlaneseq
        %v4028 = vshrl.u32 %v4027, 7
        %v4029 = vsub.s32 1, %v4028
        %v4030 = vrot.slane %v3887, %v4029
        %v4031 = vmul.f32 %v3855, %v4030
        %v4032 = vmul.f32 %v3856, %v4030
        %v4033 = vmul.f32 %v3857, %v4030
        %v4034 = vmul.f32 %v3858, %v4030
        %v4035 = vmul.f32 %v3859, %v4030
        %v4036 = vmul.f32 %v3860, %v4030
        %v4037 = vmul.f32 %v3861, %v4030
        %v4038 = vmul.f32 %v3862, %v4030
        %v4039 = vmul.f32 %v3863, %v4030
        %v4040 = vmul.f32 %v3864, %v4030
        %v4041 = vmul.f32 %v3865, %v4030
        %v4042 = vmul.f32 %v3866, %v4030
        %v4043 = vmul.f32 %v3867, %v4030
        %v4044 = vmul.f32 %v3868, %v4030
        %v4045 = vmul.f32 %v3869, %v4030
        %v4046 = vmul.f32 %v3870, %v4030
        %v4047 = vmul.f32 %v3871, %v4030
        %v4048 = vmul.f32 %v3872, %v4030
        %v4049 = vmul.f32 %v3873, %v4030
        %v4050 = vmul.f32 %v3874, %v4030
        %v4051 = vmul.f32 %v3875, %v4030
        %v4052 = vmul.f32 %v3876, %v4030
        %v4053 = vmul.f32 %v3877, %v4030
        %v4054 = vmul.f32 %v3878, %v4030
        %v4055 = vmul.f32 %v3879, %v4030
        %v4056 = vmul.f32 %v3880, %v4030
        %v4057 = vmul.f32 %v3881, %v4030
        %v4058 = vmul.f32 %v3882, %v4030
        %v4059 = vmul.f32 %v3883, %v4030
        %v4060 = vmul.f32 %v3884, %v4030
        %v4061 = vmul.f32 %v3885, %v4030
        %v4062 = vmul.f32 %v3886, %v4030
        %4063 = vadd.xlane.f32.xlu0 %v4031
        %v4064 = vpop.xlane.xlu0 %4063
        %4065 = vadd.xlane.f32.xlu0 %v4032
        %v4066 = vpop.xlane.xlu0 %4065
        %4067 = vadd.xlane.f32.xlu0 %v4033
        %v4068 = vpop.xlane.xlu0 %4067
        %4069 = vadd.xlane.f32.xlu0 %v4034
        %v4070 = vpop.xlane.xlu0 %4069
        %4071 = vadd.xlane.f32.xlu0 %v4035
        %v4072 = vpop.xlane.xlu0 %4071
        %4073 = vadd.xlane.f32.xlu0 %v4036
        %v4074 = vpop.xlane.xlu0 %4073
        %4075 = vadd.xlane.f32.xlu0 %v4037
        %v4076 = vpop.xlane.xlu0 %4075
        %4077 = vadd.xlane.f32.xlu0 %v4038
        %v4078 = vpop.xlane.xlu0 %4077
        %4079 = vadd.xlane.f32.xlu0 %v4039
        %v4080 = vpop.xlane.xlu0 %4079
        %4081 = vadd.xlane.f32.xlu0 %v4040
        %v4082 = vpop.xlane.xlu0 %4081
        %4083 = vadd.xlane.f32.xlu0 %v4041
        %v4084 = vpop.xlane.xlu0 %4083
        %4085 = vadd.xlane.f32.xlu0 %v4042
        %v4086 = vpop.xlane.xlu0 %4085
        %4087 = vadd.xlane.f32.xlu0 %v4043
        %v4088 = vpop.xlane.xlu0 %4087
        %4089 = vadd.xlane.f32.xlu0 %v4044
        %v4090 = vpop.xlane.xlu0 %4089
        %4091 = vadd.xlane.f32.xlu0 %v4045
        %v4092 = vpop.xlane.xlu0 %4091
        %4093 = vadd.xlane.f32.xlu0 %v4046
        %v4094 = vpop.xlane.xlu0 %4093
        %4095 = vadd.xlane.f32.xlu0 %v4047
        %v4096 = vpop.xlane.xlu0 %4095
        %4097 = vadd.xlane.f32.xlu0 %v4048
        %v4098 = vpop.xlane.xlu0 %4097
        %4099 = vadd.xlane.f32.xlu0 %v4049
        %v4100 = vpop.xlane.xlu0 %4099
        %4101 = vadd.xlane.f32.xlu0 %v4050
        %v4102 = vpop.xlane.xlu0 %4101
        %4103 = vadd.xlane.f32.xlu0 %v4051
        %v4104 = vpop.xlane.xlu0 %4103
        %4105 = vadd.xlane.f32.xlu0 %v4052
        %v4106 = vpop.xlane.xlu0 %4105
        %4107 = vadd.xlane.f32.xlu0 %v4053
        %v4108 = vpop.xlane.xlu0 %4107
        %4109 = vadd.xlane.f32.xlu0 %v4054
        %v4110 = vpop.xlane.xlu0 %4109
        %4111 = vadd.xlane.f32.xlu0 %v4055
        %v4112 = vpop.xlane.xlu0 %4111
        %4113 = vadd.xlane.f32.xlu0 %v4056
        %v4114 = vpop.xlane.xlu0 %4113
        %4115 = vadd.xlane.f32.xlu0 %v4057
        %v4116 = vpop.xlane.xlu0 %4115
        %4117 = vadd.xlane.f32.xlu0 %v4058
        %v4118 = vpop.xlane.xlu0 %4117
        %4119 = vadd.xlane.f32.xlu0 %v4059
        %v4120 = vpop.xlane.xlu0 %4119
        %4121 = vadd.xlane.f32.xlu0 %v4060
        %v4122 = vpop.xlane.xlu0 %4121
        %4123 = vadd.xlane.f32.xlu0 %v4061
        %v4124 = vpop.xlane.xlu0 %4123
        %4125 = vadd.xlane.f32.xlu0 %v4062
        %v4126 = vpop.xlane.xlu0 %4125
        %v4127 = vadd.f32 %v4064, %v3993
        %v4128 = vadd.f32 %v4066, %v3993
        %v4129 = vadd.f32 %v4068, %v3993
        %v4130 = vadd.f32 %v4070, %v3993
        %v4131 = vadd.f32 %v4072, %v3993
        %v4132 = vadd.f32 %v4074, %v3993
        %v4133 = vadd.f32 %v4076, %v3993
        %v4134 = vadd.f32 %v4078, %v3993
        %v4135 = vadd.f32 %v4080, %v3993
        %v4136 = vadd.f32 %v4082, %v3993
        %v4137 = vadd.f32 %v4084, %v3993
        %v4138 = vadd.f32 %v4086, %v3993
        %v4139 = vadd.f32 %v4088, %v3993
        %v4140 = vadd.f32 %v4090, %v3993
        %v4141 = vadd.f32 %v4092, %v3993
        %v4142 = vadd.f32 %v4094, %v3993
        %v4143 = vadd.f32 %v4096, %v3993
        %v4144 = vadd.f32 %v4098, %v3993
        %v4145 = vadd.f32 %v4100, %v3993
        %v4146 = vadd.f32 %v4102, %v3993
        %v4147 = vadd.f32 %v4104, %v3993
        %v4148 = vadd.f32 %v4106, %v3993
        %v4149 = vadd.f32 %v4108, %v3993
        %v4150 = vadd.f32 %v4110, %v3993
        %v4151 = vadd.f32 %v4112, %v3993
        %v4152 = vadd.f32 %v4114, %v3993
        %v4153 = vadd.f32 %v4116, %v3993
        %v4154 = vadd.f32 %v4118, %v3993
        %v4155 = vadd.f32 %v4120, %v3993
        %v4156 = vadd.f32 %v4122, %v3993
        %v4157 = vadd.f32 %v4124, %v3993
        %v4158 = vadd.f32 %v4126, %v3993
        %v4159 = vxor.u32 %v3995, 2147483648
        %v4160 = vxor.u32 %v3996, 2147483648
        %v4161 = vxor.u32 %v3997, 2147483648
        %v4162 = vxor.u32 %v3998, 2147483648
        %v4163 = vxor.u32 %v3999, 2147483648
        %v4164 = vxor.u32 %v4000, 2147483648
        %v4165 = vxor.u32 %v4001, 2147483648
        %v4166 = vxor.u32 %v4002, 2147483648
        %v4167 = vxor.u32 %v4003, 2147483648
        %v4168 = vxor.u32 %v4004, 2147483648
        %v4169 = vxor.u32 %v4005, 2147483648
        %v4170 = vxor.u32 %v4006, 2147483648
        %v4171 = vxor.u32 %v4007, 2147483648
        %v4172 = vxor.u32 %v4008, 2147483648
        %v4173 = vxor.u32 %v4009, 2147483648
        %v4174 = vxor.u32 %v4010, 2147483648
        %v4175 = vxor.u32 %v4011, 2147483648
        %v4176 = vxor.u32 %v4012, 2147483648
        %v4177 = vxor.u32 %v4013, 2147483648
        %v4178 = vxor.u32 %v4014, 2147483648
        %v4179 = vxor.u32 %v4015, 2147483648
        %v4180 = vxor.u32 %v4016, 2147483648
        %v4181 = vxor.u32 %v4017, 2147483648
        %v4182 = vxor.u32 %v4018, 2147483648
        %v4183 = vxor.u32 %v4019, 2147483648
        %v4184 = vxor.u32 %v4020, 2147483648
        %v4185 = vxor.u32 %v4021, 2147483648
        %v4186 = vxor.u32 %v4022, 2147483648
        %v4187 = vxor.u32 %v4023, 2147483648
        %v4188 = vxor.u32 %v4024, 2147483648
        %v4189 = vxor.u32 %v4025, 2147483648
        %v4190 = vxor.u32 %v4026, 2147483648
        %v4191 = vmul.f32 %v4159, 1.442695
        %v4192 = vpow.pop %v4191
        %v4193 = vmul.f32 %v4160, 1.442695
        %v4194 = vpow.pop %v4193
        %v4195 = vmul.f32 %v4161, 1.442695
        %v4196 = vpow.pop %v4195
        %v4197 = vmul.f32 %v4162, 1.442695
        %v4198 = vpow.pop %v4197
        %v4199 = vmul.f32 %v4163, 1.442695
        %v4200 = vpow.pop %v4199
        %v4201 = vmul.f32 %v4164, 1.442695
        %v4202 = vpow.pop %v4201
        %v4203 = vmul.f32 %v4165, 1.442695
        %v4204 = vpow.pop %v4203
        %v4205 = vmul.f32 %v4166, 1.442695
        %v4206 = vpow.pop %v4205
        %v4207 = vmul.f32 %v4167, 1.442695
        %v4208 = vpow.pop %v4207
        %v4209 = vmul.f32 %v4168, 1.442695
        %v4210 = vpow.pop %v4209
        %v4211 = vmul.f32 %v4169, 1.442695
        %v4212 = vpow.pop %v4211
        %v4213 = vmul.f32 %v4170, 1.442695
        %v4214 = vpow.pop %v4213
        %v4215 = vmul.f32 %v4171, 1.442695
        %v4216 = vpow.pop %v4215
        %v4217 = vmul.f32 %v4172, 1.442695
        %v4218 = vpow.pop %v4217
        %v4219 = vmul.f32 %v4173, 1.442695
        %v4220 = vpow.pop %v4219
        %v4221 = vmul.f32 %v4174, 1.442695
        %v4222 = vpow.pop %v4221
        %v4223 = vmul.f32 %v4175, 1.442695
        %v4224 = vpow.pop %v4223
        %v4225 = vmul.f32 %v4176, 1.442695
        %v4226 = vpow.pop %v4225
        %v4227 = vmul.f32 %v4177, 1.442695
        %v4228 = vpow.pop %v4227
        %v4229 = vmul.f32 %v4178, 1.442695
        %v4230 = vpow.pop %v4229
        %v4231 = vmul.f32 %v4179, 1.442695
        %v4232 = vpow.pop %v4231
        %v4233 = vmul.f32 %v4180, 1.442695
        %v4234 = vpow.pop %v4233
        %v4235 = vmul.f32 %v4181, 1.442695
        %v4236 = vpow.pop %v4235
        %v4237 = vmul.f32 %v4182, 1.442695
        %v4238 = vpow.pop %v4237
        %v4239 = vmul.f32 %v4183, 1.442695
        %v4240 = vpow.pop %v4239
        %v4241 = vmul.f32 %v4184, 1.442695
        %v4242 = vpow.pop %v4241
        %v4243 = vmul.f32 %v4185, 1.442695
        %v4244 = vpow.pop %v4243
        %v4245 = vmul.f32 %v4186, 1.442695
        %v4246 = vpow.pop %v4245
        %v4247 = vmul.f32 %v4187, 1.442695
        %v4248 = vpow.pop %v4247
        %v4249 = vmul.f32 %v4188, 1.442695
        %v4250 = vpow.pop %v4249
        %v4251 = vmul.f32 %v4189, 1.442695
        %v4252 = vpow.pop %v4251
        %v4253 = vmul.f32 %v4190, 1.442695
        %v4254 = vpow.pop %v4253
        %v4255 = vadd.f32 %v4192, 1.0
        %v4256 = vadd.f32 %v4194, 1.0
        %v4257 = vadd.f32 %v4196, 1.0
        %v4258 = vadd.f32 %v4198, 1.0
        %v4259 = vadd.f32 %v4200, 1.0
        %v4260 = vadd.f32 %v4202, 1.0
        %v4261 = vadd.f32 %v4204, 1.0
        %v4262 = vadd.f32 %v4206, 1.0
        %v4263 = vadd.f32 %v4208, 1.0
        %v4264 = vadd.f32 %v4210, 1.0
        %v4265 = vadd.f32 %v4212, 1.0
        %v4266 = vadd.f32 %v4214, 1.0
        %v4267 = vadd.f32 %v4216, 1.0
        %v4268 = vadd.f32 %v4218, 1.0
        %v4269 = vadd.f32 %v4220, 1.0
        %v4270 = vadd.f32 %v4222, 1.0
        %v4271 = vadd.f32 %v4224, 1.0
        %v4272 = vadd.f32 %v4226, 1.0
        %v4273 = vadd.f32 %v4228, 1.0
        %v4274 = vadd.f32 %v4230, 1.0
        %v4275 = vadd.f32 %v4232, 1.0
        %v4276 = vadd.f32 %v4234, 1.0
        %v4277 = vadd.f32 %v4236, 1.0
        %v4278 = vadd.f32 %v4238, 1.0
        %v4279 = vadd.f32 %v4240, 1.0
        %v4280 = vadd.f32 %v4242, 1.0
        %v4281 = vadd.f32 %v4244, 1.0
        %v4282 = vadd.f32 %v4246, 1.0
        %v4283 = vadd.f32 %v4248, 1.0
        %v4284 = vadd.f32 %v4250, 1.0
        %v4285 = vadd.f32 %v4252, 1.0
        %v4286 = vadd.f32 %v4254, 1.0
        %v4287 = vrcp.pop %v4255
        %v4288 = vmul.f32 1.0, %v4287
        %v4289 = vrcp.pop %v4256
        %v4290 = vmul.f32 1.0, %v4289
        %v4291 = vrcp.pop %v4257
        %v4292 = vmul.f32 1.0, %v4291
        %v4293 = vrcp.pop %v4258
        %v4294 = vmul.f32 1.0, %v4293
        %v4295 = vrcp.pop %v4259
        %v4296 = vmul.f32 1.0, %v4295
        %v4297 = vrcp.pop %v4260
        %v4298 = vmul.f32 1.0, %v4297
        %v4299 = vrcp.pop %v4261
        %v4300 = vmul.f32 1.0, %v4299
        %v4301 = vrcp.pop %v4262
        %v4302 = vmul.f32 1.0, %v4301
        %v4303 = vrcp.pop %v4263
        %v4304 = vmul.f32 1.0, %v4303
        %v4305 = vrcp.pop %v4264
        %v4306 = vmul.f32 1.0, %v4305
        %v4307 = vrcp.pop %v4265
        %v4308 = vmul.f32 1.0, %v4307
        %v4309 = vrcp.pop %v4266
        %v4310 = vmul.f32 1.0, %v4309
        %v4311 = vrcp.pop %v4267
        %v4312 = vmul.f32 1.0, %v4311
        %v4313 = vrcp.pop %v4268
        %v4314 = vmul.f32 1.0, %v4313
        %v4315 = vrcp.pop %v4269
        %v4316 = vmul.f32 1.0, %v4315
        %v4317 = vrcp.pop %v4270
        %v4318 = vmul.f32 1.0, %v4317
        %v4319 = vrcp.pop %v4271
        %v4320 = vmul.f32 1.0, %v4319
        %v4321 = vrcp.pop %v4272
        %v4322 = vmul.f32 1.0, %v4321
        %v4323 = vrcp.pop %v4273
        %v4324 = vmul.f32 1.0, %v4323
        %v4325 = vrcp.pop %v4274
        %v4326 = vmul.f32 1.0, %v4325
        %v4327 = vrcp.pop %v4275
        %v4328 = vmul.f32 1.0, %v4327
        %v4329 = vrcp.pop %v4276
        %v4330 = vmul.f32 1.0, %v4329
        %v4331 = vrcp.pop %v4277
        %v4332 = vmul.f32 1.0, %v4331
        %v4333 = vrcp.pop %v4278
        %v4334 = vmul.f32 1.0, %v4333
        %v4335 = vrcp.pop %v4279
        %v4336 = vmul.f32 1.0, %v4335
        %v4337 = vrcp.pop %v4280
        %v4338 = vmul.f32 1.0, %v4337
        %v4339 = vrcp.pop %v4281
        %v4340 = vmul.f32 1.0, %v4339
        %v4341 = vrcp.pop %v4282
        %v4342 = vmul.f32 1.0, %v4341
        %v4343 = vrcp.pop %v4283
        %v4344 = vmul.f32 1.0, %v4343
        %v4345 = vrcp.pop %v4284
        %v4346 = vmul.f32 1.0, %v4345
        %v4347 = vrcp.pop %v4285
        %v4348 = vmul.f32 1.0, %v4347
        %v4349 = vrcp.pop %v4286
        %v4350 = vmul.f32 1.0, %v4349
        %4352 = vset.pattern.permute.xlu0 0
        %4353 = vperm.xlu0 %4352, %v4288
        %v4354 = vpop.permute.xlu0 %4353
        %4357 = vset.pattern.permute.xlu0 0
        %4358 = vperm.xlu0 %4357, %v4290
        %v4359 = vpop.permute.xlu0 %4358
        %4362 = vset.pattern.permute.xlu0 0
        %4363 = vperm.xlu0 %4362, %v4292
        %v4364 = vpop.permute.xlu0 %4363
        %4367 = vset.pattern.permute.xlu0 0
        %4368 = vperm.xlu0 %4367, %v4294
        %v4369 = vpop.permute.xlu0 %4368
        %4372 = vset.pattern.permute.xlu0 0
        %4373 = vperm.xlu0 %4372, %v4296
        %v4374 = vpop.permute.xlu0 %4373
        %4377 = vset.pattern.permute.xlu0 0
        %4378 = vperm.xlu0 %4377, %v4298
        %v4379 = vpop.permute.xlu0 %4378
        %4382 = vset.pattern.permute.xlu0 0
        %4383 = vperm.xlu0 %4382, %v4300
        %v4384 = vpop.permute.xlu0 %4383
        %4387 = vset.pattern.permute.xlu0 0
        %4388 = vperm.xlu0 %4387, %v4302
        %v4389 = vpop.permute.xlu0 %4388
        %4392 = vset.pattern.permute.xlu0 0
        %4393 = vperm.xlu0 %4392, %v4304
        %v4394 = vpop.permute.xlu0 %4393
        %4397 = vset.pattern.permute.xlu0 0
        %4398 = vperm.xlu0 %4397, %v4306
        %v4399 = vpop.permute.xlu0 %4398
        %4402 = vset.pattern.permute.xlu0 0
        %4403 = vperm.xlu0 %4402, %v4308
        %v4404 = vpop.permute.xlu0 %4403
        %4407 = vset.pattern.permute.xlu0 0
        %4408 = vperm.xlu0 %4407, %v4310
        %v4409 = vpop.permute.xlu0 %4408
        %4412 = vset.pattern.permute.xlu0 0
        %4413 = vperm.xlu0 %4412, %v4312
        %v4414 = vpop.permute.xlu0 %4413
        %4417 = vset.pattern.permute.xlu0 0
        %4418 = vperm.xlu0 %4417, %v4314
        %v4419 = vpop.permute.xlu0 %4418
        %4422 = vset.pattern.permute.xlu0 0
        %4423 = vperm.xlu0 %4422, %v4316
        %v4424 = vpop.permute.xlu0 %4423
        %4427 = vset.pattern.permute.xlu0 0
        %4428 = vperm.xlu0 %4427, %v4318
        %v4429 = vpop.permute.xlu0 %4428
        %4432 = vset.pattern.permute.xlu0 0
        %4433 = vperm.xlu0 %4432, %v4320
        %v4434 = vpop.permute.xlu0 %4433
        %4437 = vset.pattern.permute.xlu0 0
        %4438 = vperm.xlu0 %4437, %v4322
        %v4439 = vpop.permute.xlu0 %4438
        %4442 = vset.pattern.permute.xlu0 0
        %4443 = vperm.xlu0 %4442, %v4324
        %v4444 = vpop.permute.xlu0 %4443
        %4447 = vset.pattern.permute.xlu0 0
        %4448 = vperm.xlu0 %4447, %v4326
        %v4449 = vpop.permute.xlu0 %4448
        %4452 = vset.pattern.permute.xlu0 0
        %4453 = vperm.xlu0 %4452, %v4328
        %v4454 = vpop.permute.xlu0 %4453
        %4457 = vset.pattern.permute.xlu0 0
        %4458 = vperm.xlu0 %4457, %v4330
        %v4459 = vpop.permute.xlu0 %4458
        %4462 = vset.pattern.permute.xlu0 0
        %4463 = vperm.xlu0 %4462, %v4332
        %v4464 = vpop.permute.xlu0 %4463
        %4467 = vset.pattern.permute.xlu0 0
        %4468 = vperm.xlu0 %4467, %v4334
        %v4469 = vpop.permute.xlu0 %4468
        %4472 = vset.pattern.permute.xlu0 0
        %4473 = vperm.xlu0 %4472, %v4336
        %v4474 = vpop.permute.xlu0 %4473
        %4477 = vset.pattern.permute.xlu0 0
        %4478 = vperm.xlu0 %4477, %v4338
        %v4479 = vpop.permute.xlu0 %4478
        %4482 = vset.pattern.permute.xlu0 0
        %4483 = vperm.xlu0 %4482, %v4340
        %v4484 = vpop.permute.xlu0 %4483
        %4487 = vset.pattern.permute.xlu0 0
        %4488 = vperm.xlu0 %4487, %v4342
        %v4489 = vpop.permute.xlu0 %4488
        %4492 = vset.pattern.permute.xlu0 0
        %4493 = vperm.xlu0 %4492, %v4344
        %v4494 = vpop.permute.xlu0 %4493
        %4497 = vset.pattern.permute.xlu0 0
        %4498 = vperm.xlu0 %4497, %v4346
        %v4499 = vpop.permute.xlu0 %4498
        %4502 = vset.pattern.permute.xlu0 0
        %4503 = vperm.xlu0 %4502, %v4348
        %v4504 = vpop.permute.xlu0 %4503
        %4507 = vset.pattern.permute.xlu0 0
        %4508 = vperm.xlu0 %4507, %v4350
        %v4509 = vpop.permute.xlu0 %4508
        %v4511 = vmul.f32 %v3342, %v4354
        %v4512 = vmul.f32 %v3343, %v4359
        %v4513 = vmul.f32 %v3344, %v4364
        %v4514 = vmul.f32 %v3345, %v4369
        %v4515 = vmul.f32 %v3346, %v4374
        %v4516 = vmul.f32 %v3347, %v4379
        %v4517 = vmul.f32 %v3348, %v4384
        %v4518 = vmul.f32 %v3349, %v4389
        %v4519 = vmul.f32 %v3350, %v4394
        %v4520 = vmul.f32 %v3351, %v4399
        %v4521 = vmul.f32 %v3352, %v4404
        %v4522 = vmul.f32 %v3353, %v4409
        %v4523 = vmul.f32 %v3354, %v4414
        %v4524 = vmul.f32 %v3355, %v4419
        %v4525 = vmul.f32 %v3356, %v4424
        %v4526 = vmul.f32 %v3357, %v4429
        %v4527 = vmul.f32 %v3358, %v4434
        %v4528 = vmul.f32 %v3359, %v4439
        %v4529 = vmul.f32 %v3360, %v4444
        %v4530 = vmul.f32 %v3361, %v4449
        %v4531 = vmul.f32 %v3362, %v4454
        %v4532 = vmul.f32 %v3363, %v4459
        %v4533 = vmul.f32 %v3364, %v4464
        %v4534 = vmul.f32 %v3365, %v4469
        %v4535 = vmul.f32 %v3366, %v4474
        %v4536 = vmul.f32 %v3367, %v4479
        %v4537 = vmul.f32 %v3368, %v4484
        %v4538 = vmul.f32 %v3369, %v4489
        %v4539 = vmul.f32 %v3370, %v4494
        %v4540 = vmul.f32 %v3371, %v4499
        %v4541 = vmul.f32 %v3372, %v4504
        %v4542 = vmul.f32 %v3373, %v4509
        %v4543 = vxor.u32 %v4127, 2147483648
        %v4544 = vxor.u32 %v4128, 2147483648
        %v4545 = vxor.u32 %v4129, 2147483648
        %v4546 = vxor.u32 %v4130, 2147483648
        %v4547 = vxor.u32 %v4131, 2147483648
        %v4548 = vxor.u32 %v4132, 2147483648
        %v4549 = vxor.u32 %v4133, 2147483648
        %v4550 = vxor.u32 %v4134, 2147483648
        %v4551 = vxor.u32 %v4135, 2147483648
        %v4552 = vxor.u32 %v4136, 2147483648
        %v4553 = vxor.u32 %v4137, 2147483648
        %v4554 = vxor.u32 %v4138, 2147483648
        %v4555 = vxor.u32 %v4139, 2147483648
        %v4556 = vxor.u32 %v4140, 2147483648
        %v4557 = vxor.u32 %v4141, 2147483648
        %v4558 = vxor.u32 %v4142, 2147483648
        %v4559 = vxor.u32 %v4143, 2147483648
        %v4560 = vxor.u32 %v4144, 2147483648
        %v4561 = vxor.u32 %v4145, 2147483648
        %v4562 = vxor.u32 %v4146, 2147483648
        %v4563 = vxor.u32 %v4147, 2147483648
        %v4564 = vxor.u32 %v4148, 2147483648
        %v4565 = vxor.u32 %v4149, 2147483648
        %v4566 = vxor.u32 %v4150, 2147483648
        %v4567 = vxor.u32 %v4151, 2147483648
        %v4568 = vxor.u32 %v4152, 2147483648
        %v4569 = vxor.u32 %v4153, 2147483648
        %v4570 = vxor.u32 %v4154, 2147483648
        %v4571 = vxor.u32 %v4155, 2147483648
        %v4572 = vxor.u32 %v4156, 2147483648
        %v4573 = vxor.u32 %v4157, 2147483648
        %v4574 = vxor.u32 %v4158, 2147483648
        %v4575 = vmul.f32 %v4543, 1.442695
        %v4576 = vpow.pop %v4575
        %v4577 = vmul.f32 %v4544, 1.442695
        %v4578 = vpow.pop %v4577
        %v4579 = vmul.f32 %v4545, 1.442695
        %v4580 = vpow.pop %v4579
        %v4581 = vmul.f32 %v4546, 1.442695
        %v4582 = vpow.pop %v4581
        %v4583 = vmul.f32 %v4547, 1.442695
        %v4584 = vpow.pop %v4583
        %v4585 = vmul.f32 %v4548, 1.442695
        %v4586 = vpow.pop %v4585
        %v4587 = vmul.f32 %v4549, 1.442695
        %v4588 = vpow.pop %v4587
        %v4589 = vmul.f32 %v4550, 1.442695
        %v4590 = vpow.pop %v4589
        %v4591 = vmul.f32 %v4551, 1.442695
        %v4592 = vpow.pop %v4591
        %v4593 = vmul.f32 %v4552, 1.442695
        %v4594 = vpow.pop %v4593
        %v4595 = vmul.f32 %v4553, 1.442695
        %v4596 = vpow.pop %v4595
        %v4597 = vmul.f32 %v4554, 1.442695
        %v4598 = vpow.pop %v4597
        %v4599 = vmul.f32 %v4555, 1.442695
        %v4600 = vpow.pop %v4599
        %v4601 = vmul.f32 %v4556, 1.442695
        %v4602 = vpow.pop %v4601
        %v4603 = vmul.f32 %v4557, 1.442695
        %v4604 = vpow.pop %v4603
        %v4605 = vmul.f32 %v4558, 1.442695
        %v4606 = vpow.pop %v4605
        %v4607 = vmul.f32 %v4559, 1.442695
        %v4608 = vpow.pop %v4607
        %v4609 = vmul.f32 %v4560, 1.442695
        %v4610 = vpow.pop %v4609
        %v4611 = vmul.f32 %v4561, 1.442695
        %v4612 = vpow.pop %v4611
        %v4613 = vmul.f32 %v4562, 1.442695
        %v4614 = vpow.pop %v4613
        %v4615 = vmul.f32 %v4563, 1.442695
        %v4616 = vpow.pop %v4615
        %v4617 = vmul.f32 %v4564, 1.442695
        %v4618 = vpow.pop %v4617
        %v4619 = vmul.f32 %v4565, 1.442695
        %v4620 = vpow.pop %v4619
        %v4621 = vmul.f32 %v4566, 1.442695
        %v4622 = vpow.pop %v4621
        %v4623 = vmul.f32 %v4567, 1.442695
        %v4624 = vpow.pop %v4623
        %v4625 = vmul.f32 %v4568, 1.442695
        %v4626 = vpow.pop %v4625
        %v4627 = vmul.f32 %v4569, 1.442695
        %v4628 = vpow.pop %v4627
        %v4629 = vmul.f32 %v4570, 1.442695
        %v4630 = vpow.pop %v4629
        %v4631 = vmul.f32 %v4571, 1.442695
        %v4632 = vpow.pop %v4631
        %v4633 = vmul.f32 %v4572, 1.442695
        %v4634 = vpow.pop %v4633
        %v4635 = vmul.f32 %v4573, 1.442695
        %v4636 = vpow.pop %v4635
        %v4637 = vmul.f32 %v4574, 1.442695
        %v4638 = vpow.pop %v4637
        %v4639 = vadd.f32 %v4576, 1.0
        %v4640 = vadd.f32 %v4578, 1.0
        %v4641 = vadd.f32 %v4580, 1.0
        %v4642 = vadd.f32 %v4582, 1.0
        %v4643 = vadd.f32 %v4584, 1.0
        %v4644 = vadd.f32 %v4586, 1.0
        %v4645 = vadd.f32 %v4588, 1.0
        %v4646 = vadd.f32 %v4590, 1.0
        %v4647 = vadd.f32 %v4592, 1.0
        %v4648 = vadd.f32 %v4594, 1.0
        %v4649 = vadd.f32 %v4596, 1.0
        %v4650 = vadd.f32 %v4598, 1.0
        %v4651 = vadd.f32 %v4600, 1.0
        %v4652 = vadd.f32 %v4602, 1.0
        %v4653 = vadd.f32 %v4604, 1.0
        %v4654 = vadd.f32 %v4606, 1.0
        %v4655 = vadd.f32 %v4608, 1.0
        %v4656 = vadd.f32 %v4610, 1.0
        %v4657 = vadd.f32 %v4612, 1.0
        %v4658 = vadd.f32 %v4614, 1.0
        %v4659 = vadd.f32 %v4616, 1.0
        %v4660 = vadd.f32 %v4618, 1.0
        %v4661 = vadd.f32 %v4620, 1.0
        %v4662 = vadd.f32 %v4622, 1.0
        %v4663 = vadd.f32 %v4624, 1.0
        %v4664 = vadd.f32 %v4626, 1.0
        %v4665 = vadd.f32 %v4628, 1.0
        %v4666 = vadd.f32 %v4630, 1.0
        %v4667 = vadd.f32 %v4632, 1.0
        %v4668 = vadd.f32 %v4634, 1.0
        %v4669 = vadd.f32 %v4636, 1.0
        %v4670 = vadd.f32 %v4638, 1.0
        %v4671 = vrcp.pop %v4639
        %v4672 = vmul.f32 1.0, %v4671
        %v4673 = vrcp.pop %v4640
        %v4674 = vmul.f32 1.0, %v4673
        %v4675 = vrcp.pop %v4641
        %v4676 = vmul.f32 1.0, %v4675
        %v4677 = vrcp.pop %v4642
        %v4678 = vmul.f32 1.0, %v4677
        %v4679 = vrcp.pop %v4643
        %v4680 = vmul.f32 1.0, %v4679
        %v4681 = vrcp.pop %v4644
        %v4682 = vmul.f32 1.0, %v4681
        %v4683 = vrcp.pop %v4645
        %v4684 = vmul.f32 1.0, %v4683
        %v4685 = vrcp.pop %v4646
        %v4686 = vmul.f32 1.0, %v4685
        %v4687 = vrcp.pop %v4647
        %v4688 = vmul.f32 1.0, %v4687
        %v4689 = vrcp.pop %v4648
        %v4690 = vmul.f32 1.0, %v4689
        %v4691 = vrcp.pop %v4649
        %v4692 = vmul.f32 1.0, %v4691
        %v4693 = vrcp.pop %v4650
        %v4694 = vmul.f32 1.0, %v4693
        %v4695 = vrcp.pop %v4651
        %v4696 = vmul.f32 1.0, %v4695
        %v4697 = vrcp.pop %v4652
        %v4698 = vmul.f32 1.0, %v4697
        %v4699 = vrcp.pop %v4653
        %v4700 = vmul.f32 1.0, %v4699
        %v4701 = vrcp.pop %v4654
        %v4702 = vmul.f32 1.0, %v4701
        %v4703 = vrcp.pop %v4655
        %v4704 = vmul.f32 1.0, %v4703
        %v4705 = vrcp.pop %v4656
        %v4706 = vmul.f32 1.0, %v4705
        %v4707 = vrcp.pop %v4657
        %v4708 = vmul.f32 1.0, %v4707
        %v4709 = vrcp.pop %v4658
        %v4710 = vmul.f32 1.0, %v4709
        %v4711 = vrcp.pop %v4659
        %v4712 = vmul.f32 1.0, %v4711
        %v4713 = vrcp.pop %v4660
        %v4714 = vmul.f32 1.0, %v4713
        %v4715 = vrcp.pop %v4661
        %v4716 = vmul.f32 1.0, %v4715
        %v4717 = vrcp.pop %v4662
        %v4718 = vmul.f32 1.0, %v4717
        %v4719 = vrcp.pop %v4663
        %v4720 = vmul.f32 1.0, %v4719
        %v4721 = vrcp.pop %v4664
        %v4722 = vmul.f32 1.0, %v4721
        %v4723 = vrcp.pop %v4665
        %v4724 = vmul.f32 1.0, %v4723
        %v4725 = vrcp.pop %v4666
        %v4726 = vmul.f32 1.0, %v4725
        %v4727 = vrcp.pop %v4667
        %v4728 = vmul.f32 1.0, %v4727
        %v4729 = vrcp.pop %v4668
        %v4730 = vmul.f32 1.0, %v4729
        %v4731 = vrcp.pop %v4669
        %v4732 = vmul.f32 1.0, %v4731
        %v4733 = vrcp.pop %v4670
        %v4734 = vmul.f32 1.0, %v4733
        %4736 = vset.pattern.permute.xlu0 1
        %4737 = vperm.xlu0 %4736, %v4672
        %v4738 = vpop.permute.xlu0 %4737
        %4741 = vset.pattern.permute.xlu0 1
        %4742 = vperm.xlu0 %4741, %v4674
        %v4743 = vpop.permute.xlu0 %4742
        %4746 = vset.pattern.permute.xlu0 1
        %4747 = vperm.xlu0 %4746, %v4676
        %v4748 = vpop.permute.xlu0 %4747
        %4751 = vset.pattern.permute.xlu0 1
        %4752 = vperm.xlu0 %4751, %v4678
        %v4753 = vpop.permute.xlu0 %4752
        %4756 = vset.pattern.permute.xlu0 1
        %4757 = vperm.xlu0 %4756, %v4680
        %v4758 = vpop.permute.xlu0 %4757
        %4761 = vset.pattern.permute.xlu0 1
        %4762 = vperm.xlu0 %4761, %v4682
        %v4763 = vpop.permute.xlu0 %4762
        %4766 = vset.pattern.permute.xlu0 1
        %4767 = vperm.xlu0 %4766, %v4684
        %v4768 = vpop.permute.xlu0 %4767
        %4771 = vset.pattern.permute.xlu0 1
        %4772 = vperm.xlu0 %4771, %v4686
        %v4773 = vpop.permute.xlu0 %4772
        %4776 = vset.pattern.permute.xlu0 1
        %4777 = vperm.xlu0 %4776, %v4688
        %v4778 = vpop.permute.xlu0 %4777
        %4781 = vset.pattern.permute.xlu0 1
        %4782 = vperm.xlu0 %4781, %v4690
        %v4783 = vpop.permute.xlu0 %4782
        %4786 = vset.pattern.permute.xlu0 1
        %4787 = vperm.xlu0 %4786, %v4692
        %v4788 = vpop.permute.xlu0 %4787
        %4791 = vset.pattern.permute.xlu0 1
        %4792 = vperm.xlu0 %4791, %v4694
        %v4793 = vpop.permute.xlu0 %4792
        %4796 = vset.pattern.permute.xlu0 1
        %4797 = vperm.xlu0 %4796, %v4696
        %v4798 = vpop.permute.xlu0 %4797
        %4801 = vset.pattern.permute.xlu0 1
        %4802 = vperm.xlu0 %4801, %v4698
        %v4803 = vpop.permute.xlu0 %4802
        %4806 = vset.pattern.permute.xlu0 1
        %4807 = vperm.xlu0 %4806, %v4700
        %v4808 = vpop.permute.xlu0 %4807
        %4811 = vset.pattern.permute.xlu0 1
        %4812 = vperm.xlu0 %4811, %v4702
        %v4813 = vpop.permute.xlu0 %4812
        %4816 = vset.pattern.permute.xlu0 1
        %4817 = vperm.xlu0 %4816, %v4704
        %v4818 = vpop.permute.xlu0 %4817
        %4821 = vset.pattern.permute.xlu0 1
        %4822 = vperm.xlu0 %4821, %v4706
        %v4823 = vpop.permute.xlu0 %4822
        %4826 = vset.pattern.permute.xlu0 1
        %4827 = vperm.xlu0 %4826, %v4708
        %v4828 = vpop.permute.xlu0 %4827
        %4831 = vset.pattern.permute.xlu0 1
        %4832 = vperm.xlu0 %4831, %v4710
        %v4833 = vpop.permute.xlu0 %4832
        %4836 = vset.pattern.permute.xlu0 1
        %4837 = vperm.xlu0 %4836, %v4712
        %v4838 = vpop.permute.xlu0 %4837
        %4841 = vset.pattern.permute.xlu0 1
        %4842 = vperm.xlu0 %4841, %v4714
        %v4843 = vpop.permute.xlu0 %4842
        %4846 = vset.pattern.permute.xlu0 1
        %4847 = vperm.xlu0 %4846, %v4716
        %v4848 = vpop.permute.xlu0 %4847
        %4851 = vset.pattern.permute.xlu0 1
        %4852 = vperm.xlu0 %4851, %v4718
        %v4853 = vpop.permute.xlu0 %4852
        %4856 = vset.pattern.permute.xlu0 1
        %4857 = vperm.xlu0 %4856, %v4720
        %v4858 = vpop.permute.xlu0 %4857
        %4861 = vset.pattern.permute.xlu0 1
        %4862 = vperm.xlu0 %4861, %v4722
        %v4863 = vpop.permute.xlu0 %4862
        %4866 = vset.pattern.permute.xlu0 1
        %4867 = vperm.xlu0 %4866, %v4724
        %v4868 = vpop.permute.xlu0 %4867
        %4871 = vset.pattern.permute.xlu0 1
        %4872 = vperm.xlu0 %4871, %v4726
        %v4873 = vpop.permute.xlu0 %4872
        %4876 = vset.pattern.permute.xlu0 1
        %4877 = vperm.xlu0 %4876, %v4728
        %v4878 = vpop.permute.xlu0 %4877
        %4881 = vset.pattern.permute.xlu0 1
        %4882 = vperm.xlu0 %4881, %v4730
        %v4883 = vpop.permute.xlu0 %4882
        %4886 = vset.pattern.permute.xlu0 1
        %4887 = vperm.xlu0 %4886, %v4732
        %v4888 = vpop.permute.xlu0 %4887
        %4891 = vset.pattern.permute.xlu0 1
        %4892 = vperm.xlu0 %4891, %v4734
        %v4893 = vpop.permute.xlu0 %4892
        %v4895 = vmul.f32 %v3569, %v4738
        %v4896 = vmul.f32 %v3574, %v4743
        %v4897 = vmul.f32 %v3579, %v4748
        %v4898 = vmul.f32 %v3584, %v4753
        %v4899 = vmul.f32 %v3589, %v4758
        %v4900 = vmul.f32 %v3594, %v4763
        %v4901 = vmul.f32 %v3599, %v4768
        %v4902 = vmul.f32 %v3604, %v4773
        %v4903 = vmul.f32 %v3609, %v4778
        %v4904 = vmul.f32 %v3614, %v4783
        %v4905 = vmul.f32 %v3619, %v4788
        %v4906 = vmul.f32 %v3624, %v4793
        %v4907 = vmul.f32 %v3629, %v4798
        %v4908 = vmul.f32 %v3634, %v4803
        %v4909 = vmul.f32 %v3639, %v4808
        %v4910 = vmul.f32 %v3644, %v4813
        %v4911 = vmul.f32 %v3649, %v4818
        %v4912 = vmul.f32 %v3654, %v4823
        %v4913 = vmul.f32 %v3659, %v4828
        %v4914 = vmul.f32 %v3664, %v4833
        %v4915 = vmul.f32 %v3669, %v4838
        %v4916 = vmul.f32 %v3674, %v4843
        %v4917 = vmul.f32 %v3679, %v4848
        %v4918 = vmul.f32 %v3684, %v4853
        %v4919 = vmul.f32 %v3689, %v4858
        %v4920 = vmul.f32 %v3694, %v4863
        %v4921 = vmul.f32 %v3699, %v4868
        %v4922 = vmul.f32 %v3704, %v4873
        %v4923 = vmul.f32 %v3709, %v4878
        %v4924 = vmul.f32 %v3714, %v4883
        %v4925 = vmul.f32 %v3719, %v4888
        %v4926 = vmul.f32 %v3724, %v4893
        %v4927 = vadd.f32 %v4511, %v4895
        %v4928 = vadd.f32 %v4512, %v4896
        %v4929 = vadd.f32 %v4513, %v4897
        %v4930 = vadd.f32 %v4514, %v4898
        %v4931 = vadd.f32 %v4515, %v4899
        %v4932 = vadd.f32 %v4516, %v4900
        %v4933 = vadd.f32 %v4517, %v4901
        %v4934 = vadd.f32 %v4518, %v4902
        %v4935 = vadd.f32 %v4519, %v4903
        %v4936 = vadd.f32 %v4520, %v4904
        %v4937 = vadd.f32 %v4521, %v4905
        %v4938 = vadd.f32 %v4522, %v4906
        %v4939 = vadd.f32 %v4523, %v4907
        %v4940 = vadd.f32 %v4524, %v4908
        %v4941 = vadd.f32 %v4525, %v4909
        %v4942 = vadd.f32 %v4526, %v4910
        %v4943 = vadd.f32 %v4527, %v4911
        %v4944 = vadd.f32 %v4528, %v4912
        %v4945 = vadd.f32 %v4529, %v4913
        %v4946 = vadd.f32 %v4530, %v4914
        %v4947 = vadd.f32 %v4531, %v4915
        %v4948 = vadd.f32 %v4532, %v4916
        %v4949 = vadd.f32 %v4533, %v4917
        %v4950 = vadd.f32 %v4534, %v4918
        %v4951 = vadd.f32 %v4535, %v4919
        %v4952 = vadd.f32 %v4536, %v4920
        %v4953 = vadd.f32 %v4537, %v4921
        %v4954 = vadd.f32 %v4538, %v4922
        %v4955 = vadd.f32 %v4539, %v4923
        %v4956 = vadd.f32 %v4540, %v4924
        %v4957 = vadd.f32 %v4541, %v4925
        %v4958 = vadd.f32 %v4542, %v4926
        %v4959 = vadd.s32 %v871, 64
        %v4960 = vadd.s32 %v871, 72
        %v4961 = vadd.s32 %v871, 80
        %v4962 = vadd.s32 %v871, 88
        %v4963 = vadd.s32 %v871, 96
        %v4964 = vadd.s32 %v871, 104
        %v4965 = vadd.s32 %v871, 112
        %v4966 = vadd.s32 %v871, 120
        %v4967 = vadd.s32 %v871, 128
        %v4968 = vadd.s32 %v871, 136
        %v4969 = vadd.s32 %v871, 144
        %v4970 = vadd.s32 %v871, 152
        %v4971 = vadd.s32 %v871, 160
        %v4972 = vadd.s32 %v871, 168
        %v4973 = vadd.s32 %v871, 176
        %v4974 = vadd.s32 %v871, 184
        %v4975 = vadd.s32 %v871, 192
        %v4976 = vadd.s32 %v871, 200
        %v4977 = vadd.s32 %v871, 208
        %v4978 = vadd.s32 %v871, 216
        %v4979 = vadd.s32 %v871, 224
        %v4980 = vadd.s32 %v871, 232
        %v4981 = vadd.s32 %v871, 240
        %v4982 = vadd.s32 %v871, 248
        %vm4983 = vcmp.lt.s32.totalorder %v871, 0
        %v4984 = vsub.s32 0, %v871
        %v4985 = vsel %vm4983, %v4984, %v871
        %v4986 = vshrl.u32 %v4985, 4
        %v4987 = vand.u32 %v4985, 15
        %v4988 = vsub.s32 0, %v4987
        %v4989 = vsel %vm4983, %v4988, %v4987
        %vm4990 = vcmp.lt.s32.totalorder %v872, 0
        %v4991 = vsub.s32 0, %v872
        %v4992 = vsel %vm4990, %v4991, %v872
        %v4993 = vshrl.u32 %v4992, 4
        %v4994 = vand.u32 %v4992, 15
        %v4995 = vsub.s32 0, %v4994
        %v4996 = vsel %vm4990, %v4995, %v4994
        %vm4997 = vcmp.lt.s32.totalorder %v2039, 0
        %v4998 = vsub.s32 0, %v2039
        %v4999 = vsel %vm4997, %v4998, %v2039
        %v5000 = vshrl.u32 %v4999, 4
        %v5001 = vand.u32 %v4999, 15
        %v5002 = vsub.s32 0, %v5001
        %v5003 = vsel %vm4997, %v5002, %v5001
        %vm5004 = vcmp.lt.s32.totalorder %v2040, 0
        %v5005 = vsub.s32 0, %v2040
        %v5006 = vsel %vm5004, %v5005, %v2040
        %v5007 = vshrl.u32 %v5006, 4
        %v5008 = vand.u32 %v5006, 15
        %v5009 = vsub.s32 0, %v5008
        %v5010 = vsel %vm5004, %v5009, %v5008
        %vm5011 = vcmp.lt.s32.totalorder %v2041, 0
        %v5012 = vsub.s32 0, %v2041
        %v5013 = vsel %vm5011, %v5012, %v2041
        %v5014 = vshrl.u32 %v5013, 4
        %v5015 = vand.u32 %v5013, 15
        %v5016 = vsub.s32 0, %v5015
        %v5017 = vsel %vm5011, %v5016, %v5015
        %vm5018 = vcmp.lt.s32.totalorder %v2042, 0
        %v5019 = vsub.s32 0, %v2042
        %v5020 = vsel %vm5018, %v5019, %v2042
        %v5021 = vshrl.u32 %v5020, 4
        %v5022 = vand.u32 %v5020, 15
        %v5023 = vsub.s32 0, %v5022
        %v5024 = vsel %vm5018, %v5023, %v5022
        %vm5025 = vcmp.lt.s32.totalorder %v2043, 0
        %v5026 = vsub.s32 0, %v2043
        %v5027 = vsel %vm5025, %v5026, %v2043
        %v5028 = vshrl.u32 %v5027, 4
        %v5029 = vand.u32 %v5027, 15
        %v5030 = vsub.s32 0, %v5029
        %v5031 = vsel %vm5025, %v5030, %v5029
        %vm5032 = vcmp.lt.s32.totalorder %v2044, 0
        %v5033 = vsub.s32 0, %v2044
        %v5034 = vsel %vm5032, %v5033, %v2044
        %v5035 = vshrl.u32 %v5034, 4
        %v5036 = vand.u32 %v5034, 15
        %v5037 = vsub.s32 0, %v5036
        %v5038 = vsel %vm5032, %v5037, %v5036
        %vm5039 = vcmp.lt.s32.totalorder %v4959, 0
        %v5040 = vsub.s32 0, %v4959
        %v5041 = vsel %vm5039, %v5040, %v4959
        %v5042 = vshrl.u32 %v5041, 4
        %v5043 = vand.u32 %v5041, 15
        %v5044 = vsub.s32 0, %v5043
        %v5045 = vsel %vm5039, %v5044, %v5043
        %vm5046 = vcmp.lt.s32.totalorder %v4960, 0
        %v5047 = vsub.s32 0, %v4960
        %v5048 = vsel %vm5046, %v5047, %v4960
        %v5049 = vshrl.u32 %v5048, 4
        %v5050 = vand.u32 %v5048, 15
        %v5051 = vsub.s32 0, %v5050
        %v5052 = vsel %vm5046, %v5051, %v5050
        %vm5053 = vcmp.lt.s32.totalorder %v4961, 0
        %v5054 = vsub.s32 0, %v4961
        %v5055 = vsel %vm5053, %v5054, %v4961
        %v5056 = vshrl.u32 %v5055, 4
        %v5057 = vand.u32 %v5055, 15
        %v5058 = vsub.s32 0, %v5057
        %v5059 = vsel %vm5053, %v5058, %v5057
        %vm5060 = vcmp.lt.s32.totalorder %v4962, 0
        %v5061 = vsub.s32 0, %v4962
        %v5062 = vsel %vm5060, %v5061, %v4962
        %v5063 = vshrl.u32 %v5062, 4
        %v5064 = vand.u32 %v5062, 15
        %v5065 = vsub.s32 0, %v5064
        %v5066 = vsel %vm5060, %v5065, %v5064
        %vm5067 = vcmp.lt.s32.totalorder %v4963, 0
        %v5068 = vsub.s32 0, %v4963
        %v5069 = vsel %vm5067, %v5068, %v4963
        %v5070 = vshrl.u32 %v5069, 4
        %v5071 = vand.u32 %v5069, 15
        %v5072 = vsub.s32 0, %v5071
        %v5073 = vsel %vm5067, %v5072, %v5071
        %vm5074 = vcmp.lt.s32.totalorder %v4964, 0
        %v5075 = vsub.s32 0, %v4964
        %v5076 = vsel %vm5074, %v5075, %v4964
        %v5077 = vshrl.u32 %v5076, 4
        %v5078 = vand.u32 %v5076, 15
        %v5079 = vsub.s32 0, %v5078
        %v5080 = vsel %vm5074, %v5079, %v5078
        %vm5081 = vcmp.lt.s32.totalorder %v4965, 0
        %v5082 = vsub.s32 0, %v4965
        %v5083 = vsel %vm5081, %v5082, %v4965
        %v5084 = vshrl.u32 %v5083, 4
        %v5085 = vand.u32 %v5083, 15
        %v5086 = vsub.s32 0, %v5085
        %v5087 = vsel %vm5081, %v5086, %v5085
        %vm5088 = vcmp.lt.s32.totalorder %v4966, 0
        %v5089 = vsub.s32 0, %v4966
        %v5090 = vsel %vm5088, %v5089, %v4966
        %v5091 = vshrl.u32 %v5090, 4
        %v5092 = vand.u32 %v5090, 15
        %v5093 = vsub.s32 0, %v5092
        %v5094 = vsel %vm5088, %v5093, %v5092
        %vm5095 = vcmp.lt.s32.totalorder %v4967, 0
        %v5096 = vsub.s32 0, %v4967
        %v5097 = vsel %vm5095, %v5096, %v4967
        %v5098 = vshrl.u32 %v5097, 4
        %v5099 = vand.u32 %v5097, 15
        %v5100 = vsub.s32 0, %v5099
        %v5101 = vsel %vm5095, %v5100, %v5099
        %vm5102 = vcmp.lt.s32.totalorder %v4968, 0
        %v5103 = vsub.s32 0, %v4968
        %v5104 = vsel %vm5102, %v5103, %v4968
        %v5105 = vshrl.u32 %v5104, 4
        %v5106 = vand.u32 %v5104, 15
        %v5107 = vsub.s32 0, %v5106
        %v5108 = vsel %vm5102, %v5107, %v5106
        %vm5109 = vcmp.lt.s32.totalorder %v4969, 0
        %v5110 = vsub.s32 0, %v4969
        %v5111 = vsel %vm5109, %v5110, %v4969
        %v5112 = vshrl.u32 %v5111, 4
        %v5113 = vand.u32 %v5111, 15
        %v5114 = vsub.s32 0, %v5113
        %v5115 = vsel %vm5109, %v5114, %v5113
        %vm5116 = vcmp.lt.s32.totalorder %v4970, 0
        %v5117 = vsub.s32 0, %v4970
        %v5118 = vsel %vm5116, %v5117, %v4970
        %v5119 = vshrl.u32 %v5118, 4
        %v5120 = vand.u32 %v5118, 15
        %v5121 = vsub.s32 0, %v5120
        %v5122 = vsel %vm5116, %v5121, %v5120
        %vm5123 = vcmp.lt.s32.totalorder %v4971, 0
        %v5124 = vsub.s32 0, %v4971
        %v5125 = vsel %vm5123, %v5124, %v4971
        %v5126 = vshrl.u32 %v5125, 4
        %v5127 = vand.u32 %v5125, 15
        %v5128 = vsub.s32 0, %v5127
        %v5129 = vsel %vm5123, %v5128, %v5127
        %vm5130 = vcmp.lt.s32.totalorder %v4972, 0
        %v5131 = vsub.s32 0, %v4972
        %v5132 = vsel %vm5130, %v5131, %v4972
        %v5133 = vshrl.u32 %v5132, 4
        %v5134 = vand.u32 %v5132, 15
        %v5135 = vsub.s32 0, %v5134
        %v5136 = vsel %vm5130, %v5135, %v5134
        %vm5137 = vcmp.lt.s32.totalorder %v4973, 0
        %v5138 = vsub.s32 0, %v4973
        %v5139 = vsel %vm5137, %v5138, %v4973
        %v5140 = vshrl.u32 %v5139, 4
        %v5141 = vand.u32 %v5139, 15
        %v5142 = vsub.s32 0, %v5141
        %v5143 = vsel %vm5137, %v5142, %v5141
        %vm5144 = vcmp.lt.s32.totalorder %v4974, 0
        %v5145 = vsub.s32 0, %v4974
        %v5146 = vsel %vm5144, %v5145, %v4974
        %v5147 = vshrl.u32 %v5146, 4
        %v5148 = vand.u32 %v5146, 15
        %v5149 = vsub.s32 0, %v5148
        %v5150 = vsel %vm5144, %v5149, %v5148
        %vm5151 = vcmp.lt.s32.totalorder %v4975, 0
        %v5152 = vsub.s32 0, %v4975
        %v5153 = vsel %vm5151, %v5152, %v4975
        %v5154 = vshrl.u32 %v5153, 4
        %v5155 = vand.u32 %v5153, 15
        %v5156 = vsub.s32 0, %v5155
        %v5157 = vsel %vm5151, %v5156, %v5155
        %vm5158 = vcmp.lt.s32.totalorder %v4976, 0
        %v5159 = vsub.s32 0, %v4976
        %v5160 = vsel %vm5158, %v5159, %v4976
        %v5161 = vshrl.u32 %v5160, 4
        %v5162 = vand.u32 %v5160, 15
        %v5163 = vsub.s32 0, %v5162
        %v5164 = vsel %vm5158, %v5163, %v5162
        %vm5165 = vcmp.lt.s32.totalorder %v4977, 0
        %v5166 = vsub.s32 0, %v4977
        %v5167 = vsel %vm5165, %v5166, %v4977
        %v5168 = vshrl.u32 %v5167, 4
        %v5169 = vand.u32 %v5167, 15
        %v5170 = vsub.s32 0, %v5169
        %v5171 = vsel %vm5165, %v5170, %v5169
        %vm5172 = vcmp.lt.s32.totalorder %v4978, 0
        %v5173 = vsub.s32 0, %v4978
        %v5174 = vsel %vm5172, %v5173, %v4978
        %v5175 = vshrl.u32 %v5174, 4
        %v5176 = vand.u32 %v5174, 15
        %v5177 = vsub.s32 0, %v5176
        %v5178 = vsel %vm5172, %v5177, %v5176
        %vm5179 = vcmp.lt.s32.totalorder %v4979, 0
        %v5180 = vsub.s32 0, %v4979
        %v5181 = vsel %vm5179, %v5180, %v4979
        %v5182 = vshrl.u32 %v5181, 4
        %v5183 = vand.u32 %v5181, 15
        %v5184 = vsub.s32 0, %v5183
        %v5185 = vsel %vm5179, %v5184, %v5183
        %vm5186 = vcmp.lt.s32.totalorder %v4980, 0
        %v5187 = vsub.s32 0, %v4980
        %v5188 = vsel %vm5186, %v5187, %v4980
        %v5189 = vshrl.u32 %v5188, 4
        %v5190 = vand.u32 %v5188, 15
        %v5191 = vsub.s32 0, %v5190
        %v5192 = vsel %vm5186, %v5191, %v5190
        %vm5193 = vcmp.lt.s32.totalorder %v4981, 0
        %v5194 = vsub.s32 0, %v4981
        %v5195 = vsel %vm5193, %v5194, %v4981
        %v5196 = vshrl.u32 %v5195, 4
        %v5197 = vand.u32 %v5195, 15
        %v5198 = vsub.s32 0, %v5197
        %v5199 = vsel %vm5193, %v5198, %v5197
        %vm5200 = vcmp.lt.s32.totalorder %v4982, 0
        %v5201 = vsub.s32 0, %v4982
        %v5202 = vsel %vm5200, %v5201, %v4982
        %v5203 = vshrl.u32 %v5202, 4
        %v5204 = vand.u32 %v5202, 15
        %v5205 = vsub.s32 0, %v5204
        %v5206 = vsel %vm5200, %v5205, %v5204
        %vm5207 = vcmp.ne.s32.totalorder %v4989, 0
        %vm5208 = vcmp.ne.s32.totalorder %v4996, 0
        %vm5209 = vcmp.ne.s32.totalorder %v5003, 0
        %vm5210 = vcmp.ne.s32.totalorder %v5010, 0
        %vm5211 = vcmp.ne.s32.totalorder %v5017, 0
        %vm5212 = vcmp.ne.s32.totalorder %v5024, 0
        %vm5213 = vcmp.ne.s32.totalorder %v5031, 0
        %vm5214 = vcmp.ne.s32.totalorder %v5038, 0
        %vm5215 = vcmp.ne.s32.totalorder %v5045, 0
        %vm5216 = vcmp.ne.s32.totalorder %v5052, 0
        %vm5217 = vcmp.ne.s32.totalorder %v5059, 0
        %vm5218 = vcmp.ne.s32.totalorder %v5066, 0
        %vm5219 = vcmp.ne.s32.totalorder %v5073, 0
        %vm5220 = vcmp.ne.s32.totalorder %v5080, 0
        %vm5221 = vcmp.ne.s32.totalorder %v5087, 0
        %vm5222 = vcmp.ne.s32.totalorder %v5094, 0
        %vm5223 = vcmp.ne.s32.totalorder %v5101, 0
        %vm5224 = vcmp.ne.s32.totalorder %v5108, 0
        %vm5225 = vcmp.ne.s32.totalorder %v5115, 0
        %vm5226 = vcmp.ne.s32.totalorder %v5122, 0
        %vm5227 = vcmp.ne.s32.totalorder %v5129, 0
        %vm5228 = vcmp.ne.s32.totalorder %v5136, 0
        %vm5229 = vcmp.ne.s32.totalorder %v5143, 0
        %vm5230 = vcmp.ne.s32.totalorder %v5150, 0
        %vm5231 = vcmp.ne.s32.totalorder %v5157, 0
        %vm5232 = vcmp.ne.s32.totalorder %v5164, 0
        %vm5233 = vcmp.ne.s32.totalorder %v5171, 0
        %vm5234 = vcmp.ne.s32.totalorder %v5178, 0
        %vm5235 = vcmp.ne.s32.totalorder %v5185, 0
        %vm5236 = vcmp.ne.s32.totalorder %v5192, 0
        %vm5237 = vcmp.ne.s32.totalorder %v5199, 0
        %vm5238 = vcmp.ne.s32.totalorder %v5206, 0
        %vm5239 = vcmp.lt.s32.totalorder %v4989, 0
        %vm5240 = vcmp.lt.s32.totalorder %v4996, 0
        %vm5241 = vcmp.lt.s32.totalorder %v5003, 0
        %vm5242 = vcmp.lt.s32.totalorder %v5010, 0
        %vm5243 = vcmp.lt.s32.totalorder %v5017, 0
        %vm5244 = vcmp.lt.s32.totalorder %v5024, 0
        %vm5245 = vcmp.lt.s32.totalorder %v5031, 0
        %vm5246 = vcmp.lt.s32.totalorder %v5038, 0
        %vm5247 = vcmp.lt.s32.totalorder %v5045, 0
        %vm5248 = vcmp.lt.s32.totalorder %v5052, 0
        %vm5249 = vcmp.lt.s32.totalorder %v5059, 0
        %vm5250 = vcmp.lt.s32.totalorder %v5066, 0
        %vm5251 = vcmp.lt.s32.totalorder %v5073, 0
        %vm5252 = vcmp.lt.s32.totalorder %v5080, 0
        %vm5253 = vcmp.lt.s32.totalorder %v5087, 0
        %vm5254 = vcmp.lt.s32.totalorder %v5094, 0
        %vm5255 = vcmp.lt.s32.totalorder %v5101, 0
        %vm5256 = vcmp.lt.s32.totalorder %v5108, 0
        %vm5257 = vcmp.lt.s32.totalorder %v5115, 0
        %vm5258 = vcmp.lt.s32.totalorder %v5122, 0
        %vm5259 = vcmp.lt.s32.totalorder %v5129, 0
        %vm5260 = vcmp.lt.s32.totalorder %v5136, 0
        %vm5261 = vcmp.lt.s32.totalorder %v5143, 0
        %vm5262 = vcmp.lt.s32.totalorder %v5150, 0
        %vm5263 = vcmp.lt.s32.totalorder %v5157, 0
        %vm5264 = vcmp.lt.s32.totalorder %v5164, 0
        %vm5265 = vcmp.lt.s32.totalorder %v5171, 0
        %vm5266 = vcmp.lt.s32.totalorder %v5178, 0
        %vm5267 = vcmp.lt.s32.totalorder %v5185, 0
        %vm5268 = vcmp.lt.s32.totalorder %v5192, 0
        %vm5269 = vcmp.lt.s32.totalorder %v5199, 0
        %vm5270 = vcmp.lt.s32.totalorder %v5206, 0
        %vm5271 = vmand %vm5239, %vm5207
        %vm5272 = vmand %vm5240, %vm5208
        %vm5273 = vmand %vm5241, %vm5209
        %vm5274 = vmand %vm5242, %vm5210
        %vm5275 = vmand %vm5243, %vm5211
        %vm5276 = vmand %vm5244, %vm5212
        %vm5277 = vmand %vm5245, %vm5213
        %vm5278 = vmand %vm5246, %vm5214
        %vm5279 = vmand %vm5247, %vm5215
        %vm5280 = vmand %vm5248, %vm5216
        %vm5281 = vmand %vm5249, %vm5217
        %vm5282 = vmand %vm5250, %vm5218
        %vm5283 = vmand %vm5251, %vm5219
        %vm5284 = vmand %vm5252, %vm5220
        %vm5285 = vmand %vm5253, %vm5221
        %vm5286 = vmand %vm5254, %vm5222
        %vm5287 = vmand %vm5255, %vm5223
        %vm5288 = vmand %vm5256, %vm5224
        %vm5289 = vmand %vm5257, %vm5225
        %vm5290 = vmand %vm5258, %vm5226
        %vm5291 = vmand %vm5259, %vm5227
        %vm5292 = vmand %vm5260, %vm5228
        %vm5293 = vmand %vm5261, %vm5229
        %vm5294 = vmand %vm5262, %vm5230
        %vm5295 = vmand %vm5263, %vm5231
        %vm5296 = vmand %vm5264, %vm5232
        %vm5297 = vmand %vm5265, %vm5233
        %vm5298 = vmand %vm5266, %vm5234
        %vm5299 = vmand %vm5267, %vm5235
        %vm5300 = vmand %vm5268, %vm5236
        %vm5301 = vmand %vm5269, %vm5237
        %vm5302 = vmand %vm5270, %vm5238
        %v5303 = vadd.s32 %v4989, 16
        %v5304 = vadd.s32 %v4996, 16
        %v5305 = vadd.s32 %v5003, 16
        %v5306 = vadd.s32 %v5010, 16
        %v5307 = vadd.s32 %v5017, 16
        %v5308 = vadd.s32 %v5024, 16
        %v5309 = vadd.s32 %v5031, 16
        %v5310 = vadd.s32 %v5038, 16
        %v5311 = vadd.s32 %v5045, 16
        %v5312 = vadd.s32 %v5052, 16
        %v5313 = vadd.s32 %v5059, 16
        %v5314 = vadd.s32 %v5066, 16
        %v5315 = vadd.s32 %v5073, 16
        %v5316 = vadd.s32 %v5080, 16
        %v5317 = vadd.s32 %v5087, 16
        %v5318 = vadd.s32 %v5094, 16
        %v5319 = vadd.s32 %v5101, 16
        %v5320 = vadd.s32 %v5108, 16
        %v5321 = vadd.s32 %v5115, 16
        %v5322 = vadd.s32 %v5122, 16
        %v5323 = vadd.s32 %v5129, 16
        %v5324 = vadd.s32 %v5136, 16
        %v5325 = vadd.s32 %v5143, 16
        %v5326 = vadd.s32 %v5150, 16
        %v5327 = vadd.s32 %v5157, 16
        %v5328 = vadd.s32 %v5164, 16
        %v5329 = vadd.s32 %v5171, 16
        %v5330 = vadd.s32 %v5178, 16
        %v5331 = vadd.s32 %v5185, 16
        %v5332 = vadd.s32 %v5192, 16
        %v5333 = vadd.s32 %v5199, 16
        %v5334 = vadd.s32 %v5206, 16
        %v5335 = vsel %vm5271, %v5303, %v4989
        %v5336 = vsel %vm5272, %v5304, %v4996
        %v5337 = vsel %vm5273, %v5305, %v5003
        %v5338 = vsel %vm5274, %v5306, %v5010
        %v5339 = vsel %vm5275, %v5307, %v5017
        %v5340 = vsel %vm5276, %v5308, %v5024
        %v5341 = vsel %vm5277, %v5309, %v5031
        %v5342 = vsel %vm5278, %v5310, %v5038
        %v5343 = vsel %vm5279, %v5311, %v5045
        %v5344 = vsel %vm5280, %v5312, %v5052
        %v5345 = vsel %vm5281, %v5313, %v5059
        %v5346 = vsel %vm5282, %v5314, %v5066
        %v5347 = vsel %vm5283, %v5315, %v5073
        %v5348 = vsel %vm5284, %v5316, %v5080
        %v5349 = vsel %vm5285, %v5317, %v5087
        %v5350 = vsel %vm5286, %v5318, %v5094
        %v5351 = vsel %vm5287, %v5319, %v5101
        %v5352 = vsel %vm5288, %v5320, %v5108
        %v5353 = vsel %vm5289, %v5321, %v5115
        %v5354 = vsel %vm5290, %v5322, %v5122
        %v5355 = vsel %vm5291, %v5323, %v5129
        %v5356 = vsel %vm5292, %v5324, %v5136
        %v5357 = vsel %vm5293, %v5325, %v5143
        %v5358 = vsel %vm5294, %v5326, %v5150
        %v5359 = vsel %vm5295, %v5327, %v5157
        %v5360 = vsel %vm5296, %v5328, %v5164
        %v5361 = vsel %vm5297, %v5329, %v5171
        %v5362 = vsel %vm5298, %v5330, %v5178
        %v5363 = vsel %vm5299, %v5331, %v5185
        %v5364 = vsel %vm5300, %v5332, %v5192
        %v5365 = vsel %vm5301, %v5333, %v5199
        %v5366 = vsel %vm5302, %v5334, %v5206
        %vm5367 = vcmp.ge.s32.totalorder %v5335, 1
        %vm5368 = vcmp.ge.s32.totalorder %v5336, 1
        %vm5369 = vcmp.ge.s32.totalorder %v5337, 1
        %vm5370 = vcmp.ge.s32.totalorder %v5338, 1
        %vm5371 = vcmp.ge.s32.totalorder %v5339, 1
        %vm5372 = vcmp.ge.s32.totalorder %v5340, 1
        %vm5373 = vcmp.ge.s32.totalorder %v5341, 1
        %vm5374 = vcmp.ge.s32.totalorder %v5342, 1
        %vm5375 = vcmp.ge.s32.totalorder %v5343, 1
        %vm5376 = vcmp.ge.s32.totalorder %v5344, 1
        %vm5377 = vcmp.ge.s32.totalorder %v5345, 1
        %vm5378 = vcmp.ge.s32.totalorder %v5346, 1
        %vm5379 = vcmp.ge.s32.totalorder %v5347, 1
        %vm5380 = vcmp.ge.s32.totalorder %v5348, 1
        %vm5381 = vcmp.ge.s32.totalorder %v5349, 1
        %vm5382 = vcmp.ge.s32.totalorder %v5350, 1
        %vm5383 = vcmp.ge.s32.totalorder %v5351, 1
        %vm5384 = vcmp.ge.s32.totalorder %v5352, 1
        %vm5385 = vcmp.ge.s32.totalorder %v5353, 1
        %vm5386 = vcmp.ge.s32.totalorder %v5354, 1
        %vm5387 = vcmp.ge.s32.totalorder %v5355, 1
        %vm5388 = vcmp.ge.s32.totalorder %v5356, 1
        %vm5389 = vcmp.ge.s32.totalorder %v5357, 1
        %vm5390 = vcmp.ge.s32.totalorder %v5358, 1
        %vm5391 = vcmp.ge.s32.totalorder %v5359, 1
        %vm5392 = vcmp.ge.s32.totalorder %v5360, 1
        %vm5393 = vcmp.ge.s32.totalorder %v5361, 1
        %vm5394 = vcmp.ge.s32.totalorder %v5362, 1
        %vm5395 = vcmp.ge.s32.totalorder %v5363, 1
        %vm5396 = vcmp.ge.s32.totalorder %v5364, 1
        %vm5397 = vcmp.ge.s32.totalorder %v5365, 1
        %vm5398 = vcmp.ge.s32.totalorder %v5366, 1
        %vm5399 = vcmp.le.s32.totalorder %v5335, 14
        %vm5400 = vcmp.le.s32.totalorder %v5336, 14
        %vm5401 = vcmp.le.s32.totalorder %v5337, 14
        %vm5402 = vcmp.le.s32.totalorder %v5338, 14
        %vm5403 = vcmp.le.s32.totalorder %v5339, 14
        %vm5404 = vcmp.le.s32.totalorder %v5340, 14
        %vm5405 = vcmp.le.s32.totalorder %v5341, 14
        %vm5406 = vcmp.le.s32.totalorder %v5342, 14
        %vm5407 = vcmp.le.s32.totalorder %v5343, 14
        %vm5408 = vcmp.le.s32.totalorder %v5344, 14
        %vm5409 = vcmp.le.s32.totalorder %v5345, 14
        %vm5410 = vcmp.le.s32.totalorder %v5346, 14
        %vm5411 = vcmp.le.s32.totalorder %v5347, 14
        %vm5412 = vcmp.le.s32.totalorder %v5348, 14
        %vm5413 = vcmp.le.s32.totalorder %v5349, 14
        %vm5414 = vcmp.le.s32.totalorder %v5350, 14
        %vm5415 = vcmp.le.s32.totalorder %v5351, 14
        %vm5416 = vcmp.le.s32.totalorder %v5352, 14
        %vm5417 = vcmp.le.s32.totalorder %v5353, 14
        %vm5418 = vcmp.le.s32.totalorder %v5354, 14
        %vm5419 = vcmp.le.s32.totalorder %v5355, 14
        %vm5420 = vcmp.le.s32.totalorder %v5356, 14
        %vm5421 = vcmp.le.s32.totalorder %v5357, 14
        %vm5422 = vcmp.le.s32.totalorder %v5358, 14
        %vm5423 = vcmp.le.s32.totalorder %v5359, 14
        %vm5424 = vcmp.le.s32.totalorder %v5360, 14
        %vm5425 = vcmp.le.s32.totalorder %v5361, 14
        %vm5426 = vcmp.le.s32.totalorder %v5362, 14
        %vm5427 = vcmp.le.s32.totalorder %v5363, 14
        %vm5428 = vcmp.le.s32.totalorder %v5364, 14
        %vm5429 = vcmp.le.s32.totalorder %v5365, 14
        %vm5430 = vcmp.le.s32.totalorder %v5366, 14
        %v5431 = vsel %vm5367, 1, 0
        %v5432 = vsel %vm5368, 1, 0
        %v5433 = vsel %vm5369, 1, 0
        %v5434 = vsel %vm5370, 1, 0
        %v5435 = vsel %vm5371, 1, 0
        %v5436 = vsel %vm5372, 1, 0
        %v5437 = vsel %vm5373, 1, 0
        %v5438 = vsel %vm5374, 1, 0
        %v5439 = vsel %vm5375, 1, 0
        %v5440 = vsel %vm5376, 1, 0
        %v5441 = vsel %vm5377, 1, 0
        %v5442 = vsel %vm5378, 1, 0
        %v5443 = vsel %vm5379, 1, 0
        %v5444 = vsel %vm5380, 1, 0
        %v5445 = vsel %vm5381, 1, 0
        %v5446 = vsel %vm5382, 1, 0
        %v5447 = vsel %vm5383, 1, 0
        %v5448 = vsel %vm5384, 1, 0
        %v5449 = vsel %vm5385, 1, 0
        %v5450 = vsel %vm5386, 1, 0
        %v5451 = vsel %vm5387, 1, 0
        %v5452 = vsel %vm5388, 1, 0
        %v5453 = vsel %vm5389, 1, 0
        %v5454 = vsel %vm5390, 1, 0
        %v5455 = vsel %vm5391, 1, 0
        %v5456 = vsel %vm5392, 1, 0
        %v5457 = vsel %vm5393, 1, 0
        %v5458 = vsel %vm5394, 1, 0
        %v5459 = vsel %vm5395, 1, 0
        %v5460 = vsel %vm5396, 1, 0
        %v5461 = vsel %vm5397, 1, 0
        %v5462 = vsel %vm5398, 1, 0
        %vm5463 = vcmp.eq.s32.totalorder %v5431, 1
        %vm5464 = vcmp.eq.s32.totalorder %v5432, 1
        %vm5465 = vcmp.eq.s32.totalorder %v5433, 1
        %vm5466 = vcmp.eq.s32.totalorder %v5434, 1
        %vm5467 = vcmp.eq.s32.totalorder %v5435, 1
        %vm5468 = vcmp.eq.s32.totalorder %v5436, 1
        %vm5469 = vcmp.eq.s32.totalorder %v5437, 1
        %vm5470 = vcmp.eq.s32.totalorder %v5438, 1
        %vm5471 = vcmp.eq.s32.totalorder %v5439, 1
        %vm5472 = vcmp.eq.s32.totalorder %v5440, 1
        %vm5473 = vcmp.eq.s32.totalorder %v5441, 1
        %vm5474 = vcmp.eq.s32.totalorder %v5442, 1
        %vm5475 = vcmp.eq.s32.totalorder %v5443, 1
        %vm5476 = vcmp.eq.s32.totalorder %v5444, 1
        %vm5477 = vcmp.eq.s32.totalorder %v5445, 1
        %vm5478 = vcmp.eq.s32.totalorder %v5446, 1
        %vm5479 = vcmp.eq.s32.totalorder %v5447, 1
        %vm5480 = vcmp.eq.s32.totalorder %v5448, 1
        %vm5481 = vcmp.eq.s32.totalorder %v5449, 1
        %vm5482 = vcmp.eq.s32.totalorder %v5450, 1
        %vm5483 = vcmp.eq.s32.totalorder %v5451, 1
        %vm5484 = vcmp.eq.s32.totalorder %v5452, 1
        %vm5485 = vcmp.eq.s32.totalorder %v5453, 1
        %vm5486 = vcmp.eq.s32.totalorder %v5454, 1
        %vm5487 = vcmp.eq.s32.totalorder %v5455, 1
        %vm5488 = vcmp.eq.s32.totalorder %v5456, 1
        %vm5489 = vcmp.eq.s32.totalorder %v5457, 1
        %vm5490 = vcmp.eq.s32.totalorder %v5458, 1
        %vm5491 = vcmp.eq.s32.totalorder %v5459, 1
        %vm5492 = vcmp.eq.s32.totalorder %v5460, 1
        %vm5493 = vcmp.eq.s32.totalorder %v5461, 1
        %vm5494 = vcmp.eq.s32.totalorder %v5462, 1
        %v5525 = vrot.slane %v4927, 7
        %v5526 = vsel %vm932, %v933, %v5525
        %v5527 = vrot.slane %v4928, 7
        %v5528 = vsel %vm932, %v5525, %v5527
        %v5529 = vrot.slane %v4929, 7
        %v5530 = vsel %vm932, %v5527, %v5529
        %v5531 = vrot.slane %v4930, 7
        %v5532 = vsel %vm932, %v5529, %v5531
        %v5533 = vrot.slane %v4931, 7
        %v5534 = vsel %vm932, %v5531, %v5533
        %v5535 = vrot.slane %v4932, 7
        %v5536 = vsel %vm932, %v5533, %v5535
        %v5537 = vrot.slane %v4933, 7
        %v5538 = vsel %vm932, %v5535, %v5537
        %v5539 = vrot.slane %v4934, 7
        %v5540 = vsel %vm932, %v5537, %v5539
        %v5541 = vrot.slane %v4935, 7
        %v5542 = vsel %vm932, %v5539, %v5541
        %v5543 = vrot.slane %v4936, 7
        %v5544 = vsel %vm932, %v5541, %v5543
        %v5545 = vrot.slane %v4937, 7
        %v5546 = vsel %vm932, %v5543, %v5545
        %v5547 = vrot.slane %v4938, 7
        %v5548 = vsel %vm932, %v5545, %v5547
        %v5549 = vrot.slane %v4939, 7
        %v5550 = vsel %vm932, %v5547, %v5549
        %v5551 = vrot.slane %v4940, 7
        %v5552 = vsel %vm932, %v5549, %v5551
        %v5553 = vrot.slane %v4941, 7
        %v5554 = vsel %vm932, %v5551, %v5553
        %v5555 = vrot.slane %v4942, 7
        %v5556 = vsel %vm932, %v5553, %v5555
        %v5557 = vrot.slane %v4943, 7
        %v5558 = vsel %vm932, %v5555, %v5557
        %v5559 = vrot.slane %v4944, 7
        %v5560 = vsel %vm932, %v5557, %v5559
        %v5561 = vrot.slane %v4945, 7
        %v5562 = vsel %vm932, %v5559, %v5561
        %v5563 = vrot.slane %v4946, 7
        %v5564 = vsel %vm932, %v5561, %v5563
        %v5565 = vrot.slane %v4947, 7
        %v5566 = vsel %vm932, %v5563, %v5565
        %v5567 = vrot.slane %v4948, 7
        %v5568 = vsel %vm932, %v5565, %v5567
        %v5569 = vrot.slane %v4949, 7
        %v5570 = vsel %vm932, %v5567, %v5569
        %v5571 = vrot.slane %v4950, 7
        %v5572 = vsel %vm932, %v5569, %v5571
        %v5573 = vrot.slane %v4951, 7
        %v5574 = vsel %vm932, %v5571, %v5573
        %v5575 = vrot.slane %v4952, 7
        %v5576 = vsel %vm932, %v5573, %v5575
        %v5577 = vrot.slane %v4953, 7
        %v5578 = vsel %vm932, %v5575, %v5577
        %v5579 = vrot.slane %v4954, 7
        %v5580 = vsel %vm932, %v5577, %v5579
        %v5581 = vrot.slane %v4955, 7
        %v5582 = vsel %vm932, %v5579, %v5581
        %v5583 = vrot.slane %v4956, 7
        %v5584 = vsel %vm932, %v5581, %v5583
        %v5615 = vsel %vm5463, %v2180, 0.0
        %v5616 = vsel %vm5464, %v2180, 0.0
        %v5617 = vsel %vm5465, %v5526, 0.0
        %v5618 = vsel %vm5466, %v5528, 0.0
        %v5619 = vsel %vm5467, %v5530, 0.0
        %v5620 = vsel %vm5468, %v5532, 0.0
        %v5621 = vsel %vm5469, %v5534, 0.0
        %v5622 = vsel %vm5470, %v5536, 0.0
        %v5623 = vsel %vm5471, %v5538, 0.0
        %v5624 = vsel %vm5472, %v5540, 0.0
        %v5625 = vsel %vm5473, %v5542, 0.0
        %v5626 = vsel %vm5474, %v5544, 0.0
        %v5627 = vsel %vm5475, %v5546, 0.0
        %v5628 = vsel %vm5476, %v5548, 0.0
        %v5629 = vsel %vm5477, %v5550, 0.0
        %v5630 = vsel %vm5478, %v5552, 0.0
        %v5631 = vsel %vm5479, %v5554, 0.0
        %v5632 = vsel %vm5480, %v5556, 0.0
        %v5633 = vsel %vm5481, %v5558, 0.0
        %v5634 = vsel %vm5482, %v5560, 0.0
        %v5635 = vsel %vm5483, %v5562, 0.0
        %v5636 = vsel %vm5484, %v5564, 0.0
        %v5637 = vsel %vm5485, %v5566, 0.0
        %v5638 = vsel %vm5486, %v5568, 0.0
        %v5639 = vsel %vm5487, %v5570, 0.0
        %v5640 = vsel %vm5488, %v5572, 0.0
        %v5641 = vsel %vm5489, %v5574, 0.0
        %v5642 = vsel %vm5490, %v5576, 0.0
        %v5643 = vsel %vm5491, %v5578, 0.0
        %v5644 = vsel %vm5492, %v5580, 0.0
        %v5645 = vsel %vm5493, %v5582, 0.0
        %v5646 = vsel %vm5494, %v5584, 0.0
        %v5647 = vsel %vm5399, 1, 0
        %v5648 = vsel %vm5400, 1, 0
        %v5649 = vsel %vm5401, 1, 0
        %v5650 = vsel %vm5402, 1, 0
        %v5651 = vsel %vm5403, 1, 0
        %v5652 = vsel %vm5404, 1, 0
        %v5653 = vsel %vm5405, 1, 0
        %v5654 = vsel %vm5406, 1, 0
        %v5655 = vsel %vm5407, 1, 0
        %v5656 = vsel %vm5408, 1, 0
        %v5657 = vsel %vm5409, 1, 0
        %v5658 = vsel %vm5410, 1, 0
        %v5659 = vsel %vm5411, 1, 0
        %v5660 = vsel %vm5412, 1, 0
        %v5661 = vsel %vm5413, 1, 0
        %v5662 = vsel %vm5414, 1, 0
        %v5663 = vsel %vm5415, 1, 0
        %v5664 = vsel %vm5416, 1, 0
        %v5665 = vsel %vm5417, 1, 0
        %v5666 = vsel %vm5418, 1, 0
        %v5667 = vsel %vm5419, 1, 0
        %v5668 = vsel %vm5420, 1, 0
        %v5669 = vsel %vm5421, 1, 0
        %v5670 = vsel %vm5422, 1, 0
        %v5671 = vsel %vm5423, 1, 0
        %v5672 = vsel %vm5424, 1, 0
        %v5673 = vsel %vm5425, 1, 0
        %v5674 = vsel %vm5426, 1, 0
        %v5675 = vsel %vm5427, 1, 0
        %v5676 = vsel %vm5428, 1, 0
        %v5677 = vsel %vm5429, 1, 0
        %v5678 = vsel %vm5430, 1, 0
        %vm5679 = vcmp.eq.s32.totalorder %v5647, 1
        %vm5680 = vcmp.eq.s32.totalorder %v5648, 1
        %vm5681 = vcmp.eq.s32.totalorder %v5649, 1
        %vm5682 = vcmp.eq.s32.totalorder %v5650, 1
        %vm5683 = vcmp.eq.s32.totalorder %v5651, 1
        %vm5684 = vcmp.eq.s32.totalorder %v5652, 1
        %vm5685 = vcmp.eq.s32.totalorder %v5653, 1
        %vm5686 = vcmp.eq.s32.totalorder %v5654, 1
        %vm5687 = vcmp.eq.s32.totalorder %v5655, 1
        %vm5688 = vcmp.eq.s32.totalorder %v5656, 1
        %vm5689 = vcmp.eq.s32.totalorder %v5657, 1
        %vm5690 = vcmp.eq.s32.totalorder %v5658, 1
        %vm5691 = vcmp.eq.s32.totalorder %v5659, 1
        %vm5692 = vcmp.eq.s32.totalorder %v5660, 1
        %vm5693 = vcmp.eq.s32.totalorder %v5661, 1
        %vm5694 = vcmp.eq.s32.totalorder %v5662, 1
        %vm5695 = vcmp.eq.s32.totalorder %v5663, 1
        %vm5696 = vcmp.eq.s32.totalorder %v5664, 1
        %vm5697 = vcmp.eq.s32.totalorder %v5665, 1
        %vm5698 = vcmp.eq.s32.totalorder %v5666, 1
        %vm5699 = vcmp.eq.s32.totalorder %v5667, 1
        %vm5700 = vcmp.eq.s32.totalorder %v5668, 1
        %vm5701 = vcmp.eq.s32.totalorder %v5669, 1
        %vm5702 = vcmp.eq.s32.totalorder %v5670, 1
        %vm5703 = vcmp.eq.s32.totalorder %v5671, 1
        %vm5704 = vcmp.eq.s32.totalorder %v5672, 1
        %vm5705 = vcmp.eq.s32.totalorder %v5673, 1
        %vm5706 = vcmp.eq.s32.totalorder %v5674, 1
        %vm5707 = vcmp.eq.s32.totalorder %v5675, 1
        %vm5708 = vcmp.eq.s32.totalorder %v5676, 1
        %vm5709 = vcmp.eq.s32.totalorder %v5677, 1
        %vm5710 = vcmp.eq.s32.totalorder %v5678, 1
        %v5712 = vrot.slane %v4927, 1
        %v5713 = vsel %vm942, %v946, %v5712
        %v5714 = vrot.slane %v4928, 1
        %v5715 = vsel %vm942, %v5712, %v5714
        %v5716 = vrot.slane %v4929, 1
        %v5717 = vsel %vm942, %v5714, %v5716
        %v5718 = vrot.slane %v4930, 1
        %v5719 = vsel %vm942, %v5716, %v5718
        %v5720 = vrot.slane %v4931, 1
        %v5721 = vsel %vm942, %v5718, %v5720
        %v5722 = vrot.slane %v4932, 1
        %v5723 = vsel %vm942, %v5720, %v5722
        %v5724 = vrot.slane %v4933, 1
        %v5725 = vsel %vm942, %v5722, %v5724
        %v5726 = vrot.slane %v4934, 1
        %v5727 = vsel %vm942, %v5724, %v5726
        %v5728 = vrot.slane %v4935, 1
        %v5729 = vsel %vm942, %v5726, %v5728
        %v5730 = vrot.slane %v4936, 1
        %v5731 = vsel %vm942, %v5728, %v5730
        %v5732 = vrot.slane %v4937, 1
        %v5733 = vsel %vm942, %v5730, %v5732
        %v5734 = vrot.slane %v4938, 1
        %v5735 = vsel %vm942, %v5732, %v5734
        %v5736 = vrot.slane %v4939, 1
        %v5737 = vsel %vm942, %v5734, %v5736
        %v5738 = vrot.slane %v4940, 1
        %v5739 = vsel %vm942, %v5736, %v5738
        %v5740 = vrot.slane %v4941, 1
        %v5741 = vsel %vm942, %v5738, %v5740
        %v5742 = vrot.slane %v4942, 1
        %v5743 = vsel %vm942, %v5740, %v5742
        %v5744 = vrot.slane %v4943, 1
        %v5745 = vsel %vm942, %v5742, %v5744
        %v5746 = vrot.slane %v4944, 1
        %v5747 = vsel %vm942, %v5744, %v5746
        %v5748 = vrot.slane %v4945, 1
        %v5749 = vsel %vm942, %v5746, %v5748
        %v5750 = vrot.slane %v4946, 1
        %v5751 = vsel %vm942, %v5748, %v5750
        %v5752 = vrot.slane %v4947, 1
        %v5753 = vsel %vm942, %v5750, %v5752
        %v5754 = vrot.slane %v4948, 1
        %v5755 = vsel %vm942, %v5752, %v5754
        %v5756 = vrot.slane %v4949, 1
        %v5757 = vsel %vm942, %v5754, %v5756
        %v5758 = vrot.slane %v4950, 1
        %v5759 = vsel %vm942, %v5756, %v5758
        %v5760 = vrot.slane %v4951, 1
        %v5761 = vsel %vm942, %v5758, %v5760
        %v5762 = vrot.slane %v4952, 1
        %v5763 = vsel %vm942, %v5760, %v5762
        %v5764 = vrot.slane %v4953, 1
        %v5765 = vsel %vm942, %v5762, %v5764
        %v5766 = vrot.slane %v4954, 1
        %v5767 = vsel %vm942, %v5764, %v5766
        %v5768 = vrot.slane %v4955, 1
        %v5769 = vsel %vm942, %v5766, %v5768
        %v5770 = vrot.slane %v4956, 1
        %v5771 = vsel %vm942, %v5768, %v5770
        %v5772 = vrot.slane %v4957, 1
        %v5773 = vsel %vm942, %v5770, %v5772
        %v5805 = vsel %vm5679, %v2291, 0.0
        %v5806 = vsel %vm5680, %v5713, 0.0
        %v5807 = vsel %vm5681, %v5715, 0.0
        %v5808 = vsel %vm5682, %v5717, 0.0
        %v5809 = vsel %vm5683, %v5719, 0.0
        %v5810 = vsel %vm5684, %v5721, 0.0
        %v5811 = vsel %vm5685, %v5723, 0.0
        %v5812 = vsel %vm5686, %v5725, 0.0
        %v5813 = vsel %vm5687, %v5727, 0.0
        %v5814 = vsel %vm5688, %v5729, 0.0
        %v5815 = vsel %vm5689, %v5731, 0.0
        %v5816 = vsel %vm5690, %v5733, 0.0
        %v5817 = vsel %vm5691, %v5735, 0.0
        %v5818 = vsel %vm5692, %v5737, 0.0
        %v5819 = vsel %vm5693, %v5739, 0.0
        %v5820 = vsel %vm5694, %v5741, 0.0
        %v5821 = vsel %vm5695, %v5743, 0.0
        %v5822 = vsel %vm5696, %v5745, 0.0
        %v5823 = vsel %vm5697, %v5747, 0.0
        %v5824 = vsel %vm5698, %v5749, 0.0
        %v5825 = vsel %vm5699, %v5751, 0.0
        %v5826 = vsel %vm5700, %v5753, 0.0
        %v5827 = vsel %vm5701, %v5755, 0.0
        %v5828 = vsel %vm5702, %v5757, 0.0
        %v5829 = vsel %vm5703, %v5759, 0.0
        %v5830 = vsel %vm5704, %v5761, 0.0
        %v5831 = vsel %vm5705, %v5763, 0.0
        %v5832 = vsel %vm5706, %v5765, 0.0
        %v5833 = vsel %vm5707, %v5767, 0.0
        %v5834 = vsel %vm5708, %v5769, 0.0
        %v5835 = vsel %vm5709, %v5771, 0.0
        %v5836 = vsel %vm5710, %v5773, 0.0
        %v5838 = vrot.slane %v4957, 7
        %v5839 = vsel %vm932, %v5583, %v5838
        %v5840 = vrot.slane %v4958, 7
        %v5841 = vsel %vm932, %v5838, %v5840
        %v5844 = vsel %vm5463, %v5526, 0.0
        %v5845 = vsel %vm5464, %v5528, 0.0
        %v5846 = vsel %vm5465, %v5530, 0.0
        %v5847 = vsel %vm5466, %v5532, 0.0
        %v5848 = vsel %vm5467, %v5534, 0.0
        %v5849 = vsel %vm5468, %v5536, 0.0
        %v5850 = vsel %vm5469, %v5538, 0.0
        %v5851 = vsel %vm5470, %v5540, 0.0
        %v5852 = vsel %vm5471, %v5542, 0.0
        %v5853 = vsel %vm5472, %v5544, 0.0
        %v5854 = vsel %vm5473, %v5546, 0.0
        %v5855 = vsel %vm5474, %v5548, 0.0
        %v5856 = vsel %vm5475, %v5550, 0.0
        %v5857 = vsel %vm5476, %v5552, 0.0
        %v5858 = vsel %vm5477, %v5554, 0.0
        %v5859 = vsel %vm5478, %v5556, 0.0
        %v5860 = vsel %vm5479, %v5558, 0.0
        %v5861 = vsel %vm5480, %v5560, 0.0
        %v5862 = vsel %vm5481, %v5562, 0.0
        %v5863 = vsel %vm5482, %v5564, 0.0
        %v5864 = vsel %vm5483, %v5566, 0.0
        %v5865 = vsel %vm5484, %v5568, 0.0
        %v5866 = vsel %vm5485, %v5570, 0.0
        %v5867 = vsel %vm5486, %v5572, 0.0
        %v5868 = vsel %vm5487, %v5574, 0.0
        %v5869 = vsel %vm5488, %v5576, 0.0
        %v5870 = vsel %vm5489, %v5578, 0.0
        %v5871 = vsel %vm5490, %v5580, 0.0
        %v5872 = vsel %vm5491, %v5582, 0.0
        %v5873 = vsel %vm5492, %v5584, 0.0
        %v5874 = vsel %vm5493, %v5839, 0.0
        %v5875 = vsel %vm5494, %v5841, 0.0
        %v5876 = vrot.slane %v4958, 1
        %v5877 = vsel %vm942, %v5772, %v5876
        %v5878 = vsel %vm942, %v5876, %v946
        %v5881 = vsel %vm5679, %v5715, 0.0
        %v5882 = vsel %vm5680, %v5717, 0.0
        %v5883 = vsel %vm5681, %v5719, 0.0
        %v5884 = vsel %vm5682, %v5721, 0.0
        %v5885 = vsel %vm5683, %v5723, 0.0
        %v5886 = vsel %vm5684, %v5725, 0.0
        %v5887 = vsel %vm5685, %v5727, 0.0
        %v5888 = vsel %vm5686, %v5729, 0.0
        %v5889 = vsel %vm5687, %v5731, 0.0
        %v5890 = vsel %vm5688, %v5733, 0.0
        %v5891 = vsel %vm5689, %v5735, 0.0
        %v5892 = vsel %vm5690, %v5737, 0.0
        %v5893 = vsel %vm5691, %v5739, 0.0
        %v5894 = vsel %vm5692, %v5741, 0.0
        %v5895 = vsel %vm5693, %v5743, 0.0
        %v5896 = vsel %vm5694, %v5745, 0.0
        %v5897 = vsel %vm5695, %v5747, 0.0
        %v5898 = vsel %vm5696, %v5749, 0.0
        %v5899 = vsel %vm5697, %v5751, 0.0
        %v5900 = vsel %vm5698, %v5753, 0.0
        %v5901 = vsel %vm5699, %v5755, 0.0
        %v5902 = vsel %vm5700, %v5757, 0.0
        %v5903 = vsel %vm5701, %v5759, 0.0
        %v5904 = vsel %vm5702, %v5761, 0.0
        %v5905 = vsel %vm5703, %v5763, 0.0
        %v5906 = vsel %vm5704, %v5765, 0.0
        %v5907 = vsel %vm5705, %v5767, 0.0
        %v5908 = vsel %vm5706, %v5769, 0.0
        %v5909 = vsel %vm5707, %v5771, 0.0
        %v5910 = vsel %vm5708, %v5773, 0.0
        %v5911 = vsel %vm5709, %v5877, 0.0
        %v5912 = vsel %vm5710, %v5878, 0.0
        %v5913 = vsel %vm932, %v5840, %v933
        %v5915 = vsel %vm5463, %v5530, 0.0
        %v5916 = vsel %vm5464, %v5532, 0.0
        %v5917 = vsel %vm5465, %v5534, 0.0
        %v5918 = vsel %vm5466, %v5536, 0.0
        %v5919 = vsel %vm5467, %v5538, 0.0
        %v5920 = vsel %vm5468, %v5540, 0.0
        %v5921 = vsel %vm5469, %v5542, 0.0
        %v5922 = vsel %vm5470, %v5544, 0.0
        %v5923 = vsel %vm5471, %v5546, 0.0
        %v5924 = vsel %vm5472, %v5548, 0.0
        %v5925 = vsel %vm5473, %v5550, 0.0
        %v5926 = vsel %vm5474, %v5552, 0.0
        %v5927 = vsel %vm5475, %v5554, 0.0
        %v5928 = vsel %vm5476, %v5556, 0.0
        %v5929 = vsel %vm5477, %v5558, 0.0
        %v5930 = vsel %vm5478, %v5560, 0.0
        %v5931 = vsel %vm5479, %v5562, 0.0
        %v5932 = vsel %vm5480, %v5564, 0.0
        %v5933 = vsel %vm5481, %v5566, 0.0
        %v5934 = vsel %vm5482, %v5568, 0.0
        %v5935 = vsel %vm5483, %v5570, 0.0
        %v5936 = vsel %vm5484, %v5572, 0.0
        %v5937 = vsel %vm5485, %v5574, 0.0
        %v5938 = vsel %vm5486, %v5576, 0.0
        %v5939 = vsel %vm5487, %v5578, 0.0
        %v5940 = vsel %vm5488, %v5580, 0.0
        %v5941 = vsel %vm5489, %v5582, 0.0
        %v5942 = vsel %vm5490, %v5584, 0.0
        %v5943 = vsel %vm5491, %v5839, 0.0
        %v5944 = vsel %vm5492, %v5841, 0.0
        %v5945 = vsel %vm5493, %v5913, 0.0
        %v5946 = vsel %vm5494, %v2180, 0.0
        %v5947 = vsel %vm5679, %v5719, 0.0
        %v5948 = vsel %vm5680, %v5721, 0.0
        %v5949 = vsel %vm5681, %v5723, 0.0
        %v5950 = vsel %vm5682, %v5725, 0.0
        %v5951 = vsel %vm5683, %v5727, 0.0
        %v5952 = vsel %vm5684, %v5729, 0.0
        %v5953 = vsel %vm5685, %v5731, 0.0
        %v5954 = vsel %vm5686, %v5733, 0.0
        %v5955 = vsel %vm5687, %v5735, 0.0
        %v5956 = vsel %vm5688, %v5737, 0.0
        %v5957 = vsel %vm5689, %v5739, 0.0
        %v5958 = vsel %vm5690, %v5741, 0.0
        %v5959 = vsel %vm5691, %v5743, 0.0
        %v5960 = vsel %vm5692, %v5745, 0.0
        %v5961 = vsel %vm5693, %v5747, 0.0
        %v5962 = vsel %vm5694, %v5749, 0.0
        %v5963 = vsel %vm5695, %v5751, 0.0
        %v5964 = vsel %vm5696, %v5753, 0.0
        %v5965 = vsel %vm5697, %v5755, 0.0
        %v5966 = vsel %vm5698, %v5757, 0.0
        %v5967 = vsel %vm5699, %v5759, 0.0
        %v5968 = vsel %vm5700, %v5761, 0.0
        %v5969 = vsel %vm5701, %v5763, 0.0
        %v5970 = vsel %vm5702, %v5765, 0.0
        %v5971 = vsel %vm5703, %v5767, 0.0
        %v5972 = vsel %vm5704, %v5769, 0.0
        %v5973 = vsel %vm5705, %v5771, 0.0
        %v5974 = vsel %vm5706, %v5773, 0.0
        %v5975 = vsel %vm5707, %v5877, 0.0
        %v5976 = vsel %vm5708, %v5878, 0.0
        %v5977 = vsel %vm5709, %v2291, 0.0
        %v5978 = vsel %vm5710, %v2291, 0.0
        %5979 = vrot.lane.b32.xlu0 %v4927, 64
        %v5980 = vpop.permute.xlu0 %5979
        %5981 = vrot.lane.b32.xlu0 %v4928, 64
        %v5982 = vpop.permute.xlu0 %5981
        %5983 = vrot.lane.b32.xlu0 %v4929, 64
        %v5984 = vpop.permute.xlu0 %5983
        %5985 = vrot.lane.b32.xlu0 %v4930, 64
        %v5986 = vpop.permute.xlu0 %5985
        %5987 = vrot.lane.b32.xlu0 %v4931, 64
        %v5988 = vpop.permute.xlu0 %5987
        %5989 = vrot.lane.b32.xlu0 %v4932, 64
        %v5990 = vpop.permute.xlu0 %5989
        %5991 = vrot.lane.b32.xlu0 %v4933, 64
        %v5992 = vpop.permute.xlu0 %5991
        %5993 = vrot.lane.b32.xlu0 %v4934, 64
        %v5994 = vpop.permute.xlu0 %5993
        %5995 = vrot.lane.b32.xlu0 %v4935, 64
        %v5996 = vpop.permute.xlu0 %5995
        %5997 = vrot.lane.b32.xlu0 %v4936, 64
        %v5998 = vpop.permute.xlu0 %5997
        %5999 = vrot.lane.b32.xlu0 %v4937, 64
        %v6000 = vpop.permute.xlu0 %5999
        %6001 = vrot.lane.b32.xlu0 %v4938, 64
        %v6002 = vpop.permute.xlu0 %6001
        %6003 = vrot.lane.b32.xlu0 %v4939, 64
        %v6004 = vpop.permute.xlu0 %6003
        %6005 = vrot.lane.b32.xlu0 %v4940, 64
        %v6006 = vpop.permute.xlu0 %6005
        %6007 = vrot.lane.b32.xlu0 %v4941, 64
        %v6008 = vpop.permute.xlu0 %6007
        %6009 = vrot.lane.b32.xlu0 %v4942, 64
        %v6010 = vpop.permute.xlu0 %6009
        %6011 = vrot.lane.b32.xlu0 %v4943, 64
        %v6012 = vpop.permute.xlu0 %6011
        %6013 = vrot.lane.b32.xlu0 %v4944, 64
        %v6014 = vpop.permute.xlu0 %6013
        %6015 = vrot.lane.b32.xlu0 %v4945, 64
        %v6016 = vpop.permute.xlu0 %6015
        %6017 = vrot.lane.b32.xlu0 %v4946, 64
        %v6018 = vpop.permute.xlu0 %6017
        %6019 = vrot.lane.b32.xlu0 %v4947, 64
        %v6020 = vpop.permute.xlu0 %6019
        %6021 = vrot.lane.b32.xlu0 %v4948, 64
        %v6022 = vpop.permute.xlu0 %6021
        %6023 = vrot.lane.b32.xlu0 %v4949, 64
        %v6024 = vpop.permute.xlu0 %6023
        %6025 = vrot.lane.b32.xlu0 %v4950, 64
        %v6026 = vpop.permute.xlu0 %6025
        %6027 = vrot.lane.b32.xlu0 %v4951, 64
        %v6028 = vpop.permute.xlu0 %6027
        %6029 = vrot.lane.b32.xlu0 %v4952, 64
        %v6030 = vpop.permute.xlu0 %6029
        %6031 = vrot.lane.b32.xlu0 %v4953, 64
        %v6032 = vpop.permute.xlu0 %6031
        %6033 = vrot.lane.b32.xlu0 %v4954, 64
        %v6034 = vpop.permute.xlu0 %6033
        %6035 = vrot.lane.b32.xlu0 %v4955, 64
        %v6036 = vpop.permute.xlu0 %6035
        %6037 = vrot.lane.b32.xlu0 %v4956, 64
        %v6038 = vpop.permute.xlu0 %6037
        %6101 = vrot.lane.b32.xlu0 %v5844, 64
        %v6102 = vpop.permute.xlu0 %6101
        %6103 = vrot.lane.b32.xlu0 %v5845, 64
        %v6104 = vpop.permute.xlu0 %6103
        %6105 = vrot.lane.b32.xlu0 %v5846, 64
        %v6106 = vpop.permute.xlu0 %6105
        %6107 = vrot.lane.b32.xlu0 %v5847, 64
        %v6108 = vpop.permute.xlu0 %6107
        %6109 = vrot.lane.b32.xlu0 %v5848, 64
        %v6110 = vpop.permute.xlu0 %6109
        %6111 = vrot.lane.b32.xlu0 %v5849, 64
        %v6112 = vpop.permute.xlu0 %6111
        %6113 = vrot.lane.b32.xlu0 %v5850, 64
        %v6114 = vpop.permute.xlu0 %6113
        %6115 = vrot.lane.b32.xlu0 %v5851, 64
        %v6116 = vpop.permute.xlu0 %6115
        %6117 = vrot.lane.b32.xlu0 %v5852, 64
        %v6118 = vpop.permute.xlu0 %6117
        %6119 = vrot.lane.b32.xlu0 %v5853, 64
        %v6120 = vpop.permute.xlu0 %6119
        %6121 = vrot.lane.b32.xlu0 %v5854, 64
        %v6122 = vpop.permute.xlu0 %6121
        %6123 = vrot.lane.b32.xlu0 %v5855, 64
        %v6124 = vpop.permute.xlu0 %6123
        %6125 = vrot.lane.b32.xlu0 %v5856, 64
        %v6126 = vpop.permute.xlu0 %6125
        %6127 = vrot.lane.b32.xlu0 %v5857, 64
        %v6128 = vpop.permute.xlu0 %6127
        %6129 = vrot.lane.b32.xlu0 %v5858, 64
        %v6130 = vpop.permute.xlu0 %6129
        %6131 = vrot.lane.b32.xlu0 %v5859, 64
        %v6132 = vpop.permute.xlu0 %6131
        %6133 = vrot.lane.b32.xlu0 %v5860, 64
        %v6134 = vpop.permute.xlu0 %6133
        %6135 = vrot.lane.b32.xlu0 %v5861, 64
        %v6136 = vpop.permute.xlu0 %6135
        %6137 = vrot.lane.b32.xlu0 %v5862, 64
        %v6138 = vpop.permute.xlu0 %6137
        %6139 = vrot.lane.b32.xlu0 %v5863, 64
        %v6140 = vpop.permute.xlu0 %6139
        %6141 = vrot.lane.b32.xlu0 %v5864, 64
        %v6142 = vpop.permute.xlu0 %6141
        %6143 = vrot.lane.b32.xlu0 %v5865, 64
        %v6144 = vpop.permute.xlu0 %6143
        %6145 = vrot.lane.b32.xlu0 %v5866, 64
        %v6146 = vpop.permute.xlu0 %6145
        %6147 = vrot.lane.b32.xlu0 %v5867, 64
        %v6148 = vpop.permute.xlu0 %6147
        %6149 = vrot.lane.b32.xlu0 %v5868, 64
        %v6150 = vpop.permute.xlu0 %6149
        %6151 = vrot.lane.b32.xlu0 %v5869, 64
        %v6152 = vpop.permute.xlu0 %6151
        %6153 = vrot.lane.b32.xlu0 %v5870, 64
        %v6154 = vpop.permute.xlu0 %6153
        %6155 = vrot.lane.b32.xlu0 %v5871, 64
        %v6156 = vpop.permute.xlu0 %6155
        %6157 = vrot.lane.b32.xlu0 %v5872, 64
        %v6158 = vpop.permute.xlu0 %6157
        %6159 = vrot.lane.b32.xlu0 %v5873, 64
        %v6160 = vpop.permute.xlu0 %6159
        %6161 = vrot.lane.b32.xlu0 %v5874, 64
        %v6162 = vpop.permute.xlu0 %6161
        %6163 = vrot.lane.b32.xlu0 %v5875, 64
        %v6164 = vpop.permute.xlu0 %6163
        %6229 = vrot.lane.b32.xlu0 %v5881, 64
        %v6230 = vpop.permute.xlu0 %6229
        %6231 = vrot.lane.b32.xlu0 %v5882, 64
        %v6232 = vpop.permute.xlu0 %6231
        %6233 = vrot.lane.b32.xlu0 %v5883, 64
        %v6234 = vpop.permute.xlu0 %6233
        %6235 = vrot.lane.b32.xlu0 %v5884, 64
        %v6236 = vpop.permute.xlu0 %6235
        %6237 = vrot.lane.b32.xlu0 %v5885, 64
        %v6238 = vpop.permute.xlu0 %6237
        %6239 = vrot.lane.b32.xlu0 %v5886, 64
        %v6240 = vpop.permute.xlu0 %6239
        %6241 = vrot.lane.b32.xlu0 %v5887, 64
        %v6242 = vpop.permute.xlu0 %6241
        %6243 = vrot.lane.b32.xlu0 %v5888, 64
        %v6244 = vpop.permute.xlu0 %6243
        %6245 = vrot.lane.b32.xlu0 %v5889, 64
        %v6246 = vpop.permute.xlu0 %6245
        %6247 = vrot.lane.b32.xlu0 %v5890, 64
        %v6248 = vpop.permute.xlu0 %6247
        %6249 = vrot.lane.b32.xlu0 %v5891, 64
        %v6250 = vpop.permute.xlu0 %6249
        %6251 = vrot.lane.b32.xlu0 %v5892, 64
        %v6252 = vpop.permute.xlu0 %6251
        %6253 = vrot.lane.b32.xlu0 %v5893, 64
        %v6254 = vpop.permute.xlu0 %6253
        %6255 = vrot.lane.b32.xlu0 %v5894, 64
        %v6256 = vpop.permute.xlu0 %6255
        %6257 = vrot.lane.b32.xlu0 %v5895, 64
        %v6258 = vpop.permute.xlu0 %6257
        %6259 = vrot.lane.b32.xlu0 %v5896, 64
        %v6260 = vpop.permute.xlu0 %6259
        %6261 = vrot.lane.b32.xlu0 %v5897, 64
        %v6262 = vpop.permute.xlu0 %6261
        %6263 = vrot.lane.b32.xlu0 %v5898, 64
        %v6264 = vpop.permute.xlu0 %6263
        %6265 = vrot.lane.b32.xlu0 %v5899, 64
        %v6266 = vpop.permute.xlu0 %6265
        %6267 = vrot.lane.b32.xlu0 %v5900, 64
        %v6268 = vpop.permute.xlu0 %6267
        %6269 = vrot.lane.b32.xlu0 %v5901, 64
        %v6270 = vpop.permute.xlu0 %6269
        %6271 = vrot.lane.b32.xlu0 %v5902, 64
        %v6272 = vpop.permute.xlu0 %6271
        %6273 = vrot.lane.b32.xlu0 %v5903, 64
        %v6274 = vpop.permute.xlu0 %6273
        %6275 = vrot.lane.b32.xlu0 %v5904, 64
        %v6276 = vpop.permute.xlu0 %6275
        %6277 = vrot.lane.b32.xlu0 %v5905, 64
        %v6278 = vpop.permute.xlu0 %6277
        %6279 = vrot.lane.b32.xlu0 %v5906, 64
        %v6280 = vpop.permute.xlu0 %6279
        %6281 = vrot.lane.b32.xlu0 %v5907, 64
        %v6282 = vpop.permute.xlu0 %6281
        %6283 = vrot.lane.b32.xlu0 %v5908, 64
        %v6284 = vpop.permute.xlu0 %6283
        %6285 = vrot.lane.b32.xlu0 %v5909, 64
        %v6286 = vpop.permute.xlu0 %6285
        %6287 = vrot.lane.b32.xlu0 %v5910, 64
        %v6288 = vpop.permute.xlu0 %6287
        %6289 = vrot.lane.b32.xlu0 %v5911, 64
        %v6290 = vpop.permute.xlu0 %6289
        %6291 = vrot.lane.b32.xlu0 %v5912, 64
        %v6292 = vpop.permute.xlu0 %6291
        %6325 = vrot.lane.b32.xlu0 %v4957, 64
        %v6326 = vpop.permute.xlu0 %6325
        %6327 = vrot.lane.b32.xlu0 %v4958, 64
        %v6328 = vpop.permute.xlu0 %6327
        %v6331 = vsel %vm813, %v5615, %v2302
        %v6332 = vsel %vm813, %v5616, %v2302
        %v6333 = vsel %vm813, %v5617, %v5980
        %v6334 = vsel %vm813, %v5618, %v5982
        %v6335 = vsel %vm813, %v5619, %v5984
        %v6336 = vsel %vm813, %v5620, %v5986
        %v6337 = vsel %vm813, %v5621, %v5988
        %v6338 = vsel %vm813, %v5622, %v5990
        %v6339 = vsel %vm813, %v5623, %v5992
        %v6340 = vsel %vm813, %v5624, %v5994
        %v6341 = vsel %vm813, %v5625, %v5996
        %v6342 = vsel %vm813, %v5626, %v5998
        %v6343 = vsel %vm813, %v5627, %v6000
        %v6344 = vsel %vm813, %v5628, %v6002
        %v6345 = vsel %vm813, %v5629, %v6004
        %v6346 = vsel %vm813, %v5630, %v6006
        %v6347 = vsel %vm813, %v5631, %v6008
        %v6348 = vsel %vm813, %v5632, %v6010
        %v6349 = vsel %vm813, %v5633, %v6012
        %v6350 = vsel %vm813, %v5634, %v6014
        %v6351 = vsel %vm813, %v5635, %v6016
        %v6352 = vsel %vm813, %v5636, %v6018
        %v6353 = vsel %vm813, %v5637, %v6020
        %v6354 = vsel %vm813, %v5638, %v6022
        %v6355 = vsel %vm813, %v5639, %v6024
        %v6356 = vsel %vm813, %v5640, %v6026
        %v6357 = vsel %vm813, %v5641, %v6028
        %v6358 = vsel %vm813, %v5642, %v6030
        %v6359 = vsel %vm813, %v5643, %v6032
        %v6360 = vsel %vm813, %v5644, %v6034
        %v6361 = vsel %vm813, %v5645, %v6036
        %v6362 = vsel %vm813, %v5646, %v6038
        %v6363 = vsel %vm813, %v5805, %v6102
        %v6364 = vsel %vm813, %v5806, %v6104
        %v6365 = vsel %vm813, %v5807, %v6106
        %v6366 = vsel %vm813, %v5808, %v6108
        %v6367 = vsel %vm813, %v5809, %v6110
        %v6368 = vsel %vm813, %v5810, %v6112
        %v6369 = vsel %vm813, %v5811, %v6114
        %v6370 = vsel %vm813, %v5812, %v6116
        %v6371 = vsel %vm813, %v5813, %v6118
        %v6372 = vsel %vm813, %v5814, %v6120
        %v6373 = vsel %vm813, %v5815, %v6122
        %v6374 = vsel %vm813, %v5816, %v6124
        %v6375 = vsel %vm813, %v5817, %v6126
        %v6376 = vsel %vm813, %v5818, %v6128
        %v6377 = vsel %vm813, %v5819, %v6130
        %v6378 = vsel %vm813, %v5820, %v6132
        %v6379 = vsel %vm813, %v5821, %v6134
        %v6380 = vsel %vm813, %v5822, %v6136
        %v6381 = vsel %vm813, %v5823, %v6138
        %v6382 = vsel %vm813, %v5824, %v6140
        %v6383 = vsel %vm813, %v5825, %v6142
        %v6384 = vsel %vm813, %v5826, %v6144
        %v6385 = vsel %vm813, %v5827, %v6146
        %v6386 = vsel %vm813, %v5828, %v6148
        %v6387 = vsel %vm813, %v5829, %v6150
        %v6388 = vsel %vm813, %v5830, %v6152
        %v6389 = vsel %vm813, %v5831, %v6154
        %v6390 = vsel %vm813, %v5832, %v6156
        %v6391 = vsel %vm813, %v5833, %v6158
        %v6392 = vsel %vm813, %v5834, %v6160
        %v6393 = vsel %vm813, %v5835, %v6162
        %v6394 = vsel %vm813, %v5836, %v6164
        %v6395 = vsel %vm813, %v4927, %v6230
        %v6396 = vsel %vm813, %v4928, %v6232
        %v6397 = vsel %vm813, %v4929, %v6234
        %v6398 = vsel %vm813, %v4930, %v6236
        %v6399 = vsel %vm813, %v4931, %v6238
        %v6400 = vsel %vm813, %v4932, %v6240
        %v6401 = vsel %vm813, %v4933, %v6242
        %v6402 = vsel %vm813, %v4934, %v6244
        %v6403 = vsel %vm813, %v4935, %v6246
        %v6404 = vsel %vm813, %v4936, %v6248
        %v6405 = vsel %vm813, %v4937, %v6250
        %v6406 = vsel %vm813, %v4938, %v6252
        %v6407 = vsel %vm813, %v4939, %v6254
        %v6408 = vsel %vm813, %v4940, %v6256
        %v6409 = vsel %vm813, %v4941, %v6258
        %v6410 = vsel %vm813, %v4942, %v6260
        %v6411 = vsel %vm813, %v4943, %v6262
        %v6412 = vsel %vm813, %v4944, %v6264
        %v6413 = vsel %vm813, %v4945, %v6266
        %v6414 = vsel %vm813, %v4946, %v6268
        %v6415 = vsel %vm813, %v4947, %v6270
        %v6416 = vsel %vm813, %v4948, %v6272
        %v6417 = vsel %vm813, %v4949, %v6274
        %v6418 = vsel %vm813, %v4950, %v6276
        %v6419 = vsel %vm813, %v4951, %v6278
        %v6420 = vsel %vm813, %v4952, %v6280
        %v6421 = vsel %vm813, %v4953, %v6282
        %v6422 = vsel %vm813, %v4954, %v6284
        %v6423 = vsel %vm813, %v4955, %v6286
        %v6424 = vsel %vm813, %v4956, %v6288
        %v6425 = vsel %vm813, %v4957, %v6290
        %v6426 = vsel %vm813, %v4958, %v6292
        %v6427 = vsel %vm813, %v5915, %v5984
        %v6428 = vsel %vm813, %v5916, %v5986
        %v6429 = vsel %vm813, %v5917, %v5988
        %v6430 = vsel %vm813, %v5918, %v5990
        %v6431 = vsel %vm813, %v5919, %v5992
        %v6432 = vsel %vm813, %v5920, %v5994
        %v6433 = vsel %vm813, %v5921, %v5996
        %v6434 = vsel %vm813, %v5922, %v5998
        %v6435 = vsel %vm813, %v5923, %v6000
        %v6436 = vsel %vm813, %v5924, %v6002
        %v6437 = vsel %vm813, %v5925, %v6004
        %v6438 = vsel %vm813, %v5926, %v6006
        %v6439 = vsel %vm813, %v5927, %v6008
        %v6440 = vsel %vm813, %v5928, %v6010
        %v6441 = vsel %vm813, %v5929, %v6012
        %v6442 = vsel %vm813, %v5930, %v6014
        %v6443 = vsel %vm813, %v5931, %v6016
        %v6444 = vsel %vm813, %v5932, %v6018
        %v6445 = vsel %vm813, %v5933, %v6020
        %v6446 = vsel %vm813, %v5934, %v6022
        %v6447 = vsel %vm813, %v5935, %v6024
        %v6448 = vsel %vm813, %v5936, %v6026
        %v6449 = vsel %vm813, %v5937, %v6028
        %v6450 = vsel %vm813, %v5938, %v6030
        %v6451 = vsel %vm813, %v5939, %v6032
        %v6452 = vsel %vm813, %v5940, %v6034
        %v6453 = vsel %vm813, %v5941, %v6036
        %v6454 = vsel %vm813, %v5942, %v6038
        %v6455 = vsel %vm813, %v5943, %v6326
        %v6456 = vsel %vm813, %v5944, %v6328
        %v6457 = vsel %vm813, %v5945, %v2302
        %v6458 = vsel %vm813, %v5946, %v2302
        %v6459 = vpack.c.bf16 %v6332, %v6331
        %v6460 = vpack.c.bf16 %v6364, %v6363
        %v6461 = vpack.c.bf16 %v6396, %v6395
        %v6462 = vpack.c.bf16 %v6428, %v6427
        %v6463 = vpack.c.bf16 %v5948, %v5947
        %v6464 = vpack.c.bf16 %v6334, %v6333
        %v6465 = vpack.c.bf16 %v6366, %v6365
        %v6466 = vpack.c.bf16 %v6398, %v6397
        %v6467 = vpack.c.bf16 %v6430, %v6429
        %v6468 = vpack.c.bf16 %v5950, %v5949
        %v6469 = vpack.c.bf16 %v6336, %v6335
        %v6470 = vpack.c.bf16 %v6368, %v6367
        %v6471 = vpack.c.bf16 %v6400, %v6399
        %v6472 = vpack.c.bf16 %v6432, %v6431
        %v6473 = vpack.c.bf16 %v5952, %v5951
        %v6474 = vpack.c.bf16 %v6338, %v6337
        %v6475 = vpack.c.bf16 %v6370, %v6369
        %v6476 = vpack.c.bf16 %v6402, %v6401
        %v6477 = vpack.c.bf16 %v6434, %v6433
        %v6478 = vpack.c.bf16 %v5954, %v5953
        %v6479 = vpack.c.bf16 %v6340, %v6339
        %v6480 = vpack.c.bf16 %v6372, %v6371
        %v6481 = vpack.c.bf16 %v6404, %v6403
        %v6482 = vpack.c.bf16 %v6436, %v6435
        %v6483 = vpack.c.bf16 %v5956, %v5955
        %v6484 = vpack.c.bf16 %v6342, %v6341
        %v6485 = vpack.c.bf16 %v6374, %v6373
        %v6486 = vpack.c.bf16 %v6406, %v6405
        %v6487 = vpack.c.bf16 %v6438, %v6437
        %v6488 = vpack.c.bf16 %v5958, %v5957
        %v6489 = vpack.c.bf16 %v6344, %v6343
        %v6490 = vpack.c.bf16 %v6376, %v6375
        %v6491 = vpack.c.bf16 %v6408, %v6407
        %v6492 = vpack.c.bf16 %v6440, %v6439
        %v6493 = vpack.c.bf16 %v5960, %v5959
        %v6494 = vpack.c.bf16 %v6346, %v6345
        %v6495 = vpack.c.bf16 %v6378, %v6377
        %v6496 = vpack.c.bf16 %v6410, %v6409
        %v6497 = vpack.c.bf16 %v6442, %v6441
        %v6498 = vpack.c.bf16 %v5962, %v5961
        %v6499 = vpack.c.bf16 %v6348, %v6347
        %v6500 = vpack.c.bf16 %v6380, %v6379
        %v6501 = vpack.c.bf16 %v6412, %v6411
        %v6502 = vpack.c.bf16 %v6444, %v6443
        %v6503 = vpack.c.bf16 %v5964, %v5963
        %v6504 = vpack.c.bf16 %v6350, %v6349
        %v6505 = vpack.c.bf16 %v6382, %v6381
        %v6506 = vpack.c.bf16 %v6414, %v6413
        %v6507 = vpack.c.bf16 %v6446, %v6445
        %v6508 = vpack.c.bf16 %v5966, %v5965
        %v6509 = vpack.c.bf16 %v6352, %v6351
        %v6510 = vpack.c.bf16 %v6384, %v6383
        %v6511 = vpack.c.bf16 %v6416, %v6415
        %v6512 = vpack.c.bf16 %v6448, %v6447
        %v6513 = vpack.c.bf16 %v5968, %v5967
        %v6514 = vpack.c.bf16 %v6354, %v6353
        %v6515 = vpack.c.bf16 %v6386, %v6385
        %v6516 = vpack.c.bf16 %v6418, %v6417
        %v6517 = vpack.c.bf16 %v6450, %v6449
        %v6518 = vpack.c.bf16 %v5970, %v5969
        %v6519 = vpack.c.bf16 %v6356, %v6355
        %v6520 = vpack.c.bf16 %v6388, %v6387
        %v6521 = vpack.c.bf16 %v6420, %v6419
        %v6522 = vpack.c.bf16 %v6452, %v6451
        %v6523 = vpack.c.bf16 %v5972, %v5971
        %v6524 = vpack.c.bf16 %v6358, %v6357
        %v6525 = vpack.c.bf16 %v6390, %v6389
        %v6526 = vpack.c.bf16 %v6422, %v6421
        %v6527 = vpack.c.bf16 %v6454, %v6453
        %v6528 = vpack.c.bf16 %v5974, %v5973
        %v6529 = vpack.c.bf16 %v6360, %v6359
        %v6530 = vpack.c.bf16 %v6392, %v6391
        %v6531 = vpack.c.bf16 %v6424, %v6423
        %v6532 = vpack.c.bf16 %v6456, %v6455
        %v6533 = vpack.c.bf16 %v5976, %v5975
        %v6534 = vpack.c.bf16 %v6362, %v6361
        %v6535 = vpack.c.bf16 %v6394, %v6393
        %v6536 = vpack.c.bf16 %v6426, %v6425
        %v6537 = vpack.c.bf16 %v6458, %v6457
        %v6538 = vpack.c.bf16 %v5978, %v5977
        %v6539 = vld [vmem:[%s19] sm:$0x3]
        %v6540 = vld [vmem:[%s18] sm:$0xf]
        %v6541 = vld [vmem:[%s18 + $0x4] sm:$0xf]
        %v6542 = vld [vmem:[%s18 + $0x8] sm:$0xf]
        %v6543 = vld [vmem:[%s18 + $0xc] sm:$0xf]
        %v6544 = vld [vmem:[%s18 + $0x10] sm:$0xf]
        %v6545 = vld [vmem:[%s18 + $0x14] sm:$0xf]
        %v6546 = vld [vmem:[%s18 + $0x18] sm:$0xf]
        %v6547 = vld [vmem:[%s18 + $0x1c] sm:$0xf]
        %v6548 = vld [vmem:[%s18 + $0x20] sm:$0xf]
        %v6549 = vld [vmem:[%s18 + $0x24] sm:$0xf]
        %v6550 = vld [vmem:[%s18 + $0x28] sm:$0xf]
        %v6551 = vld [vmem:[%s18 + $0x2c] sm:$0xf]
        %v6552 = vld [vmem:[%s18 + $0x30] sm:$0xf]
        %v6553 = vld [vmem:[%s18 + $0x34] sm:$0xf]
        %v6554 = vld [vmem:[%s18 + $0x38] sm:$0xf]
        %v6555 = vld [vmem:[%s18 + $0x3c] sm:$0xf]
        %v6556 = vld [vmem:[%s18 + $0x40] sm:$0xf]
        %v6557 = vld [vmem:[%s18 + $0x44] sm:$0xf]
        %v6558 = vld [vmem:[%s18 + $0x48] sm:$0xf]
        %v6559 = vld [vmem:[%s18 + $0x4c] sm:$0xf]
        %v6560 = vld [vmem:[%s18 + $0x50] sm:$0xf]
        %v6561 = vld [vmem:[%s18 + $0x54] sm:$0xf]
        %v6562 = vld [vmem:[%s18 + $0x58] sm:$0xf]
        %v6563 = vld [vmem:[%s18 + $0x5c] sm:$0xf]
        %v6564 = vld [vmem:[%s18 + $0x60] sm:$0xf]
        %v6565 = vld [vmem:[%s18 + $0x64] sm:$0xf]
        %v6566 = vld [vmem:[%s18 + $0x68] sm:$0xf]
        %v6567 = vld [vmem:[%s18 + $0x6c] sm:$0xf]
        %v6568 = vld [vmem:[%s18 + $0x70] sm:$0xf]
        %v6569 = vld [vmem:[%s18 + $0x74] sm:$0xf]
        %v6570 = vld [vmem:[%s18 + $0x78] sm:$0xf]
        %v6571 = vld [vmem:[%s18 + $0x7c] sm:$0xf]
        %v6572 = vld [vmem:[%s18 + $0x80] sm:$0xf]
        %v6573 = vld [vmem:[%s18 + $0x84] sm:$0xf]
        %v6574 = vld [vmem:[%s18 + $0x88] sm:$0xf]
        %v6575 = vld [vmem:[%s18 + $0x8c] sm:$0xf]
        %v6576 = vld [vmem:[%s18 + $0x90] sm:$0xf]
        %v6577 = vld [vmem:[%s18 + $0x94] sm:$0xf]
        %v6578 = vld [vmem:[%s18 + $0x98] sm:$0xf]
        %v6579 = vld [vmem:[%s18 + $0x9c] sm:$0xf]
        %v6580 = vld [vmem:[%s18 + $0xa0] sm:$0xf]
        %v6581 = vld [vmem:[%s18 + $0xa4] sm:$0xf]
        %v6582 = vld [vmem:[%s18 + $0xa8] sm:$0xf]
        %v6583 = vld [vmem:[%s18 + $0xac] sm:$0xf]
        %v6584 = vld [vmem:[%s18 + $0xb0] sm:$0xf]
        %v6585 = vld [vmem:[%s18 + $0xb4] sm:$0xf]
        %v6586 = vld [vmem:[%s18 + $0xb8] sm:$0xf]
        %v6587 = vld [vmem:[%s18 + $0xbc] sm:$0xf]
        %v6588 = vld [vmem:[%s18 + $0xc0] sm:$0xf]
        %v6589 = vld [vmem:[%s18 + $0xc4] sm:$0xf]
        %v6590 = vld [vmem:[%s18 + $0xc8] sm:$0xf]
        %v6591 = vld [vmem:[%s18 + $0xcc] sm:$0xf]
        %v6592 = vld [vmem:[%s18 + $0xd0] sm:$0xf]
        %v6593 = vld [vmem:[%s18 + $0xd4] sm:$0xf]
        %v6594 = vld [vmem:[%s18 + $0xd8] sm:$0xf]
        %v6595 = vld [vmem:[%s18 + $0xdc] sm:$0xf]
        %v6596 = vld [vmem:[%s18 + $0xe0] sm:$0xf]
        %v6597 = vld [vmem:[%s18 + $0xe4] sm:$0xf]
        %v6598 = vld [vmem:[%s18 + $0xe8] sm:$0xf]
        %v6599 = vld [vmem:[%s18 + $0xec] sm:$0xf]
        %v6600 = vld [vmem:[%s18 + $0xf0] sm:$0xf]
        %v6601 = vld [vmem:[%s18 + $0xf4] sm:$0xf]
        %v6602 = vld [vmem:[%s18 + $0xf8] sm:$0xf]
        %v6603 = vld [vmem:[%s18 + $0xfc] sm:$0xf]
        %v6604 = vld [vmem:[%s18 + $0x100] sm:$0xf]
        %v6605 = vld [vmem:[%s18 + $0x104] sm:$0xf]
        %v6606 = vld [vmem:[%s18 + $0x108] sm:$0xf]
        %v6607 = vld [vmem:[%s18 + $0x10c] sm:$0xf]
        %v6608 = vld [vmem:[%s18 + $0x110] sm:$0xf]
        %v6609 = vld [vmem:[%s18 + $0x114] sm:$0xf]
        %v6610 = vld [vmem:[%s18 + $0x118] sm:$0xf]
        %v6611 = vld [vmem:[%s18 + $0x11c] sm:$0xf]
        %v6684 = vunpack.c.l.b16 %v6540
        %v6685 = vunpack.c.l.b16 %v6541
        %v6686 = vunpack.c.l.b16 %v6542
        %v6687 = vunpack.c.l.b16 %v6543
        %v6688 = vunpack.c.l.b16 %v6544
        %v6689 = vunpack.c.l.b16 %v6545
        %v6690 = vunpack.c.l.b16 %v6546
        %v6691 = vunpack.c.l.b16 %v6547
        %v6692 = vunpack.c.l.b16 %v6548
        %v6693 = vunpack.c.l.b16 %v6549
        %v6694 = vunpack.c.l.b16 %v6550
        %v6695 = vunpack.c.l.b16 %v6551
        %v6696 = vunpack.c.l.b16 %v6552
        %v6697 = vunpack.c.l.b16 %v6553
        %v6698 = vunpack.c.l.b16 %v6554
        %v6699 = vunpack.c.l.b16 %v6555
        %v6700 = vunpack.c.l.b16 %v6556
        %v6701 = vunpack.c.l.b16 %v6557
        %v6702 = vunpack.c.l.b16 %v6558
        %v6703 = vunpack.c.l.b16 %v6559
        %v6704 = vunpack.c.l.b16 %v6560
        %v6705 = vunpack.c.l.b16 %v6561
        %v6706 = vunpack.c.l.b16 %v6562
        %v6707 = vunpack.c.l.b16 %v6563
        %v6708 = vunpack.c.l.b16 %v6564
        %v6709 = vunpack.c.l.b16 %v6565
        %v6710 = vunpack.c.l.b16 %v6566
        %v6711 = vunpack.c.l.b16 %v6567
        %v6712 = vunpack.c.l.b16 %v6568
        %v6713 = vunpack.c.l.b16 %v6569
        %v6714 = vunpack.c.l.b16 %v6570
        %v6715 = vunpack.c.l.b16 %v6571
        %v6716 = vunpack.c.l.b16 %v6572
        %v6717 = vunpack.c.l.b16 %v6573
        %v6718 = vunpack.c.l.b16 %v6574
        %v6719 = vunpack.c.l.b16 %v6575
        %v6720 = vunpack.c.l.b16 %v6576
        %v6721 = vunpack.c.l.b16 %v6577
        %v6722 = vunpack.c.l.b16 %v6578
        %v6723 = vunpack.c.l.b16 %v6579
        %v6724 = vunpack.c.l.b16 %v6580
        %v6725 = vunpack.c.l.b16 %v6581
        %v6726 = vunpack.c.l.b16 %v6582
        %v6727 = vunpack.c.l.b16 %v6583
        %v6728 = vunpack.c.l.b16 %v6584
        %v6729 = vunpack.c.l.b16 %v6585
        %v6730 = vunpack.c.l.b16 %v6586
        %v6731 = vunpack.c.l.b16 %v6587
        %v6732 = vunpack.c.l.b16 %v6588
        %v6733 = vunpack.c.l.b16 %v6589
        %v6734 = vunpack.c.l.b16 %v6590
        %v6735 = vunpack.c.l.b16 %v6591
        %v6736 = vunpack.c.l.b16 %v6592
        %v6737 = vunpack.c.l.b16 %v6593
        %v6738 = vunpack.c.l.b16 %v6594
        %v6739 = vunpack.c.l.b16 %v6595
        %v6740 = vunpack.c.l.b16 %v6596
        %v6741 = vunpack.c.l.b16 %v6597
        %v6742 = vunpack.c.l.b16 %v6598
        %v6743 = vunpack.c.l.b16 %v6599
        %v6744 = vunpack.c.l.b16 %v6600
        %v6745 = vunpack.c.l.b16 %v6601
        %v6746 = vunpack.c.l.b16 %v6602
        %v6747 = vunpack.c.l.b16 %v6603
        %v6748 = vunpack.c.l.b16 %v6604
        %v6749 = vunpack.c.l.b16 %v6605
        %v6750 = vunpack.c.l.b16 %v6606
        %v6751 = vunpack.c.l.b16 %v6607
        %v6752 = vunpack.c.l.b16 %v6608
        %v6753 = vunpack.c.l.b16 %v6609
        %v6754 = vunpack.c.l.b16 %v6610
        %v6755 = vunpack.c.l.b16 %v6611
        %v6756 = vpack.c.b16 %v6685, %v6684
        %v6757 = vpack.c.b16 %v6687, %v6686
        %v6758 = vpack.c.b16 %v6689, %v6688
        %v6759 = vpack.c.b16 %v6691, %v6690
        %v6760 = vpack.c.b16 %v6693, %v6692
        %v6761 = vpack.c.b16 %v6695, %v6694
        %v6762 = vpack.c.b16 %v6697, %v6696
        %v6763 = vpack.c.b16 %v6699, %v6698
        %v6764 = vpack.c.b16 %v6701, %v6700
        %v6765 = vpack.c.b16 %v6703, %v6702
        %v6766 = vpack.c.b16 %v6705, %v6704
        %v6767 = vpack.c.b16 %v6707, %v6706
        %v6768 = vpack.c.b16 %v6709, %v6708
        %v6769 = vpack.c.b16 %v6711, %v6710
        %v6770 = vpack.c.b16 %v6713, %v6712
        %v6771 = vpack.c.b16 %v6715, %v6714
        %v6772 = vpack.c.b16 %v6717, %v6716
        %v6773 = vpack.c.b16 %v6719, %v6718
        %v6774 = vpack.c.b16 %v6721, %v6720
        %v6775 = vpack.c.b16 %v6723, %v6722
        %v6776 = vpack.c.b16 %v6725, %v6724
        %v6777 = vpack.c.b16 %v6727, %v6726
        %v6778 = vpack.c.b16 %v6729, %v6728
        %v6779 = vpack.c.b16 %v6731, %v6730
        %v6780 = vpack.c.b16 %v6733, %v6732
        %v6781 = vpack.c.b16 %v6735, %v6734
        %v6782 = vpack.c.b16 %v6737, %v6736
        %v6783 = vpack.c.b16 %v6739, %v6738
        %v6784 = vpack.c.b16 %v6741, %v6740
        %v6785 = vpack.c.b16 %v6743, %v6742
        %v6786 = vpack.c.b16 %v6745, %v6744
        %v6787 = vpack.c.b16 %v6747, %v6746
        %v6788 = vpack.c.b16 %v6749, %v6748
        %v6789 = vpack.c.b16 %v6751, %v6750
        %v6790 = vpack.c.b16 %v6753, %v6752
        %v6791 = vpack.c.b16 %v6755, %v6754
        %v6829 = vsel %vm813, %v6463, 0
        %v6832 = vsel %vm813, %v6468, 0
        %v6835 = vsel %vm813, %v6473, 0
        %v6838 = vsel %vm813, %v6478, 0
        %v6841 = vsel %vm813, %v6483, 0
        %v6844 = vsel %vm813, %v6488, 0
        %v6847 = vsel %vm813, %v6493, 0
        %v6850 = vsel %vm813, %v6498, 0
        %v6853 = vsel %vm813, %v6503, 0
        %v6856 = vsel %vm813, %v6508, 0
        %v6859 = vsel %vm813, %v6513, 0
        %v6862 = vsel %vm813, %v6518, 0
        %v6865 = vsel %vm813, %v6523, 0
        %v6868 = vsel %vm813, %v6528, 0
        %v6871 = vsel %vm813, %v6533, 0
        %v6874 = vsel %vm813, %v6538, 0
        %6876 = vmatprep.subr.bf16.mxu0 0
        %6877 = vmatpush1.bf16.msra.mxu0 %v6756
        %6878 = vmatprep.subr.bf16.mxu0 0
        %6879 = vmatpush1.bf16.msra.mxu0 %v6757
        %6880 = vmatprep.subr.bf16.mxu0 0
        %6881 = vmatpush1.bf16.msra.mxu0 %v6758
        %6882 = vmatprep.subr.bf16.mxu0 0
        %6883 = vmatpush1.bf16.msra.mxu0 %v6759
        %6884 = vmatprep.subr.bf16.mxu0 0
        %6885 = vmatpush1.bf16.msra.mxu0 %v6760
        %6886 = vmatprep.subr.bf16.mxu0 0
        %6887 = vmatpush1.bf16.msra.mxu0 %v6761
        %6888 = vmatprep.subr.bf16.mxu0 0
        %6889 = vmatpush1.bf16.msra.mxu0 %v6762
        %6890 = vmatprep.subr.bf16.mxu0 0
        %6891 = vmatpush1.bf16.msra.mxu0 %v6763
        %6892 = vmatprep.subr.bf16.mxu0 0
        %6893 = vmatpush1.bf16.msra.mxu0 %v6764
        %6894 = vmatprep.subr.bf16.mxu0 0
        %6895 = vmatpush1.bf16.msra.mxu0 %v6765
        %6896 = vmatprep.subr.bf16.mxu0 0
        %6897 = vmatpush1.bf16.msra.mxu0 %v6766
        %6898 = vmatprep.subr.bf16.mxu0 0
        %6899 = vmatpush1.bf16.msra.mxu0 %v6767
        %6900 = vmatprep.subr.bf16.mxu0 0
        %6901 = vmatpush1.bf16.msra.mxu0 %v6768
        %6902 = vmatprep.subr.bf16.mxu0 0
        %6903 = vmatpush1.bf16.msra.mxu0 %v6769
        %6904 = vmatprep.subr.bf16.mxu0 0
        %6905 = vmatpush1.bf16.msra.mxu0 %v6770
        %6906 = vmatprep.subr.bf16.mxu0 0
        %6907 = vmatpush1.bf16.msra.mxu0 %v6771
        %6908 = vmatprep.mubr.bf16.mxu0 %v6460
        %6909 = vmatmul.mubr.bf16.gmra.mrb[0].mxu0 %v6459
        %v6910 = vpop.f32.mrb[0].mxu0
        %v6911 = vadd.f32 0.0, %v6910
        %v6912 = vpop.f32.mrb[0].mxu0
        %v6913 = vpop.f32.mrb[0].mxu0
        %v6914 = vadd.f32 0.0, %v6913
        %v6915 = vpop.f32.mrb[0].mxu0
        %6916 = vmatprep.mubr.bf16.mxu0 %v6465
        %6917 = vmatmul.mubr.bf16.gmra.mrb[0].mxu0 %v6464
        %v6918 = vpop.f32.mrb[0].mxu0
        %v6919 = vadd.f32 0.0, %v6918
        %v6920 = vpop.f32.mrb[0].mxu0
        %v6921 = vpop.f32.mrb[0].mxu0
        %v6922 = vadd.f32 0.0, %v6921
        %v6923 = vpop.f32.mrb[0].mxu0
        %6924 = vmatprep.mubr.bf16.mxu0 %v6470
        %6925 = vmatmul.mubr.bf16.gmra.mrb[0].mxu0 %v6469
        %v6926 = vpop.f32.mrb[0].mxu0
        %v6927 = vadd.f32 0.0, %v6926
        %v6928 = vpop.f32.mrb[0].mxu0
        %v6929 = vpop.f32.mrb[0].mxu0
        %v6930 = vadd.f32 0.0, %v6929
        %v6931 = vpop.f32.mrb[0].mxu0
        %6932 = vmatprep.mubr.bf16.mxu0 %v6475
        %6933 = vmatmul.mubr.bf16.gmra.mrb[0].mxu0 %v6474
        %v6934 = vpop.f32.mrb[0].mxu0
        %v6935 = vadd.f32 0.0, %v6934
        %v6936 = vpop.f32.mrb[0].mxu0
        %v6937 = vpop.f32.mrb[0].mxu0
        %v6938 = vadd.f32 0.0, %v6937
        %v6939 = vpop.f32.mrb[0].mxu0
        %6940 = vmatprep.mubr.bf16.mxu0 %v6480
        %6941 = vmatmul.mubr.bf16.gmra.mrb[0].mxu0 %v6479
        %v6942 = vpop.f32.mrb[0].mxu0
        %v6943 = vadd.f32 0.0, %v6942
        %v6944 = vpop.f32.mrb[0].mxu0
        %v6945 = vpop.f32.mrb[0].mxu0
        %v6946 = vadd.f32 0.0, %v6945
        %v6947 = vpop.f32.mrb[0].mxu0
        %6948 = vmatprep.mubr.bf16.mxu0 %v6485
        %6949 = vmatmul.mubr.bf16.gmra.mrb[0].mxu0 %v6484
        %v6950 = vpop.f32.mrb[0].mxu0
        %v6951 = vadd.f32 0.0, %v6950
        %v6952 = vpop.f32.mrb[0].mxu0
        %v6953 = vpop.f32.mrb[0].mxu0
        %v6954 = vadd.f32 0.0, %v6953
        %v6955 = vpop.f32.mrb[0].mxu0
        %6956 = vmatprep.mubr.bf16.mxu0 %v6490
        %6957 = vmatmul.mubr.bf16.gmra.mrb[0].mxu0 %v6489
        %v6958 = vpop.f32.mrb[0].mxu0
        %v6959 = vadd.f32 0.0, %v6958
        %v6960 = vpop.f32.mrb[0].mxu0
        %v6961 = vpop.f32.mrb[0].mxu0
        %v6962 = vadd.f32 0.0, %v6961
        %v6963 = vpop.f32.mrb[0].mxu0
        %6964 = vmatprep.mubr.bf16.mxu0 %v6495
        %6965 = vmatmul.mubr.bf16.gmra.mrb[0].mxu0 %v6494
        %v6966 = vpop.f32.mrb[0].mxu0
        %v6967 = vadd.f32 0.0, %v6966
        %v6968 = vpop.f32.mrb[0].mxu0
        %v6969 = vpop.f32.mrb[0].mxu0
        %v6970 = vadd.f32 0.0, %v6969
        %v6971 = vpop.f32.mrb[0].mxu0
        %6972 = vmatprep.mubr.bf16.mxu0 %v6500
        %6973 = vmatmul.mubr.bf16.gmra.mrb[0].mxu0 %v6499
        %v6974 = vpop.f32.mrb[0].mxu0
        %v6975 = vadd.f32 0.0, %v6974
        %v6976 = vpop.f32.mrb[0].mxu0
        %v6977 = vpop.f32.mrb[0].mxu0
        %v6978 = vadd.f32 0.0, %v6977
        %v6979 = vpop.f32.mrb[0].mxu0
        %6980 = vmatprep.mubr.bf16.mxu0 %v6505
        %6981 = vmatmul.mubr.bf16.gmra.mrb[0].mxu0 %v6504
        %v6982 = vpop.f32.mrb[0].mxu0
        %v6983 = vadd.f32 0.0, %v6982
        %v6984 = vpop.f32.mrb[0].mxu0
        %v6985 = vpop.f32.mrb[0].mxu0
        %v6986 = vadd.f32 0.0, %v6985
        %v6987 = vpop.f32.mrb[0].mxu0
        %6988 = vmatprep.mubr.bf16.mxu0 %v6510
        %6989 = vmatmul.mubr.bf16.gmra.mrb[0].mxu0 %v6509
        %v6990 = vpop.f32.mrb[0].mxu0
        %v6991 = vadd.f32 0.0, %v6990
        %v6992 = vpop.f32.mrb[0].mxu0
        %v6993 = vpop.f32.mrb[0].mxu0
        %v6994 = vadd.f32 0.0, %v6993
        %v6995 = vpop.f32.mrb[0].mxu0
        %6996 = vmatprep.mubr.bf16.mxu0 %v6515
        %6997 = vmatmul.mubr.bf16.gmra.mrb[0].mxu0 %v6514
        %v6998 = vpop.f32.mrb[0].mxu0
        %v6999 = vadd.f32 0.0, %v6998
        %v7000 = vpop.f32.mrb[0].mxu0
        %v7001 = vpop.f32.mrb[0].mxu0
        %v7002 = vadd.f32 0.0, %v7001
        %v7003 = vpop.f32.mrb[0].mxu0
        %7004 = vmatprep.mubr.bf16.mxu0 %v6520
        %7005 = vmatmul.mubr.bf16.gmra.mrb[0].mxu0 %v6519
        %v7006 = vpop.f32.mrb[0].mxu0
        %v7007 = vadd.f32 0.0, %v7006
        %v7008 = vpop.f32.mrb[0].mxu0
        %v7009 = vpop.f32.mrb[0].mxu0
        %v7010 = vadd.f32 0.0, %v7009
        %v7011 = vpop.f32.mrb[0].mxu0
        %7012 = vmatprep.mubr.bf16.mxu0 %v6525
        %7013 = vmatmul.mubr.bf16.gmra.mrb[0].mxu0 %v6524
        %v7014 = vpop.f32.mrb[0].mxu0
        %v7015 = vadd.f32 0.0, %v7014
        %v7016 = vpop.f32.mrb[0].mxu0
        %v7017 = vpop.f32.mrb[0].mxu0
        %v7018 = vadd.f32 0.0, %v7017
        %v7019 = vpop.f32.mrb[0].mxu0
        %7020 = vmatprep.mubr.bf16.mxu0 %v6530
        %7021 = vmatmul.mubr.bf16.gmra.mrb[0].mxu0 %v6529
        %v7022 = vpop.f32.mrb[0].mxu0
        %v7023 = vadd.f32 0.0, %v7022
        %v7024 = vpop.f32.mrb[0].mxu0
        %v7025 = vpop.f32.mrb[0].mxu0
        %v7026 = vadd.f32 0.0, %v7025
        %v7027 = vpop.f32.mrb[0].mxu0
        %7028 = vmatprep.mubr.bf16.mxu0 %v6535
        %7029 = vmatmul.mubr.bf16.gmra.mrb[0].mxu0 %v6534
        %v7030 = vpop.f32.mrb[0].mxu0
        %v7031 = vadd.f32 0.0, %v7030
        %v7032 = vpop.f32.mrb[0].mxu0
        %v7033 = vpop.f32.mrb[0].mxu0
        %v7034 = vadd.f32 0.0, %v7033
        %v7035 = vpop.f32.mrb[0].mxu0
        %7036 = vdwg.mxu0
        %7037 = vmatprep.subr.bf16.mxu0 0
        %7038 = vmatpush1.bf16.msra.mxu0 %v6772
        %7039 = vmatprep.subr.bf16.mxu0 0
        %7040 = vmatpush1.bf16.msra.mxu0 %v6773
        %7041 = vmatprep.subr.bf16.mxu0 0
        %7042 = vmatpush1.bf16.msra.mxu0 %v6774
        %7043 = vmatprep.subr.bf16.mxu0 0
        %7044 = vmatpush1.bf16.msra.mxu0 %v6775
        %7045 = vmatprep.subr.bf16.mxu0 0
        %7046 = vmatpush1.bf16.msra.mxu0 %v6776
        %7047 = vmatprep.subr.bf16.mxu0 0
        %7048 = vmatpush1.bf16.msra.mxu0 %v6777
        %7049 = vmatprep.subr.bf16.mxu0 0
        %7050 = vmatpush1.bf16.msra.mxu0 %v6778
        %7051 = vmatprep.subr.bf16.mxu0 0
        %7052 = vmatpush1.bf16.msra.mxu0 %v6779
        %7053 = vmatprep.subr.bf16.mxu0 0
        %7054 = vmatpush1.bf16.msra.mxu0 %v6780
        %7055 = vmatprep.subr.bf16.mxu0 0
        %7056 = vmatpush1.bf16.msra.mxu0 %v6781
        %7057 = vmatprep.subr.bf16.mxu0 0
        %7058 = vmatpush1.bf16.msra.mxu0 %v6782
        %7059 = vmatprep.subr.bf16.mxu0 0
        %7060 = vmatpush1.bf16.msra.mxu0 %v6783
        %7061 = vmatprep.subr.bf16.mxu0 0
        %7062 = vmatpush1.bf16.msra.mxu0 %v6784
        %7063 = vmatprep.subr.bf16.mxu0 0
        %7064 = vmatpush1.bf16.msra.mxu0 %v6785
        %7065 = vmatprep.subr.bf16.mxu0 0
        %7066 = vmatpush1.bf16.msra.mxu0 %v6786
        %7067 = vmatprep.subr.bf16.mxu0 0
        %7068 = vmatpush1.bf16.msra.mxu0 %v6787
        %7069 = vmatprep.mubr.bf16.mxu0 %v6462
        %7070 = vmatmul.mubr.bf16.gmra.mrb[0].mxu0 %v6461
        %v7071 = vpop.f32.mrb[0].mxu0
        %v7072 = vadd.f32 %v6911, %v7071
        %v7073 = vpop.f32.mrb[0].mxu0
        %v7074 = vpop.f32.mrb[0].mxu0
        %v7075 = vadd.f32 %v6914, %v7074
        %v7076 = vpop.f32.mrb[0].mxu0
        %7077 = vmatprep.mubr.bf16.mxu0 %v6467
        %7078 = vmatmul.mubr.bf16.gmra.mrb[0].mxu0 %v6466
        %v7079 = vpop.f32.mrb[0].mxu0
        %v7080 = vadd.f32 %v6919, %v7079
        %v7081 = vpop.f32.mrb[0].mxu0
        %v7082 = vpop.f32.mrb[0].mxu0
        %v7083 = vadd.f32 %v6922, %v7082
        %v7084 = vpop.f32.mrb[0].mxu0
        %7085 = vmatprep.mubr.bf16.mxu0 %v6472
        %7086 = vmatmul.mubr.bf16.gmra.mrb[0].mxu0 %v6471
        %v7087 = vpop.f32.mrb[0].mxu0
        %v7088 = vadd.f32 %v6927, %v7087
        %v7089 = vpop.f32.mrb[0].mxu0
        %v7090 = vpop.f32.mrb[0].mxu0
        %v7091 = vadd.f32 %v6930, %v7090
        %v7092 = vpop.f32.mrb[0].mxu0
        %7093 = vmatprep.mubr.bf16.mxu0 %v6477
        %7094 = vmatmul.mubr.bf16.gmra.mrb[0].mxu0 %v6476
        %v7095 = vpop.f32.mrb[0].mxu0
        %v7096 = vadd.f32 %v6935, %v7095
        %v7097 = vpop.f32.mrb[0].mxu0
        %v7098 = vpop.f32.mrb[0].mxu0
        %v7099 = vadd.f32 %v6938, %v7098
        %v7100 = vpop.f32.mrb[0].mxu0
        %7101 = vmatprep.mubr.bf16.mxu0 %v6482
        %7102 = vmatmul.mubr.bf16.gmra.mrb[0].mxu0 %v6481
        %v7103 = vpop.f32.mrb[0].mxu0
        %v7104 = vadd.f32 %v6943, %v7103
        %v7105 = vpop.f32.mrb[0].mxu0
        %v7106 = vpop.f32.mrb[0].mxu0
        %v7107 = vadd.f32 %v6946, %v7106
        %v7108 = vpop.f32.mrb[0].mxu0
        %7109 = vmatprep.mubr.bf16.mxu0 %v6487
        %7110 = vmatmul.mubr.bf16.gmra.mrb[0].mxu0 %v6486
        %v7111 = vpop.f32.mrb[0].mxu0
        %v7112 = vadd.f32 %v6951, %v7111
        %v7113 = vpop.f32.mrb[0].mxu0
        %v7114 = vpop.f32.mrb[0].mxu0
        %v7115 = vadd.f32 %v6954, %v7114
        %v7116 = vpop.f32.mrb[0].mxu0
        %7117 = vmatprep.mubr.bf16.mxu0 %v6492
        %7118 = vmatmul.mubr.bf16.gmra.mrb[0].mxu0 %v6491
        %v7119 = vpop.f32.mrb[0].mxu0
        %v7120 = vadd.f32 %v6959, %v7119
        %v7121 = vpop.f32.mrb[0].mxu0
        %v7122 = vpop.f32.mrb[0].mxu0
        %v7123 = vadd.f32 %v6962, %v7122
        %v7124 = vpop.f32.mrb[0].mxu0
        %7125 = vmatprep.mubr.bf16.mxu0 %v6497
        %7126 = vmatmul.mubr.bf16.gmra.mrb[0].mxu0 %v6496
        %v7127 = vpop.f32.mrb[0].mxu0
        %v7128 = vadd.f32 %v6967, %v7127
        %v7129 = vpop.f32.mrb[0].mxu0
        %v7130 = vpop.f32.mrb[0].mxu0
        %v7131 = vadd.f32 %v6970, %v7130
        %v7132 = vpop.f32.mrb[0].mxu0
        %7133 = vmatprep.mubr.bf16.mxu0 %v6502
        %7134 = vmatmul.mubr.bf16.gmra.mrb[0].mxu0 %v6501
        %v7135 = vpop.f32.mrb[0].mxu0
        %v7136 = vadd.f32 %v6975, %v7135
        %v7137 = vpop.f32.mrb[0].mxu0
        %v7138 = vpop.f32.mrb[0].mxu0
        %v7139 = vadd.f32 %v6978, %v7138
        %v7140 = vpop.f32.mrb[0].mxu0
        %7141 = vmatprep.mubr.bf16.mxu0 %v6507
        %7142 = vmatmul.mubr.bf16.gmra.mrb[0].mxu0 %v6506
        %v7143 = vpop.f32.mrb[0].mxu0
        %v7144 = vadd.f32 %v6983, %v7143
        %v7145 = vpop.f32.mrb[0].mxu0
        %v7146 = vpop.f32.mrb[0].mxu0
        %v7147 = vadd.f32 %v6986, %v7146
        %v7148 = vpop.f32.mrb[0].mxu0
        %7149 = vmatprep.mubr.bf16.mxu0 %v6512
        %7150 = vmatmul.mubr.bf16.gmra.mrb[0].mxu0 %v6511
        %v7151 = vpop.f32.mrb[0].mxu0
        %v7152 = vadd.f32 %v6991, %v7151
        %v7153 = vpop.f32.mrb[0].mxu0
        %v7154 = vpop.f32.mrb[0].mxu0
        %v7155 = vadd.f32 %v6994, %v7154
        %v7156 = vpop.f32.mrb[0].mxu0
        %7157 = vmatprep.mubr.bf16.mxu0 %v6517
        %7158 = vmatmul.mubr.bf16.gmra.mrb[0].mxu0 %v6516
        %v7159 = vpop.f32.mrb[0].mxu0
        %v7160 = vadd.f32 %v6999, %v7159
        %v7161 = vpop.f32.mrb[0].mxu0
        %v7162 = vpop.f32.mrb[0].mxu0
        %v7163 = vadd.f32 %v7002, %v7162
        %v7164 = vpop.f32.mrb[0].mxu0
        %7165 = vmatprep.mubr.bf16.mxu0 %v6522
        %7166 = vmatmul.mubr.bf16.gmra.mrb[0].mxu0 %v6521
        %v7167 = vpop.f32.mrb[0].mxu0
        %v7168 = vadd.f32 %v7007, %v7167
        %v7169 = vpop.f32.mrb[0].mxu0
        %v7170 = vpop.f32.mrb[0].mxu0
        %v7171 = vadd.f32 %v7010, %v7170
        %v7172 = vpop.f32.mrb[0].mxu0
        %7173 = vmatprep.mubr.bf16.mxu0 %v6527
        %7174 = vmatmul.mubr.bf16.gmra.mrb[0].mxu0 %v6526
        %v7175 = vpop.f32.mrb[0].mxu0
        %v7176 = vadd.f32 %v7015, %v7175
        %v7177 = vpop.f32.mrb[0].mxu0
        %v7178 = vpop.f32.mrb[0].mxu0
        %v7179 = vadd.f32 %v7018, %v7178
        %v7180 = vpop.f32.mrb[0].mxu0
        %7181 = vmatprep.mubr.bf16.mxu0 %v6532
        %7182 = vmatmul.mubr.bf16.gmra.mrb[0].mxu0 %v6531
        %v7183 = vpop.f32.mrb[0].mxu0
        %v7184 = vadd.f32 %v7023, %v7183
        %v7185 = vpop.f32.mrb[0].mxu0
        %v7186 = vpop.f32.mrb[0].mxu0
        %v7187 = vadd.f32 %v7026, %v7186
        %v7188 = vpop.f32.mrb[0].mxu0
        %7189 = vmatprep.mubr.bf16.mxu0 %v6537
        %7190 = vmatmul.mubr.bf16.gmra.mrb[0].mxu0 %v6536
        %v7191 = vpop.f32.mrb[0].mxu0
        %v7192 = vadd.f32 %v7031, %v7191
        %v7193 = vpop.f32.mrb[0].mxu0
        %v7194 = vpop.f32.mrb[0].mxu0
        %v7195 = vadd.f32 %v7034, %v7194
        %v7196 = vpop.f32.mrb[0].mxu0
        %7197 = vdwg.mxu0
        %7198 = vmatprep.subr.bf16.mxu0 0
        %7199 = vmatpush1.bf16.msra.mxu0 %v6788
        %7200 = vmatprep.subr.bf16.mxu0 0
        %7201 = vmatpush1.bf16.msra.mxu0 %v6789
        %7202 = vmatprep.subr.bf16.mxu0 0
        %7203 = vmatpush1.bf16.msra.mxu0 %v6790
        %7204 = vmatprep.subr.bf16.mxu0 0
        %7205 = vmatpush1.bf16.msra.mxu0 %v6791
        %7206 = vmatprep.subr.bf16.mxu0 0
        %7207 = vmatpush1.bf16.msra.mxu0 0
        %7208 = vmatprep.subr.bf16.mxu0 0
        %7209 = vmatpush1.bf16.msra.mxu0 0
        %7210 = vmatprep.subr.bf16.mxu0 0
        %7211 = vmatpush1.bf16.msra.mxu0 0
        %7212 = vmatprep.subr.bf16.mxu0 0
        %7213 = vmatpush1.bf16.msra.mxu0 0
        %7214 = vmatprep.subr.bf16.mxu0 0
        %7215 = vmatpush1.bf16.msra.mxu0 0
        %7216 = vmatprep.subr.bf16.mxu0 0
        %7217 = vmatpush1.bf16.msra.mxu0 0
        %7218 = vmatprep.subr.bf16.mxu0 0
        %7219 = vmatpush1.bf16.msra.mxu0 0
        %7220 = vmatprep.subr.bf16.mxu0 0
        %7221 = vmatpush1.bf16.msra.mxu0 0
        %7222 = vmatprep.subr.bf16.mxu0 0
        %7223 = vmatpush1.bf16.msra.mxu0 0
        %7224 = vmatprep.subr.bf16.mxu0 0
        %7225 = vmatpush1.bf16.msra.mxu0 0
        %7226 = vmatprep.subr.bf16.mxu0 0
        %7227 = vmatpush1.bf16.msra.mxu0 0
        %7228 = vmatprep.subr.bf16.mxu0 0
        %7229 = vmatpush1.bf16.msra.mxu0 0
        %7230 = vmatprep.mubr.bf16.mxu0 0
        %7231 = vmatmul.mubr.bf16.gmra.mrb[0].mxu0 %v6829
        %v7232 = vpop.f32.mrb[0].mxu0
        %v7233 = vadd.f32 %v7072, %v7232
        %v7234 = vpop.f32.mrb[0].mxu0
        %v7235 = vpop.f32.mrb[0].mxu0
        %v7236 = vadd.f32 %v7075, %v7235
        %v7237 = vpop.f32.mrb[0].mxu0
        %7238 = vmatprep.mubr.bf16.mxu0 0
        %7239 = vmatmul.mubr.bf16.gmra.mrb[0].mxu0 %v6832
        %v7240 = vpop.f32.mrb[0].mxu0
        %v7241 = vadd.f32 %v7080, %v7240
        %v7242 = vpop.f32.mrb[0].mxu0
        %v7243 = vpop.f32.mrb[0].mxu0
        %v7244 = vadd.f32 %v7083, %v7243
        %v7245 = vpop.f32.mrb[0].mxu0
        %7246 = vmatprep.mubr.bf16.mxu0 0
        %7247 = vmatmul.mubr.bf16.gmra.mrb[0].mxu0 %v6835
        %v7248 = vpop.f32.mrb[0].mxu0
        %v7249 = vadd.f32 %v7088, %v7248
        %v7250 = vpop.f32.mrb[0].mxu0
        %v7251 = vpop.f32.mrb[0].mxu0
        %v7252 = vadd.f32 %v7091, %v7251
        %v7253 = vpop.f32.mrb[0].mxu0
        %7254 = vmatprep.mubr.bf16.mxu0 0
        %7255 = vmatmul.mubr.bf16.gmra.mrb[0].mxu0 %v6838
        %v7256 = vpop.f32.mrb[0].mxu0
        %v7257 = vadd.f32 %v7096, %v7256
        %v7258 = vpop.f32.mrb[0].mxu0
        %v7259 = vpop.f32.mrb[0].mxu0
        %v7260 = vadd.f32 %v7099, %v7259
        %v7261 = vpop.f32.mrb[0].mxu0
        %7262 = vmatprep.mubr.bf16.mxu0 0
        %7263 = vmatmul.mubr.bf16.gmra.mrb[0].mxu0 %v6841
        %v7264 = vpop.f32.mrb[0].mxu0
        %v7265 = vadd.f32 %v7104, %v7264
        %v7266 = vpop.f32.mrb[0].mxu0
        %v7267 = vpop.f32.mrb[0].mxu0
        %v7268 = vadd.f32 %v7107, %v7267
        %v7269 = vpop.f32.mrb[0].mxu0
        %7270 = vmatprep.mubr.bf16.mxu0 0
        %7271 = vmatmul.mubr.bf16.gmra.mrb[0].mxu0 %v6844
        %v7272 = vpop.f32.mrb[0].mxu0
        %v7273 = vadd.f32 %v7112, %v7272
        %v7274 = vpop.f32.mrb[0].mxu0
        %v7275 = vpop.f32.mrb[0].mxu0
        %v7276 = vadd.f32 %v7115, %v7275
        %v7277 = vpop.f32.mrb[0].mxu0
        %7278 = vmatprep.mubr.bf16.mxu0 0
        %7279 = vmatmul.mubr.bf16.gmra.mrb[0].mxu0 %v6847
        %v7280 = vpop.f32.mrb[0].mxu0
        %v7281 = vadd.f32 %v7120, %v7280
        %v7282 = vpop.f32.mrb[0].mxu0
        %v7283 = vpop.f32.mrb[0].mxu0
        %v7284 = vadd.f32 %v7123, %v7283
        %v7285 = vpop.f32.mrb[0].mxu0
        %7286 = vmatprep.mubr.bf16.mxu0 0
        %7287 = vmatmul.mubr.bf16.gmra.mrb[0].mxu0 %v6850
        %v7288 = vpop.f32.mrb[0].mxu0
        %v7289 = vadd.f32 %v7128, %v7288
        %v7290 = vpop.f32.mrb[0].mxu0
        %v7291 = vpop.f32.mrb[0].mxu0
        %v7292 = vadd.f32 %v7131, %v7291
        %v7293 = vpop.f32.mrb[0].mxu0
        %7294 = vmatprep.mubr.bf16.mxu0 0
        %7295 = vmatmul.mubr.bf16.gmra.mrb[0].mxu0 %v6853
        %v7296 = vpop.f32.mrb[0].mxu0
        %v7297 = vadd.f32 %v7136, %v7296
        %v7298 = vpop.f32.mrb[0].mxu0
        %v7299 = vpop.f32.mrb[0].mxu0
        %v7300 = vadd.f32 %v7139, %v7299
        %v7301 = vpop.f32.mrb[0].mxu0
        %7302 = vmatprep.mubr.bf16.mxu0 0
        %7303 = vmatmul.mubr.bf16.gmra.mrb[0].mxu0 %v6856
        %v7304 = vpop.f32.mrb[0].mxu0
        %v7305 = vadd.f32 %v7144, %v7304
        %v7306 = vpop.f32.mrb[0].mxu0
        %v7307 = vpop.f32.mrb[0].mxu0
        %v7308 = vadd.f32 %v7147, %v7307
        %v7309 = vpop.f32.mrb[0].mxu0
        %7310 = vmatprep.mubr.bf16.mxu0 0
        %7311 = vmatmul.mubr.bf16.gmra.mrb[0].mxu0 %v6859
        %v7312 = vpop.f32.mrb[0].mxu0
        %v7313 = vadd.f32 %v7152, %v7312
        %v7314 = vpop.f32.mrb[0].mxu0
        %v7315 = vpop.f32.mrb[0].mxu0
        %v7316 = vadd.f32 %v7155, %v7315
        %v7317 = vpop.f32.mrb[0].mxu0
        %7318 = vmatprep.mubr.bf16.mxu0 0
        %7319 = vmatmul.mubr.bf16.gmra.mrb[0].mxu0 %v6862
        %v7320 = vpop.f32.mrb[0].mxu0
        %v7321 = vadd.f32 %v7160, %v7320
        %v7322 = vpop.f32.mrb[0].mxu0
        %v7323 = vpop.f32.mrb[0].mxu0
        %v7324 = vadd.f32 %v7163, %v7323
        %v7325 = vpop.f32.mrb[0].mxu0
        %7326 = vmatprep.mubr.bf16.mxu0 0
        %7327 = vmatmul.mubr.bf16.gmra.mrb[0].mxu0 %v6865
        %v7328 = vpop.f32.mrb[0].mxu0
        %v7329 = vadd.f32 %v7168, %v7328
        %v7330 = vpop.f32.mrb[0].mxu0
        %v7331 = vpop.f32.mrb[0].mxu0
        %v7332 = vadd.f32 %v7171, %v7331
        %v7333 = vpop.f32.mrb[0].mxu0
        %7334 = vmatprep.mubr.bf16.mxu0 0
        %7335 = vmatmul.mubr.bf16.gmra.mrb[0].mxu0 %v6868
        %v7336 = vpop.f32.mrb[0].mxu0
        %v7337 = vadd.f32 %v7176, %v7336
        %v7338 = vpop.f32.mrb[0].mxu0
        %v7339 = vpop.f32.mrb[0].mxu0
        %v7340 = vadd.f32 %v7179, %v7339
        %v7341 = vpop.f32.mrb[0].mxu0
        %7342 = vmatprep.mubr.bf16.mxu0 0
        %7343 = vmatmul.mubr.bf16.gmra.mrb[0].mxu0 %v6871
        %v7344 = vpop.f32.mrb[0].mxu0
        %v7345 = vadd.f32 %v7184, %v7344
        %v7346 = vpop.f32.mrb[0].mxu0
        %v7347 = vpop.f32.mrb[0].mxu0
        %v7348 = vadd.f32 %v7187, %v7347
        %v7349 = vpop.f32.mrb[0].mxu0
        %7350 = vmatprep.mubr.bf16.mxu0 0
        %7351 = vmatmul.mubr.bf16.gmra.mrb[0].mxu0 %v6874
        %v7352 = vpop.f32.mrb[0].mxu0
        %v7353 = vadd.f32 %v7192, %v7352
        %v7354 = vpop.f32.mrb[0].mxu0
        %v7355 = vpop.f32.mrb[0].mxu0
        %v7356 = vadd.f32 %v7195, %v7355
        %v7357 = vpop.f32.mrb[0].mxu0
        %7358 = vdwg.mxu0
        %v7359 = vlaneseq
        %v7360 = vshrl.u32 %v7359, 7
        %v7361 = vsub.s32 0, %v7360
        %v7362 = vrot.slane %v6539, %v7361
        %v7363 = vmul.f32 %v7233, %v7362
        %v7364 = vmul.f32 %v7236, %v7362
        %v7365 = vmul.f32 %v7241, %v7362
        %v7366 = vmul.f32 %v7244, %v7362
        %v7367 = vmul.f32 %v7249, %v7362
        %v7368 = vmul.f32 %v7252, %v7362
        %v7369 = vmul.f32 %v7257, %v7362
        %v7370 = vmul.f32 %v7260, %v7362
        %v7371 = vmul.f32 %v7265, %v7362
        %v7372 = vmul.f32 %v7268, %v7362
        %v7373 = vmul.f32 %v7273, %v7362
        %v7374 = vmul.f32 %v7276, %v7362
        %v7375 = vmul.f32 %v7281, %v7362
        %v7376 = vmul.f32 %v7284, %v7362
        %v7377 = vmul.f32 %v7289, %v7362
        %v7378 = vmul.f32 %v7292, %v7362
        %v7379 = vmul.f32 %v7297, %v7362
        %v7380 = vmul.f32 %v7300, %v7362
        %v7381 = vmul.f32 %v7305, %v7362
        %v7382 = vmul.f32 %v7308, %v7362
        %v7383 = vmul.f32 %v7313, %v7362
        %v7384 = vmul.f32 %v7316, %v7362
        %v7385 = vmul.f32 %v7321, %v7362
        %v7386 = vmul.f32 %v7324, %v7362
        %v7387 = vmul.f32 %v7329, %v7362
        %v7388 = vmul.f32 %v7332, %v7362
        %v7389 = vmul.f32 %v7337, %v7362
        %v7390 = vmul.f32 %v7340, %v7362
        %v7391 = vmul.f32 %v7345, %v7362
        %v7392 = vmul.f32 %v7348, %v7362
        %v7393 = vmul.f32 %v7353, %v7362
        %v7394 = vmul.f32 %v7356, %v7362
        %v7395 = vlaneseq
        %v7396 = vshrl.u32 %v7395, 7
        %v7397 = vsub.s32 1, %v7396
        %v7398 = vrot.slane %v6539, %v7397
        %v7399 = vadd.f32 %v7363, %v7398
        %v7400 = vadd.f32 %v7364, %v7398
        %v7401 = vadd.f32 %v7365, %v7398
        %v7402 = vadd.f32 %v7366, %v7398
        %v7403 = vadd.f32 %v7367, %v7398
        %v7404 = vadd.f32 %v7368, %v7398
        %v7405 = vadd.f32 %v7369, %v7398
        %v7406 = vadd.f32 %v7370, %v7398
        %v7407 = vadd.f32 %v7371, %v7398
        %v7408 = vadd.f32 %v7372, %v7398
        %v7409 = vadd.f32 %v7373, %v7398
        %v7410 = vadd.f32 %v7374, %v7398
        %v7411 = vadd.f32 %v7375, %v7398
        %v7412 = vadd.f32 %v7376, %v7398
        %v7413 = vadd.f32 %v7377, %v7398
        %v7414 = vadd.f32 %v7378, %v7398
        %v7415 = vadd.f32 %v7379, %v7398
        %v7416 = vadd.f32 %v7380, %v7398
        %v7417 = vadd.f32 %v7381, %v7398
        %v7418 = vadd.f32 %v7382, %v7398
        %v7419 = vadd.f32 %v7383, %v7398
        %v7420 = vadd.f32 %v7384, %v7398
        %v7421 = vadd.f32 %v7385, %v7398
        %v7422 = vadd.f32 %v7386, %v7398
        %v7423 = vadd.f32 %v7387, %v7398
        %v7424 = vadd.f32 %v7388, %v7398
        %v7425 = vadd.f32 %v7389, %v7398
        %v7426 = vadd.f32 %v7390, %v7398
        %v7427 = vadd.f32 %v7391, %v7398
        %v7428 = vadd.f32 %v7392, %v7398
        %v7429 = vadd.f32 %v7393, %v7398
        %v7430 = vadd.f32 %v7394, %v7398
        %7431 = vst.msk [vmem:[%s771] sm:$0xff] %vm1589, %v7399
        %7432 = vst.msk [vmem:[%s771 + $0x8] sm:$0xff] %vm1589, %v7400
        %7433 = vst.msk [vmem:[%s771 + $0x10] sm:$0xff] %vm1589, %v7401
        %7434 = vst.msk [vmem:[%s771 + $0x18] sm:$0xff] %vm1589, %v7402
        %7435 = vst.msk [vmem:[%s771 + $0x20] sm:$0xff] %vm1589, %v7403
        %7436 = vst.msk [vmem:[%s771 + $0x28] sm:$0xff] %vm1589, %v7404
        %7437 = vst.msk [vmem:[%s771 + $0x30] sm:$0xff] %vm1589, %v7405
        %7438 = vst.msk [vmem:[%s771 + $0x38] sm:$0xff] %vm1589, %v7406
        %7439 = vst.msk [vmem:[%s771 + $0x40] sm:$0xff] %vm1589, %v7407
        %7440 = vst.msk [vmem:[%s771 + $0x48] sm:$0xff] %vm1589, %v7408
        %7441 = vst.msk [vmem:[%s771 + $0x50] sm:$0xff] %vm1589, %v7409
        %7442 = vst.msk [vmem:[%s771 + $0x58] sm:$0xff] %vm1589, %v7410
        %7443 = vst.msk [vmem:[%s771 + $0x60] sm:$0xff] %vm1589, %v7411
        %7444 = vst.msk [vmem:[%s771 + $0x68] sm:$0xff] %vm1589, %v7412
        %7445 = vst.msk [vmem:[%s771 + $0x70] sm:$0xff] %vm1589, %v7413
        %7446 = vst.msk [vmem:[%s771 + $0x78] sm:$0xff] %vm1589, %v7414
        %7447 = vst.msk [vmem:[%s771 + $0x80] sm:$0xff] %vm1589, %v7415
        %7448 = vst.msk [vmem:[%s771 + $0x88] sm:$0xff] %vm1589, %v7416
        %7449 = vst.msk [vmem:[%s771 + $0x90] sm:$0xff] %vm1589, %v7417
        %7450 = vst.msk [vmem:[%s771 + $0x98] sm:$0xff] %vm1589, %v7418
        %7451 = vst.msk [vmem:[%s771 + $0xa0] sm:$0xff] %vm1589, %v7419
        %7452 = vst.msk [vmem:[%s771 + $0xa8] sm:$0xff] %vm1589, %v7420
        %7453 = vst.msk [vmem:[%s771 + $0xb0] sm:$0xff] %vm1589, %v7421
        %7454 = vst.msk [vmem:[%s771 + $0xb8] sm:$0xff] %vm1589, %v7422
        %7455 = vst.msk [vmem:[%s771 + $0xc0] sm:$0xff] %vm1589, %v7423
        %7456 = vst.msk [vmem:[%s771 + $0xc8] sm:$0xff] %vm1589, %v7424
        %7457 = vst.msk [vmem:[%s771 + $0xd0] sm:$0xff] %vm1589, %v7425
        %7458 = vst.msk [vmem:[%s771 + $0xd8] sm:$0xff] %vm1589, %v7426
        %7459 = vst.msk [vmem:[%s771 + $0xe0] sm:$0xff] %vm1589, %v7427
        %7460 = vst.msk [vmem:[%s771 + $0xe8] sm:$0xff] %vm1589, %v7428
        %7461 = vst.msk [vmem:[%s771 + $0xf0] sm:$0xff] %vm1589, %v7429
        %7462 = vst.msk [vmem:[%s771 + $0xf8] sm:$0xff] %vm1589, %v7430
        %s7463 = sand.u32 %s505, 1
        %s7464 = scalar_lea.sflag [#allocation3], %s7463
        %s7465 = sand.u32 %s505, 1
        %s7466 = smul.addr %s7465, 16
        %s7467 = scalar_lea.vmem [#allocation2], %s7466
        %s7468 = sand.u32 %s531, 1
        %s7469 = scalar_lea.sflag [#allocation5], %s7468
        %s7470 = sand.u32 %s531, 1
        %s7471 = smul.addr %s7470, 64
        %s7472 = scalar_lea.vmem [#allocation4], %s7471
        %p7473 = scmp.lt.s32.totalorder %s41, 1
        %s7474 = scalar_select %p7473, %s41, 1
        %s7475 = smul.addr %s7474, 32
        %s7476 = smul.addr %s7475, 8
        %s7477 = scalar_lea.vmem %s23, %s7476
        // Predicated region
        $region105: #{reviewkd_forward.1} parent=103 // pred_check
          %p7478 = pneg %p515
        $region106: #{reviewkd_forward.1} parent=103 // pred_check_branch
          %7480 = sbr.rel (%p7478) target = $region108
        $region107: #{reviewkd_forward.1} parent=103 // pred_region
          %s7482 = ssub.s32 256, 256
          %7483 = vsyncadd %s7464, %s7482
          %s7484 = smul.addr %s41, 2
          %s7485 = smul.addr %s7484, 128
          %s7486 = scalar_lea.hbm %s21, %s7485
          %s7487 = sshll.u32 %s7467, 4
          %s7488 = int_to_ptr.vmem [resolvable:$true] %s7487
          %7493 = dma.vmem_to_hbm [thread:$0]  %s7488, 256, %s7486, %s7464, 128, 128, 8
        $region108: #{reviewkd_forward.1} parent=103 // pred_fallthru
          _
        // Predicated region
        $region109: #{reviewkd_forward.1} parent=103 // pred_check
          %p7494 = pneg %p541
        $region110: #{reviewkd_forward.1} parent=103 // pred_check_branch
          %7496 = sbr.rel (%p7494) target = $region112
        $region111: #{reviewkd_forward.1} parent=103 // pred_region
          %s7498 = ssub.s32 1024, 1024
          %7499 = vsyncadd %s7469, %s7498
          %s7500 = smul.addr %s41, 8
          %s7501 = smul.addr %s7500, 128
          %s7502 = scalar_lea.hbm %s22, %s7501
          %s7503 = sshll.u32 %s7472, 4
          %s7504 = int_to_ptr.vmem [resolvable:$true] %s7503
          %7509 = dma.vmem_to_hbm [thread:$0]  %s7504, 1024, %s7502, %s7469, 128, 128, 8
        $region112: #{reviewkd_forward.1} parent=103 // pred_fallthru
          _
        // Predicated region
        $region113: #{reviewkd_forward.1} parent=103 // pred_check
          %p7510 = pneg %p567
        $region114: #{reviewkd_forward.1} parent=103 // pred_check_branch
          %7512 = sbr.rel (%p7510) target = $region116
        $region115: #{reviewkd_forward.1} parent=103 // pred_region
          _
        $region116: #{reviewkd_forward.1} parent=103 // pred_fallthru
          _
      $region104: #{reviewkd_forward.1} parent=5 // pred_fallthru
        _
      %p7513 = scmp.le.s32.totalorder 2, %s36
      // Predicated region
      $region117: #{reviewkd_forward.1} parent=5 // pred_check
        %p7514 = pneg %p7513
      $region118: #{reviewkd_forward.1} parent=5 // pred_check_branch
        %7516 = sbr.rel (%p7514) target = $region120
      $region119: #{reviewkd_forward.1} parent=5 // pred_region
        %s7517 = ssub.s32 %s36, 2
        // Predicated region
        $region121: #{reviewkd_forward.1} parent=119 // pred_check
          %p7518 = pneg %p521
        $region122: #{reviewkd_forward.1} parent=119 // pred_check_branch
          %7520 = sbr.rel (%p7518) target = $region124
        $region123: #{reviewkd_forward.1} parent=119 // pred_region
          %s7521 = sand.u32 %s506, 1
          %s7522 = scalar_lea.sflag [#allocation3], %s7521
          %s7523 = sand.u32 %s506, 1
          %s7524 = smul.addr %s7523, 16
          %s7525 = scalar_lea.vmem [#allocation2], %s7524
          %7526 = dma.done %s7522, 256
        $region124: #{reviewkd_forward.1} parent=119 // pred_fallthru
          _
        // Predicated region
        $region125: #{reviewkd_forward.1} parent=119 // pred_check
          %p7527 = pneg %p547
        $region126: #{reviewkd_forward.1} parent=119 // pred_check_branch
          %7529 = sbr.rel (%p7527) target = $region128
        $region127: #{reviewkd_forward.1} parent=119 // pred_region
          %s7530 = sand.u32 %s532, 1
          %s7531 = scalar_lea.sflag [#allocation5], %s7530
          %s7532 = sand.u32 %s532, 1
          %s7533 = smul.addr %s7532, 64
          %s7534 = scalar_lea.vmem [#allocation4], %s7533
          %7535 = dma.done %s7531, 1024
        $region128: #{reviewkd_forward.1} parent=119 // pred_fallthru
          _
        // Predicated region
        $region129: #{reviewkd_forward.1} parent=119 // pred_check
          %p7536 = pneg %p573
        $region130: #{reviewkd_forward.1} parent=119 // pred_check_branch
          %7538 = sbr.rel (%p7536) target = $region132
        $region131: #{reviewkd_forward.1} parent=119 // pred_region
          %p7539 = scmp.lt.s32.totalorder %s42, 1
          %s7540 = scalar_select %p7539, %s42, 1
          %s7541 = smul.addr %s7540, 32
          %s7542 = smul.addr %s7541, 8
          %s7543 = scalar_lea.vmem %s23, %s7542
        $region132: #{reviewkd_forward.1} parent=119 // pred_fallthru
          _
      $region120: #{reviewkd_forward.1} parent=5 // pred_fallthru
        _
    $region6: #{reviewkd_forward.1} parent=1 // loop_footer
      %s40 = sadd.s32 1, %s36
    $region7: #{reviewkd_forward.1} parent=1 // loop_footer_branch
      %35 = sbr.rel target = $region3
    $region8: #{reviewkd_forward.1} parent=1 // loop_exit
      _
    %7544 = vsyncpa [#allocation3], 1
    %s7545 = scalar_lea.sflag [#allocation3], 1
    %7546 = vsyncpa %s7545, 1
    %7547 = vsyncpa [#allocation5], 1
    %s7548 = scalar_lea.sflag [#allocation5], 1
    %7549 = vsyncpa %s7548, 1

</llo_original>
